<compile_context>
chip_gen: v5e
topology: v5e:2x2
jax: 0.10.0
libtpu: 0.0.40
codegen_flags: <defaults>
</compile_context>

<pallas_src>
import functools

import jax
import jax.numpy as jnp
from jax import lax
from jax.experimental import pallas as pl
from jax.experimental.pallas import tpu as pltpu

EPS = 1e-5
LANE = 128
_HI = jax.lax.Precision.HIGHEST
_VMEM_LIMIT = 32 << 20  # per-tile working sets stay far below this on v5e/v6e/v7x
# TODO(synk): on v5e/v6e (128 MiB VMEM) the limit could be raised and on v7x the
# constant-index weight block could be single-buffered (pl.Buffered(1)) via a
# pltpu.get_tpu_info()-dependent config.


def _ru(x, m):
    return (x + m - 1) // m * m


def _cparams(rank):
    return pltpu.CompilerParams(
        dimension_semantics=("parallel",) * rank,
        vmem_limit_bytes=_VMEM_LIMIT,
    )


# ------------------------------ Pallas kernels ------------------------------ #
def _stats(acc, mask):
    """Masked per-channel [sum, sum-of-squares] of an f32 (TM, Cp) tile."""
    am = acc * mask                                   # mask: (TM, 1) in {0, 1}
    s = jnp.sum(am, axis=0, keepdims=True)            # (1, Cp)
    sq = jnp.sum(am * acc, axis=0, keepdims=True)     # (1, Cp) == sum(mask*acc^2)
    return jnp.concatenate([s, sq], axis=0).reshape(1, 2, acc.shape[1])


def conv3x3_stats_kernel(x_ref, w_ref, m_ref, y_ref, st_ref, *, offs, tm):
    """Fused 3x3 conv over a VMEM-resident padded-flat activation slab.

    x_ref : (S, Cin)   bf16 per-batch slab ([TM lead][padded grid rows][tail])
    w_ref : (9, Cin, Cp) bf16 per-tap weights
    m_ref : (TM, 1)    f32 validity of this tile's padded-grid rows
    y_ref : (TM, Cp)   bf16 conv output (padded-grid layout; ring rows = junk)
    st_ref: (1, 2, Cp) f32 masked per-tile [sum, sumsq]
    """
    r0 = pl.program_id(1) * tm
    acc = None
    for t, (off_al, rem) in enumerate(offs):          # static 9-tap unrolled loop
        start = pl.multiple_of(r0 + off_al, 8)        # 8-aligned dynamic start
        win = x_ref[pl.ds(start, tm + 8), :]
        xin = win[rem:rem + tm, :]                    # small static shift
        d = jnp.dot(xin, w_ref[t], preferred_element_type=jnp.float32)
        acc = d if acc is None else acc + d
    y_ref[...] = acc.astype(y_ref.dtype)
    st_ref[...] = _stats(acc, m_ref[...])


def conv1x1_stats_kernel(x_ref, w_ref, m_ref, y_ref, st_ref):
    acc = jnp.dot(x_ref[...], w_ref[...], preferred_element_type=jnp.float32)
    y_ref[...] = acc.astype(y_ref.dtype)
    st_ref[...] = _stats(acc, m_ref[...])


def matmul_stats_kernel(p_ref, w_ref, y_ref, st_ref):
    # stride != 1 conv1: y = patches @ w (zero row-padding adds 0 to the stats).
    acc = jnp.dot(p_ref[...], w_ref[...], preferred_element_type=jnp.float32)
    y_ref[...] = acc.astype(y_ref.dtype)
    s = jnp.sum(acc, axis=0, keepdims=True)
    sq = jnp.sum(acc * acc, axis=0, keepdims=True)
    st_ref[...] = jnp.concatenate([s, sq], axis=0).reshape(1, 2, acc.shape[1])


def bn_relu_mask_kernel(y_ref, sc_ref, sh_ref, m_ref, o_ref):
    # out = relu(y*scale + shift) * mask, written straight into conv2's padded
    # input layout (mask zeroes the padding ring and the halo tiles).
    v = jnp.maximum(y_ref[...].astype(jnp.float32) * sc_ref[...] + sh_ref[...], 0.0)
    o_ref[...] = (v * m_ref[...]).astype(o_ref.dtype)


def bn_relu_kernel(y_ref, sc_ref, sh_ref, o_ref):
    v = jnp.maximum(y_ref[...].astype(jnp.float32) * sc_ref[...] + sh_ref[...], 0.0)
    o_ref[...] = v.astype(o_ref.dtype)


def bn_add_id_relu_kernel(y_ref, sc_ref, sh_ref, idn_ref, o_ref):
    # out = relu(bn2(y2) + identity); identity is channel-padded in-kernel.
    idn = idn_ref[...].astype(jnp.float32)
    pad = o_ref.shape[-1] - idn.shape[-1]
    if pad:
        idn = jnp.concatenate(
            [idn, jnp.zeros((idn.shape[0], pad), jnp.float32)], axis=-1)
    v = y_ref[...].astype(jnp.float32) * sc_ref[...] + sh_ref[...] + idn
    o_ref[...] = jnp.maximum(v, 0.0).astype(o_ref.dtype)


def bn_bn_add_relu_kernel(y_ref, sc_ref, sh_ref, yd_ref, scd_ref, shd_ref, o_ref):
    main = y_ref[...].astype(jnp.float32) * sc_ref[...] + sh_ref[...]
    idn = yd_ref[...].astype(jnp.float32) * scd_ref[...] + shd_ref[...]
    o_ref[...] = jnp.maximum(main + idn, 0.0).astype(o_ref.dtype)


# --------------------------- pallas_call wrappers --------------------------- #
def _conv3x3_fused(x_slab, w_taps, mask, *, n, nt, tm, wp, cp):
    s, cin = x_slab.shape[1], x_slab.shape[2]
    offs = []
    for kh in range(3):
        for kw in range(3):
            off = tm + (kh - 1) * wp + (kw - 1)       # slab lead (= tm) + tap shift
            rem = off % 8
            offs.append((off - rem, rem))
    return pl.pallas_call(
        functools.partial(conv3x3_stats_kernel, offs=tuple(offs), tm=tm),
        grid=(n, nt),
        in_specs=[
            pl.BlockSpec((None, s, cin), lambda i, j: (i, 0, 0)),   # slab: 1 DMA / n
            pl.BlockSpec((9, cin, cp), lambda i, j: (0, 0, 0)),
            pl.BlockSpec((tm, 1), lambda i, j: (j + 1, 0)),
        ],
        out_specs=(
            pl.BlockSpec((None, tm, cp), lambda i, j: (i, j, 0)),
            pl.BlockSpec((None, 1, 2, cp), lambda i, j: (i, j, 0, 0)),
        ),
        out_shape=(
            jax.ShapeDtypeStruct((n, nt * tm, cp), jnp.bfloat16),
            jax.ShapeDtypeStruct((n, nt, 2, cp), jnp.float32),
        ),
        compiler_params=_cparams(2),
    )(x_slab, w_taps, mask)


def _conv1x1_stats(xd, wd, mask, *, n, nt, tm, cp, blk_off):
    cin = xd.shape[-1]
    return pl.pallas_call(
        conv1x1_stats_kernel,
        grid=(n, nt),
        in_specs=[
            pl.BlockSpec((None, tm, cin), lambda i, j: (i, j + blk_off, 0)),
            pl.BlockSpec((cin, cp), lambda i, j: (0, 0)),
            pl.BlockSpec((tm, 1), lambda i, j: (j + 1, 0)),
        ],
        out_specs=(
            pl.BlockSpec((None, tm, cp), lambda i, j: (i, j, 0)),
            pl.BlockSpec((None, 1, 2, cp), lambda i, j: (i, j, 0, 0)),
        ),
        out_shape=(
            jax.ShapeDtypeStruct((n, nt * tm, cp), jnp.bfloat16),
            jax.ShapeDtypeStruct((n, nt, 2, cp), jnp.float32),
        ),
        compiler_params=_cparams(2),
    )(xd, wd, mask)


def _conv_im2col_stats(p, w, tm):
    mp, k = p.shape
    cp = w.shape[1]
    nt = mp // tm
    return pl.pallas_call(
        matmul_stats_kernel,
        grid=(nt,),
        in_specs=[pl.BlockSpec((tm, k), lambda i: (i, 0)),
                  pl.BlockSpec((k, cp), lambda i: (0, 0))],
        out_specs=(pl.BlockSpec((tm, cp), lambda i: (i, 0)),
                   pl.BlockSpec((1, 2, cp), lambda i: (i, 0, 0))),
        out_shape=(jax.ShapeDtypeStruct((mp, cp), jnp.bfloat16),
                   jax.ShapeDtypeStruct((nt, 2, cp), jnp.float32)),
        compiler_params=_cparams(1),
    )(p, w)


def _bn1_to_slab(y1, sc, sh, mask, *, n, nt, tm, cp):
    # BN1 + ReLU written directly into conv2's padded-flat input layout:
    # [TM zero lead][nt*TM data rows, ring rows zeroed][TM zero trail].
    return pl.pallas_call(
        bn_relu_mask_kernel,
        grid=(n, nt + 2),
        in_specs=[
            pl.BlockSpec((None, tm, cp),
                         lambda i, j: (i, jnp.clip(j - 1, 0, nt - 1), 0)),
            pl.BlockSpec((1, cp), lambda i, j: (0, 0)),
            pl.BlockSpec((1, cp), lambda i, j: (0, 0)),
            pl.BlockSpec((tm, 1), lambda i, j: (j, 0)),
        ],
        out_specs=pl.BlockSpec((None, tm, cp), lambda i, j: (i, j, 0)),
        out_shape=jax.ShapeDtypeStruct((n, (nt + 2) * tm, cp), jnp.bfloat16),
        compiler_params=_cparams(2),
    )(y1, sc, sh, mask)


def _bn_relu_rows(y, sc, sh, tm):
    mp, cp = y.shape
    nt = mp // tm
    return pl.pallas_call(
        bn_relu_kernel,
        grid=(nt,),
        in_specs=[pl.BlockSpec((tm, cp), lambda i: (i, 0)),
                  pl.BlockSpec((1, cp), lambda i: (0, 0)),
                  pl.BlockSpec((1, cp), lambda i: (0, 0))],
        out_specs=pl.BlockSpec((tm, cp), lambda i: (i, 0)),
        out_shape=jax.ShapeDtypeStruct((mp, cp), jnp.bfloat16),
        compiler_params=_cparams(1),
    )(y, sc, sh)


def _bn2_add_identity(y2, sc, sh, x_slab, *, n, nt, tm, cp):
    cin = x_slab.shape[-1]
    return pl.pallas_call(
        bn_add_id_relu_kernel,
        grid=(n, nt),
        in_specs=[
            pl.BlockSpec((None, tm, cp), lambda i, j: (i, j, 0)),
            pl.BlockSpec((1, cp), lambda i, j: (0, 0)),
            pl.BlockSpec((1, cp), lambda i, j: (0, 0)),
            pl.BlockSpec((None, tm, cin), lambda i, j: (i, j + 1, 0)),  # reuse x slab
        ],
        out_specs=pl.BlockSpec((None, tm, cp), lambda i, j: (i, j, 0)),
        out_shape=jax.ShapeDtypeStruct((n, nt * tm, cp), jnp.float32),
        compiler_params=_cparams(2),
    )(y2, sc, sh, x_slab)


def _bn2_add_ds(y2, sc, sh, yd, scd, shd, *, n, nt, tm, cp):
    return pl.pallas_call(
        bn_bn_add_relu_kernel,
        grid=(n, nt),
        in_specs=[pl.BlockSpec((None, tm, cp), lambda i, j: (i, j, 0)),
                  pl.BlockSpec((1, cp), lambda i, j: (0, 0)),
                  pl.BlockSpec((1, cp), lambda i, j: (0, 0)),
                  pl.BlockSpec((None, tm, cp), lambda i, j: (i, j, 0)),
                  pl.BlockSpec((1, cp), lambda i, j: (0, 0)),
                  pl.BlockSpec((1, cp), lambda i, j: (0, 0))],
        out_specs=pl.BlockSpec((None, tm, cp), lambda i, j: (i, j, 0)),
        out_shape=jax.ShapeDtypeStruct((n, nt * tm, cp), jnp.float32),
        compiler_params=_cparams(2),
    )(y2, sc, sh, yd, scd, shd)


# ------------------------------- JAX glue ---------------------------------- #
def _im2col(x_nhwc, ksize, stride, padding):
    n, h, w, c = x_nhwc.shape
    ho = (h + 2 * padding - ksize) // stride + 1
    wo = (w + 2 * padding - ksize) // stride + 1
    xp = jnp.pad(x_nhwc, ((0, 0), (padding, padding), (padding, padding), (0, 0)))
    cols = []
    for kh in range(ksize):
        for kw in range(ksize):
            cols.append(xp[:, kh:kh + stride * (ho - 1) + 1:stride,
                           kw:kw + stride * (wo - 1) + 1:stride, :])
    patches = jnp.concatenate(cols, axis=-1)
    return patches.reshape(n * ho * wo, ksize * ksize * c), ho, wo


def _w3x3_taps(w, cin_pad, cp):
    # (Cout, Cin, 3, 3) -> (9, cin_pad, Cp) bf16, tap t = kh*3+kw, [ci, co] layout.
    cout, cin = w.shape[0], w.shape[1]
    m = jnp.transpose(w, (2, 3, 1, 0)).reshape(9, cin, cout)
    m = jnp.pad(m, ((0, 0), (0, cin_pad - cin), (0, cp - cout)))
    return m.astype(jnp.bfloat16)


def _w_oihw_to_mat(w, cp):
    cout = w.shape[0]
    wm = jnp.transpose(w, (2, 3, 1, 0)).reshape(-1, cout)
    return jnp.pad(wm, ((0, 0), (0, cp - cout))).astype(jnp.bfloat16)


def _pick_tile(m, cap=512):
    for t in range(min(cap, _ru(m, 8)), 0, -8):
        if m % t == 0:
            return t
    return 8


def _finish_bn(stats, count, gamma, beta, cp):
    """Per-tile [sum, sumsq] -> folded per-channel scale/shift (tiny JAX op)."""
    # TODO(synk): E[x^2]-E[x]^2 in f32 loses precision when |mean| >> std;
    # a centered/Welford combine would be more robust.
    st = stats.reshape(-1, 2, cp)
    s = jnp.sum(st[:, 0, :], axis=0)
    sq = jnp.sum(st[:, 1, :], axis=0)
    g = jnp.pad(gamma, (0, cp - gamma.shape[0])).astype(jnp.float32)
    b = jnp.pad(beta, (0, cp - beta.shape[0])).astype(jnp.float32)
    mean = s / count
    var = jnp.maximum(sq / count - mean * mean, 0.0)   # biased variance
    scale = g * lax.rsqrt(var + EPS)
    shift = b - mean * scale
    return scale.reshape(1, cp), shift.reshape(1, cp)


def res_block(x_nchw, params, *, stride=1, tile_rows=512):
    """Forward pass of ResBlock (training-mode batch-statistics BatchNorm)."""
    x = jnp.transpose(x_nchw, (0, 2, 3, 1)).astype(jnp.bfloat16)   # NHWC bf16 once
    n, h, w, cin = x.shape
    cout = params["w1"].shape[0]
    cp = _ru(cout, LANE)                     # lane-dense padded channel dim

    ho = (h + 2 - 3) // stride + 1
    wo = (w + 2 - 3) // stride + 1
    p2 = (ho + 2) * (wo + 2)                 # conv2/residual padded-grid rows / image
    tm = max(min(_ru(tile_rows, 8), _ru(p2, 8)), _ru(wo + 11, 8))
    nt = pl.cdiv(p2, tm)
    m_valid = n * ho * wo

    # Row-validity mask over the padded grid, laid out like the activation slabs:
    # [TM zero lead][nt*TM rows: interior=1, ring/tail=0][TM zero trail].
    core = jnp.pad(jnp.ones((ho, wo), jnp.float32), 1).reshape(p2)
    mask = jnp.concatenate([
        jnp.zeros((tm,), jnp.float32),
        jnp.pad(core, (0, nt * tm - p2)),
        jnp.zeros((tm,), jnp.float32),
    ]).reshape((nt + 2) * tm, 1)

    x_slab = None
    if stride == 1:
        # Fused conv1: x in padded-flat slab layout (same grid as conv2's).
        xp = jnp.pad(x, ((0, 0), (1, 1), (1, 1), (0, 0))).reshape(n, p2, cin)
        x_slab = jnp.pad(xp, ((0, 0), (tm, (nt + 1) * tm - p2), (0, 0)))
        y1, st1 = _conv3x3_fused(x_slab, _w3x3_taps(params["w1"], cin, cp), mask,
                                 n=n, nt=nt, tm=tm, wp=wo + 2, cp=cp)
        sc1, sh1 = _finish_bn(st1, m_valid, params["g1"], params["b1"], cp)
        out1_slab = _bn1_to_slab(y1, sc1, sh1, mask, n=n, nt=nt, tm=tm, cp=cp)
    else:
        # conv1 with stride != 1 (minority path): bf16 im2col + tiled matmul.
        patches, _, _ = _im2col(x, 3, stride, 1)
        m_rows = patches.shape[0]
        tm1 = _pick_tile(m_rows)
        mp = _ru(m_rows, tm1)
        if mp != m_rows:
            patches = jnp.pad(patches, ((0, mp - m_rows), (0, 0)))
        y1, st1 = _conv_im2col_stats(patches, _w_oihw_to_mat(params["w1"], cp), tm1)
        sc1, sh1 = _finish_bn(st1, m_valid, params["g1"], params["b1"], cp)
        out1 = _bn_relu_rows(y1, sc1, sh1, tm1)[:m_rows].reshape(n, ho, wo, cp)
        out1 = jnp.pad(out1, ((0, 0), (1, 1), (1, 1), (0, 0))).reshape(n, p2, cp)
        out1_slab = jnp.pad(out1, ((0, 0), (tm, (nt + 1) * tm - p2), (0, 0)))

    # Fused conv2, fed directly from conv1's normalized padded-layout tiles.
    y2, st2 = _conv3x3_fused(out1_slab, _w3x3_taps(params["w2"], cp, cp), mask,
                             n=n, nt=nt, tm=tm, wp=wo + 2, cp=cp)
    sc2, sh2 = _finish_bn(st2, m_valid, params["g2"], params["b2"], cp)

    if stride != 1 or cin != cout:
        wd = jnp.pad(params["wd"].reshape(cout, cin).T,
                     ((0, 0), (0, cp - cout))).astype(jnp.bfloat16)
        if stride == 1:
            ds_in, blk_off = x_slab, 1        # reuse existing x slab (no copy)
        else:
            xs = x[:, ::stride, ::stride, :][:, :ho, :wo, :]
            xs = jnp.pad(xs, ((0, 0), (1, 1), (1, 1), (0, 0))).reshape(n, p2, cin)
            ds_in = jnp.pad(xs, ((0, 0), (0, nt * tm - p2), (0, 0)))
            blk_off = 0
        yd, std = _conv1x1_stats(ds_in, wd, mask, n=n, nt=nt, tm=tm, cp=cp,
                                 blk_off=blk_off)
        scd, shd = _finish_bn(std, m_valid, params["gd"], params["bd"], cp)
        out_slab = _bn2_add_ds(y2, sc2, sh2, yd, scd, shd, n=n, nt=nt, tm=tm, cp=cp)
    else:
        out_slab = _bn2_add_identity(y2, sc2, sh2, x_slab, n=n, nt=nt, tm=tm, cp=cp)

    out = out_slab[:, :p2, :].reshape(n, ho + 2, wo + 2, cp)[:, 1:ho + 1, 1:wo + 1, :cout]
    return jnp.transpose(out, (0, 3, 1, 2))                       # back to NCHW


# --------------------------- pure-JAX reference ----------------------------- #
def res_block_ref(x, params, *, stride=1):
    def conv(x, w, s, pad):
        return lax.conv_general_dilated(
            x, w, (s, s), [(pad, pad), (pad, pad)],
            dimension_numbers=("NCHW", "OIHW", "NCHW"), precision=_HI)

    def bn(x, g, b):
        mean = jnp.mean(x, axis=(0, 2, 3), keepdims=True)
        var = jnp.mean((x - mean) ** 2, axis=(0, 2, 3), keepdims=True)
        return ((x - mean) * lax.rsqrt(var + EPS) * g.reshape(1, -1, 1, 1)
                + b.reshape(1, -1, 1, 1))

    out = jnp.maximum(bn(conv(x, params["w1"], stride, 1), params["g1"], params["b1"]), 0.0)
    out = bn(conv(out, params["w2"], 1, 1), params["g2"], params["b2"])
    cin, cout = x.shape[1], params["w1"].shape[0]
    if stride != 1 or cin != cout:
        idn = bn(conv(x, params["wd"], stride, 0), params["gd"], params["bd"])
    else:
        idn = x
    return jnp.maximum(out + idn, 0.0)


# ---------------------------------- main ------------------------------------ #
if __name__ == "__main__":
    key = jax.random.PRNGKey(0)

    def make_params(key, cin, cout, need_ds):
        ks = jax.random.split(key, 9)
        p = {
            "w1": jax.random.normal(ks[0], (cout, cin, 3, 3), jnp.float32) * 0.1,
            "g1": 1.0 + 0.1 * jax.random.normal(ks[1], (cout,), jnp.float32),
            "b1": 0.1 * jax.random.normal(ks[2], (cout,), jnp.float32),
            "w2": jax.random.normal(ks[3], (cout, cout, 3, 3), jnp.float32) * 0.1,
            "g2": 1.0 + 0.1 * jax.random.normal(ks[4], (cout,), jnp.float32),
            "b2": 0.1 * jax.random.normal(ks[5], (cout,), jnp.float32),
        }
        if need_ds:
            p["wd"] = jax.random.normal(ks[6], (cout, cin, 1, 1), jnp.float32) * 0.1
            p["gd"] = 1.0 + 0.1 * jax.random.normal(ks[7], (cout,), jnp.float32)
            p["bd"] = 0.1 * jax.random.normal(ks[8], (cout,), jnp.float32)
        return p

    cases = [
        dict(n=2, cin=4, cout=8, hw=16, stride=1),   # 1x1 downsample (channel change)
        dict(n=2, cin=8, cout=8, hw=16, stride=1),   # identity branch
        dict(n=2, cin=4, cout=8, hw=16, stride=2),   # strided downsample
    ]
    for cfg in cases:
        k_x, k_p, key = jax.random.split(key, 3)
        need_ds = cfg["stride"] != 1 or cfg["cin"] != cfg["cout"]
        x = jax.random.normal(
            k_x, (cfg["n"], cfg["cin"], cfg["hw"], cfg["hw"]), jnp.float32)
        params = make_params(k_p, cfg["cin"], cfg["cout"], need_ds)

        fwd = jax.jit(functools.partial(res_block, stride=cfg["stride"]))
        out = fwd(x, params)
        jax.block_until_ready(out)

        ref = res_block_ref(x, params, stride=cfg["stride"])
        hw_o = cfg["hw"] // cfg["stride"]
        assert out.shape == (cfg["n"], cfg["cout"], hw_o, hw_o), out.shape
        # bf16 activations/weights on the MXU (f32 accumulation & statistics) vs
        # an f32 HIGHEST-precision reference: a few 1e-2 absolute is expected.
        err = float(jnp.max(jnp.abs(out - ref)))
        assert jnp.allclose(out, ref, rtol=1e-1, atol=1e-1), err

    print("KERNEL_OK")
</pallas_src>

<mosaic_0001>
module attributes {stable_mosaic.version = 11 : i64} {
  func.func @conv3x3_stats_kernel(%arg0: i32, %arg1: i32, %arg2: memref<1x984x4xbf16, #tpu.memory_space<vmem>>, %arg3: memref<9x4x128xbf16, #tpu.memory_space<vmem>>, %arg4: memref<328x1xf32, #tpu.memory_space<vmem>>, %arg5: memref<1x328x128xbf16, #tpu.memory_space<vmem>>, %arg6: memref<1x1x2x128xf32, #tpu.memory_space<vmem>>) attributes {dimension_semantics = [#tpu.dimension_semantics<parallel>, #tpu.dimension_semantics<parallel>], iteration_bounds = array<i64: 2, 1>, scalar_prefetch = 0 : i64, scratch_operands = 0 : i64, tpu.core_type = #tpu.core_type<tc>, window_params = [{transform_indices = @transform_0, window_bounds = array<i64: 1, 984, 4>}, {pipeline_mode = #tpu.pipeline_mode<synchronous>, transform_indices = @transform_1, window_bounds = array<i64: 9, 4, 128>}, {transform_indices = @transform_2, window_bounds = array<i64: 328, 1>}, {transform_indices = @transform_3, window_bounds = array<i64: 1, 328, 128>}, {transform_indices = @transform_4, window_bounds = array<i64: 1, 1, 2, 128>}]} {
    %c328_i32 = arith.constant 328 : i32
    %0 = arith.muli %arg1, %c328_i32 : i32
    %c304_i32 = arith.constant 304 : i32
    %1 = arith.addi %0, %c304_i32 : i32
    %2 = tpu.assume_multiple %1, 8 : i32
    %c0 = arith.constant 0 : index
    %3 = arith.index_cast %2 : i32 to index
    %c0_0 = arith.constant 0 : index
    %4 = vector.load %arg2[%c0, %3, %c0_0] : memref<1x984x4xbf16, #tpu.memory_space<vmem>>, vector<1x336x4xbf16>
    %5 = vector.shape_cast %4 : vector<1x336x4xbf16> to vector<336x4xbf16>
    %6 = vector.extract_strided_slice %5 {offsets = [5, 0], sizes = [328, 4], strides = [1, 1]} : vector<336x4xbf16> to vector<328x4xbf16>
    %c0_1 = arith.constant 0 : index
    %c0_2 = arith.constant 0 : index
    %c0_3 = arith.constant 0 : index
    %7 = vector.load %arg3[%c0_1, %c0_2, %c0_3] : memref<9x4x128xbf16, #tpu.memory_space<vmem>>, vector<1x4x128xbf16>
    %8 = vector.shape_cast %7 : vector<1x4x128xbf16> to vector<4x128xbf16>
    %cst = arith.constant dense<0.000000e+00> : vector<328x128xf32>
    %9 = tpu.matmul %6, %8, %cst {dimension_numbers = #tpu.dot_dimension_numbers<[1], [0], [0], [1], [0, 0, 1, 1], [], []>} : vector<328x4xbf16>, vector<4x128xbf16>, vector<328x128xf32> -> vector<328x128xf32>
    %c304_i32_4 = arith.constant 304 : i32
    %10 = arith.addi %0, %c304_i32_4 : i32
    %11 = tpu.assume_multiple %10, 8 : i32
    %c0_5 = arith.constant 0 : index
    %12 = arith.index_cast %11 : i32 to index
    %c0_6 = arith.constant 0 : index
    %13 = vector.load %arg2[%c0_5, %12, %c0_6] : memref<1x984x4xbf16, #tpu.memory_space<vmem>>, vector<1x336x4xbf16>
    %14 = vector.shape_cast %13 : vector<1x336x4xbf16> to vector<336x4xbf16>
    %15 = vector.extract_strided_slice %14 {offsets = [6, 0], sizes = [328, 4], strides = [1, 1]} : vector<336x4xbf16> to vector<328x4xbf16>
    %c1 = arith.constant 1 : index
    %c0_7 = arith.constant 0 : index
    %c0_8 = arith.constant 0 : index
    %16 = vector.load %arg3[%c1, %c0_7, %c0_8] : memref<9x4x128xbf16, #tpu.memory_space<vmem>>, vector<1x4x128xbf16>
    %17 = vector.shape_cast %16 : vector<1x4x128xbf16> to vector<4x128xbf16>
    %cst_9 = arith.constant dense<0.000000e+00> : vector<328x128xf32>
    %18 = tpu.matmul %15, %17, %cst_9 {dimension_numbers = #tpu.dot_dimension_numbers<[1], [0], [0], [1], [0, 0, 1, 1], [], []>} : vector<328x4xbf16>, vector<4x128xbf16>, vector<328x128xf32> -> vector<328x128xf32>
    %19 = arith.addf %9, %18 : vector<328x128xf32>
    %c304_i32_10 = arith.constant 304 : i32
    %20 = arith.addi %0, %c304_i32_10 : i32
    %21 = tpu.assume_multiple %20, 8 : i32
    %c0_11 = arith.constant 0 : index
    %22 = arith.index_cast %21 : i32 to index
    %c0_12 = arith.constant 0 : index
    %23 = vector.load %arg2[%c0_11, %22, %c0_12] : memref<1x984x4xbf16, #tpu.memory_space<vmem>>, vector<1x336x4xbf16>
    %24 = vector.shape_cast %23 : vector<1x336x4xbf16> to vector<336x4xbf16>
    %25 = vector.extract_strided_slice %24 {offsets = [7, 0], sizes = [328, 4], strides = [1, 1]} : vector<336x4xbf16> to vector<328x4xbf16>
    %c2 = arith.constant 2 : index
    %c0_13 = arith.constant 0 : index
    %c0_14 = arith.constant 0 : index
    %26 = vector.load %arg3[%c2, %c0_13, %c0_14] : memref<9x4x128xbf16, #tpu.memory_space<vmem>>, vector<1x4x128xbf16>
    %27 = vector.shape_cast %26 : vector<1x4x128xbf16> to vector<4x128xbf16>
    %cst_15 = arith.constant dense<0.000000e+00> : vector<328x128xf32>
    %28 = tpu.matmul %25, %27, %cst_15 {dimension_numbers = #tpu.dot_dimension_numbers<[1], [0], [0], [1], [0, 0, 1, 1], [], []>} : vector<328x4xbf16>, vector<4x128xbf16>, vector<328x128xf32> -> vector<328x128xf32>
    %29 = arith.addf %19, %28 : vector<328x128xf32>
    %c320_i32 = arith.constant 320 : i32
    %30 = arith.addi %0, %c320_i32 : i32
    %31 = tpu.assume_multiple %30, 8 : i32
    %c0_16 = arith.constant 0 : index
    %32 = arith.index_cast %31 : i32 to index
    %c0_17 = arith.constant 0 : index
    %33 = vector.load %arg2[%c0_16, %32, %c0_17] : memref<1x984x4xbf16, #tpu.memory_space<vmem>>, vector<1x336x4xbf16>
    %34 = vector.shape_cast %33 : vector<1x336x4xbf16> to vector<336x4xbf16>
    %35 = vector.extract_strided_slice %34 {offsets = [7, 0], sizes = [328, 4], strides = [1, 1]} : vector<336x4xbf16> to vector<328x4xbf16>
    %c3 = arith.constant 3 : index
    %c0_18 = arith.constant 0 : index
    %c0_19 = arith.constant 0 : index
    %36 = vector.load %arg3[%c3, %c0_18, %c0_19] : memref<9x4x128xbf16, #tpu.memory_space<vmem>>, vector<1x4x128xbf16>
    %37 = vector.shape_cast %36 : vector<1x4x128xbf16> to vector<4x128xbf16>
    %cst_20 = arith.constant dense<0.000000e+00> : vector<328x128xf32>
    %38 = tpu.matmul %35, %37, %cst_20 {dimension_numbers = #tpu.dot_dimension_numbers<[1], [0], [0], [1], [0, 0, 1, 1], [], []>} : vector<328x4xbf16>, vector<4x128xbf16>, vector<328x128xf32> -> vector<328x128xf32>
    %39 = arith.addf %29, %38 : vector<328x128xf32>
    %c328_i32_21 = arith.constant 328 : i32
    %40 = arith.addi %0, %c328_i32_21 : i32
    %41 = tpu.assume_multiple %40, 8 : i32
    %c0_22 = arith.constant 0 : index
    %42 = arith.index_cast %41 : i32 to index
    %c0_23 = arith.constant 0 : index
    %43 = vector.load %arg2[%c0_22, %42, %c0_23] : memref<1x984x4xbf16, #tpu.memory_space<vmem>>, vector<1x336x4xbf16>
    %44 = vector.shape_cast %43 : vector<1x336x4xbf16> to vector<336x4xbf16>
    %45 = vector.extract_strided_slice %44 {offsets = [0, 0], sizes = [328, 4], strides = [1, 1]} : vector<336x4xbf16> to vector<328x4xbf16>
    %c4 = arith.constant 4 : index
    %c0_24 = arith.constant 0 : index
    %c0_25 = arith.constant 0 : index
    %46 = vector.load %arg3[%c4, %c0_24, %c0_25] : memref<9x4x128xbf16, #tpu.memory_space<vmem>>, vector<1x4x128xbf16>
    %47 = vector.shape_cast %46 : vector<1x4x128xbf16> to vector<4x128xbf16>
    %cst_26 = arith.constant dense<0.000000e+00> : vector<328x128xf32>
    %48 = tpu.matmul %45, %47, %cst_26 {dimension_numbers = #tpu.dot_dimension_numbers<[1], [0], [0], [1], [0, 0, 1, 1], [], []>} : vector<328x4xbf16>, vector<4x128xbf16>, vector<328x128xf32> -> vector<328x128xf32>
    %49 = arith.addf %39, %48 : vector<328x128xf32>
    %c328_i32_27 = arith.constant 328 : i32
    %50 = arith.addi %0, %c328_i32_27 : i32
    %51 = tpu.assume_multiple %50, 8 : i32
    %c0_28 = arith.constant 0 : index
    %52 = arith.index_cast %51 : i32 to index
    %c0_29 = arith.constant 0 : index
    %53 = vector.load %arg2[%c0_28, %52, %c0_29] : memref<1x984x4xbf16, #tpu.memory_space<vmem>>, vector<1x336x4xbf16>
    %54 = vector.shape_cast %53 : vector<1x336x4xbf16> to vector<336x4xbf16>
    %55 = vector.extract_strided_slice %54 {offsets = [1, 0], sizes = [328, 4], strides = [1, 1]} : vector<336x4xbf16> to vector<328x4xbf16>
    %c5 = arith.constant 5 : index
    %c0_30 = arith.constant 0 : index
    %c0_31 = arith.constant 0 : index
    %56 = vector.load %arg3[%c5, %c0_30, %c0_31] : memref<9x4x128xbf16, #tpu.memory_space<vmem>>, vector<1x4x128xbf16>
    %57 = vector.shape_cast %56 : vector<1x4x128xbf16> to vector<4x128xbf16>
    %cst_32 = arith.constant dense<0.000000e+00> : vector<328x128xf32>
    %58 = tpu.matmul %55, %57, %cst_32 {dimension_numbers = #tpu.dot_dimension_numbers<[1], [0], [0], [1], [0, 0, 1, 1], [], []>} : vector<328x4xbf16>, vector<4x128xbf16>, vector<328x128xf32> -> vector<328x128xf32>
    %59 = arith.addf %49, %58 : vector<328x128xf32>
    %c344_i32 = arith.constant 344 : i32
    %60 = arith.addi %0, %c344_i32 : i32
    %61 = tpu.assume_multiple %60, 8 : i32
    %c0_33 = arith.constant 0 : index
    %62 = arith.index_cast %61 : i32 to index
    %c0_34 = arith.constant 0 : index
    %63 = vector.load %arg2[%c0_33, %62, %c0_34] : memref<1x984x4xbf16, #tpu.memory_space<vmem>>, vector<1x336x4xbf16>
    %64 = vector.shape_cast %63 : vector<1x336x4xbf16> to vector<336x4xbf16>
    %65 = vector.extract_strided_slice %64 {offsets = [1, 0], sizes = [328, 4], strides = [1, 1]} : vector<336x4xbf16> to vector<328x4xbf16>
    %c6 = arith.constant 6 : index
    %c0_35 = arith.constant 0 : index
    %c0_36 = arith.constant 0 : index
    %66 = vector.load %arg3[%c6, %c0_35, %c0_36] : memref<9x4x128xbf16, #tpu.memory_space<vmem>>, vector<1x4x128xbf16>
    %67 = vector.shape_cast %66 : vector<1x4x128xbf16> to vector<4x128xbf16>
    %cst_37 = arith.constant dense<0.000000e+00> : vector<328x128xf32>
    %68 = tpu.matmul %65, %67, %cst_37 {dimension_numbers = #tpu.dot_dimension_numbers<[1], [0], [0], [1], [0, 0, 1, 1], [], []>} : vector<328x4xbf16>, vector<4x128xbf16>, vector<328x128xf32> -> vector<328x128xf32>
    %69 = arith.addf %59, %68 : vector<328x128xf32>
    %c344_i32_38 = arith.constant 344 : i32
    %70 = arith.addi %0, %c344_i32_38 : i32
    %71 = tpu.assume_multiple %70, 8 : i32
    %c0_39 = arith.constant 0 : index
    %72 = arith.index_cast %71 : i32 to index
    %c0_40 = arith.constant 0 : index
    %73 = vector.load %arg2[%c0_39, %72, %c0_40] : memref<1x984x4xbf16, #tpu.memory_space<vmem>>, vector<1x336x4xbf16>
    %74 = vector.shape_cast %73 : vector<1x336x4xbf16> to vector<336x4xbf16>
    %75 = vector.extract_strided_slice %74 {offsets = [2, 0], sizes = [328, 4], strides = [1, 1]} : vector<336x4xbf16> to vector<328x4xbf16>
    %c7 = arith.constant 7 : index
    %c0_41 = arith.constant 0 : index
    %c0_42 = arith.constant 0 : index
    %76 = vector.load %arg3[%c7, %c0_41, %c0_42] : memref<9x4x128xbf16, #tpu.memory_space<vmem>>, vector<1x4x128xbf16>
    %77 = vector.shape_cast %76 : vector<1x4x128xbf16> to vector<4x128xbf16>
    %cst_43 = arith.constant dense<0.000000e+00> : vector<328x128xf32>
    %78 = tpu.matmul %75, %77, %cst_43 {dimension_numbers = #tpu.dot_dimension_numbers<[1], [0], [0], [1], [0, 0, 1, 1], [], []>} : vector<328x4xbf16>, vector<4x128xbf16>, vector<328x128xf32> -> vector<328x128xf32>
    %79 = arith.addf %69, %78 : vector<328x128xf32>
    %c344_i32_44 = arith.constant 344 : i32
    %80 = arith.addi %0, %c344_i32_44 : i32
    %81 = tpu.assume_multiple %80, 8 : i32
    %c0_45 = arith.constant 0 : index
    %82 = arith.index_cast %81 : i32 to index
    %c0_46 = arith.constant 0 : index
    %83 = vector.load %arg2[%c0_45, %82, %c0_46] : memref<1x984x4xbf16, #tpu.memory_space<vmem>>, vector<1x336x4xbf16>
    %84 = vector.shape_cast %83 : vector<1x336x4xbf16> to vector<336x4xbf16>
    %85 = vector.extract_strided_slice %84 {offsets = [3, 0], sizes = [328, 4], strides = [1, 1]} : vector<336x4xbf16> to vector<328x4xbf16>
    %c8 = arith.constant 8 : index
    %c0_47 = arith.constant 0 : index
    %c0_48 = arith.constant 0 : index
    %86 = vector.load %arg3[%c8, %c0_47, %c0_48] : memref<9x4x128xbf16, #tpu.memory_space<vmem>>, vector<1x4x128xbf16>
    %87 = vector.shape_cast %86 : vector<1x4x128xbf16> to vector<4x128xbf16>
    %cst_49 = arith.constant dense<0.000000e+00> : vector<328x128xf32>
    %88 = tpu.matmul %85, %87, %cst_49 {dimension_numbers = #tpu.dot_dimension_numbers<[1], [0], [0], [1], [0, 0, 1, 1], [], []>} : vector<328x4xbf16>, vector<4x128xbf16>, vector<328x128xf32> -> vector<328x128xf32>
    %89 = arith.addf %79, %88 : vector<328x128xf32>
    %90 = arith.truncf %89 : vector<328x128xf32> to vector<328x128xbf16>
    %c0_50 = arith.constant 0 : index
    %c0_51 = arith.constant 0 : index
    %c0_52 = arith.constant 0 : index
    %91 = vector.load %arg5[%c0_50, %c0_51, %c0_52] : memref<1x328x128xbf16, #tpu.memory_space<vmem>>, vector<1x328x128xbf16>
    %92 = vector.shape_cast %91 : vector<1x328x128xbf16> to vector<328x128xbf16>
    %93 = vector.shape_cast %90 : vector<328x128xbf16> to vector<1x328x128xbf16>
    tpu.vector_store %arg5[%c0_50, %c0_51, %c0_52], %93 {strides = array<i32>} : memref<1x328x128xbf16, #tpu.memory_space<vmem>>, vector<1x328x128xbf16>,
    %c0_53 = arith.constant 0 : index
    %c0_54 = arith.constant 0 : index
    %94 = vector.load %arg4[%c0_53, %c0_54] : memref<328x1xf32, #tpu.memory_space<vmem>>, vector<328x1xf32>
    %95 = vector.broadcast %94 : vector<328x1xf32> to vector<328x128xf32>
    %96 = arith.mulf %89, %95 : vector<328x128xf32>
    %cst_55 = arith.constant dense<0.000000e+00> : vector<128xf32>
    %97 = vector.multi_reduction <add>, %96, %cst_55 [0] : vector<328x128xf32> to vector<128xf32>
    %98 = vector.shape_cast %97 : vector<128xf32> to vector<1x128xf32>
    %99 = arith.mulf %96, %89 : vector<328x128xf32>
    %cst_56 = arith.constant dense<0.000000e+00> : vector<128xf32>
    %100 = vector.multi_reduction <add>, %99, %cst_56 [0] : vector<328x128xf32> to vector<128xf32>
    %101 = vector.shape_cast %100 : vector<128xf32> to vector<1x128xf32>
    %102 = tpu.concatenate %98, %101 in 0 : vector<1x128xf32>, vector<1x128xf32> -> vector<2x128xf32>
    %103 = vector.shape_cast %102 : vector<2x128xf32> to vector<1x2x128xf32>
    %c0_57 = arith.constant 0 : index
    %c0_58 = arith.constant 0 : index
    %c0_59 = arith.constant 0 : index
    %c0_60 = arith.constant 0 : index
    %104 = vector.load %arg6[%c0_57, %c0_58, %c0_59, %c0_60] : memref<1x1x2x128xf32, #tpu.memory_space<vmem>>, vector<1x1x2x128xf32>
    %105 = vector.shape_cast %104 : vector<1x1x2x128xf32> to vector<1x2x128xf32>
    %106 = vector.shape_cast %103 : vector<1x2x128xf32> to vector<1x1x2x128xf32>
    tpu.vector_store %arg6[%c0_57, %c0_58, %c0_59, %c0_60], %106 {strides = array<i32>} : memref<1x1x2x128xf32, #tpu.memory_space<vmem>>, vector<1x1x2x128xf32>,
    return
  }
  func.func @transform_0(%arg0: i32, %arg1: i32) -> (i32, i32, i32) {
    %c0_i32 = arith.constant 0 : i32
    %c0_i32_0 = arith.constant 0 : i32
    %c0_i32_1 = arith.constant 0 : i32
    return %arg0, %c0_i32, %c0_i32_0 : i32, i32, i32
  }
  func.func @transform_1(%arg0: i32, %arg1: i32) -> (i32, i32, i32) {
    %c0_i32 = arith.constant 0 : i32
    %c0_i32_0 = arith.constant 0 : i32
    %c0_i32_1 = arith.constant 0 : i32
    %c0_i32_2 = arith.constant 0 : i32
    return %c0_i32, %c0_i32_0, %c0_i32_1 : i32, i32, i32
  }
  func.func @transform_2(%arg0: i32, %arg1: i32) -> (i32, i32) {
    %c1_i32 = arith.constant 1 : i32
    %0 = arith.addi %arg1, %c1_i32 : i32
    %c0_i32 = arith.constant 0 : i32
    %c0_i32_0 = arith.constant 0 : i32
    return %0, %c0_i32 : i32, i32
  }
  func.func @transform_3(%arg0: i32, %arg1: i32) -> (i32, i32, i32) {
    %c0_i32 = arith.constant 0 : i32
    %c0_i32_0 = arith.constant 0 : i32
    return %arg0, %arg1, %c0_i32 : i32, i32, i32
  }
  func.func @transform_4(%arg0: i32, %arg1: i32) -> (i32, i32, i32, i32) {
    %c0_i32 = arith.constant 0 : i32
    %c0_i32_0 = arith.constant 0 : i32
    %c0_i32_1 = arith.constant 0 : i32
    return %arg0, %arg1, %c0_i32, %c0_i32_0 : i32, i32, i32, i32
  }
}

module attributes {stable_mosaic.version = 11 : i64} {
  func.func @conv1x1_stats_kernel(%arg0: i32, %arg1: i32, %arg2: memref<1x328x4xbf16, #tpu.memory_space<vmem>>, %arg3: memref<4x128xbf16, #tpu.memory_space<vmem>>, %arg4: memref<328x1xf32, #tpu.memory_space<vmem>>, %arg5: memref<1x328x128xbf16, #tpu.memory_space<vmem>>, %arg6: memref<1x1x2x128xf32, #tpu.memory_space<vmem>>) attributes {dimension_semantics = [#tpu.dimension_semantics<parallel>, #tpu.dimension_semantics<parallel>], iteration_bounds = array<i64: 2, 1>, scalar_prefetch = 0 : i64, scratch_operands = 0 : i64, tpu.core_type = #tpu.core_type<tc>, window_params = [{transform_indices = @transform_0, window_bounds = array<i64: 1, 328, 4>}, {pipeline_mode = #tpu.pipeline_mode<synchronous>, transform_indices = @transform_1, window_bounds = array<i64: 4, 128>}, {transform_indices = @transform_2, window_bounds = array<i64: 328, 1>}, {transform_indices = @transform_3, window_bounds = array<i64: 1, 328, 128>}, {transform_indices = @transform_4, window_bounds = array<i64: 1, 1, 2, 128>}]} {
    %c0 = arith.constant 0 : index
    %c0_0 = arith.constant 0 : index
    %c0_1 = arith.constant 0 : index
    %0 = vector.load %arg2[%c0, %c0_0, %c0_1] : memref<1x328x4xbf16, #tpu.memory_space<vmem>>, vector<1x328x4xbf16>
    %1 = vector.shape_cast %0 : vector<1x328x4xbf16> to vector<328x4xbf16>
    %c0_2 = arith.constant 0 : index
    %c0_3 = arith.constant 0 : index
    %2 = vector.load %arg3[%c0_2, %c0_3] : memref<4x128xbf16, #tpu.memory_space<vmem>>, vector<4x128xbf16>
    %cst = arith.constant dense<0.000000e+00> : vector<328x128xf32>
    %3 = tpu.matmul %1, %2, %cst {dimension_numbers = #tpu.dot_dimension_numbers<[1], [0], [0], [1], [0, 0, 1, 1], [], []>} : vector<328x4xbf16>, vector<4x128xbf16>, vector<328x128xf32> -> vector<328x128xf32>
    %4 = arith.truncf %3 : vector<328x128xf32> to vector<328x128xbf16>
    %c0_4 = arith.constant 0 : index
    %c0_5 = arith.constant 0 : index
    %c0_6 = arith.constant 0 : index
    %5 = vector.load %arg5[%c0_4, %c0_5, %c0_6] : memref<1x328x128xbf16, #tpu.memory_space<vmem>>, vector<1x328x128xbf16>
    %6 = vector.shape_cast %5 : vector<1x328x128xbf16> to vector<328x128xbf16>
    %7 = vector.shape_cast %4 : vector<328x128xbf16> to vector<1x328x128xbf16>
    tpu.vector_store %arg5[%c0_4, %c0_5, %c0_6], %7 {strides = array<i32>} : memref<1x328x128xbf16, #tpu.memory_space<vmem>>, vector<1x328x128xbf16>,
    %c0_7 = arith.constant 0 : index
    %c0_8 = arith.constant 0 : index
    %8 = vector.load %arg4[%c0_7, %c0_8] : memref<328x1xf32, #tpu.memory_space<vmem>>, vector<328x1xf32>
    %9 = vector.broadcast %8 : vector<328x1xf32> to vector<328x128xf32>
    %10 = arith.mulf %3, %9 : vector<328x128xf32>
    %cst_9 = arith.constant dense<0.000000e+00> : vector<128xf32>
    %11 = vector.multi_reduction <add>, %10, %cst_9 [0] : vector<328x128xf32> to vector<128xf32>
    %12 = vector.shape_cast %11 : vector<128xf32> to vector<1x128xf32>
    %13 = arith.mulf %10, %3 : vector<328x128xf32>
    %cst_10 = arith.constant dense<0.000000e+00> : vector<128xf32>
    %14 = vector.multi_reduction <add>, %13, %cst_10 [0] : vector<328x128xf32> to vector<128xf32>
    %15 = vector.shape_cast %14 : vector<128xf32> to vector<1x128xf32>
    %16 = tpu.concatenate %12, %15 in 0 : vector<1x128xf32>, vector<1x128xf32> -> vector<2x128xf32>
    %17 = vector.shape_cast %16 : vector<2x128xf32> to vector<1x2x128xf32>
    %c0_11 = arith.constant 0 : index
    %c0_12 = arith.constant 0 : index
    %c0_13 = arith.constant 0 : index
    %c0_14 = arith.constant 0 : index
    %18 = vector.load %arg6[%c0_11, %c0_12, %c0_13, %c0_14] : memref<1x1x2x128xf32, #tpu.memory_space<vmem>>, vector<1x1x2x128xf32>
    %19 = vector.shape_cast %18 : vector<1x1x2x128xf32> to vector<1x2x128xf32>
    %20 = vector.shape_cast %17 : vector<1x2x128xf32> to vector<1x1x2x128xf32>
    tpu.vector_store %arg6[%c0_11, %c0_12, %c0_13, %c0_14], %20 {strides = array<i32>} : memref<1x1x2x128xf32, #tpu.memory_space<vmem>>, vector<1x1x2x128xf32>,
    return
  }
  func.func @transform_0(%arg0: i32, %arg1: i32) -> (i32, i32, i32) {
    %c1_i32 = arith.constant 1 : i32
    %0 = arith.addi %arg1, %c1_i32 : i32
    %c0_i32 = arith.constant 0 : i32
    %c0_i32_0 = arith.constant 0 : i32
    return %arg0, %0, %c0_i32 : i32, i32, i32
  }
  func.func @transform_1(%arg0: i32, %arg1: i32) -> (i32, i32) {
    %c0_i32 = arith.constant 0 : i32
    %c0_i32_0 = arith.constant 0 : i32
    %c0_i32_1 = arith.constant 0 : i32
    return %c0_i32, %c0_i32_0 : i32, i32
  }
  func.func @transform_2(%arg0: i32, %arg1: i32) -> (i32, i32) {
    %c1_i32 = arith.constant 1 : i32
    %0 = arith.addi %arg1, %c1_i32 : i32
    %c0_i32 = arith.constant 0 : i32
    %c0_i32_0 = arith.constant 0 : i32
    return %0, %c0_i32 : i32, i32
  }
  func.func @transform_3(%arg0: i32, %arg1: i32) -> (i32, i32, i32) {
    %c0_i32 = arith.constant 0 : i32
    %c0_i32_0 = arith.constant 0 : i32
    return %arg0, %arg1, %c0_i32 : i32, i32, i32
  }
  func.func @transform_4(%arg0: i32, %arg1: i32) -> (i32, i32, i32, i32) {
    %c0_i32 = arith.constant 0 : i32
    %c0_i32_0 = arith.constant 0 : i32
    %c0_i32_1 = arith.constant 0 : i32
    return %arg0, %arg1, %c0_i32, %c0_i32_0 : i32, i32, i32, i32
  }
}

module attributes {stable_mosaic.version = 11 : i64} {
  func.func @bn_relu_mask_kernel(%arg0: i32, %arg1: i32, %arg2: memref<1x328x128xbf16, #tpu.memory_space<vmem>>, %arg3: memref<1x128xf32, #tpu.memory_space<vmem>>, %arg4: memref<1x128xf32, #tpu.memory_space<vmem>>, %arg5: memref<328x1xf32, #tpu.memory_space<vmem>>, %arg6: memref<1x328x128xbf16, #tpu.memory_space<vmem>>) attributes {dimension_semantics = [#tpu.dimension_semantics<parallel>, #tpu.dimension_semantics<parallel>], iteration_bounds = array<i64: 2, 3>, scalar_prefetch = 0 : i64, scratch_operands = 0 : i64, tpu.core_type = #tpu.core_type<tc>, window_params = [{transform_indices = @transform_0, window_bounds = array<i64: 1, 328, 128>}, {pipeline_mode = #tpu.pipeline_mode<synchronous>, transform_indices = @transform_1, window_bounds = array<i64: 1, 128>}, {pipeline_mode = #tpu.pipeline_mode<synchronous>, transform_indices = @transform_2, window_bounds = array<i64: 1, 128>}, {transform_indices = @transform_3, window_bounds = array<i64: 328, 1>}, {transform_indices = @transform_4, window_bounds = array<i64: 1, 328, 128>}]} {
    %c0 = arith.constant 0 : index
    %c0_0 = arith.constant 0 : index
    %c0_1 = arith.constant 0 : index
    %0 = vector.load %arg2[%c0, %c0_0, %c0_1] : memref<1x328x128xbf16, #tpu.memory_space<vmem>>, vector<1x328x128xbf16>
    %1 = vector.shape_cast %0 : vector<1x328x128xbf16> to vector<328x128xbf16>
    %2 = arith.extf %1 : vector<328x128xbf16> to vector<328x128xf32>
    %c0_2 = arith.constant 0 : index
    %c0_3 = arith.constant 0 : index
    %3 = vector.load %arg3[%c0_2, %c0_3] : memref<1x128xf32, #tpu.memory_space<vmem>>, vector<1x128xf32>
    %4 = vector.broadcast %3 : vector<1x128xf32> to vector<328x128xf32>
    %5 = arith.mulf %2, %4 : vector<328x128xf32>
    %c0_4 = arith.constant 0 : index
    %c0_5 = arith.constant 0 : index
    %6 = vector.load %arg4[%c0_4, %c0_5] : memref<1x128xf32, #tpu.memory_space<vmem>>, vector<1x128xf32>
    %7 = vector.broadcast %6 : vector<1x128xf32> to vector<328x128xf32>
    %8 = arith.addf %5, %7 : vector<328x128xf32>
    %cst = arith.constant 0.000000e+00 : f32
    %9 = vector.broadcast %cst : f32 to vector<328x128xf32>
    %10 = arith.maximumf %8, %9 : vector<328x128xf32>
    %c0_6 = arith.constant 0 : index
    %c0_7 = arith.constant 0 : index
    %11 = vector.load %arg5[%c0_6, %c0_7] : memref<328x1xf32, #tpu.memory_space<vmem>>, vector<328x1xf32>
    %12 = vector.broadcast %11 : vector<328x1xf32> to vector<328x128xf32>
    %13 = arith.mulf %10, %12 : vector<328x128xf32>
    %14 = arith.truncf %13 : vector<328x128xf32> to vector<328x128xbf16>
    %c0_8 = arith.constant 0 : index
    %c0_9 = arith.constant 0 : index
    %c0_10 = arith.constant 0 : index
    %15 = vector.load %arg6[%c0_8, %c0_9, %c0_10] : memref<1x328x128xbf16, #tpu.memory_space<vmem>>, vector<1x328x128xbf16>
    %16 = vector.shape_cast %15 : vector<1x328x128xbf16> to vector<328x128xbf16>
    %17 = vector.shape_cast %14 : vector<328x128xbf16> to vector<1x328x128xbf16>
    tpu.vector_store %arg6[%c0_8, %c0_9, %c0_10], %17 {strides = array<i32>} : memref<1x328x128xbf16, #tpu.memory_space<vmem>>, vector<1x328x128xbf16>,
    return
  }
  func.func @transform_0(%arg0: i32, %arg1: i32) -> (i32, i32, i32) {
    %c1_i32 = arith.constant 1 : i32
    %0 = arith.subi %arg1, %c1_i32 : i32
    %c0_i32 = arith.constant 0 : i32
    %c0_i32_0 = arith.constant 0 : i32
    %1 = arith.maxsi %c0_i32, %0 : i32
    %2 = arith.minsi %c0_i32_0, %1 : i32
    %c0_i32_1 = arith.constant 0 : i32
    %c0_i32_2 = arith.constant 0 : i32
    return %arg0, %2, %c0_i32_1 : i32, i32, i32
  }
  func.func @transform_1(%arg0: i32, %arg1: i32) -> (i32, i32) {
    %c0_i32 = arith.constant 0 : i32
    %c0_i32_0 = arith.constant 0 : i32
    %c0_i32_1 = arith.constant 0 : i32
    return %c0_i32, %c0_i32_0 : i32, i32
  }
  func.func @transform_2(%arg0: i32, %arg1: i32) -> (i32, i32) {
    %c0_i32 = arith.constant 0 : i32
    %c0_i32_0 = arith.constant 0 : i32
    %c0_i32_1 = arith.constant 0 : i32
    return %c0_i32, %c0_i32_0 : i32, i32
  }
  func.func @transform_3(%arg0: i32, %arg1: i32) -> (i32, i32) {
    %c0_i32 = arith.constant 0 : i32
    %c0_i32_0 = arith.constant 0 : i32
    return %arg1, %c0_i32 : i32, i32
  }
  func.func @transform_4(%arg0: i32, %arg1: i32) -> (i32, i32, i32) {
    %c0_i32 = arith.constant 0 : i32
    %c0_i32_0 = arith.constant 0 : i32
    return %arg0, %arg1, %c0_i32 : i32, i32, i32
  }
}

module attributes {stable_mosaic.version = 11 : i64} {
  func.func @conv3x3_stats_kernel(%arg0: i32, %arg1: i32, %arg2: memref<1x984x128xbf16, #tpu.memory_space<vmem>>, %arg3: memref<9x128x128xbf16, #tpu.memory_space<vmem>>, %arg4: memref<328x1xf32, #tpu.memory_space<vmem>>, %arg5: memref<1x328x128xbf16, #tpu.memory_space<vmem>>, %arg6: memref<1x1x2x128xf32, #tpu.memory_space<vmem>>) attributes {dimension_semantics = [#tpu.dimension_semantics<parallel>, #tpu.dimension_semantics<parallel>], iteration_bounds = array<i64: 2, 1>, scalar_prefetch = 0 : i64, scratch_operands = 0 : i64, tpu.core_type = #tpu.core_type<tc>, window_params = [{transform_indices = @transform_0, window_bounds = array<i64: 1, 984, 128>}, {pipeline_mode = #tpu.pipeline_mode<synchronous>, transform_indices = @transform_1, window_bounds = array<i64: 9, 128, 128>}, {transform_indices = @transform_2, window_bounds = array<i64: 328, 1>}, {transform_indices = @transform_3, window_bounds = array<i64: 1, 328, 128>}, {transform_indices = @transform_4, window_bounds = array<i64: 1, 1, 2, 128>}]} {
    %c328_i32 = arith.constant 328 : i32
    %0 = arith.muli %arg1, %c328_i32 : i32
    %c304_i32 = arith.constant 304 : i32
    %1 = arith.addi %0, %c304_i32 : i32
    %2 = tpu.assume_multiple %1, 8 : i32
    %c0 = arith.constant 0 : index
    %3 = arith.index_cast %2 : i32 to index
    %c0_0 = arith.constant 0 : index
    %4 = vector.load %arg2[%c0, %3, %c0_0] : memref<1x984x128xbf16, #tpu.memory_space<vmem>>, vector<1x336x128xbf16>
    %5 = vector.shape_cast %4 : vector<1x336x128xbf16> to vector<336x128xbf16>
    %6 = vector.extract_strided_slice %5 {offsets = [5, 0], sizes = [328, 128], strides = [1, 1]} : vector<336x128xbf16> to vector<328x128xbf16>
    %c0_1 = arith.constant 0 : index
    %c0_2 = arith.constant 0 : index
    %c0_3 = arith.constant 0 : index
    %7 = vector.load %arg3[%c0_1, %c0_2, %c0_3] : memref<9x128x128xbf16, #tpu.memory_space<vmem>>, vector<1x128x128xbf16>
    %8 = vector.shape_cast %7 : vector<1x128x128xbf16> to vector<128x128xbf16>
    %cst = arith.constant dense<0.000000e+00> : vector<328x128xf32>
    %9 = tpu.matmul %6, %8, %cst {dimension_numbers = #tpu.dot_dimension_numbers<[1], [0], [0], [1], [0, 0, 1, 1], [], []>} : vector<328x128xbf16>, vector<128x128xbf16>, vector<328x128xf32> -> vector<328x128xf32>
    %c304_i32_4 = arith.constant 304 : i32
    %10 = arith.addi %0, %c304_i32_4 : i32
    %11 = tpu.assume_multiple %10, 8 : i32
    %c0_5 = arith.constant 0 : index
    %12 = arith.index_cast %11 : i32 to index
    %c0_6 = arith.constant 0 : index
    %13 = vector.load %arg2[%c0_5, %12, %c0_6] : memref<1x984x128xbf16, #tpu.memory_space<vmem>>, vector<1x336x128xbf16>
    %14 = vector.shape_cast %13 : vector<1x336x128xbf16> to vector<336x128xbf16>
    %15 = vector.extract_strided_slice %14 {offsets = [6, 0], sizes = [328, 128], strides = [1, 1]} : vector<336x128xbf16> to vector<328x128xbf16>
    %c1 = arith.constant 1 : index
    %c0_7 = arith.constant 0 : index
    %c0_8 = arith.constant 0 : index
    %16 = vector.load %arg3[%c1, %c0_7, %c0_8] : memref<9x128x128xbf16, #tpu.memory_space<vmem>>, vector<1x128x128xbf16>
    %17 = vector.shape_cast %16 : vector<1x128x128xbf16> to vector<128x128xbf16>
    %cst_9 = arith.constant dense<0.000000e+00> : vector<328x128xf32>
    %18 = tpu.matmul %15, %17, %cst_9 {dimension_numbers = #tpu.dot_dimension_numbers<[1], [0], [0], [1], [0, 0, 1, 1], [], []>} : vector<328x128xbf16>, vector<128x128xbf16>, vector<328x128xf32> -> vector<328x128xf32>
    %19 = arith.addf %9, %18 : vector<328x128xf32>
    %c304_i32_10 = arith.constant 304 : i32
    %20 = arith.addi %0, %c304_i32_10 : i32
    %21 = tpu.assume_multiple %20, 8 : i32
    %c0_11 = arith.constant 0 : index
    %22 = arith.index_cast %21 : i32 to index
    %c0_12 = arith.constant 0 : index
    %23 = vector.load %arg2[%c0_11, %22, %c0_12] : memref<1x984x128xbf16, #tpu.memory_space<vmem>>, vector<1x336x128xbf16>
    %24 = vector.shape_cast %23 : vector<1x336x128xbf16> to vector<336x128xbf16>
    %25 = vector.extract_strided_slice %24 {offsets = [7, 0], sizes = [328, 128], strides = [1, 1]} : vector<336x128xbf16> to vector<328x128xbf16>
    %c2 = arith.constant 2 : index
    %c0_13 = arith.constant 0 : index
    %c0_14 = arith.constant 0 : index
    %26 = vector.load %arg3[%c2, %c0_13, %c0_14] : memref<9x128x128xbf16, #tpu.memory_space<vmem>>, vector<1x128x128xbf16>
    %27 = vector.shape_cast %26 : vector<1x128x128xbf16> to vector<128x128xbf16>
    %cst_15 = arith.constant dense<0.000000e+00> : vector<328x128xf32>
    %28 = tpu.matmul %25, %27, %cst_15 {dimension_numbers = #tpu.dot_dimension_numbers<[1], [0], [0], [1], [0, 0, 1, 1], [], []>} : vector<328x128xbf16>, vector<128x128xbf16>, vector<328x128xf32> -> vector<328x128xf32>
    %29 = arith.addf %19, %28 : vector<328x128xf32>
    %c320_i32 = arith.constant 320 : i32
    %30 = arith.addi %0, %c320_i32 : i32
    %31 = tpu.assume_multiple %30, 8 : i32
    %c0_16 = arith.constant 0 : index
    %32 = arith.index_cast %31 : i32 to index
    %c0_17 = arith.constant 0 : index
    %33 = vector.load %arg2[%c0_16, %32, %c0_17] : memref<1x984x128xbf16, #tpu.memory_space<vmem>>, vector<1x336x128xbf16>
    %34 = vector.shape_cast %33 : vector<1x336x128xbf16> to vector<336x128xbf16>
    %35 = vector.extract_strided_slice %34 {offsets = [7, 0], sizes = [328, 128], strides = [1, 1]} : vector<336x128xbf16> to vector<328x128xbf16>
    %c3 = arith.constant 3 : index
    %c0_18 = arith.constant 0 : index
    %c0_19 = arith.constant 0 : index
    %36 = vector.load %arg3[%c3, %c0_18, %c0_19] : memref<9x128x128xbf16, #tpu.memory_space<vmem>>, vector<1x128x128xbf16>
    %37 = vector.shape_cast %36 : vector<1x128x128xbf16> to vector<128x128xbf16>
    %cst_20 = arith.constant dense<0.000000e+00> : vector<328x128xf32>
    %38 = tpu.matmul %35, %37, %cst_20 {dimension_numbers = #tpu.dot_dimension_numbers<[1], [0], [0], [1], [0, 0, 1, 1], [], []>} : vector<328x128xbf16>, vector<128x128xbf16>, vector<328x128xf32> -> vector<328x128xf32>
    %39 = arith.addf %29, %38 : vector<328x128xf32>
    %c328_i32_21 = arith.constant 328 : i32
    %40 = arith.addi %0, %c328_i32_21 : i32
    %41 = tpu.assume_multiple %40, 8 : i32
    %c0_22 = arith.constant 0 : index
    %42 = arith.index_cast %41 : i32 to index
    %c0_23 = arith.constant 0 : index
    %43 = vector.load %arg2[%c0_22, %42, %c0_23] : memref<1x984x128xbf16, #tpu.memory_space<vmem>>, vector<1x336x128xbf16>
    %44 = vector.shape_cast %43 : vector<1x336x128xbf16> to vector<336x128xbf16>
    %45 = vector.extract_strided_slice %44 {offsets = [0, 0], sizes = [328, 128], strides = [1, 1]} : vector<336x128xbf16> to vector<328x128xbf16>
    %c4 = arith.constant 4 : index
    %c0_24 = arith.constant 0 : index
    %c0_25 = arith.constant 0 : index
    %46 = vector.load %arg3[%c4, %c0_24, %c0_25] : memref<9x128x128xbf16, #tpu.memory_space<vmem>>, vector<1x128x128xbf16>
    %47 = vector.shape_cast %46 : vector<1x128x128xbf16> to vector<128x128xbf16>
    %cst_26 = arith.constant dense<0.000000e+00> : vector<328x128xf32>
    %48 = tpu.matmul %45, %47, %cst_26 {dimension_numbers = #tpu.dot_dimension_numbers<[1], [0], [0], [1], [0, 0, 1, 1], [], []>} : vector<328x128xbf16>, vector<128x128xbf16>, vector<328x128xf32> -> vector<328x128xf32>
    %49 = arith.addf %39, %48 : vector<328x128xf32>
    %c328_i32_27 = arith.constant 328 : i32
    %50 = arith.addi %0, %c328_i32_27 : i32
    %51 = tpu.assume_multiple %50, 8 : i32
    %c0_28 = arith.constant 0 : index
    %52 = arith.index_cast %51 : i32 to index
    %c0_29 = arith.constant 0 : index
    %53 = vector.load %arg2[%c0_28, %52, %c0_29] : memref<1x984x128xbf16, #tpu.memory_space<vmem>>, vector<1x336x128xbf16>
    %54 = vector.shape_cast %53 : vector<1x336x128xbf16> to vector<336x128xbf16>
    %55 = vector.extract_strided_slice %54 {offsets = [1, 0], sizes = [328, 128], strides = [1, 1]} : vector<336x128xbf16> to vector<328x128xbf16>
    %c5 = arith.constant 5 : index
    %c0_30 = arith.constant 0 : index
    %c0_31 = arith.constant 0 : index
    %56 = vector.load %arg3[%c5, %c0_30, %c0_31] : memref<9x128x128xbf16, #tpu.memory_space<vmem>>, vector<1x128x128xbf16>
    %57 = vector.shape_cast %56 : vector<1x128x128xbf16> to vector<128x128xbf16>
    %cst_32 = arith.constant dense<0.000000e+00> : vector<328x128xf32>
    %58 = tpu.matmul %55, %57, %cst_32 {dimension_numbers = #tpu.dot_dimension_numbers<[1], [0], [0], [1], [0, 0, 1, 1], [], []>} : vector<328x128xbf16>, vector<128x128xbf16>, vector<328x128xf32> -> vector<328x128xf32>
    %59 = arith.addf %49, %58 : vector<328x128xf32>
    %c344_i32 = arith.constant 344 : i32
    %60 = arith.addi %0, %c344_i32 : i32
    %61 = tpu.assume_multiple %60, 8 : i32
    %c0_33 = arith.constant 0 : index
    %62 = arith.index_cast %61 : i32 to index
    %c0_34 = arith.constant 0 : index
    %63 = vector.load %arg2[%c0_33, %62, %c0_34] : memref<1x984x128xbf16, #tpu.memory_space<vmem>>, vector<1x336x128xbf16>
    %64 = vector.shape_cast %63 : vector<1x336x128xbf16> to vector<336x128xbf16>
    %65 = vector.extract_strided_slice %64 {offsets = [1, 0], sizes = [328, 128], strides = [1, 1]} : vector<336x128xbf16> to vector<328x128xbf16>
    %c6 = arith.constant 6 : index
    %c0_35 = arith.constant 0 : index
    %c0_36 = arith.constant 0 : index
    %66 = vector.load %arg3[%c6, %c0_35, %c0_36] : memref<9x128x128xbf16, #tpu.memory_space<vmem>>, vector<1x128x128xbf16>
    %67 = vector.shape_cast %66 : vector<1x128x128xbf16> to vector<128x128xbf16>
    %cst_37 = arith.constant dense<0.000000e+00> : vector<328x128xf32>
    %68 = tpu.matmul %65, %67, %cst_37 {dimension_numbers = #tpu.dot_dimension_numbers<[1], [0], [0], [1], [0, 0, 1, 1], [], []>} : vector<328x128xbf16>, vector<128x128xbf16>, vector<328x128xf32> -> vector<328x128xf32>
    %69 = arith.addf %59, %68 : vector<328x128xf32>
    %c344_i32_38 = arith.constant 344 : i32
    %70 = arith.addi %0, %c344_i32_38 : i32
    %71 = tpu.assume_multiple %70, 8 : i32
    %c0_39 = arith.constant 0 : index
    %72 = arith.index_cast %71 : i32 to index
    %c0_40 = arith.constant 0 : index
    %73 = vector.load %arg2[%c0_39, %72, %c0_40] : memref<1x984x128xbf16, #tpu.memory_space<vmem>>, vector<1x336x128xbf16>
    %74 = vector.shape_cast %73 : vector<1x336x128xbf16> to vector<336x128xbf16>
    %75 = vector.extract_strided_slice %74 {offsets = [2, 0], sizes = [328, 128], strides = [1, 1]} : vector<336x128xbf16> to vector<328x128xbf16>
    %c7 = arith.constant 7 : index
    %c0_41 = arith.constant 0 : index
    %c0_42 = arith.constant 0 : index
    %76 = vector.load %arg3[%c7, %c0_41, %c0_42] : memref<9x128x128xbf16, #tpu.memory_space<vmem>>, vector<1x128x128xbf16>
    %77 = vector.shape_cast %76 : vector<1x128x128xbf16> to vector<128x128xbf16>
    %cst_43 = arith.constant dense<0.000000e+00> : vector<328x128xf32>
    %78 = tpu.matmul %75, %77, %cst_43 {dimension_numbers = #tpu.dot_dimension_numbers<[1], [0], [0], [1], [0, 0, 1, 1], [], []>} : vector<328x128xbf16>, vector<128x128xbf16>, vector<328x128xf32> -> vector<328x128xf32>
    %79 = arith.addf %69, %78 : vector<328x128xf32>
    %c344_i32_44 = arith.constant 344 : i32
    %80 = arith.addi %0, %c344_i32_44 : i32
    %81 = tpu.assume_multiple %80, 8 : i32
    %c0_45 = arith.constant 0 : index
    %82 = arith.index_cast %81 : i32 to index
    %c0_46 = arith.constant 0 : index
    %83 = vector.load %arg2[%c0_45, %82, %c0_46] : memref<1x984x128xbf16, #tpu.memory_space<vmem>>, vector<1x336x128xbf16>
    %84 = vector.shape_cast %83 : vector<1x336x128xbf16> to vector<336x128xbf16>
    %85 = vector.extract_strided_slice %84 {offsets = [3, 0], sizes = [328, 128], strides = [1, 1]} : vector<336x128xbf16> to vector<328x128xbf16>
    %c8 = arith.constant 8 : index
    %c0_47 = arith.constant 0 : index
    %c0_48 = arith.constant 0 : index
    %86 = vector.load %arg3[%c8, %c0_47, %c0_48] : memref<9x128x128xbf16, #tpu.memory_space<vmem>>, vector<1x128x128xbf16>
    %87 = vector.shape_cast %86 : vector<1x128x128xbf16> to vector<128x128xbf16>
    %cst_49 = arith.constant dense<0.000000e+00> : vector<328x128xf32>
    %88 = tpu.matmul %85, %87, %cst_49 {dimension_numbers = #tpu.dot_dimension_numbers<[1], [0], [0], [1], [0, 0, 1, 1], [], []>} : vector<328x128xbf16>, vector<128x128xbf16>, vector<328x128xf32> -> vector<328x128xf32>
    %89 = arith.addf %79, %88 : vector<328x128xf32>
    %90 = arith.truncf %89 : vector<328x128xf32> to vector<328x128xbf16>
    %c0_50 = arith.constant 0 : index
    %c0_51 = arith.constant 0 : index
    %c0_52 = arith.constant 0 : index
    %91 = vector.load %arg5[%c0_50, %c0_51, %c0_52] : memref<1x328x128xbf16, #tpu.memory_space<vmem>>, vector<1x328x128xbf16>
    %92 = vector.shape_cast %91 : vector<1x328x128xbf16> to vector<328x128xbf16>
    %93 = vector.shape_cast %90 : vector<328x128xbf16> to vector<1x328x128xbf16>
    tpu.vector_store %arg5[%c0_50, %c0_51, %c0_52], %93 {strides = array<i32>} : memref<1x328x128xbf16, #tpu.memory_space<vmem>>, vector<1x328x128xbf16>,
    %c0_53 = arith.constant 0 : index
    %c0_54 = arith.constant 0 : index
    %94 = vector.load %arg4[%c0_53, %c0_54] : memref<328x1xf32, #tpu.memory_space<vmem>>, vector<328x1xf32>
    %95 = vector.broadcast %94 : vector<328x1xf32> to vector<328x128xf32>
    %96 = arith.mulf %89, %95 : vector<328x128xf32>
    %cst_55 = arith.constant dense<0.000000e+00> : vector<128xf32>
    %97 = vector.multi_reduction <add>, %96, %cst_55 [0] : vector<328x128xf32> to vector<128xf32>
    %98 = vector.shape_cast %97 : vector<128xf32> to vector<1x128xf32>
    %99 = arith.mulf %96, %89 : vector<328x128xf32>
    %cst_56 = arith.constant dense<0.000000e+00> : vector<128xf32>
    %100 = vector.multi_reduction <add>, %99, %cst_56 [0] : vector<328x128xf32> to vector<128xf32>
    %101 = vector.shape_cast %100 : vector<128xf32> to vector<1x128xf32>
    %102 = tpu.concatenate %98, %101 in 0 : vector<1x128xf32>, vector<1x128xf32> -> vector<2x128xf32>
    %103 = vector.shape_cast %102 : vector<2x128xf32> to vector<1x2x128xf32>
    %c0_57 = arith.constant 0 : index
    %c0_58 = arith.constant 0 : index
    %c0_59 = arith.constant 0 : index
    %c0_60 = arith.constant 0 : index
    %104 = vector.load %arg6[%c0_57, %c0_58, %c0_59, %c0_60] : memref<1x1x2x128xf32, #tpu.memory_space<vmem>>, vector<1x1x2x128xf32>
    %105 = vector.shape_cast %104 : vector<1x1x2x128xf32> to vector<1x2x128xf32>
    %106 = vector.shape_cast %103 : vector<1x2x128xf32> to vector<1x1x2x128xf32>
    tpu.vector_store %arg6[%c0_57, %c0_58, %c0_59, %c0_60], %106 {strides = array<i32>} : memref<1x1x2x128xf32, #tpu.memory_space<vmem>>, vector<1x1x2x128xf32>,
    return
  }
  func.func @transform_0(%arg0: i32, %arg1: i32) -> (i32, i32, i32) {
    %c0_i32 = arith.constant 0 : i32
    %c0_i32_0 = arith.constant 0 : i32
    %c0_i32_1 = arith.constant 0 : i32
    return %arg0, %c0_i32, %c0_i32_0 : i32, i32, i32
  }
  func.func @transform_1(%arg0: i32, %arg1: i32) -> (i32, i32, i32) {
    %c0_i32 = arith.constant 0 : i32
    %c0_i32_0 = arith.constant 0 : i32
    %c0_i32_1 = arith.constant 0 : i32
    %c0_i32_2 = arith.constant 0 : i32
    return %c0_i32, %c0_i32_0, %c0_i32_1 : i32, i32, i32
  }
  func.func @transform_2(%arg0: i32, %arg1: i32) -> (i32, i32) {
    %c1_i32 = arith.constant 1 : i32
    %0 = arith.addi %arg1, %c1_i32 : i32
    %c0_i32 = arith.constant 0 : i32
    %c0_i32_0 = arith.constant 0 : i32
    return %0, %c0_i32 : i32, i32
  }
  func.func @transform_3(%arg0: i32, %arg1: i32) -> (i32, i32, i32) {
    %c0_i32 = arith.constant 0 : i32
    %c0_i32_0 = arith.constant 0 : i32
    return %arg0, %arg1, %c0_i32 : i32, i32, i32
  }
  func.func @transform_4(%arg0: i32, %arg1: i32) -> (i32, i32, i32, i32) {
    %c0_i32 = arith.constant 0 : i32
    %c0_i32_0 = arith.constant 0 : i32
    %c0_i32_1 = arith.constant 0 : i32
    return %arg0, %arg1, %c0_i32, %c0_i32_0 : i32, i32, i32, i32
  }
}

module attributes {stable_mosaic.version = 11 : i64} {
  func.func @bn_bn_add_relu_kernel(%arg0: i32, %arg1: i32, %arg2: memref<1x328x128xbf16, #tpu.memory_space<vmem>>, %arg3: memref<1x128xf32, #tpu.memory_space<vmem>>, %arg4: memref<1x128xf32, #tpu.memory_space<vmem>>, %arg5: memref<1x328x128xbf16, #tpu.memory_space<vmem>>, %arg6: memref<1x128xf32, #tpu.memory_space<vmem>>, %arg7: memref<1x128xf32, #tpu.memory_space<vmem>>, %arg8: memref<1x328x128xf32, #tpu.memory_space<vmem>>) attributes {dimension_semantics = [#tpu.dimension_semantics<parallel>, #tpu.dimension_semantics<parallel>], iteration_bounds = array<i64: 2, 1>, scalar_prefetch = 0 : i64, scratch_operands = 0 : i64, tpu.core_type = #tpu.core_type<tc>, window_params = [{transform_indices = @transform_0, window_bounds = array<i64: 1, 328, 128>}, {pipeline_mode = #tpu.pipeline_mode<synchronous>, transform_indices = @transform_1, window_bounds = array<i64: 1, 128>}, {pipeline_mode = #tpu.pipeline_mode<synchronous>, transform_indices = @transform_2, window_bounds = array<i64: 1, 128>}, {transform_indices = @transform_3, window_bounds = array<i64: 1, 328, 128>}, {pipeline_mode = #tpu.pipeline_mode<synchronous>, transform_indices = @transform_4, window_bounds = array<i64: 1, 128>}, {pipeline_mode = #tpu.pipeline_mode<synchronous>, transform_indices = @transform_5, window_bounds = array<i64: 1, 128>}, {transform_indices = @transform_6, window_bounds = array<i64: 1, 328, 128>}]} {
    %c0 = arith.constant 0 : index
    %c0_0 = arith.constant 0 : index
    %c0_1 = arith.constant 0 : index
    %0 = vector.load %arg2[%c0, %c0_0, %c0_1] : memref<1x328x128xbf16, #tpu.memory_space<vmem>>, vector<1x328x128xbf16>
    %1 = vector.shape_cast %0 : vector<1x328x128xbf16> to vector<328x128xbf16>
    %2 = arith.extf %1 : vector<328x128xbf16> to vector<328x128xf32>
    %c0_2 = arith.constant 0 : index
    %c0_3 = arith.constant 0 : index
    %3 = vector.load %arg3[%c0_2, %c0_3] : memref<1x128xf32, #tpu.memory_space<vmem>>, vector<1x128xf32>
    %4 = vector.broadcast %3 : vector<1x128xf32> to vector<328x128xf32>
    %5 = arith.mulf %2, %4 : vector<328x128xf32>
    %c0_4 = arith.constant 0 : index
    %c0_5 = arith.constant 0 : index
    %6 = vector.load %arg4[%c0_4, %c0_5] : memref<1x128xf32, #tpu.memory_space<vmem>>, vector<1x128xf32>
    %7 = vector.broadcast %6 : vector<1x128xf32> to vector<328x128xf32>
    %8 = arith.addf %5, %7 : vector<328x128xf32>
    %c0_6 = arith.constant 0 : index
    %c0_7 = arith.constant 0 : index
    %c0_8 = arith.constant 0 : index
    %9 = vector.load %arg5[%c0_6, %c0_7, %c0_8] : memref<1x328x128xbf16, #tpu.memory_space<vmem>>, vector<1x328x128xbf16>
    %10 = vector.shape_cast %9 : vector<1x328x128xbf16> to vector<328x128xbf16>
    %11 = arith.extf %10 : vector<328x128xbf16> to vector<328x128xf32>
    %c0_9 = arith.constant 0 : index
    %c0_10 = arith.constant 0 : index
    %12 = vector.load %arg6[%c0_9, %c0_10] : memref<1x128xf32, #tpu.memory_space<vmem>>, vector<1x128xf32>
    %13 = vector.broadcast %12 : vector<1x128xf32> to vector<328x128xf32>
    %14 = arith.mulf %11, %13 : vector<328x128xf32>
    %c0_11 = arith.constant 0 : index
    %c0_12 = arith.constant 0 : index
    %15 = vector.load %arg7[%c0_11, %c0_12] : memref<1x128xf32, #tpu.memory_space<vmem>>, vector<1x128xf32>
    %16 = vector.broadcast %15 : vector<1x128xf32> to vector<328x128xf32>
    %17 = arith.addf %14, %16 : vector<328x128xf32>
    %18 = arith.addf %8, %17 : vector<328x128xf32>
    %cst = arith.constant 0.000000e+00 : f32
    %19 = vector.broadcast %cst : f32 to vector<328x128xf32>
    %20 = arith.maximumf %18, %19 : vector<328x128xf32>
    %c0_13 = arith.constant 0 : index
    %c0_14 = arith.constant 0 : index
    %c0_15 = arith.constant 0 : index
    %21 = vector.load %arg8[%c0_13, %c0_14, %c0_15] : memref<1x328x128xf32, #tpu.memory_space<vmem>>, vector<1x328x128xf32>
    %22 = vector.shape_cast %21 : vector<1x328x128xf32> to vector<328x128xf32>
    %23 = vector.shape_cast %20 : vector<328x128xf32> to vector<1x328x128xf32>
    tpu.vector_store %arg8[%c0_13, %c0_14, %c0_15], %23 {strides = array<i32>} : memref<1x328x128xf32, #tpu.memory_space<vmem>>, vector<1x328x128xf32>,
    return
  }
  func.func @transform_0(%arg0: i32, %arg1: i32) -> (i32, i32, i32) {
    %c0_i32 = arith.constant 0 : i32
    %c0_i32_0 = arith.constant 0 : i32
    return %arg0, %arg1, %c0_i32 : i32, i32, i32
  }
  func.func @transform_1(%arg0: i32, %arg1: i32) -> (i32, i32) {
    %c0_i32 = arith.constant 0 : i32
    %c0_i32_0 = arith.constant 0 : i32
    %c0_i32_1 = arith.constant 0 : i32
    return %c0_i32, %c0_i32_0 : i32, i32
  }
  func.func @transform_2(%arg0: i32, %arg1: i32) -> (i32, i32) {
    %c0_i32 = arith.constant 0 : i32
    %c0_i32_0 = arith.constant 0 : i32
    %c0_i32_1 = arith.constant 0 : i32
    return %c0_i32, %c0_i32_0 : i32, i32
  }
  func.func @transform_3(%arg0: i32, %arg1: i32) -> (i32, i32, i32) {
    %c0_i32 = arith.constant 0 : i32
    %c0_i32_0 = arith.constant 0 : i32
    return %arg0, %arg1, %c0_i32 : i32, i32, i32
  }
  func.func @transform_4(%arg0: i32, %arg1: i32) -> (i32, i32) {
    %c0_i32 = arith.constant 0 : i32
    %c0_i32_0 = arith.constant 0 : i32
    %c0_i32_1 = arith.constant 0 : i32
    return %c0_i32, %c0_i32_0 : i32, i32
  }
  func.func @transform_5(%arg0: i32, %arg1: i32) -> (i32, i32) {
    %c0_i32 = arith.constant 0 : i32
    %c0_i32_0 = arith.constant 0 : i32
    %c0_i32_1 = arith.constant 0 : i32
    return %c0_i32, %c0_i32_0 : i32, i32
  }
  func.func @transform_6(%arg0: i32, %arg1: i32) -> (i32, i32, i32) {
    %c0_i32 = arith.constant 0 : i32
    %c0_i32_0 = arith.constant 0 : i32
    return %arg0, %arg1, %c0_i32 : i32, i32, i32
  }
}

</mosaic_0001>

<llo_original>
// kernel: res_block.6
$region0: #{res_block.6}
  #allocation0 [shape = 'u32[]', space=smem, size = 0x4, offset = 0x4, fixed_abs, tag = 'smem constant byte address 0x4 - core index']
  #allocation1 [shape = 'u32[72,128]{1,0:T(1,128)}', space=vmem, size = 0x9000, scoped, tag = 'internal scratch']
  %s0 = inlined_call_operand.vmem [shape: bf16[2,328,128], index: 0, kind: input, shape index: {}]
  %s1 = inlined_call_operand.vmem [shape: f32[1,128], index: 1, kind: input, shape index: {}]
  %s2 = inlined_call_operand.vmem [shape: f32[1,128], index: 2, kind: input, shape index: {}]
  %s3 = inlined_call_operand.vmem [shape: f32[984,1], index: 3, kind: input, shape index: {}]
  %s4 = inlined_call_operand.vmem [shape: bf16[2,984,128], index: 4, kind: output, shape index: {}]
  %s5 = sld [smem:[#allocation0]]
  $region49: #{res_block.6} parent=0
    _
  %s7 = ssub.s32 1, %s5
  %s8 = scalar_select 0, %s7, %s5
  loop: start=0, step=1, limit=8
  $region2: #{res_block.6} parent=0 // loop_pre_header
    _
  $region3: #{res_block.6} parent=0 // loop_header
    %s10 = sphi 0, %s14
    %p11 = scmp.ge.s32.totalorder %s10, 8
    %s17 = sphi 0, %s29
    %s18 = sphi 0, %s25
    %s19 = sphi 0, %s17
    %s20 = sphi 0, %s18
    %s21 = sphi 0, %s19
    %s22 = sphi 0, %s20
    %s44 = sphi 0, %s46
    %s47 = sphi 0, %s44
    %s48 = sphi 0, %s47
    %s64 = sphi 0, %s48
    %s68 = sphi 0, %s68
    %s70 = sphi 0, %s68
    %s71 = sphi 0, %s70
    %s85 = sphi 0, %s71
    %s89 = sphi 0, %s89
    %s91 = sphi 0, %s89
    %s92 = sphi 0, %s91
    %s106 = sphi 0, %s92
    %s112 = sphi 0, %s114
    %s115 = sphi 0, %s112
    %s116 = sphi 0, %s115
    %s132 = sphi 0, %s116
    %s140 = sphi 0, %s142
    %s143 = sphi 0, %s140
    %s144 = sphi 0, %s143
    %s160 = sphi 0, %s144
  $region4: #{res_block.6} parent=0 // loop_header_branch
    %13 = sbr.rel (%p11) target = $region8
  $region5: #{res_block.6} parent=0 // loop_body
    %s15 = ssub.s32 %s10, 1
    %s16 = ssub.s32 %s10, 2
    %s23 = sadd.s32 1, %s18
    %p24 = scmp.ge.s32.totalorder %s23, 3
    %s25 = scalar_select %p24, 0, %s23
    %s26 = sadd.s32 1, %s17
    %s27 = scalar_select %p24, %s26, %s17
    %p28 = scmp.ge.s32.totalorder %s27, 2
    %s29 = scalar_select %p28, 0, %s27
    %s30 = ssub.s32 %s18, 1
    %p31 = scmp.gt.s32.totalorder %s30, 0
    %s32 = scalar_select %p31, %s30, 0
    %p33 = scmp.lt.s32.totalorder %s32, 0
    %s34 = scalar_select %p33, %s32, 0
    %s35 = ssub.s32 %s25, 1
    %p36 = scmp.gt.s32.totalorder %s35, 0
    %s37 = scalar_select %p36, %s35, 0
    %p38 = scmp.lt.s32.totalorder %s37, 0
    %s39 = scalar_select %p38, %s37, 0
    %s40 = ssub.s32 %s17, %s29
    %s41 = ssub.s32 %s34, %s39
    %s42 = sor.u32 %s40, %s41
    %p43 = scmp.eq.s32.totalorder %s42, 0
    %s45 = sadd.s32 %s44, 1
    %s46 = scalar_select %p43, %s44, %s45
    %p49 = pneg %p43
    %p50 = scmp.eq.s32.totalorder %s10, 5
    %p51 = por %p49, %p50
    %p52 = scmp.ne.s32.totalorder %s44, %s47
    %p53 = scmp.eq.s32.totalorder %s10, 0
    %p54 = por %p52, %p53
    %p55 = scmp.ne.s32.totalorder %s44, %s47
    %p56 = scmp.eq.s32.totalorder %s15, 5
    %p57 = por %p55, %p56
    %p58 = scmp.ne.s32.totalorder %s47, %s48
    %p59 = scmp.eq.s32.totalorder %s15, 0
    %p60 = por %p58, %p59
    %p61 = scmp.ne.s32.totalorder %s47, %s48
    %p62 = scmp.eq.s32.totalorder %s16, 5
    %p63 = por %p61, %p62
    %p65 = scmp.ne.s32.totalorder %s48, %s64
    %p66 = scmp.eq.s32.totalorder %s16, 0
    %p67 = por %p65, %p66
    %s69 = sadd.s32 %s68, 1
    %p72 = scmp.eq.s32.totalorder %s10, 5
    %p73 = scmp.ne.s32.totalorder %s68, %s70
    %p74 = scmp.eq.s32.totalorder %s10, 0
    %p75 = por %p73, %p74
    %p76 = scmp.ne.s32.totalorder %s68, %s70
    %p77 = scmp.eq.s32.totalorder %s15, 5
    %p78 = por %p76, %p77
    %p79 = scmp.ne.s32.totalorder %s70, %s71
    %p80 = scmp.eq.s32.totalorder %s15, 0
    %p81 = por %p79, %p80
    %p82 = scmp.ne.s32.totalorder %s70, %s71
    %p83 = scmp.eq.s32.totalorder %s16, 5
    %p84 = por %p82, %p83
    %p86 = scmp.ne.s32.totalorder %s71, %s85
    %p87 = scmp.eq.s32.totalorder %s16, 0
    %p88 = por %p86, %p87
    %s90 = sadd.s32 %s89, 1
    %p93 = scmp.eq.s32.totalorder %s10, 5
    %p94 = scmp.ne.s32.totalorder %s89, %s91
    %p95 = scmp.eq.s32.totalorder %s10, 0
    %p96 = por %p94, %p95
    %p97 = scmp.ne.s32.totalorder %s89, %s91
    %p98 = scmp.eq.s32.totalorder %s15, 5
    %p99 = por %p97, %p98
    %p100 = scmp.ne.s32.totalorder %s91, %s92
    %p101 = scmp.eq.s32.totalorder %s15, 0
    %p102 = por %p100, %p101
    %p103 = scmp.ne.s32.totalorder %s91, %s92
    %p104 = scmp.eq.s32.totalorder %s16, 5
    %p105 = por %p103, %p104
    %p107 = scmp.ne.s32.totalorder %s92, %s106
    %p108 = scmp.eq.s32.totalorder %s16, 0
    %p109 = por %p107, %p108
    %s110 = ssub.s32 %s18, %s25
    %p111 = scmp.eq.s32.totalorder %s110, 0
    %s113 = sadd.s32 %s112, 1
    %s114 = scalar_select %p111, %s112, %s113
    %p117 = pneg %p111
    %p118 = scmp.eq.s32.totalorder %s10, 5
    %p119 = por %p117, %p118
    %p120 = scmp.ne.s32.totalorder %s112, %s115
    %p121 = scmp.eq.s32.totalorder %s10, 0
    %p122 = por %p120, %p121
    %p123 = scmp.ne.s32.totalorder %s112, %s115
    %p124 = scmp.eq.s32.totalorder %s15, 5
    %p125 = por %p123, %p124
    %p126 = scmp.ne.s32.totalorder %s115, %s116
    %p127 = scmp.eq.s32.totalorder %s15, 0
    %p128 = por %p126, %p127
    %p129 = scmp.ne.s32.totalorder %s115, %s116
    %p130 = scmp.eq.s32.totalorder %s16, 5
    %p131 = por %p129, %p130
    %p133 = scmp.ne.s32.totalorder %s116, %s132
    %p134 = scmp.eq.s32.totalorder %s16, 0
    %p135 = por %p133, %p134
    %s136 = ssub.s32 %s17, %s29
    %s137 = ssub.s32 %s18, %s25
    %s138 = sor.u32 %s136, %s137
    %p139 = scmp.eq.s32.totalorder %s138, 0
    %s141 = sadd.s32 %s140, 1
    %s142 = scalar_select %p139, %s140, %s141
    %p145 = pneg %p139
    %p146 = scmp.eq.s32.totalorder %s10, 5
    %p147 = por %p145, %p146
    %p148 = scmp.ne.s32.totalorder %s140, %s143
    %p149 = scmp.eq.s32.totalorder %s10, 0
    %p150 = por %p148, %p149
    %p151 = scmp.ne.s32.totalorder %s140, %s143
    %p152 = scmp.eq.s32.totalorder %s15, 5
    %p153 = por %p151, %p152
    %p154 = scmp.ne.s32.totalorder %s143, %s144
    %p155 = scmp.eq.s32.totalorder %s15, 0
    %p156 = por %p154, %p155
    %p157 = scmp.ne.s32.totalorder %s143, %s144
    %p158 = scmp.eq.s32.totalorder %s16, 5
    %p159 = por %p157, %p158
    %p161 = scmp.ne.s32.totalorder %s144, %s160
    %p162 = scmp.eq.s32.totalorder %s16, 0
    %p163 = por %p161, %p162
    %p164 = scmp.le.s32.totalorder 1, %s10
    %p165 = scmp.lt.s32.totalorder %s10, 7
    %p166 = pnand %p164, %p165
    %p167 = pneg %p166
    // Predicated region
    $region9: #{res_block.6} parent=5 // pred_check
      _
    $region10: #{res_block.6} parent=5 // pred_check_branch
      %169 = sbr.rel (%p166) target = $region12
    $region11: #{res_block.6} parent=5 // pred_region
      %s170 = ssub.s32 %s10, 1
      // Predicated region
      $region13: #{res_block.6} parent=11 // pred_check
        %p171 = pneg %p81
      $region14: #{res_block.6} parent=11 // pred_check_branch
        %173 = sbr.rel (%p171) target = $region16
      $region15: #{res_block.6} parent=11 // pred_region
        _
      $region16: #{res_block.6} parent=11 // pred_fallthru
        _
      // Predicated region
      $region17: #{res_block.6} parent=11 // pred_check
        %p174 = pneg %p102
      $region18: #{res_block.6} parent=11 // pred_check_branch
        %176 = sbr.rel (%p174) target = $region20
      $region19: #{res_block.6} parent=11 // pred_region
        _
      $region20: #{res_block.6} parent=11 // pred_fallthru
        _
    $region12: #{res_block.6} parent=5 // pred_fallthru
      _
    %p177 = scmp.lt.s32.totalorder %s10, 6
    // Predicated region
    $region21: #{res_block.6} parent=5 // pred_check
      %p178 = pneg %p177
    $region22: #{res_block.6} parent=5 // pred_check_branch
      %180 = sbr.rel (%p178) target = $region24
    $region23: #{res_block.6} parent=5 // pred_region
      // Predicated region
      $region25: #{res_block.6} parent=23 // pred_check
        %p181 = pneg %p54
      $region26: #{res_block.6} parent=23 // pred_check_branch
        %183 = sbr.rel (%p181) target = $region28
      $region27: #{res_block.6} parent=23 // pred_region
        %s184 = ssub.s32 %s18, 1
        %p185 = scmp.gt.s32.totalorder %s184, 0
        %s186 = scalar_select %p185, %s184, 0
        %p187 = scmp.lt.s32.totalorder %s186, 0
        %s188 = scalar_select %p187, %s186, 0
        %s189 = smul.u32 41, %s188
        %p190 = scmp.lt.s32.totalorder %s17, 1
        %s191 = scalar_select %p190, %s17, 1
        %p192 = scmp.lt.s32.totalorder %s189, 40
        %s193 = scalar_select %p192, %s189, 40
        %s194 = smul.addr %s191, 41
        %s195 = sadd.s32 %s193, %s194
        %s196 = smul.addr %s195, 4
        %s197 = scalar_lea.vmem %s0, %s196
        %s198 = ssub.s32 %s18, 1
        %p199 = scmp.gt.s32.totalorder %s198, 0
        %s200 = scalar_select %p199, %s198, 0
        %p201 = scmp.lt.s32.totalorder %s200, 0
        %s202 = scalar_select %p201, %s200, 0
        %s203 = smul.u32 41, %s202
      $region28: #{res_block.6} parent=23 // pred_fallthru
        _
      // Predicated region
      $region29: #{res_block.6} parent=23 // pred_check
        %p204 = pneg %p122
      $region30: #{res_block.6} parent=23 // pred_check_branch
        %206 = sbr.rel (%p204) target = $region32
      $region31: #{res_block.6} parent=23 // pred_region
        %s207 = smul.u32 41, %s18
        %p208 = scmp.lt.s32.totalorder %s207, 122
        %s209 = scalar_select %p208, %s207, 122
        %s210 = smul.addr %s209, 8
        %s211 = scalar_lea.vmem %s3, %s210
        %s212 = smul.u32 41, %s18
      $region32: #{res_block.6} parent=23 // pred_fallthru
        _
    $region24: #{res_block.6} parent=5 // pred_fallthru
      _
    %p213 = scmp.le.s32.totalorder 1, %s10
    %p214 = scmp.lt.s32.totalorder %s10, 7
    %p215 = pnand %p213, %p214
    %p216 = pneg %p215
    // Predicated region
    $region33: #{res_block.6} parent=5 // pred_check
      _
    $region34: #{res_block.6} parent=5 // pred_check_branch
      %218 = sbr.rel (%p215) target = $region36
    $region35: #{res_block.6} parent=5 // pred_region
      %s219 = ssub.s32 %s10, 1
      %s220 = ssub.s32 %s20, 1
      %p221 = scmp.gt.s32.totalorder %s220, 0
      %s222 = scalar_select %p221, %s220, 0
      %p223 = scmp.lt.s32.totalorder %s222, 0
      %s224 = scalar_select %p223, %s222, 0
      %s225 = smul.u32 41, %s224
      %p226 = scmp.lt.s32.totalorder %s19, 1
      %s227 = scalar_select %p226, %s19, 1
      %p228 = scmp.lt.s32.totalorder %s225, 40
      %s229 = scalar_select %p228, %s225, 40
      %s230 = smul.addr %s227, 41
      %s231 = sadd.s32 %s229, %s230
      %s232 = smul.addr %s231, 4
      %s233 = scalar_lea.vmem %s0, %s232
      %p234 = pneg %p60
      %p235 = pneg %p57
      %p236 = pneg %p81
      %p237 = pneg %p78
      %p238 = pneg %p102
      %p239 = pneg %p99
      %s240 = smul.u32 41, %s20
      %p241 = scmp.lt.s32.totalorder %s240, 122
      %s242 = scalar_select %p241, %s240, 122
      %s243 = smul.addr %s242, 8
      %s244 = scalar_lea.vmem %s3, %s243
      %p245 = pneg %p128
      %p246 = pneg %p125
      %p247 = pneg %p156
      %p248 = pneg %p153
      %s249 = smul.u32 41, %s20
      %p250 = scmp.lt.s32.totalorder %s19, 1
      %s251 = scalar_select %p250, %s19, 1
      %p252 = scmp.lt.s32.totalorder %s249, 122
      %s253 = scalar_select %p252, %s249, 122
      %s254 = smul.addr %s251, 123
      %s255 = sadd.s32 %s253, %s254
      %s256 = smul.addr %s255, 4
      %s257 = scalar_lea.vmem %s4, %s256
      %s258 = ssub.s32 %s20, 1
      %p259 = scmp.gt.s32.totalorder %s258, 0
      %s260 = scalar_select %p259, %s258, 0
      %p261 = scmp.lt.s32.totalorder %s260, 0
      %s262 = scalar_select %p261, %s260, 0
      %s263 = smul.u32 41, %s262
      %p264 = scmp.lt.s32.totalorder %s19, 1
      %s265 = scalar_select %p264, %s19, 1
      %p266 = scmp.lt.s32.totalorder %s263, 40
      %s267 = scalar_select %p266, %s263, 40
      %s268 = smul.addr %s265, 41
      %s269 = sadd.s32 %s267, %s268
      %s270 = smul.addr %s269, 4
      %s271 = scalar_lea.vmem %s0, %s270
      %s272 = ssub.s32 %s20, 1
      %p273 = scmp.gt.s32.totalorder %s272, 0
      %s274 = scalar_select %p273, %s272, 0
      %p275 = scmp.lt.s32.totalorder %s274, 0
      %s276 = scalar_select %p275, %s274, 0
      %s277 = smul.u32 41, %s276
      %s278 = smul.u32 41, %s20
      %p279 = scmp.lt.s32.totalorder %s278, 122
      %s280 = scalar_select %p279, %s278, 122
      %s281 = smul.addr %s280, 8
      %s282 = scalar_lea.vmem %s3, %s281
      %s283 = smul.u32 41, %s20
      %s284 = smul.u32 41, %s20
      %p285 = scmp.lt.s32.totalorder %s19, 1
      %s286 = scalar_select %p285, %s19, 1
      %p287 = scmp.lt.s32.totalorder %s284, 122
      %s288 = scalar_select %p287, %s284, 122
      %s289 = smul.addr %s286, 123
      %s290 = sadd.s32 %s288, %s289
      %s291 = smul.addr %s290, 4
      %s292 = scalar_lea.vmem %s4, %s291
      %s293 = smul.u32 41, %s20
      %v294 = vld [vmem:[%s271] sm:$0xf]
      %v295 = vld [vmem:[%s271 + $0x4] sm:$0xf]
      %v296 = vld [vmem:[%s271 + $0x8] sm:$0xf]
      %v297 = vld [vmem:[%s271 + $0xc] sm:$0xf]
      %v298 = vld [vmem:[%s271 + $0x10] sm:$0xf]
      %v299 = vld [vmem:[%s271 + $0x14] sm:$0xf]
      %v300 = vld [vmem:[%s271 + $0x18] sm:$0xf]
      %v301 = vld [vmem:[%s271 + $0x1c] sm:$0xf]
      %v302 = vld [vmem:[%s271 + $0x20] sm:$0xf]
      %v303 = vld [vmem:[%s271 + $0x24] sm:$0xf]
      %v304 = vld [vmem:[%s271 + $0x28] sm:$0xf]
      %v305 = vld [vmem:[%s271 + $0x2c] sm:$0xf]
      %v306 = vld [vmem:[%s271 + $0x30] sm:$0xf]
      %v307 = vld [vmem:[%s271 + $0x34] sm:$0xf]
      %v308 = vld [vmem:[%s271 + $0x38] sm:$0xf]
      %v309 = vld [vmem:[%s271 + $0x3c] sm:$0xf]
      %v310 = vld [vmem:[%s271 + $0x40] sm:$0xf]
      %v311 = vld [vmem:[%s271 + $0x44] sm:$0xf]
      %v312 = vld [vmem:[%s271 + $0x48] sm:$0xf]
      %v313 = vld [vmem:[%s271 + $0x4c] sm:$0xf]
      %v314 = vld [vmem:[%s271 + $0x50] sm:$0xf]
      %v315 = vld [vmem:[%s271 + $0x54] sm:$0xf]
      %v316 = vld [vmem:[%s271 + $0x58] sm:$0xf]
      %v317 = vld [vmem:[%s271 + $0x5c] sm:$0xf]
      %v318 = vld [vmem:[%s271 + $0x60] sm:$0xf]
      %v319 = vld [vmem:[%s271 + $0x64] sm:$0xf]
      %v320 = vld [vmem:[%s271 + $0x68] sm:$0xf]
      %v321 = vld [vmem:[%s271 + $0x6c] sm:$0xf]
      %v322 = vld [vmem:[%s271 + $0x70] sm:$0xf]
      %v323 = vld [vmem:[%s271 + $0x74] sm:$0xf]
      %v324 = vld [vmem:[%s271 + $0x78] sm:$0xf]
      %v325 = vld [vmem:[%s271 + $0x7c] sm:$0xf]
      %v326 = vld [vmem:[%s271 + $0x80] sm:$0xf]
      %v327 = vld [vmem:[%s271 + $0x84] sm:$0xf]
      %v328 = vld [vmem:[%s271 + $0x88] sm:$0xf]
      %v329 = vld [vmem:[%s271 + $0x8c] sm:$0xf]
      %v330 = vld [vmem:[%s271 + $0x90] sm:$0xf]
      %v331 = vld [vmem:[%s271 + $0x94] sm:$0xf]
      %v332 = vld [vmem:[%s271 + $0x98] sm:$0xf]
      %v333 = vld [vmem:[%s271 + $0x9c] sm:$0xf]
      %v334 = vld [vmem:[%s271 + $0xa0] sm:$0xf]
      %v335 = vunpack.c.l.bf16 %v294
      %v336 = vunpack.c.l.bf16 %v295
      %v337 = vunpack.c.l.bf16 %v296
      %v338 = vunpack.c.l.bf16 %v297
      %v339 = vunpack.c.l.bf16 %v298
      %v340 = vunpack.c.l.bf16 %v299
      %v341 = vunpack.c.l.bf16 %v300
      %v342 = vunpack.c.l.bf16 %v301
      %v343 = vunpack.c.l.bf16 %v302
      %v344 = vunpack.c.l.bf16 %v303
      %v345 = vunpack.c.l.bf16 %v304
      %v346 = vunpack.c.l.bf16 %v305
      %v347 = vunpack.c.l.bf16 %v306
      %v348 = vunpack.c.l.bf16 %v307
      %v349 = vunpack.c.l.bf16 %v308
      %v350 = vunpack.c.l.bf16 %v309
      %v351 = vunpack.c.l.bf16 %v310
      %v352 = vunpack.c.l.bf16 %v311
      %v353 = vunpack.c.l.bf16 %v312
      %v354 = vunpack.c.l.bf16 %v313
      %v355 = vunpack.c.l.bf16 %v314
      %v356 = vunpack.c.l.bf16 %v315
      %v357 = vunpack.c.l.bf16 %v316
      %v358 = vunpack.c.l.bf16 %v317
      %v359 = vunpack.c.l.bf16 %v318
      %v360 = vunpack.c.l.bf16 %v319
      %v361 = vunpack.c.l.bf16 %v320
      %v362 = vunpack.c.l.bf16 %v321
      %v363 = vunpack.c.l.bf16 %v322
      %v364 = vunpack.c.l.bf16 %v323
      %v365 = vunpack.c.l.bf16 %v324
      %v366 = vunpack.c.l.bf16 %v325
      %v367 = vunpack.c.l.bf16 %v326
      %v368 = vunpack.c.l.bf16 %v327
      %v369 = vunpack.c.l.bf16 %v328
      %v370 = vunpack.c.l.bf16 %v329
      %v371 = vunpack.c.l.bf16 %v330
      %v372 = vunpack.c.l.bf16 %v331
      %v373 = vunpack.c.l.bf16 %v332
      %v374 = vunpack.c.l.bf16 %v333
      %v375 = vunpack.c.l.bf16 %v334
      %v376 = vld [vmem:[%s1] sm:$0x1]
      %v378 = vperm.slane %v376, 0
      %v380 = vmul.f32 %v335, %v378
      %v381 = vmul.f32 %v336, %v378
      %v382 = vmul.f32 %v337, %v378
      %v383 = vmul.f32 %v338, %v378
      %v384 = vmul.f32 %v339, %v378
      %v385 = vmul.f32 %v340, %v378
      %v386 = vmul.f32 %v341, %v378
      %v387 = vmul.f32 %v342, %v378
      %v388 = vmul.f32 %v343, %v378
      %v389 = vmul.f32 %v344, %v378
      %v390 = vmul.f32 %v345, %v378
      %v391 = vmul.f32 %v346, %v378
      %v392 = vmul.f32 %v347, %v378
      %v393 = vmul.f32 %v348, %v378
      %v394 = vmul.f32 %v349, %v378
      %v395 = vmul.f32 %v350, %v378
      %v396 = vmul.f32 %v351, %v378
      %v397 = vmul.f32 %v352, %v378
      %v398 = vmul.f32 %v353, %v378
      %v399 = vmul.f32 %v354, %v378
      %v400 = vmul.f32 %v355, %v378
      %v401 = vmul.f32 %v356, %v378
      %v402 = vmul.f32 %v357, %v378
      %v403 = vmul.f32 %v358, %v378
      %v404 = vmul.f32 %v359, %v378
      %v405 = vmul.f32 %v360, %v378
      %v406 = vmul.f32 %v361, %v378
      %v407 = vmul.f32 %v362, %v378
      %v408 = vmul.f32 %v363, %v378
      %v409 = vmul.f32 %v364, %v378
      %v410 = vmul.f32 %v365, %v378
      %v411 = vmul.f32 %v366, %v378
      %v412 = vmul.f32 %v367, %v378
      %v413 = vmul.f32 %v368, %v378
      %v414 = vmul.f32 %v369, %v378
      %v415 = vmul.f32 %v370, %v378
      %v416 = vmul.f32 %v371, %v378
      %v417 = vmul.f32 %v372, %v378
      %v418 = vmul.f32 %v373, %v378
      %v419 = vmul.f32 %v374, %v378
      %v420 = vmul.f32 %v375, %v378
      %v421 = vld [vmem:[%s2] sm:$0x1]
      %v423 = vperm.slane %v421, 0
      %v425 = vadd.f32 %v380, %v423
      %v426 = vadd.f32 %v381, %v423
      %v427 = vadd.f32 %v382, %v423
      %v428 = vadd.f32 %v383, %v423
      %v429 = vadd.f32 %v384, %v423
      %v430 = vadd.f32 %v385, %v423
      %v431 = vadd.f32 %v386, %v423
      %v432 = vadd.f32 %v387, %v423
      %v433 = vadd.f32 %v388, %v423
      %v434 = vadd.f32 %v389, %v423
      %v435 = vadd.f32 %v390, %v423
      %v436 = vadd.f32 %v391, %v423
      %v437 = vadd.f32 %v392, %v423
      %v438 = vadd.f32 %v393, %v423
      %v439 = vadd.f32 %v394, %v423
      %v440 = vadd.f32 %v395, %v423
      %v441 = vadd.f32 %v396, %v423
      %v442 = vadd.f32 %v397, %v423
      %v443 = vadd.f32 %v398, %v423
      %v444 = vadd.f32 %v399, %v423
      %v445 = vadd.f32 %v400, %v423
      %v446 = vadd.f32 %v401, %v423
      %v447 = vadd.f32 %v402, %v423
      %v448 = vadd.f32 %v403, %v423
      %v449 = vadd.f32 %v404, %v423
      %v450 = vadd.f32 %v405, %v423
      %v451 = vadd.f32 %v406, %v423
      %v452 = vadd.f32 %v407, %v423
      %v453 = vadd.f32 %v408, %v423
      %v454 = vadd.f32 %v409, %v423
      %v455 = vadd.f32 %v410, %v423
      %v456 = vadd.f32 %v411, %v423
      %v457 = vadd.f32 %v412, %v423
      %v458 = vadd.f32 %v413, %v423
      %v459 = vadd.f32 %v414, %v423
      %v460 = vadd.f32 %v415, %v423
      %v461 = vadd.f32 %v416, %v423
      %v462 = vadd.f32 %v417, %v423
      %v463 = vadd.f32 %v418, %v423
      %v464 = vadd.f32 %v419, %v423
      %v465 = vadd.f32 %v420, %v423
      %v466 = vmax.f32 %v425, 0.0
      %v467 = vmax.f32 %v426, 0.0
      %v468 = vmax.f32 %v427, 0.0
      %v469 = vmax.f32 %v428, 0.0
      %v470 = vmax.f32 %v429, 0.0
      %v471 = vmax.f32 %v430, 0.0
      %v472 = vmax.f32 %v431, 0.0
      %v473 = vmax.f32 %v432, 0.0
      %v474 = vmax.f32 %v433, 0.0
      %v475 = vmax.f32 %v434, 0.0
      %v476 = vmax.f32 %v435, 0.0
      %v477 = vmax.f32 %v436, 0.0
      %v478 = vmax.f32 %v437, 0.0
      %v479 = vmax.f32 %v438, 0.0
      %v480 = vmax.f32 %v439, 0.0
      %v481 = vmax.f32 %v440, 0.0
      %v482 = vmax.f32 %v441, 0.0
      %v483 = vmax.f32 %v442, 0.0
      %v484 = vmax.f32 %v443, 0.0
      %v485 = vmax.f32 %v444, 0.0
      %v486 = vmax.f32 %v445, 0.0
      %v487 = vmax.f32 %v446, 0.0
      %v488 = vmax.f32 %v447, 0.0
      %v489 = vmax.f32 %v448, 0.0
      %v490 = vmax.f32 %v449, 0.0
      %v491 = vmax.f32 %v450, 0.0
      %v492 = vmax.f32 %v451, 0.0
      %v493 = vmax.f32 %v452, 0.0
      %v494 = vmax.f32 %v453, 0.0
      %v495 = vmax.f32 %v454, 0.0
      %v496 = vmax.f32 %v455, 0.0
      %v497 = vmax.f32 %v456, 0.0
      %v498 = vmax.f32 %v457, 0.0
      %v499 = vmax.f32 %v458, 0.0
      %v500 = vmax.f32 %v459, 0.0
      %v501 = vmax.f32 %v460, 0.0
      %v502 = vmax.f32 %v461, 0.0
      %v503 = vmax.f32 %v462, 0.0
      %v504 = vmax.f32 %v463, 0.0
      %v505 = vmax.f32 %v464, 0.0
      %v506 = vmax.f32 %v465, 0.0
      %v507 = vld [vmem:[%s282] sm:$0xff]
      %v508 = vld [vmem:[%s282 + $0x8] sm:$0xff]
      %v509 = vld [vmem:[%s282 + $0x10] sm:$0xff]
      %v510 = vld [vmem:[%s282 + $0x18] sm:$0xff]
      %v511 = vld [vmem:[%s282 + $0x20] sm:$0xff]
      %v512 = vld [vmem:[%s282 + $0x28] sm:$0xff]
      %v513 = vld [vmem:[%s282 + $0x30] sm:$0xff]
      %v514 = vld [vmem:[%s282 + $0x38] sm:$0xff]
      %v515 = vld [vmem:[%s282 + $0x40] sm:$0xff]
      %v516 = vld [vmem:[%s282 + $0x48] sm:$0xff]
      %v517 = vld [vmem:[%s282 + $0x50] sm:$0xff]
      %v518 = vld [vmem:[%s282 + $0x58] sm:$0xff]
      %v519 = vld [vmem:[%s282 + $0x60] sm:$0xff]
      %v520 = vld [vmem:[%s282 + $0x68] sm:$0xff]
      %v521 = vld [vmem:[%s282 + $0x70] sm:$0xff]
      %v522 = vld [vmem:[%s282 + $0x78] sm:$0xff]
      %v523 = vld [vmem:[%s282 + $0x80] sm:$0xff]
      %v524 = vld [vmem:[%s282 + $0x88] sm:$0xff]
      %v525 = vld [vmem:[%s282 + $0x90] sm:$0xff]
      %v526 = vld [vmem:[%s282 + $0x98] sm:$0xff]
      %v527 = vld [vmem:[%s282 + $0xa0] sm:$0xff]
      %v528 = vld [vmem:[%s282 + $0xa8] sm:$0xff]
      %v529 = vld [vmem:[%s282 + $0xb0] sm:$0xff]
      %v530 = vld [vmem:[%s282 + $0xb8] sm:$0xff]
      %v531 = vld [vmem:[%s282 + $0xc0] sm:$0xff]
      %v532 = vld [vmem:[%s282 + $0xc8] sm:$0xff]
      %v533 = vld [vmem:[%s282 + $0xd0] sm:$0xff]
      %v534 = vld [vmem:[%s282 + $0xd8] sm:$0xff]
      %v535 = vld [vmem:[%s282 + $0xe0] sm:$0xff]
      %v536 = vld [vmem:[%s282 + $0xe8] sm:$0xff]
      %v537 = vld [vmem:[%s282 + $0xf0] sm:$0xff]
      %v538 = vld [vmem:[%s282 + $0xf8] sm:$0xff]
      %v539 = vld [vmem:[%s282 + $0x100] sm:$0xff]
      %v540 = vld [vmem:[%s282 + $0x108] sm:$0xff]
      %v541 = vld [vmem:[%s282 + $0x110] sm:$0xff]
      %v542 = vld [vmem:[%s282 + $0x118] sm:$0xff]
      %v543 = vld [vmem:[%s282 + $0x120] sm:$0xff]
      %v544 = vld [vmem:[%s282 + $0x128] sm:$0xff]
      %v545 = vld [vmem:[%s282 + $0x130] sm:$0xff]
      %v546 = vld [vmem:[%s282 + $0x138] sm:$0xff]
      %v547 = vld [vmem:[%s282 + $0x140] sm:$0xff]
      %549 = vset.pattern.permute.xlu0 0
      %550 = vperm.xlu0 %549, %v507
      %v551 = vpop.permute.xlu0 %550
      %554 = vset.pattern.permute.xlu0 0
      %555 = vperm.xlu0 %554, %v508
      %v556 = vpop.permute.xlu0 %555
      %559 = vset.pattern.permute.xlu0 0
      %560 = vperm.xlu0 %559, %v509
      %v561 = vpop.permute.xlu0 %560
      %564 = vset.pattern.permute.xlu0 0
      %565 = vperm.xlu0 %564, %v510
      %v566 = vpop.permute.xlu0 %565
      %569 = vset.pattern.permute.xlu0 0
      %570 = vperm.xlu0 %569, %v511
      %v571 = vpop.permute.xlu0 %570
      %574 = vset.pattern.permute.xlu0 0
      %575 = vperm.xlu0 %574, %v512
      %v576 = vpop.permute.xlu0 %575
      %579 = vset.pattern.permute.xlu0 0
      %580 = vperm.xlu0 %579, %v513
      %v581 = vpop.permute.xlu0 %580
      %584 = vset.pattern.permute.xlu0 0
      %585 = vperm.xlu0 %584, %v514
      %v586 = vpop.permute.xlu0 %585
      %589 = vset.pattern.permute.xlu0 0
      %590 = vperm.xlu0 %589, %v515
      %v591 = vpop.permute.xlu0 %590
      %594 = vset.pattern.permute.xlu0 0
      %595 = vperm.xlu0 %594, %v516
      %v596 = vpop.permute.xlu0 %595
      %599 = vset.pattern.permute.xlu0 0
      %600 = vperm.xlu0 %599, %v517
      %v601 = vpop.permute.xlu0 %600
      %604 = vset.pattern.permute.xlu0 0
      %605 = vperm.xlu0 %604, %v518
      %v606 = vpop.permute.xlu0 %605
      %609 = vset.pattern.permute.xlu0 0
      %610 = vperm.xlu0 %609, %v519
      %v611 = vpop.permute.xlu0 %610
      %614 = vset.pattern.permute.xlu0 0
      %615 = vperm.xlu0 %614, %v520
      %v616 = vpop.permute.xlu0 %615
      %619 = vset.pattern.permute.xlu0 0
      %620 = vperm.xlu0 %619, %v521
      %v621 = vpop.permute.xlu0 %620
      %624 = vset.pattern.permute.xlu0 0
      %625 = vperm.xlu0 %624, %v522
      %v626 = vpop.permute.xlu0 %625
      %629 = vset.pattern.permute.xlu0 0
      %630 = vperm.xlu0 %629, %v523
      %v631 = vpop.permute.xlu0 %630
      %634 = vset.pattern.permute.xlu0 0
      %635 = vperm.xlu0 %634, %v524
      %v636 = vpop.permute.xlu0 %635
      %639 = vset.pattern.permute.xlu0 0
      %640 = vperm.xlu0 %639, %v525
      %v641 = vpop.permute.xlu0 %640
      %644 = vset.pattern.permute.xlu0 0
      %645 = vperm.xlu0 %644, %v526
      %v646 = vpop.permute.xlu0 %645
      %649 = vset.pattern.permute.xlu0 0
      %650 = vperm.xlu0 %649, %v527
      %v651 = vpop.permute.xlu0 %650
      %654 = vset.pattern.permute.xlu0 0
      %655 = vperm.xlu0 %654, %v528
      %v656 = vpop.permute.xlu0 %655
      %659 = vset.pattern.permute.xlu0 0
      %660 = vperm.xlu0 %659, %v529
      %v661 = vpop.permute.xlu0 %660
      %664 = vset.pattern.permute.xlu0 0
      %665 = vperm.xlu0 %664, %v530
      %v666 = vpop.permute.xlu0 %665
      %669 = vset.pattern.permute.xlu0 0
      %670 = vperm.xlu0 %669, %v531
      %v671 = vpop.permute.xlu0 %670
      %674 = vset.pattern.permute.xlu0 0
      %675 = vperm.xlu0 %674, %v532
      %v676 = vpop.permute.xlu0 %675
      %679 = vset.pattern.permute.xlu0 0
      %680 = vperm.xlu0 %679, %v533
      %v681 = vpop.permute.xlu0 %680
      %684 = vset.pattern.permute.xlu0 0
      %685 = vperm.xlu0 %684, %v534
      %v686 = vpop.permute.xlu0 %685
      %689 = vset.pattern.permute.xlu0 0
      %690 = vperm.xlu0 %689, %v535
      %v691 = vpop.permute.xlu0 %690
      %694 = vset.pattern.permute.xlu0 0
      %695 = vperm.xlu0 %694, %v536
      %v696 = vpop.permute.xlu0 %695
      %699 = vset.pattern.permute.xlu0 0
      %700 = vperm.xlu0 %699, %v537
      %v701 = vpop.permute.xlu0 %700
      %704 = vset.pattern.permute.xlu0 0
      %705 = vperm.xlu0 %704, %v538
      %v706 = vpop.permute.xlu0 %705
      %709 = vset.pattern.permute.xlu0 0
      %710 = vperm.xlu0 %709, %v539
      %v711 = vpop.permute.xlu0 %710
      %714 = vset.pattern.permute.xlu0 0
      %715 = vperm.xlu0 %714, %v540
      %v716 = vpop.permute.xlu0 %715
      %719 = vset.pattern.permute.xlu0 0
      %720 = vperm.xlu0 %719, %v541
      %v721 = vpop.permute.xlu0 %720
      %724 = vset.pattern.permute.xlu0 0
      %725 = vperm.xlu0 %724, %v542
      %v726 = vpop.permute.xlu0 %725
      %729 = vset.pattern.permute.xlu0 0
      %730 = vperm.xlu0 %729, %v543
      %v731 = vpop.permute.xlu0 %730
      %734 = vset.pattern.permute.xlu0 0
      %735 = vperm.xlu0 %734, %v544
      %v736 = vpop.permute.xlu0 %735
      %739 = vset.pattern.permute.xlu0 0
      %740 = vperm.xlu0 %739, %v545
      %v741 = vpop.permute.xlu0 %740
      %744 = vset.pattern.permute.xlu0 0
      %745 = vperm.xlu0 %744, %v546
      %v746 = vpop.permute.xlu0 %745
      %749 = vset.pattern.permute.xlu0 0
      %750 = vperm.xlu0 %749, %v547
      %v751 = vpop.permute.xlu0 %750
      %v753 = vmul.f32 %v466, %v551
      %v754 = vmul.f32 %v467, %v556
      %v755 = vmul.f32 %v468, %v561
      %v756 = vmul.f32 %v469, %v566
      %v757 = vmul.f32 %v470, %v571
      %v758 = vmul.f32 %v471, %v576
      %v759 = vmul.f32 %v472, %v581
      %v760 = vmul.f32 %v473, %v586
      %v761 = vmul.f32 %v474, %v591
      %v762 = vmul.f32 %v475, %v596
      %v763 = vmul.f32 %v476, %v601
      %v764 = vmul.f32 %v477, %v606
      %v765 = vmul.f32 %v478, %v611
      %v766 = vmul.f32 %v479, %v616
      %v767 = vmul.f32 %v480, %v621
      %v768 = vmul.f32 %v481, %v626
      %v769 = vmul.f32 %v482, %v631
      %v770 = vmul.f32 %v483, %v636
      %v771 = vmul.f32 %v484, %v641
      %v772 = vmul.f32 %v485, %v646
      %v773 = vmul.f32 %v486, %v651
      %v774 = vmul.f32 %v487, %v656
      %v775 = vmul.f32 %v488, %v661
      %v776 = vmul.f32 %v489, %v666
      %v777 = vmul.f32 %v490, %v671
      %v778 = vmul.f32 %v491, %v676
      %v779 = vmul.f32 %v492, %v681
      %v780 = vmul.f32 %v493, %v686
      %v781 = vmul.f32 %v494, %v691
      %v782 = vmul.f32 %v495, %v696
      %v783 = vmul.f32 %v496, %v701
      %v784 = vmul.f32 %v497, %v706
      %v785 = vmul.f32 %v498, %v711
      %v786 = vmul.f32 %v499, %v716
      %v787 = vmul.f32 %v500, %v721
      %v788 = vmul.f32 %v501, %v726
      %v789 = vmul.f32 %v502, %v731
      %v790 = vmul.f32 %v503, %v736
      %v791 = vmul.f32 %v504, %v741
      %v792 = vmul.f32 %v505, %v746
      %v793 = vmul.f32 %v506, %v751
      %v794 = vpack.c.bf16 %v753, %v753
      %v795 = vpack.c.bf16 %v754, %v754
      %v796 = vpack.c.bf16 %v755, %v755
      %v797 = vpack.c.bf16 %v756, %v756
      %v798 = vpack.c.bf16 %v757, %v757
      %v799 = vpack.c.bf16 %v758, %v758
      %v800 = vpack.c.bf16 %v759, %v759
      %v801 = vpack.c.bf16 %v760, %v760
      %v802 = vpack.c.bf16 %v761, %v761
      %v803 = vpack.c.bf16 %v762, %v762
      %v804 = vpack.c.bf16 %v763, %v763
      %v805 = vpack.c.bf16 %v764, %v764
      %v806 = vpack.c.bf16 %v765, %v765
      %v807 = vpack.c.bf16 %v766, %v766
      %v808 = vpack.c.bf16 %v767, %v767
      %v809 = vpack.c.bf16 %v768, %v768
      %v810 = vpack.c.bf16 %v769, %v769
      %v811 = vpack.c.bf16 %v770, %v770
      %v812 = vpack.c.bf16 %v771, %v771
      %v813 = vpack.c.bf16 %v772, %v772
      %v814 = vpack.c.bf16 %v773, %v773
      %v815 = vpack.c.bf16 %v774, %v774
      %v816 = vpack.c.bf16 %v775, %v775
      %v817 = vpack.c.bf16 %v776, %v776
      %v818 = vpack.c.bf16 %v777, %v777
      %v819 = vpack.c.bf16 %v778, %v778
      %v820 = vpack.c.bf16 %v779, %v779
      %v821 = vpack.c.bf16 %v780, %v780
      %v822 = vpack.c.bf16 %v781, %v781
      %v823 = vpack.c.bf16 %v782, %v782
      %v824 = vpack.c.bf16 %v783, %v783
      %v825 = vpack.c.bf16 %v784, %v784
      %v826 = vpack.c.bf16 %v785, %v785
      %v827 = vpack.c.bf16 %v786, %v786
      %v828 = vpack.c.bf16 %v787, %v787
      %v829 = vpack.c.bf16 %v788, %v788
      %v830 = vpack.c.bf16 %v789, %v789
      %v831 = vpack.c.bf16 %v790, %v790
      %v832 = vpack.c.bf16 %v791, %v791
      %v833 = vpack.c.bf16 %v792, %v792
      %v834 = vpack.c.bf16 %v793, %v793
      %835 = vst [vmem:[%s292] sm:$0xf] %v794
      %836 = vst [vmem:[%s292 + $0x4] sm:$0xf] %v795
      %837 = vst [vmem:[%s292 + $0x8] sm:$0xf] %v796
      %838 = vst [vmem:[%s292 + $0xc] sm:$0xf] %v797
      %839 = vst [vmem:[%s292 + $0x10] sm:$0xf] %v798
      %840 = vst [vmem:[%s292 + $0x14] sm:$0xf] %v799
      %841 = vst [vmem:[%s292 + $0x18] sm:$0xf] %v800
      %842 = vst [vmem:[%s292 + $0x1c] sm:$0xf] %v801
      %843 = vst [vmem:[%s292 + $0x20] sm:$0xf] %v802
      %844 = vst [vmem:[%s292 + $0x24] sm:$0xf] %v803
      %845 = vst [vmem:[%s292 + $0x28] sm:$0xf] %v804
      %846 = vst [vmem:[%s292 + $0x2c] sm:$0xf] %v805
      %847 = vst [vmem:[%s292 + $0x30] sm:$0xf] %v806
      %848 = vst [vmem:[%s292 + $0x34] sm:$0xf] %v807
      %849 = vst [vmem:[%s292 + $0x38] sm:$0xf] %v808
      %850 = vst [vmem:[%s292 + $0x3c] sm:$0xf] %v809
      %851 = vst [vmem:[%s292 + $0x40] sm:$0xf] %v810
      %852 = vst [vmem:[%s292 + $0x44] sm:$0xf] %v811
      %853 = vst [vmem:[%s292 + $0x48] sm:$0xf] %v812
      %854 = vst [vmem:[%s292 + $0x4c] sm:$0xf] %v813
      %855 = vst [vmem:[%s292 + $0x50] sm:$0xf] %v814
      %856 = vst [vmem:[%s292 + $0x54] sm:$0xf] %v815
      %857 = vst [vmem:[%s292 + $0x58] sm:$0xf] %v816
      %858 = vst [vmem:[%s292 + $0x5c] sm:$0xf] %v817
      %859 = vst [vmem:[%s292 + $0x60] sm:$0xf] %v818
      %860 = vst [vmem:[%s292 + $0x64] sm:$0xf] %v819
      %861 = vst [vmem:[%s292 + $0x68] sm:$0xf] %v820
      %862 = vst [vmem:[%s292 + $0x6c] sm:$0xf] %v821
      %863 = vst [vmem:[%s292 + $0x70] sm:$0xf] %v822
      %864 = vst [vmem:[%s292 + $0x74] sm:$0xf] %v823
      %865 = vst [vmem:[%s292 + $0x78] sm:$0xf] %v824
      %866 = vst [vmem:[%s292 + $0x7c] sm:$0xf] %v825
      %867 = vst [vmem:[%s292 + $0x80] sm:$0xf] %v826
      %868 = vst [vmem:[%s292 + $0x84] sm:$0xf] %v827
      %869 = vst [vmem:[%s292 + $0x88] sm:$0xf] %v828
      %870 = vst [vmem:[%s292 + $0x8c] sm:$0xf] %v829
      %871 = vst [vmem:[%s292 + $0x90] sm:$0xf] %v830
      %872 = vst [vmem:[%s292 + $0x94] sm:$0xf] %v831
      %873 = vst [vmem:[%s292 + $0x98] sm:$0xf] %v832
      %874 = vst [vmem:[%s292 + $0x9c] sm:$0xf] %v833
      %875 = vst [vmem:[%s292 + $0xa0] sm:$0xf] %v834
      %s876 = smul.u32 41, %s20
      %p877 = scmp.lt.s32.totalorder %s19, 1
      %s878 = scalar_select %p877, %s19, 1
      %p879 = scmp.lt.s32.totalorder %s876, 122
      %s880 = scalar_select %p879, %s876, 122
      %s881 = smul.addr %s878, 123
      %s882 = sadd.s32 %s880, %s881
      %s883 = smul.addr %s882, 4
      %s884 = scalar_lea.vmem %s4, %s883
      // Predicated region
      $region37: #{res_block.6} parent=35 // pred_check
        %p885 = pneg %p153
      $region38: #{res_block.6} parent=35 // pred_check_branch
        %887 = sbr.rel (%p885) target = $region40
      $region39: #{res_block.6} parent=35 // pred_region
        %s888 = smul.u32 41, %s20
      $region40: #{res_block.6} parent=35 // pred_fallthru
        _
    $region36: #{res_block.6} parent=5 // pred_fallthru
      _
    %p889 = scmp.le.s32.totalorder 2, %s10
    // Predicated region
    $region41: #{res_block.6} parent=5 // pred_check
      %p890 = pneg %p889
    $region42: #{res_block.6} parent=5 // pred_check_branch
      %892 = sbr.rel (%p890) target = $region44
    $region43: #{res_block.6} parent=5 // pred_region
      %s893 = ssub.s32 %s10, 2
      // Predicated region
      $region45: #{res_block.6} parent=43 // pred_check
        %p894 = pneg %p159
      $region46: #{res_block.6} parent=43 // pred_check_branch
        %896 = sbr.rel (%p894) target = $region48
      $region47: #{res_block.6} parent=43 // pred_region
        %s897 = smul.u32 41, %s22
        %p898 = scmp.lt.s32.totalorder %s21, 1
        %s899 = scalar_select %p898, %s21, 1
        %p900 = scmp.lt.s32.totalorder %s897, 122
        %s901 = scalar_select %p900, %s897, 122
        %s902 = smul.addr %s899, 123
        %s903 = sadd.s32 %s901, %s902
        %s904 = smul.addr %s903, 4
        %s905 = scalar_lea.vmem %s4, %s904
      $region48: #{res_block.6} parent=43 // pred_fallthru
        _
    $region44: #{res_block.6} parent=5 // pred_fallthru
      _
  $region6: #{res_block.6} parent=0 // loop_footer
    %s14 = sadd.s32 1, %s10
  $region7: #{res_block.6} parent=0 // loop_footer_branch
    %9 = sbr.rel target = $region3
  $region8: #{res_block.6} parent=0 // loop_exit
    _

// kernel: res_block.8
$region0: #{res_block.8}
  #allocation0 [shape = 'u32[]', space=smem, size = 0x4, offset = 0x4, fixed_abs, tag = 'smem constant byte address 0x4 - core index']
  #allocation1 [shape = 'u32[72,128]{1,0:T(1,128)}', space=vmem, size = 0x9000, scoped, tag = 'internal scratch']
  %s0 = inlined_call_operand.vmem [shape: bf16[2,984,4], index: 0, kind: input, shape index: {}]
  %s1 = inlined_call_operand.vmem [shape: bf16[4,128], index: 1, kind: input, shape index: {}]
  %s2 = inlined_call_operand.vmem [shape: f32[984,1], index: 2, kind: input, shape index: {}]
  %s3 = inlined_call_operand.vmem [shape: bf16[2,328,128], index: 3, kind: output, shape index: {0}]
  %s4 = inlined_call_operand.vmem [shape: f32[2,1,2,128], index: 4, kind: output, shape index: {1}]
  %5 = xla_tuple %s3, %s4
  %s6 = sld [smem:[#allocation0]]
  $region53: #{res_block.8} parent=0
    _
  %s8 = ssub.s32 1, %s6
  %s9 = scalar_select 0, %s8, %s6
  loop: start=0, step=1, limit=4
  $region2: #{res_block.8} parent=0 // loop_pre_header
    _
  $region3: #{res_block.8} parent=0 // loop_header
    %s11 = sphi 0, %s15
    %p12 = scmp.ge.s32.totalorder %s11, 4
    %s18 = sphi 0, %s30
    %s19 = sphi 0, %s26
    %s20 = sphi 0, %s18
    %s21 = sphi 0, %s19
    %s22 = sphi 0, %s20
    %s23 = sphi 0, %s21
    %s37 = sphi 0, %s39
    %s40 = sphi 0, %s37
    %s41 = sphi 0, %s40
    %s57 = sphi 0, %s41
    %s61 = sphi 0, %s61
    %s63 = sphi 0, %s61
    %s64 = sphi 0, %s63
    %s78 = sphi 0, %s64
    %s86 = sphi 0, %s88
    %s89 = sphi 0, %s86
    %s90 = sphi 0, %s89
    %s106 = sphi 0, %s90
    %s114 = sphi 0, %s116
    %s117 = sphi 0, %s114
    %s118 = sphi 0, %s117
    %s134 = sphi 0, %s118
    %s142 = sphi 0, %s144
    %s145 = sphi 0, %s142
    %s146 = sphi 0, %s145
    %s162 = sphi 0, %s146
  $region4: #{res_block.8} parent=0 // loop_header_branch
    %14 = sbr.rel (%p12) target = $region8
  $region5: #{res_block.8} parent=0 // loop_body
    %s16 = ssub.s32 %s11, 1
    %s17 = ssub.s32 %s11, 2
    %s24 = sadd.s32 1, %s19
    %p25 = scmp.ge.s32.totalorder %s24, 1
    %s26 = scalar_select %p25, 0, %s24
    %s27 = sadd.s32 1, %s18
    %s28 = scalar_select %p25, %s27, %s18
    %p29 = scmp.ge.s32.totalorder %s28, 2
    %s30 = scalar_select %p29, 0, %s28
    %s31 = sadd.s32 %s19, 1
    %s32 = sadd.s32 %s26, 1
    %s33 = ssub.s32 %s18, %s30
    %s34 = ssub.s32 %s31, %s32
    %s35 = sor.u32 %s33, %s34
    %p36 = scmp.eq.s32.totalorder %s35, 0
    %s38 = sadd.s32 %s37, 1
    %s39 = scalar_select %p36, %s37, %s38
    %p42 = pneg %p36
    %p43 = scmp.eq.s32.totalorder %s11, 1
    %p44 = por %p42, %p43
    %p45 = scmp.ne.s32.totalorder %s37, %s40
    %p46 = scmp.eq.s32.totalorder %s11, 0
    %p47 = por %p45, %p46
    %p48 = scmp.ne.s32.totalorder %s37, %s40
    %p49 = scmp.eq.s32.totalorder %s16, 1
    %p50 = por %p48, %p49
    %p51 = scmp.ne.s32.totalorder %s40, %s41
    %p52 = scmp.eq.s32.totalorder %s16, 0
    %p53 = por %p51, %p52
    %p54 = scmp.ne.s32.totalorder %s40, %s41
    %p55 = scmp.eq.s32.totalorder %s17, 1
    %p56 = por %p54, %p55
    %p58 = scmp.ne.s32.totalorder %s41, %s57
    %p59 = scmp.eq.s32.totalorder %s17, 0
    %p60 = por %p58, %p59
    %s62 = sadd.s32 %s61, 1
    %p65 = scmp.eq.s32.totalorder %s11, 1
    %p66 = scmp.ne.s32.totalorder %s61, %s63
    %p67 = scmp.eq.s32.totalorder %s11, 0
    %p68 = por %p66, %p67
    %p69 = scmp.ne.s32.totalorder %s61, %s63
    %p70 = scmp.eq.s32.totalorder %s16, 1
    %p71 = por %p69, %p70
    %p72 = scmp.ne.s32.totalorder %s63, %s64
    %p73 = scmp.eq.s32.totalorder %s16, 0
    %p74 = por %p72, %p73
    %p75 = scmp.ne.s32.totalorder %s63, %s64
    %p76 = scmp.eq.s32.totalorder %s17, 1
    %p77 = por %p75, %p76
    %p79 = scmp.ne.s32.totalorder %s64, %s78
    %p80 = scmp.eq.s32.totalorder %s17, 0
    %p81 = por %p79, %p80
    %s82 = sadd.s32 %s19, 1
    %s83 = sadd.s32 %s26, 1
    %s84 = ssub.s32 %s82, %s83
    %p85 = scmp.eq.s32.totalorder %s84, 0
    %s87 = sadd.s32 %s86, 1
    %s88 = scalar_select %p85, %s86, %s87
    %p91 = pneg %p85
    %p92 = scmp.eq.s32.totalorder %s11, 1
    %p93 = por %p91, %p92
    %p94 = scmp.ne.s32.totalorder %s86, %s89
    %p95 = scmp.eq.s32.totalorder %s11, 0
    %p96 = por %p94, %p95
    %p97 = scmp.ne.s32.totalorder %s86, %s89
    %p98 = scmp.eq.s32.totalorder %s16, 1
    %p99 = por %p97, %p98
    %p100 = scmp.ne.s32.totalorder %s89, %s90
    %p101 = scmp.eq.s32.totalorder %s16, 0
    %p102 = por %p100, %p101
    %p103 = scmp.ne.s32.totalorder %s89, %s90
    %p104 = scmp.eq.s32.totalorder %s17, 1
    %p105 = por %p103, %p104
    %p107 = scmp.ne.s32.totalorder %s90, %s106
    %p108 = scmp.eq.s32.totalorder %s17, 0
    %p109 = por %p107, %p108
    %s110 = ssub.s32 %s18, %s30
    %s111 = ssub.s32 %s19, %s26
    %s112 = sor.u32 %s110, %s111
    %p113 = scmp.eq.s32.totalorder %s112, 0
    %s115 = sadd.s32 %s114, 1
    %s116 = scalar_select %p113, %s114, %s115
    %p119 = pneg %p113
    %p120 = scmp.eq.s32.totalorder %s11, 1
    %p121 = por %p119, %p120
    %p122 = scmp.ne.s32.totalorder %s114, %s117
    %p123 = scmp.eq.s32.totalorder %s11, 0
    %p124 = por %p122, %p123
    %p125 = scmp.ne.s32.totalorder %s114, %s117
    %p126 = scmp.eq.s32.totalorder %s16, 1
    %p127 = por %p125, %p126
    %p128 = scmp.ne.s32.totalorder %s117, %s118
    %p129 = scmp.eq.s32.totalorder %s16, 0
    %p130 = por %p128, %p129
    %p131 = scmp.ne.s32.totalorder %s117, %s118
    %p132 = scmp.eq.s32.totalorder %s17, 1
    %p133 = por %p131, %p132
    %p135 = scmp.ne.s32.totalorder %s118, %s134
    %p136 = scmp.eq.s32.totalorder %s17, 0
    %p137 = por %p135, %p136
    %s138 = ssub.s32 %s18, %s30
    %s139 = ssub.s32 %s19, %s26
    %s140 = sor.u32 %s138, %s139
    %p141 = scmp.eq.s32.totalorder %s140, 0
    %s143 = sadd.s32 %s142, 1
    %s144 = scalar_select %p141, %s142, %s143
    %p147 = pneg %p141
    %p148 = scmp.eq.s32.totalorder %s11, 1
    %p149 = por %p147, %p148
    %p150 = scmp.ne.s32.totalorder %s142, %s145
    %p151 = scmp.eq.s32.totalorder %s11, 0
    %p152 = por %p150, %p151
    %p153 = scmp.ne.s32.totalorder %s142, %s145
    %p154 = scmp.eq.s32.totalorder %s16, 1
    %p155 = por %p153, %p154
    %p156 = scmp.ne.s32.totalorder %s145, %s146
    %p157 = scmp.eq.s32.totalorder %s16, 0
    %p158 = por %p156, %p157
    %p159 = scmp.ne.s32.totalorder %s145, %s146
    %p160 = scmp.eq.s32.totalorder %s17, 1
    %p161 = por %p159, %p160
    %p163 = scmp.ne.s32.totalorder %s146, %s162
    %p164 = scmp.eq.s32.totalorder %s17, 0
    %p165 = por %p163, %p164
    %p166 = scmp.le.s32.totalorder 1, %s11
    %p167 = scmp.lt.s32.totalorder %s11, 3
    %p168 = pnand %p166, %p167
    %p169 = pneg %p168
    // Predicated region
    $region9: #{res_block.8} parent=5 // pred_check
      _
    $region10: #{res_block.8} parent=5 // pred_check_branch
      %171 = sbr.rel (%p168) target = $region12
    $region11: #{res_block.8} parent=5 // pred_region
      %s172 = ssub.s32 %s11, 1
      // Predicated region
      $region13: #{res_block.8} parent=11 // pred_check
        %p173 = pneg %p74
      $region14: #{res_block.8} parent=11 // pred_check_branch
        %175 = sbr.rel (%p173) target = $region16
      $region15: #{res_block.8} parent=11 // pred_region
        _
      $region16: #{res_block.8} parent=11 // pred_fallthru
        _
      // Predicated region
      $region17: #{res_block.8} parent=11 // pred_check
        %p176 = pneg %p102
      $region18: #{res_block.8} parent=11 // pred_check_branch
        %178 = sbr.rel (%p176) target = $region20
      $region19: #{res_block.8} parent=11 // pred_region
        %s179 = sadd.s32 %s21, 1
        %s180 = smul.u32 41, %s179
        %p181 = scmp.lt.s32.totalorder %s180, 122
        %s182 = scalar_select %p181, %s180, 122
        %s183 = smul.addr %s182, 8
        %s184 = scalar_lea.vmem %s2, %s183
        %s185 = sadd.s32 %s21, 1
        %s186 = smul.u32 41, %s185
      $region20: #{res_block.8} parent=11 // pred_fallthru
        _
    $region12: #{res_block.8} parent=5 // pred_fallthru
      _
    %p187 = scmp.lt.s32.totalorder %s11, 2
    // Predicated region
    $region21: #{res_block.8} parent=5 // pred_check
      %p188 = pneg %p187
    $region22: #{res_block.8} parent=5 // pred_check_branch
      %190 = sbr.rel (%p188) target = $region24
    $region23: #{res_block.8} parent=5 // pred_region
      // Predicated region
      $region25: #{res_block.8} parent=23 // pred_check
        %p191 = pneg %p47
      $region26: #{res_block.8} parent=23 // pred_check_branch
        %193 = sbr.rel (%p191) target = $region28
      $region27: #{res_block.8} parent=23 // pred_region
        %s194 = sadd.s32 %s19, 1
        %s195 = smul.u32 41, %s194
        %p196 = scmp.lt.s32.totalorder %s18, 1
        %s197 = scalar_select %p196, %s18, 1
        %p198 = scmp.lt.s32.totalorder %s195, 122
        %s199 = scalar_select %p198, %s195, 122
        %s200 = smul.addr %s197, 123
        %s201 = sadd.s32 %s199, %s200
        %s202 = smul.addr %s201, 4
        %s203 = scalar_lea.vmem %s0, %s202
        %s204 = sadd.s32 %s19, 1
        %s205 = smul.u32 41, %s204
      $region28: #{res_block.8} parent=23 // pred_fallthru
        _
    $region24: #{res_block.8} parent=5 // pred_fallthru
      _
    %p206 = scmp.le.s32.totalorder 1, %s11
    %p207 = scmp.lt.s32.totalorder %s11, 3
    %p208 = pnand %p206, %p207
    %p209 = pneg %p208
    // Predicated region
    $region29: #{res_block.8} parent=5 // pred_check
      _
    $region30: #{res_block.8} parent=5 // pred_check_branch
      %211 = sbr.rel (%p208) target = $region32
    $region31: #{res_block.8} parent=5 // pred_region
      %s212 = ssub.s32 %s11, 1
      %s213 = sadd.s32 %s21, 1
      %s214 = smul.u32 41, %s213
      %p215 = scmp.lt.s32.totalorder %s20, 1
      %s216 = scalar_select %p215, %s20, 1
      %p217 = scmp.lt.s32.totalorder %s214, 122
      %s218 = scalar_select %p217, %s214, 122
      %s219 = smul.addr %s216, 123
      %s220 = sadd.s32 %s218, %s219
      %s221 = smul.addr %s220, 4
      %s222 = scalar_lea.vmem %s0, %s221
      %p223 = pneg %p53
      %p224 = pneg %p50
      %p225 = pneg %p74
      %p226 = pneg %p71
      %s227 = sadd.s32 %s21, 1
      %s228 = smul.u32 41, %s227
      %p229 = scmp.lt.s32.totalorder %s228, 122
      %s230 = scalar_select %p229, %s228, 122
      %s231 = smul.addr %s230, 8
      %s232 = scalar_lea.vmem %s2, %s231
      %p233 = pneg %p102
      %p234 = pneg %p99
      %p235 = pneg %p130
      %p236 = pneg %p127
      %s237 = smul.u32 41, %s21
      %p238 = scmp.lt.s32.totalorder %s20, 1
      %s239 = scalar_select %p238, %s20, 1
      %p240 = scmp.lt.s32.totalorder %s237, 40
      %s241 = scalar_select %p240, %s237, 40
      %s242 = smul.addr %s239, 41
      %s243 = sadd.s32 %s241, %s242
      %s244 = smul.addr %s243, 4
      %s245 = scalar_lea.vmem %s3, %s244
      %p246 = pneg %p158
      %p247 = pneg %p155
      %p248 = scmp.lt.s32.totalorder %s20, 1
      %s249 = scalar_select %p248, %s20, 1
      %p250 = scmp.lt.s32.totalorder %s21, 0
      %s251 = scalar_select %p250, %s21, 0
      %s252 = sadd.s32 %s251, %s249
      %s253 = smul.addr %s252, 2
      %s254 = scalar_lea.vmem %s4, %s253
      %s255 = sadd.s32 %s21, 1
      %s256 = smul.u32 41, %s255
      %p257 = scmp.lt.s32.totalorder %s20, 1
      %s258 = scalar_select %p257, %s20, 1
      %p259 = scmp.lt.s32.totalorder %s256, 122
      %s260 = scalar_select %p259, %s256, 122
      %s261 = smul.addr %s258, 123
      %s262 = sadd.s32 %s260, %s261
      %s263 = smul.addr %s262, 4
      %s264 = scalar_lea.vmem %s0, %s263
      %s265 = sadd.s32 %s21, 1
      %s266 = smul.u32 41, %s265
      %s267 = sadd.s32 %s21, 1
      %s268 = smul.u32 41, %s267
      %p269 = scmp.lt.s32.totalorder %s268, 122
      %s270 = scalar_select %p269, %s268, 122
      %s271 = smul.addr %s270, 8
      %s272 = scalar_lea.vmem %s2, %s271
      %s273 = sadd.s32 %s21, 1
      %s274 = smul.u32 41, %s273
      %s275 = smul.u32 41, %s21
      %p276 = scmp.lt.s32.totalorder %s20, 1
      %s277 = scalar_select %p276, %s20, 1
      %p278 = scmp.lt.s32.totalorder %s275, 40
      %s279 = scalar_select %p278, %s275, 40
      %s280 = smul.addr %s277, 41
      %s281 = sadd.s32 %s279, %s280
      %s282 = smul.addr %s281, 4
      %s283 = scalar_lea.vmem %s3, %s282
      %s284 = smul.u32 41, %s21
      %p285 = scmp.lt.s32.totalorder %s20, 1
      %s286 = scalar_select %p285, %s20, 1
      %p287 = scmp.lt.s32.totalorder %s21, 0
      %s288 = scalar_select %p287, %s21, 0
      %s289 = sadd.s32 %s288, %s286
      %s290 = smul.addr %s289, 2
      %s291 = scalar_lea.vmem %s4, %s290
      %v293 = vld [vmem:[%s264] sm:$0xf]
      %v294 = vld [vmem:[%s264 + $0x4] sm:$0xf]
      %v295 = vld [vmem:[%s264 + $0x8] sm:$0xf]
      %v296 = vld [vmem:[%s264 + $0xc] sm:$0xf]
      %v297 = vld [vmem:[%s264 + $0x10] sm:$0xf]
      %v298 = vld [vmem:[%s264 + $0x14] sm:$0xf]
      %v299 = vld [vmem:[%s264 + $0x18] sm:$0xf]
      %v300 = vld [vmem:[%s264 + $0x1c] sm:$0xf]
      %v301 = vld [vmem:[%s264 + $0x20] sm:$0xf]
      %v302 = vld [vmem:[%s264 + $0x24] sm:$0xf]
      %v303 = vld [vmem:[%s264 + $0x28] sm:$0xf]
      %v304 = vld [vmem:[%s264 + $0x2c] sm:$0xf]
      %v305 = vld [vmem:[%s264 + $0x30] sm:$0xf]
      %v306 = vld [vmem:[%s264 + $0x34] sm:$0xf]
      %v307 = vld [vmem:[%s264 + $0x38] sm:$0xf]
      %v308 = vld [vmem:[%s264 + $0x3c] sm:$0xf]
      %v309 = vld [vmem:[%s264 + $0x40] sm:$0xf]
      %v310 = vld [vmem:[%s264 + $0x44] sm:$0xf]
      %v311 = vld [vmem:[%s264 + $0x48] sm:$0xf]
      %v312 = vld [vmem:[%s264 + $0x4c] sm:$0xf]
      %v313 = vld [vmem:[%s264 + $0x50] sm:$0xf]
      %v314 = vld [vmem:[%s264 + $0x54] sm:$0xf]
      %v315 = vld [vmem:[%s264 + $0x58] sm:$0xf]
      %v316 = vld [vmem:[%s264 + $0x5c] sm:$0xf]
      %v317 = vld [vmem:[%s264 + $0x60] sm:$0xf]
      %v318 = vld [vmem:[%s264 + $0x64] sm:$0xf]
      %v319 = vld [vmem:[%s264 + $0x68] sm:$0xf]
      %v320 = vld [vmem:[%s264 + $0x6c] sm:$0xf]
      %v321 = vld [vmem:[%s264 + $0x70] sm:$0xf]
      %v322 = vld [vmem:[%s264 + $0x74] sm:$0xf]
      %v323 = vld [vmem:[%s264 + $0x78] sm:$0xf]
      %v324 = vld [vmem:[%s264 + $0x7c] sm:$0xf]
      %v325 = vld [vmem:[%s264 + $0x80] sm:$0xf]
      %v326 = vld [vmem:[%s264 + $0x84] sm:$0xf]
      %v327 = vld [vmem:[%s264 + $0x88] sm:$0xf]
      %v328 = vld [vmem:[%s264 + $0x8c] sm:$0xf]
      %v329 = vld [vmem:[%s264 + $0x90] sm:$0xf]
      %v330 = vld [vmem:[%s264 + $0x94] sm:$0xf]
      %v331 = vld [vmem:[%s264 + $0x98] sm:$0xf]
      %v332 = vld [vmem:[%s264 + $0x9c] sm:$0xf]
      %v333 = vld [vmem:[%s264 + $0xa0] sm:$0xf]
      %v334 = vld [vmem:[%s1] sm:$0x3]
      %v376 = vunpack.c.l.b16 %v293
      %v377 = vunpack.c.l.b16 %v294
      %v378 = vunpack.c.l.b16 %v295
      %v379 = vunpack.c.l.b16 %v296
      %v380 = vunpack.c.l.b16 %v297
      %v381 = vunpack.c.l.b16 %v298
      %v382 = vunpack.c.l.b16 %v299
      %v383 = vunpack.c.l.b16 %v300
      %v384 = vunpack.c.l.b16 %v301
      %v385 = vunpack.c.l.b16 %v302
      %v386 = vunpack.c.l.b16 %v303
      %v387 = vunpack.c.l.b16 %v304
      %v388 = vunpack.c.l.b16 %v305
      %v389 = vunpack.c.l.b16 %v306
      %v390 = vunpack.c.l.b16 %v307
      %v391 = vunpack.c.l.b16 %v308
      %v392 = vunpack.c.l.b16 %v309
      %v393 = vunpack.c.l.b16 %v310
      %v394 = vunpack.c.l.b16 %v311
      %v395 = vunpack.c.l.b16 %v312
      %v396 = vunpack.c.l.b16 %v313
      %v397 = vunpack.c.l.b16 %v314
      %v398 = vunpack.c.l.b16 %v315
      %v399 = vunpack.c.l.b16 %v316
      %v400 = vunpack.c.l.b16 %v317
      %v401 = vunpack.c.l.b16 %v318
      %v402 = vunpack.c.l.b16 %v319
      %v403 = vunpack.c.l.b16 %v320
      %v404 = vunpack.c.l.b16 %v321
      %v405 = vunpack.c.l.b16 %v322
      %v406 = vunpack.c.l.b16 %v323
      %v407 = vunpack.c.l.b16 %v324
      %v408 = vunpack.c.l.b16 %v325
      %v409 = vunpack.c.l.b16 %v326
      %v410 = vunpack.c.l.b16 %v327
      %v411 = vunpack.c.l.b16 %v328
      %v412 = vunpack.c.l.b16 %v329
      %v413 = vunpack.c.l.b16 %v330
      %v414 = vunpack.c.l.b16 %v331
      %v415 = vunpack.c.l.b16 %v332
      %v416 = vunpack.c.l.b16 %v333
      %v417 = vpack.c.b16 %v377, %v376
      %v418 = vpack.c.b16 %v379, %v378
      %v419 = vpack.c.b16 %v381, %v380
      %v420 = vpack.c.b16 %v383, %v382
      %v421 = vpack.c.b16 %v385, %v384
      %v422 = vpack.c.b16 %v387, %v386
      %v423 = vpack.c.b16 %v389, %v388
      %v424 = vpack.c.b16 %v391, %v390
      %v425 = vpack.c.b16 %v393, %v392
      %v426 = vpack.c.b16 %v395, %v394
      %v427 = vpack.c.b16 %v397, %v396
      %v428 = vpack.c.b16 %v399, %v398
      %v429 = vpack.c.b16 %v401, %v400
      %v430 = vpack.c.b16 %v403, %v402
      %v431 = vpack.c.b16 %v405, %v404
      %v432 = vpack.c.b16 %v407, %v406
      %v433 = vpack.c.b16 %v409, %v408
      %v434 = vpack.c.b16 %v411, %v410
      %v435 = vpack.c.b16 %v413, %v412
      %v436 = vpack.c.b16 %v415, %v414
      %v437 = vpack.c.b16 %v416, %v416
      %vm438 = vcmask 31744
      %v440 = vsel %vm438, %v417, 0
      %v443 = vsel %vm438, %v418, 0
      %v446 = vsel %vm438, %v419, 0
      %v449 = vsel %vm438, %v420, 0
      %v452 = vsel %vm438, %v421, 0
      %v455 = vsel %vm438, %v422, 0
      %v458 = vsel %vm438, %v423, 0
      %v461 = vsel %vm438, %v424, 0
      %v464 = vsel %vm438, %v425, 0
      %v467 = vsel %vm438, %v426, 0
      %v470 = vsel %vm438, %v427, 0
      %v473 = vsel %vm438, %v428, 0
      %v476 = vsel %vm438, %v429, 0
      %v479 = vsel %vm438, %v430, 0
      %v482 = vsel %vm438, %v431, 0
      %v485 = vsel %vm438, %v432, 0
      %v488 = vsel %vm438, %v433, 0
      %v491 = vsel %vm438, %v434, 0
      %v494 = vsel %vm438, %v435, 0
      %v497 = vsel %vm438, %v436, 0
      %v500 = vsel %vm438, %v437, 0
      %vm502 = vcmask 1041408
      %v504 = vsel %vm502, %v334, 0
      %506 = vmatpush.bf16.msra.mxu0 0
      %507 = vmatpush.bf16.msra.mxu0 0
      %508 = vmatpush.bf16.msra.mxu0 0
      %509 = vmatpush.bf16.msra.mxu0 0
      %510 = vmatpush.bf16.msra.mxu0 0
      %511 = vmatpush.bf16.msra.mxu0 0
      %512 = vmatpush.bf16.msra.mxu0 0
      %513 = vmatpush.bf16.msra.mxu0 %v504
      %514 = vmatmul.bf16.gmra.mxu0 %v440
      %v515 = vpop.f32.mrf.mxu0
      %v516 = vadd.f32 0.0, %v515
      %v517 = vpop.f32.mrf.mxu0
      %v518 = vadd.f32 0.0, %v517
      %519 = vmatmul.bf16.gmra.mxu0 %v443
      %v520 = vpop.f32.mrf.mxu0
      %v521 = vadd.f32 0.0, %v520
      %v522 = vpop.f32.mrf.mxu0
      %v523 = vadd.f32 0.0, %v522
      %524 = vmatmul.bf16.gmra.mxu0 %v446
      %v525 = vpop.f32.mrf.mxu0
      %v526 = vadd.f32 0.0, %v525
      %v527 = vpop.f32.mrf.mxu0
      %v528 = vadd.f32 0.0, %v527
      %529 = vmatmul.bf16.gmra.mxu0 %v449
      %v530 = vpop.f32.mrf.mxu0
      %v531 = vadd.f32 0.0, %v530
      %v532 = vpop.f32.mrf.mxu0
      %v533 = vadd.f32 0.0, %v532
      %534 = vmatmul.bf16.gmra.mxu0 %v452
      %v535 = vpop.f32.mrf.mxu0
      %v536 = vadd.f32 0.0, %v535
      %v537 = vpop.f32.mrf.mxu0
      %v538 = vadd.f32 0.0, %v537
      %539 = vmatmul.bf16.gmra.mxu0 %v455
      %v540 = vpop.f32.mrf.mxu0
      %v541 = vadd.f32 0.0, %v540
      %v542 = vpop.f32.mrf.mxu0
      %v543 = vadd.f32 0.0, %v542
      %544 = vmatmul.bf16.gmra.mxu0 %v458
      %v545 = vpop.f32.mrf.mxu0
      %v546 = vadd.f32 0.0, %v545
      %v547 = vpop.f32.mrf.mxu0
      %v548 = vadd.f32 0.0, %v547
      %549 = vmatmul.bf16.gmra.mxu0 %v461
      %v550 = vpop.f32.mrf.mxu0
      %v551 = vadd.f32 0.0, %v550
      %v552 = vpop.f32.mrf.mxu0
      %v553 = vadd.f32 0.0, %v552
      %554 = vmatmul.bf16.gmra.mxu0 %v464
      %v555 = vpop.f32.mrf.mxu0
      %v556 = vadd.f32 0.0, %v555
      %v557 = vpop.f32.mrf.mxu0
      %v558 = vadd.f32 0.0, %v557
      %559 = vmatmul.bf16.gmra.mxu0 %v467
      %v560 = vpop.f32.mrf.mxu0
      %v561 = vadd.f32 0.0, %v560
      %v562 = vpop.f32.mrf.mxu0
      %v563 = vadd.f32 0.0, %v562
      %564 = vmatmul.bf16.gmra.mxu0 %v470
      %v565 = vpop.f32.mrf.mxu0
      %v566 = vadd.f32 0.0, %v565
      %v567 = vpop.f32.mrf.mxu0
      %v568 = vadd.f32 0.0, %v567
      %569 = vmatmul.bf16.gmra.mxu0 %v473
      %v570 = vpop.f32.mrf.mxu0
      %v571 = vadd.f32 0.0, %v570
      %v572 = vpop.f32.mrf.mxu0
      %v573 = vadd.f32 0.0, %v572
      %574 = vmatmul.bf16.gmra.mxu0 %v476
      %v575 = vpop.f32.mrf.mxu0
      %v576 = vadd.f32 0.0, %v575
      %v577 = vpop.f32.mrf.mxu0
      %v578 = vadd.f32 0.0, %v577
      %579 = vmatmul.bf16.gmra.mxu0 %v479
      %v580 = vpop.f32.mrf.mxu0
      %v581 = vadd.f32 0.0, %v580
      %v582 = vpop.f32.mrf.mxu0
      %v583 = vadd.f32 0.0, %v582
      %584 = vmatmul.bf16.gmra.mxu0 %v482
      %v585 = vpop.f32.mrf.mxu0
      %v586 = vadd.f32 0.0, %v585
      %v587 = vpop.f32.mrf.mxu0
      %v588 = vadd.f32 0.0, %v587
      %589 = vmatmul.bf16.gmra.mxu0 %v485
      %v590 = vpop.f32.mrf.mxu0
      %v591 = vadd.f32 0.0, %v590
      %v592 = vpop.f32.mrf.mxu0
      %v593 = vadd.f32 0.0, %v592
      %594 = vmatmul.bf16.gmra.mxu0 %v488
      %v595 = vpop.f32.mrf.mxu0
      %v596 = vadd.f32 0.0, %v595
      %v597 = vpop.f32.mrf.mxu0
      %v598 = vadd.f32 0.0, %v597
      %599 = vmatmul.bf16.gmra.mxu0 %v491
      %v600 = vpop.f32.mrf.mxu0
      %v601 = vadd.f32 0.0, %v600
      %v602 = vpop.f32.mrf.mxu0
      %v603 = vadd.f32 0.0, %v602
      %604 = vmatmul.bf16.gmra.mxu0 %v494
      %v605 = vpop.f32.mrf.mxu0
      %v606 = vadd.f32 0.0, %v605
      %v607 = vpop.f32.mrf.mxu0
      %v608 = vadd.f32 0.0, %v607
      %609 = vmatmul.bf16.gmra.mxu0 %v497
      %v610 = vpop.f32.mrf.mxu0
      %v611 = vadd.f32 0.0, %v610
      %v612 = vpop.f32.mrf.mxu0
      %v613 = vadd.f32 0.0, %v612
      %614 = vmatmul.bf16.gmra.mxu0 %v500
      %v615 = vpop.f32.mrf.mxu0
      %v616 = vadd.f32 0.0, %v615
      %v617 = vpop.f32.mrf.mxu0
      %618 = vdwg.mxu0
      %v619 = vpack.c.bf16 %v516, %v516
      %v620 = vpack.c.bf16 %v518, %v518
      %v621 = vpack.c.bf16 %v521, %v521
      %v622 = vpack.c.bf16 %v523, %v523
      %v623 = vpack.c.bf16 %v526, %v526
      %v624 = vpack.c.bf16 %v528, %v528
      %v625 = vpack.c.bf16 %v531, %v531
      %v626 = vpack.c.bf16 %v533, %v533
      %v627 = vpack.c.bf16 %v536, %v536
      %v628 = vpack.c.bf16 %v538, %v538
      %v629 = vpack.c.bf16 %v541, %v541
      %v630 = vpack.c.bf16 %v543, %v543
      %v631 = vpack.c.bf16 %v546, %v546
      %v632 = vpack.c.bf16 %v548, %v548
      %v633 = vpack.c.bf16 %v551, %v551
      %v634 = vpack.c.bf16 %v553, %v553
      %v635 = vpack.c.bf16 %v556, %v556
      %v636 = vpack.c.bf16 %v558, %v558
      %v637 = vpack.c.bf16 %v561, %v561
      %v638 = vpack.c.bf16 %v563, %v563
      %v639 = vpack.c.bf16 %v566, %v566
      %v640 = vpack.c.bf16 %v568, %v568
      %v641 = vpack.c.bf16 %v571, %v571
      %v642 = vpack.c.bf16 %v573, %v573
      %v643 = vpack.c.bf16 %v576, %v576
      %v644 = vpack.c.bf16 %v578, %v578
      %v645 = vpack.c.bf16 %v581, %v581
      %v646 = vpack.c.bf16 %v583, %v583
      %v647 = vpack.c.bf16 %v586, %v586
      %v648 = vpack.c.bf16 %v588, %v588
      %v649 = vpack.c.bf16 %v591, %v591
      %v650 = vpack.c.bf16 %v593, %v593
      %v651 = vpack.c.bf16 %v596, %v596
      %v652 = vpack.c.bf16 %v598, %v598
      %v653 = vpack.c.bf16 %v601, %v601
      %v654 = vpack.c.bf16 %v603, %v603
      %v655 = vpack.c.bf16 %v606, %v606
      %v656 = vpack.c.bf16 %v608, %v608
      %v657 = vpack.c.bf16 %v611, %v611
      %v658 = vpack.c.bf16 %v613, %v613
      %v659 = vpack.c.bf16 %v616, %v616
      %660 = vst [vmem:[%s283] sm:$0xf] %v619
      %661 = vst [vmem:[%s283 + $0x4] sm:$0xf] %v620
      %662 = vst [vmem:[%s283 + $0x8] sm:$0xf] %v621
      %663 = vst [vmem:[%s283 + $0xc] sm:$0xf] %v622
      %664 = vst [vmem:[%s283 + $0x10] sm:$0xf] %v623
      %665 = vst [vmem:[%s283 + $0x14] sm:$0xf] %v624
      %666 = vst [vmem:[%s283 + $0x18] sm:$0xf] %v625
      %667 = vst [vmem:[%s283 + $0x1c] sm:$0xf] %v626
      %668 = vst [vmem:[%s283 + $0x20] sm:$0xf] %v627
      %669 = vst [vmem:[%s283 + $0x24] sm:$0xf] %v628
      %670 = vst [vmem:[%s283 + $0x28] sm:$0xf] %v629
      %671 = vst [vmem:[%s283 + $0x2c] sm:$0xf] %v630
      %672 = vst [vmem:[%s283 + $0x30] sm:$0xf] %v631
      %673 = vst [vmem:[%s283 + $0x34] sm:$0xf] %v632
      %674 = vst [vmem:[%s283 + $0x38] sm:$0xf] %v633
      %675 = vst [vmem:[%s283 + $0x3c] sm:$0xf] %v634
      %676 = vst [vmem:[%s283 + $0x40] sm:$0xf] %v635
      %677 = vst [vmem:[%s283 + $0x44] sm:$0xf] %v636
      %678 = vst [vmem:[%s283 + $0x48] sm:$0xf] %v637
      %679 = vst [vmem:[%s283 + $0x4c] sm:$0xf] %v638
      %680 = vst [vmem:[%s283 + $0x50] sm:$0xf] %v639
      %681 = vst [vmem:[%s283 + $0x54] sm:$0xf] %v640
      %682 = vst [vmem:[%s283 + $0x58] sm:$0xf] %v641
      %683 = vst [vmem:[%s283 + $0x5c] sm:$0xf] %v642
      %684 = vst [vmem:[%s283 + $0x60] sm:$0xf] %v643
      %685 = vst [vmem:[%s283 + $0x64] sm:$0xf] %v644
      %686 = vst [vmem:[%s283 + $0x68] sm:$0xf] %v645
      %687 = vst [vmem:[%s283 + $0x6c] sm:$0xf] %v646
      %688 = vst [vmem:[%s283 + $0x70] sm:$0xf] %v647
      %689 = vst [vmem:[%s283 + $0x74] sm:$0xf] %v648
      %690 = vst [vmem:[%s283 + $0x78] sm:$0xf] %v649
      %691 = vst [vmem:[%s283 + $0x7c] sm:$0xf] %v650
      %692 = vst [vmem:[%s283 + $0x80] sm:$0xf] %v651
      %693 = vst [vmem:[%s283 + $0x84] sm:$0xf] %v652
      %694 = vst [vmem:[%s283 + $0x88] sm:$0xf] %v653
      %695 = vst [vmem:[%s283 + $0x8c] sm:$0xf] %v654
      %696 = vst [vmem:[%s283 + $0x90] sm:$0xf] %v655
      %697 = vst [vmem:[%s283 + $0x94] sm:$0xf] %v656
      %698 = vst [vmem:[%s283 + $0x98] sm:$0xf] %v657
      %699 = vst [vmem:[%s283 + $0x9c] sm:$0xf] %v658
      %700 = vst [vmem:[%s283 + $0xa0] sm:$0xf] %v659
      %v701 = vld [vmem:[%s272] sm:$0xff]
      %v702 = vld [vmem:[%s272 + $0x8] sm:$0xff]
      %v703 = vld [vmem:[%s272 + $0x10] sm:$0xff]
      %v704 = vld [vmem:[%s272 + $0x18] sm:$0xff]
      %v705 = vld [vmem:[%s272 + $0x20] sm:$0xff]
      %v706 = vld [vmem:[%s272 + $0x28] sm:$0xff]
      %v707 = vld [vmem:[%s272 + $0x30] sm:$0xff]
      %v708 = vld [vmem:[%s272 + $0x38] sm:$0xff]
      %v709 = vld [vmem:[%s272 + $0x40] sm:$0xff]
      %v710 = vld [vmem:[%s272 + $0x48] sm:$0xff]
      %v711 = vld [vmem:[%s272 + $0x50] sm:$0xff]
      %v712 = vld [vmem:[%s272 + $0x58] sm:$0xff]
      %v713 = vld [vmem:[%s272 + $0x60] sm:$0xff]
      %v714 = vld [vmem:[%s272 + $0x68] sm:$0xff]
      %v715 = vld [vmem:[%s272 + $0x70] sm:$0xff]
      %v716 = vld [vmem:[%s272 + $0x78] sm:$0xff]
      %v717 = vld [vmem:[%s272 + $0x80] sm:$0xff]
      %v718 = vld [vmem:[%s272 + $0x88] sm:$0xff]
      %v719 = vld [vmem:[%s272 + $0x90] sm:$0xff]
      %v720 = vld [vmem:[%s272 + $0x98] sm:$0xff]
      %v721 = vld [vmem:[%s272 + $0xa0] sm:$0xff]
      %v722 = vld [vmem:[%s272 + $0xa8] sm:$0xff]
      %v723 = vld [vmem:[%s272 + $0xb0] sm:$0xff]
      %v724 = vld [vmem:[%s272 + $0xb8] sm:$0xff]
      %v725 = vld [vmem:[%s272 + $0xc0] sm:$0xff]
      %v726 = vld [vmem:[%s272 + $0xc8] sm:$0xff]
      %v727 = vld [vmem:[%s272 + $0xd0] sm:$0xff]
      %v728 = vld [vmem:[%s272 + $0xd8] sm:$0xff]
      %v729 = vld [vmem:[%s272 + $0xe0] sm:$0xff]
      %v730 = vld [vmem:[%s272 + $0xe8] sm:$0xff]
      %v731 = vld [vmem:[%s272 + $0xf0] sm:$0xff]
      %v732 = vld [vmem:[%s272 + $0xf8] sm:$0xff]
      %v733 = vld [vmem:[%s272 + $0x100] sm:$0xff]
      %v734 = vld [vmem:[%s272 + $0x108] sm:$0xff]
      %v735 = vld [vmem:[%s272 + $0x110] sm:$0xff]
      %v736 = vld [vmem:[%s272 + $0x118] sm:$0xff]
      %v737 = vld [vmem:[%s272 + $0x120] sm:$0xff]
      %v738 = vld [vmem:[%s272 + $0x128] sm:$0xff]
      %v739 = vld [vmem:[%s272 + $0x130] sm:$0xff]
      %v740 = vld [vmem:[%s272 + $0x138] sm:$0xff]
      %v741 = vld [vmem:[%s272 + $0x140] sm:$0xff]
      %743 = vset.pattern.permute.xlu0 0
      %744 = vperm.xlu0 %743, %v701
      %v745 = vpop.permute.xlu0 %744
      %748 = vset.pattern.permute.xlu0 0
      %749 = vperm.xlu0 %748, %v702
      %v750 = vpop.permute.xlu0 %749
      %753 = vset.pattern.permute.xlu0 0
      %754 = vperm.xlu0 %753, %v703
      %v755 = vpop.permute.xlu0 %754
      %758 = vset.pattern.permute.xlu0 0
      %759 = vperm.xlu0 %758, %v704
      %v760 = vpop.permute.xlu0 %759
      %763 = vset.pattern.permute.xlu0 0
      %764 = vperm.xlu0 %763, %v705
      %v765 = vpop.permute.xlu0 %764
      %768 = vset.pattern.permute.xlu0 0
      %769 = vperm.xlu0 %768, %v706
      %v770 = vpop.permute.xlu0 %769
      %773 = vset.pattern.permute.xlu0 0
      %774 = vperm.xlu0 %773, %v707
      %v775 = vpop.permute.xlu0 %774
      %778 = vset.pattern.permute.xlu0 0
      %779 = vperm.xlu0 %778, %v708
      %v780 = vpop.permute.xlu0 %779
      %783 = vset.pattern.permute.xlu0 0
      %784 = vperm.xlu0 %783, %v709
      %v785 = vpop.permute.xlu0 %784
      %788 = vset.pattern.permute.xlu0 0
      %789 = vperm.xlu0 %788, %v710
      %v790 = vpop.permute.xlu0 %789
      %793 = vset.pattern.permute.xlu0 0
      %794 = vperm.xlu0 %793, %v711
      %v795 = vpop.permute.xlu0 %794
      %798 = vset.pattern.permute.xlu0 0
      %799 = vperm.xlu0 %798, %v712
      %v800 = vpop.permute.xlu0 %799
      %803 = vset.pattern.permute.xlu0 0
      %804 = vperm.xlu0 %803, %v713
      %v805 = vpop.permute.xlu0 %804
      %808 = vset.pattern.permute.xlu0 0
      %809 = vperm.xlu0 %808, %v714
      %v810 = vpop.permute.xlu0 %809
      %813 = vset.pattern.permute.xlu0 0
      %814 = vperm.xlu0 %813, %v715
      %v815 = vpop.permute.xlu0 %814
      %818 = vset.pattern.permute.xlu0 0
      %819 = vperm.xlu0 %818, %v716
      %v820 = vpop.permute.xlu0 %819
      %823 = vset.pattern.permute.xlu0 0
      %824 = vperm.xlu0 %823, %v717
      %v825 = vpop.permute.xlu0 %824
      %828 = vset.pattern.permute.xlu0 0
      %829 = vperm.xlu0 %828, %v718
      %v830 = vpop.permute.xlu0 %829
      %833 = vset.pattern.permute.xlu0 0
      %834 = vperm.xlu0 %833, %v719
      %v835 = vpop.permute.xlu0 %834
      %838 = vset.pattern.permute.xlu0 0
      %839 = vperm.xlu0 %838, %v720
      %v840 = vpop.permute.xlu0 %839
      %843 = vset.pattern.permute.xlu0 0
      %844 = vperm.xlu0 %843, %v721
      %v845 = vpop.permute.xlu0 %844
      %848 = vset.pattern.permute.xlu0 0
      %849 = vperm.xlu0 %848, %v722
      %v850 = vpop.permute.xlu0 %849
      %853 = vset.pattern.permute.xlu0 0
      %854 = vperm.xlu0 %853, %v723
      %v855 = vpop.permute.xlu0 %854
      %858 = vset.pattern.permute.xlu0 0
      %859 = vperm.xlu0 %858, %v724
      %v860 = vpop.permute.xlu0 %859
      %863 = vset.pattern.permute.xlu0 0
      %864 = vperm.xlu0 %863, %v725
      %v865 = vpop.permute.xlu0 %864
      %868 = vset.pattern.permute.xlu0 0
      %869 = vperm.xlu0 %868, %v726
      %v870 = vpop.permute.xlu0 %869
      %873 = vset.pattern.permute.xlu0 0
      %874 = vperm.xlu0 %873, %v727
      %v875 = vpop.permute.xlu0 %874
      %878 = vset.pattern.permute.xlu0 0
      %879 = vperm.xlu0 %878, %v728
      %v880 = vpop.permute.xlu0 %879
      %883 = vset.pattern.permute.xlu0 0
      %884 = vperm.xlu0 %883, %v729
      %v885 = vpop.permute.xlu0 %884
      %888 = vset.pattern.permute.xlu0 0
      %889 = vperm.xlu0 %888, %v730
      %v890 = vpop.permute.xlu0 %889
      %893 = vset.pattern.permute.xlu0 0
      %894 = vperm.xlu0 %893, %v731
      %v895 = vpop.permute.xlu0 %894
      %898 = vset.pattern.permute.xlu0 0
      %899 = vperm.xlu0 %898, %v732
      %v900 = vpop.permute.xlu0 %899
      %903 = vset.pattern.permute.xlu0 0
      %904 = vperm.xlu0 %903, %v733
      %v905 = vpop.permute.xlu0 %904
      %908 = vset.pattern.permute.xlu0 0
      %909 = vperm.xlu0 %908, %v734
      %v910 = vpop.permute.xlu0 %909
      %913 = vset.pattern.permute.xlu0 0
      %914 = vperm.xlu0 %913, %v735
      %v915 = vpop.permute.xlu0 %914
      %918 = vset.pattern.permute.xlu0 0
      %919 = vperm.xlu0 %918, %v736
      %v920 = vpop.permute.xlu0 %919
      %923 = vset.pattern.permute.xlu0 0
      %924 = vperm.xlu0 %923, %v737
      %v925 = vpop.permute.xlu0 %924
      %928 = vset.pattern.permute.xlu0 0
      %929 = vperm.xlu0 %928, %v738
      %v930 = vpop.permute.xlu0 %929
      %933 = vset.pattern.permute.xlu0 0
      %934 = vperm.xlu0 %933, %v739
      %v935 = vpop.permute.xlu0 %934
      %938 = vset.pattern.permute.xlu0 0
      %939 = vperm.xlu0 %938, %v740
      %v940 = vpop.permute.xlu0 %939
      %943 = vset.pattern.permute.xlu0 0
      %944 = vperm.xlu0 %943, %v741
      %v945 = vpop.permute.xlu0 %944
      %v947 = vmul.f32 %v516, %v745
      %v948 = vmul.f32 %v518, %v750
      %v949 = vmul.f32 %v521, %v755
      %v950 = vmul.f32 %v523, %v760
      %v951 = vmul.f32 %v526, %v765
      %v952 = vmul.f32 %v528, %v770
      %v953 = vmul.f32 %v531, %v775
      %v954 = vmul.f32 %v533, %v780
      %v955 = vmul.f32 %v536, %v785
      %v956 = vmul.f32 %v538, %v790
      %v957 = vmul.f32 %v541, %v795
      %v958 = vmul.f32 %v543, %v800
      %v959 = vmul.f32 %v546, %v805
      %v960 = vmul.f32 %v548, %v810
      %v961 = vmul.f32 %v551, %v815
      %v962 = vmul.f32 %v553, %v820
      %v963 = vmul.f32 %v556, %v825
      %v964 = vmul.f32 %v558, %v830
      %v965 = vmul.f32 %v561, %v835
      %v966 = vmul.f32 %v563, %v840
      %v967 = vmul.f32 %v566, %v845
      %v968 = vmul.f32 %v568, %v850
      %v969 = vmul.f32 %v571, %v855
      %v970 = vmul.f32 %v573, %v860
      %v971 = vmul.f32 %v576, %v865
      %v972 = vmul.f32 %v578, %v870
      %v973 = vmul.f32 %v581, %v875
      %v974 = vmul.f32 %v583, %v880
      %v975 = vmul.f32 %v586, %v885
      %v976 = vmul.f32 %v588, %v890
      %v977 = vmul.f32 %v591, %v895
      %v978 = vmul.f32 %v593, %v900
      %v979 = vmul.f32 %v596, %v905
      %v980 = vmul.f32 %v598, %v910
      %v981 = vmul.f32 %v601, %v915
      %v982 = vmul.f32 %v603, %v920
      %v983 = vmul.f32 %v606, %v925
      %v984 = vmul.f32 %v608, %v930
      %v985 = vmul.f32 %v611, %v935
      %v986 = vmul.f32 %v613, %v940
      %v987 = vmul.f32 %v616, %v945
      %v988 = vadd.f32 %v947, %v948
      %v989 = vadd.f32 %v988, %v949
      %v990 = vadd.f32 %v989, %v950
      %v991 = vadd.f32 %v990, %v951
      %v992 = vadd.f32 %v991, %v952
      %v993 = vadd.f32 %v992, %v953
      %v994 = vadd.f32 %v993, %v954
      %v995 = vadd.f32 %v994, %v955
      %v996 = vadd.f32 %v995, %v956
      %v997 = vadd.f32 %v996, %v957
      %v998 = vadd.f32 %v997, %v958
      %v999 = vadd.f32 %v998, %v959
      %v1000 = vadd.f32 %v999, %v960
      %v1001 = vadd.f32 %v1000, %v961
      %v1002 = vadd.f32 %v1001, %v962
      %v1003 = vadd.f32 %v1002, %v963
      %v1004 = vadd.f32 %v1003, %v964
      %v1005 = vadd.f32 %v1004, %v965
      %v1006 = vadd.f32 %v1005, %v966
      %v1007 = vadd.f32 %v1006, %v967
      %v1008 = vadd.f32 %v1007, %v968
      %v1009 = vadd.f32 %v1008, %v969
      %v1010 = vadd.f32 %v1009, %v970
      %v1011 = vadd.f32 %v1010, %v971
      %v1012 = vadd.f32 %v1011, %v972
      %v1013 = vadd.f32 %v1012, %v973
      %v1014 = vadd.f32 %v1013, %v974
      %v1015 = vadd.f32 %v1014, %v975
      %v1016 = vadd.f32 %v1015, %v976
      %v1017 = vadd.f32 %v1016, %v977
      %v1018 = vadd.f32 %v1017, %v978
      %v1019 = vadd.f32 %v1018, %v979
      %v1020 = vadd.f32 %v1019, %v980
      %v1021 = vadd.f32 %v1020, %v981
      %v1022 = vadd.f32 %v1021, %v982
      %v1023 = vadd.f32 %v1022, %v983
      %v1024 = vadd.f32 %v1023, %v984
      %v1025 = vadd.f32 %v1024, %v985
      %v1026 = vadd.f32 %v1025, %v986
      %v1027 = vadd.f32 %v1026, %v987
      %v1028 = vrot.slane %v1027, 4
      %v1029 = vadd.f32 %v1027, %v1028
      %v1030 = vrot.slane %v1029, 2
      %v1031 = vadd.f32 %v1029, %v1030
      %v1032 = vrot.slane %v1031, 1
      %v1033 = vadd.f32 %v1031, %v1032
      %v1034 = vmul.f32 %v947, %v516
      %v1035 = vmul.f32 %v948, %v518
      %v1036 = vmul.f32 %v949, %v521
      %v1037 = vmul.f32 %v950, %v523
      %v1038 = vmul.f32 %v951, %v526
      %v1039 = vmul.f32 %v952, %v528
      %v1040 = vmul.f32 %v953, %v531
      %v1041 = vmul.f32 %v954, %v533
      %v1042 = vmul.f32 %v955, %v536
      %v1043 = vmul.f32 %v956, %v538
      %v1044 = vmul.f32 %v957, %v541
      %v1045 = vmul.f32 %v958, %v543
      %v1046 = vmul.f32 %v959, %v546
      %v1047 = vmul.f32 %v960, %v548
      %v1048 = vmul.f32 %v961, %v551
      %v1049 = vmul.f32 %v962, %v553
      %v1050 = vmul.f32 %v963, %v556
      %v1051 = vmul.f32 %v964, %v558
      %v1052 = vmul.f32 %v965, %v561
      %v1053 = vmul.f32 %v966, %v563
      %v1054 = vmul.f32 %v967, %v566
      %v1055 = vmul.f32 %v968, %v568
      %v1056 = vmul.f32 %v969, %v571
      %v1057 = vmul.f32 %v970, %v573
      %v1058 = vmul.f32 %v971, %v576
      %v1059 = vmul.f32 %v972, %v578
      %v1060 = vmul.f32 %v973, %v581
      %v1061 = vmul.f32 %v974, %v583
      %v1062 = vmul.f32 %v975, %v586
      %v1063 = vmul.f32 %v976, %v588
      %v1064 = vmul.f32 %v977, %v591
      %v1065 = vmul.f32 %v978, %v593
      %v1066 = vmul.f32 %v979, %v596
      %v1067 = vmul.f32 %v980, %v598
      %v1068 = vmul.f32 %v981, %v601
      %v1069 = vmul.f32 %v982, %v603
      %v1070 = vmul.f32 %v983, %v606
      %v1071 = vmul.f32 %v984, %v608
      %v1072 = vmul.f32 %v985, %v611
      %v1073 = vmul.f32 %v986, %v613
      %v1074 = vmul.f32 %v987, %v616
      %v1075 = vadd.f32 %v1034, %v1035
      %v1076 = vadd.f32 %v1075, %v1036
      %v1077 = vadd.f32 %v1076, %v1037
      %v1078 = vadd.f32 %v1077, %v1038
      %v1079 = vadd.f32 %v1078, %v1039
      %v1080 = vadd.f32 %v1079, %v1040
      %v1081 = vadd.f32 %v1080, %v1041
      %v1082 = vadd.f32 %v1081, %v1042
      %v1083 = vadd.f32 %v1082, %v1043
      %v1084 = vadd.f32 %v1083, %v1044
      %v1085 = vadd.f32 %v1084, %v1045
      %v1086 = vadd.f32 %v1085, %v1046
      %v1087 = vadd.f32 %v1086, %v1047
      %v1088 = vadd.f32 %v1087, %v1048
      %v1089 = vadd.f32 %v1088, %v1049
      %v1090 = vadd.f32 %v1089, %v1050
      %v1091 = vadd.f32 %v1090, %v1051
      %v1092 = vadd.f32 %v1091, %v1052
      %v1093 = vadd.f32 %v1092, %v1053
      %v1094 = vadd.f32 %v1093, %v1054
      %v1095 = vadd.f32 %v1094, %v1055
      %v1096 = vadd.f32 %v1095, %v1056
      %v1097 = vadd.f32 %v1096, %v1057
      %v1098 = vadd.f32 %v1097, %v1058
      %v1099 = vadd.f32 %v1098, %v1059
      %v1100 = vadd.f32 %v1099, %v1060
      %v1101 = vadd.f32 %v1100, %v1061
      %v1102 = vadd.f32 %v1101, %v1062
      %v1103 = vadd.f32 %v1102, %v1063
      %v1104 = vadd.f32 %v1103, %v1064
      %v1105 = vadd.f32 %v1104, %v1065
      %v1106 = vadd.f32 %v1105, %v1066
      %v1107 = vadd.f32 %v1106, %v1067
      %v1108 = vadd.f32 %v1107, %v1068
      %v1109 = vadd.f32 %v1108, %v1069
      %v1110 = vadd.f32 %v1109, %v1070
      %v1111 = vadd.f32 %v1110, %v1071
      %v1112 = vadd.f32 %v1111, %v1072
      %v1113 = vadd.f32 %v1112, %v1073
      %v1114 = vadd.f32 %v1113, %v1074
      %v1115 = vrot.slane %v1114, 4
      %v1116 = vadd.f32 %v1114, %v1115
      %v1117 = vrot.slane %v1116, 2
      %v1118 = vadd.f32 %v1116, %v1117
      %v1119 = vrot.slane %v1118, 1
      %v1120 = vadd.f32 %v1118, %v1119
      %vm1121 = vcmask 1040384
      %v1122 = vsel %vm1121, %v1033, %v1120
      %1123 = vst [vmem:[%s291] sm:$0x3] %v1122
      %s1124 = smul.u32 41, %s21
      %p1125 = scmp.lt.s32.totalorder %s20, 1
      %s1126 = scalar_select %p1125, %s20, 1
      %p1127 = scmp.lt.s32.totalorder %s1124, 40
      %s1128 = scalar_select %p1127, %s1124, 40
      %s1129 = smul.addr %s1126, 41
      %s1130 = sadd.s32 %s1128, %s1129
      %s1131 = smul.addr %s1130, 4
      %s1132 = scalar_lea.vmem %s3, %s1131
      %p1133 = scmp.lt.s32.totalorder %s20, 1
      %s1134 = scalar_select %p1133, %s20, 1
      %p1135 = scmp.lt.s32.totalorder %s21, 0
      %s1136 = scalar_select %p1135, %s21, 0
      %s1137 = sadd.s32 %s1136, %s1134
      %s1138 = smul.addr %s1137, 2
      %s1139 = scalar_lea.vmem %s4, %s1138
      // Predicated region
      $region33: #{res_block.8} parent=31 // pred_check
        %p1140 = pneg %p127
      $region34: #{res_block.8} parent=31 // pred_check_branch
        %1142 = sbr.rel (%p1140) target = $region36
      $region35: #{res_block.8} parent=31 // pred_region
        %s1143 = smul.u32 41, %s21
      $region36: #{res_block.8} parent=31 // pred_fallthru
        _
      // Predicated region
      $region37: #{res_block.8} parent=31 // pred_check
        %p1144 = pneg %p155
      $region38: #{res_block.8} parent=31 // pred_check_branch
        %1146 = sbr.rel (%p1144) target = $region40
      $region39: #{res_block.8} parent=31 // pred_region
        _
      $region40: #{res_block.8} parent=31 // pred_fallthru
        _
    $region32: #{res_block.8} parent=5 // pred_fallthru
      _
    %p1147 = scmp.le.s32.totalorder 2, %s11
    // Predicated region
    $region41: #{res_block.8} parent=5 // pred_check
      %p1148 = pneg %p1147
    $region42: #{res_block.8} parent=5 // pred_check_branch
      %1150 = sbr.rel (%p1148) target = $region44
    $region43: #{res_block.8} parent=5 // pred_region
      %s1151 = ssub.s32 %s11, 2
      // Predicated region
      $region45: #{res_block.8} parent=43 // pred_check
        %p1152 = pneg %p133
      $region46: #{res_block.8} parent=43 // pred_check_branch
        %1154 = sbr.rel (%p1152) target = $region48
      $region47: #{res_block.8} parent=43 // pred_region
        %s1155 = smul.u32 41, %s23
        %p1156 = scmp.lt.s32.totalorder %s22, 1
        %s1157 = scalar_select %p1156, %s22, 1
        %p1158 = scmp.lt.s32.totalorder %s1155, 40
        %s1159 = scalar_select %p1158, %s1155, 40
        %s1160 = smul.addr %s1157, 41
        %s1161 = sadd.s32 %s1159, %s1160
        %s1162 = smul.addr %s1161, 4
        %s1163 = scalar_lea.vmem %s3, %s1162
      $region48: #{res_block.8} parent=43 // pred_fallthru
        _
      // Predicated region
      $region49: #{res_block.8} parent=43 // pred_check
        %p1164 = pneg %p161
      $region50: #{res_block.8} parent=43 // pred_check_branch
        %1166 = sbr.rel (%p1164) target = $region52
      $region51: #{res_block.8} parent=43 // pred_region
        %p1167 = scmp.lt.s32.totalorder %s22, 1
        %s1168 = scalar_select %p1167, %s22, 1
        %p1169 = scmp.lt.s32.totalorder %s23, 0
        %s1170 = scalar_select %p1169, %s23, 0
        %s1171 = sadd.s32 %s1170, %s1168
        %s1172 = smul.addr %s1171, 2
        %s1173 = scalar_lea.vmem %s4, %s1172
      $region52: #{res_block.8} parent=43 // pred_fallthru
        _
    $region44: #{res_block.8} parent=5 // pred_fallthru
      _
  $region6: #{res_block.8} parent=0 // loop_footer
    %s15 = sadd.s32 1, %s11
  $region7: #{res_block.8} parent=0 // loop_footer_branch
    %10 = sbr.rel target = $region3
  $region8: #{res_block.8} parent=0 // loop_exit
    _

// kernel: res_block.9
$region0: #{res_block.9}
  #allocation0 [shape = 'u32[]', space=smem, size = 0x4, offset = 0x4, fixed_abs, tag = 'smem constant byte address 0x4 - core index']
  #allocation1 [shape = 'u32[72,128]{1,0:T(1,128)}', space=vmem, size = 0x9000, scoped, tag = 'internal scratch']
  %s0 = inlined_call_operand.vmem [shape: bf16[2,328,128], index: 0, kind: input, shape index: {}]
  %s1 = inlined_call_operand.vmem [shape: f32[1,128], index: 1, kind: input, shape index: {}]
  %s2 = inlined_call_operand.vmem [shape: f32[1,128], index: 2, kind: input, shape index: {}]
  %s3 = inlined_call_operand.vmem [shape: bf16[2,328,128], index: 3, kind: input, shape index: {}]
  %s4 = inlined_call_operand.vmem [shape: f32[1,128], index: 4, kind: input, shape index: {}]
  %s5 = inlined_call_operand.vmem [shape: f32[1,128], index: 5, kind: input, shape index: {}]
  %s6 = inlined_call_operand.vmem [shape: f32[2,328,128], index: 6, kind: output, shape index: {}]
  %s7 = sld [smem:[#allocation0]]
  $region57: #{res_block.9} parent=0
    _
  %s9 = ssub.s32 1, %s7
  %s10 = scalar_select 0, %s9, %s7
  loop: start=0, step=1, limit=4
  $region2: #{res_block.9} parent=0 // loop_pre_header
    _
  $region3: #{res_block.9} parent=0 // loop_header
    %s12 = sphi 0, %s16
    %p13 = scmp.ge.s32.totalorder %s12, 4
    %s19 = sphi 0, %s31
    %s20 = sphi 0, %s27
    %s21 = sphi 0, %s19
    %s22 = sphi 0, %s20
    %s23 = sphi 0, %s21
    %s24 = sphi 0, %s22
    %s36 = sphi 0, %s38
    %s39 = sphi 0, %s36
    %s40 = sphi 0, %s39
    %s56 = sphi 0, %s40
    %s60 = sphi 0, %s60
    %s62 = sphi 0, %s60
    %s63 = sphi 0, %s62
    %s77 = sphi 0, %s63
    %s81 = sphi 0, %s81
    %s83 = sphi 0, %s81
    %s84 = sphi 0, %s83
    %s98 = sphi 0, %s84
    %s106 = sphi 0, %s108
    %s109 = sphi 0, %s106
    %s110 = sphi 0, %s109
    %s126 = sphi 0, %s110
    %s130 = sphi 0, %s130
    %s132 = sphi 0, %s130
    %s133 = sphi 0, %s132
    %s147 = sphi 0, %s133
    %s151 = sphi 0, %s151
    %s153 = sphi 0, %s151
    %s154 = sphi 0, %s153
    %s168 = sphi 0, %s154
    %s176 = sphi 0, %s178
    %s179 = sphi 0, %s176
    %s180 = sphi 0, %s179
    %s196 = sphi 0, %s180
  $region4: #{res_block.9} parent=0 // loop_header_branch
    %15 = sbr.rel (%p13) target = $region8
  $region5: #{res_block.9} parent=0 // loop_body
    %s17 = ssub.s32 %s12, 1
    %s18 = ssub.s32 %s12, 2
    %s25 = sadd.s32 1, %s20
    %p26 = scmp.ge.s32.totalorder %s25, 1
    %s27 = scalar_select %p26, 0, %s25
    %s28 = sadd.s32 1, %s19
    %s29 = scalar_select %p26, %s28, %s19
    %p30 = scmp.ge.s32.totalorder %s29, 2
    %s31 = scalar_select %p30, 0, %s29
    %s32 = ssub.s32 %s19, %s31
    %s33 = ssub.s32 %s20, %s27
    %s34 = sor.u32 %s32, %s33
    %p35 = scmp.eq.s32.totalorder %s34, 0
    %s37 = sadd.s32 %s36, 1
    %s38 = scalar_select %p35, %s36, %s37
    %p41 = pneg %p35
    %p42 = scmp.eq.s32.totalorder %s12, 1
    %p43 = por %p41, %p42
    %p44 = scmp.ne.s32.totalorder %s36, %s39
    %p45 = scmp.eq.s32.totalorder %s12, 0
    %p46 = por %p44, %p45
    %p47 = scmp.ne.s32.totalorder %s36, %s39
    %p48 = scmp.eq.s32.totalorder %s17, 1
    %p49 = por %p47, %p48
    %p50 = scmp.ne.s32.totalorder %s39, %s40
    %p51 = scmp.eq.s32.totalorder %s17, 0
    %p52 = por %p50, %p51
    %p53 = scmp.ne.s32.totalorder %s39, %s40
    %p54 = scmp.eq.s32.totalorder %s18, 1
    %p55 = por %p53, %p54
    %p57 = scmp.ne.s32.totalorder %s40, %s56
    %p58 = scmp.eq.s32.totalorder %s18, 0
    %p59 = por %p57, %p58
    %s61 = sadd.s32 %s60, 1
    %p64 = scmp.eq.s32.totalorder %s12, 1
    %p65 = scmp.ne.s32.totalorder %s60, %s62
    %p66 = scmp.eq.s32.totalorder %s12, 0
    %p67 = por %p65, %p66
    %p68 = scmp.ne.s32.totalorder %s60, %s62
    %p69 = scmp.eq.s32.totalorder %s17, 1
    %p70 = por %p68, %p69
    %p71 = scmp.ne.s32.totalorder %s62, %s63
    %p72 = scmp.eq.s32.totalorder %s17, 0
    %p73 = por %p71, %p72
    %p74 = scmp.ne.s32.totalorder %s62, %s63
    %p75 = scmp.eq.s32.totalorder %s18, 1
    %p76 = por %p74, %p75
    %p78 = scmp.ne.s32.totalorder %s63, %s77
    %p79 = scmp.eq.s32.totalorder %s18, 0
    %p80 = por %p78, %p79
    %s82 = sadd.s32 %s81, 1
    %p85 = scmp.eq.s32.totalorder %s12, 1
    %p86 = scmp.ne.s32.totalorder %s81, %s83
    %p87 = scmp.eq.s32.totalorder %s12, 0
    %p88 = por %p86, %p87
    %p89 = scmp.ne.s32.totalorder %s81, %s83
    %p90 = scmp.eq.s32.totalorder %s17, 1
    %p91 = por %p89, %p90
    %p92 = scmp.ne.s32.totalorder %s83, %s84
    %p93 = scmp.eq.s32.totalorder %s17, 0
    %p94 = por %p92, %p93
    %p95 = scmp.ne.s32.totalorder %s83, %s84
    %p96 = scmp.eq.s32.totalorder %s18, 1
    %p97 = por %p95, %p96
    %p99 = scmp.ne.s32.totalorder %s84, %s98
    %p100 = scmp.eq.s32.totalorder %s18, 0
    %p101 = por %p99, %p100
    %s102 = ssub.s32 %s19, %s31
    %s103 = ssub.s32 %s20, %s27
    %s104 = sor.u32 %s102, %s103
    %p105 = scmp.eq.s32.totalorder %s104, 0
    %s107 = sadd.s32 %s106, 1
    %s108 = scalar_select %p105, %s106, %s107
    %p111 = pneg %p105
    %p112 = scmp.eq.s32.totalorder %s12, 1
    %p113 = por %p111, %p112
    %p114 = scmp.ne.s32.totalorder %s106, %s109
    %p115 = scmp.eq.s32.totalorder %s12, 0
    %p116 = por %p114, %p115
    %p117 = scmp.ne.s32.totalorder %s106, %s109
    %p118 = scmp.eq.s32.totalorder %s17, 1
    %p119 = por %p117, %p118
    %p120 = scmp.ne.s32.totalorder %s109, %s110
    %p121 = scmp.eq.s32.totalorder %s17, 0
    %p122 = por %p120, %p121
    %p123 = scmp.ne.s32.totalorder %s109, %s110
    %p124 = scmp.eq.s32.totalorder %s18, 1
    %p125 = por %p123, %p124
    %p127 = scmp.ne.s32.totalorder %s110, %s126
    %p128 = scmp.eq.s32.totalorder %s18, 0
    %p129 = por %p127, %p128
    %s131 = sadd.s32 %s130, 1
    %p134 = scmp.eq.s32.totalorder %s12, 1
    %p135 = scmp.ne.s32.totalorder %s130, %s132
    %p136 = scmp.eq.s32.totalorder %s12, 0
    %p137 = por %p135, %p136
    %p138 = scmp.ne.s32.totalorder %s130, %s132
    %p139 = scmp.eq.s32.totalorder %s17, 1
    %p140 = por %p138, %p139
    %p141 = scmp.ne.s32.totalorder %s132, %s133
    %p142 = scmp.eq.s32.totalorder %s17, 0
    %p143 = por %p141, %p142
    %p144 = scmp.ne.s32.totalorder %s132, %s133
    %p145 = scmp.eq.s32.totalorder %s18, 1
    %p146 = por %p144, %p145
    %p148 = scmp.ne.s32.totalorder %s133, %s147
    %p149 = scmp.eq.s32.totalorder %s18, 0
    %p150 = por %p148, %p149
    %s152 = sadd.s32 %s151, 1
    %p155 = scmp.eq.s32.totalorder %s12, 1
    %p156 = scmp.ne.s32.totalorder %s151, %s153
    %p157 = scmp.eq.s32.totalorder %s12, 0
    %p158 = por %p156, %p157
    %p159 = scmp.ne.s32.totalorder %s151, %s153
    %p160 = scmp.eq.s32.totalorder %s17, 1
    %p161 = por %p159, %p160
    %p162 = scmp.ne.s32.totalorder %s153, %s154
    %p163 = scmp.eq.s32.totalorder %s17, 0
    %p164 = por %p162, %p163
    %p165 = scmp.ne.s32.totalorder %s153, %s154
    %p166 = scmp.eq.s32.totalorder %s18, 1
    %p167 = por %p165, %p166
    %p169 = scmp.ne.s32.totalorder %s154, %s168
    %p170 = scmp.eq.s32.totalorder %s18, 0
    %p171 = por %p169, %p170
    %s172 = ssub.s32 %s19, %s31
    %s173 = ssub.s32 %s20, %s27
    %s174 = sor.u32 %s172, %s173
    %p175 = scmp.eq.s32.totalorder %s174, 0
    %s177 = sadd.s32 %s176, 1
    %s178 = scalar_select %p175, %s176, %s177
    %p181 = pneg %p175
    %p182 = scmp.eq.s32.totalorder %s12, 1
    %p183 = por %p181, %p182
    %p184 = scmp.ne.s32.totalorder %s176, %s179
    %p185 = scmp.eq.s32.totalorder %s12, 0
    %p186 = por %p184, %p185
    %p187 = scmp.ne.s32.totalorder %s176, %s179
    %p188 = scmp.eq.s32.totalorder %s17, 1
    %p189 = por %p187, %p188
    %p190 = scmp.ne.s32.totalorder %s179, %s180
    %p191 = scmp.eq.s32.totalorder %s17, 0
    %p192 = por %p190, %p191
    %p193 = scmp.ne.s32.totalorder %s179, %s180
    %p194 = scmp.eq.s32.totalorder %s18, 1
    %p195 = por %p193, %p194
    %p197 = scmp.ne.s32.totalorder %s180, %s196
    %p198 = scmp.eq.s32.totalorder %s18, 0
    %p199 = por %p197, %p198
    %p200 = scmp.le.s32.totalorder 1, %s12
    %p201 = scmp.lt.s32.totalorder %s12, 3
    %p202 = pnand %p200, %p201
    %p203 = pneg %p202
    // Predicated region
    $region9: #{res_block.9} parent=5 // pred_check
      _
    $region10: #{res_block.9} parent=5 // pred_check_branch
      %205 = sbr.rel (%p202) target = $region12
    $region11: #{res_block.9} parent=5 // pred_region
      %s206 = ssub.s32 %s12, 1
      // Predicated region
      $region13: #{res_block.9} parent=11 // pred_check
        %p207 = pneg %p73
      $region14: #{res_block.9} parent=11 // pred_check_branch
        %209 = sbr.rel (%p207) target = $region16
      $region15: #{res_block.9} parent=11 // pred_region
        _
      $region16: #{res_block.9} parent=11 // pred_fallthru
        _
      // Predicated region
      $region17: #{res_block.9} parent=11 // pred_check
        %p210 = pneg %p94
      $region18: #{res_block.9} parent=11 // pred_check_branch
        %212 = sbr.rel (%p210) target = $region20
      $region19: #{res_block.9} parent=11 // pred_region
        _
      $region20: #{res_block.9} parent=11 // pred_fallthru
        _
      // Predicated region
      $region21: #{res_block.9} parent=11 // pred_check
        %p213 = pneg %p143
      $region22: #{res_block.9} parent=11 // pred_check_branch
        %215 = sbr.rel (%p213) target = $region24
      $region23: #{res_block.9} parent=11 // pred_region
        _
      $region24: #{res_block.9} parent=11 // pred_fallthru
        _
      // Predicated region
      $region25: #{res_block.9} parent=11 // pred_check
        %p216 = pneg %p164
      $region26: #{res_block.9} parent=11 // pred_check_branch
        %218 = sbr.rel (%p216) target = $region28
      $region27: #{res_block.9} parent=11 // pred_region
        _
      $region28: #{res_block.9} parent=11 // pred_fallthru
        _
    $region12: #{res_block.9} parent=5 // pred_fallthru
      _
    %p219 = scmp.lt.s32.totalorder %s12, 2
    // Predicated region
    $region29: #{res_block.9} parent=5 // pred_check
      %p220 = pneg %p219
    $region30: #{res_block.9} parent=5 // pred_check_branch
      %222 = sbr.rel (%p220) target = $region32
    $region31: #{res_block.9} parent=5 // pred_region
      // Predicated region
      $region33: #{res_block.9} parent=31 // pred_check
        %p223 = pneg %p46
      $region34: #{res_block.9} parent=31 // pred_check_branch
        %225 = sbr.rel (%p223) target = $region36
      $region35: #{res_block.9} parent=31 // pred_region
        %s226 = smul.u32 41, %s20
        %p227 = scmp.lt.s32.totalorder %s19, 1
        %s228 = scalar_select %p227, %s19, 1
        %p229 = scmp.lt.s32.totalorder %s226, 40
        %s230 = scalar_select %p229, %s226, 40
        %s231 = smul.addr %s228, 41
        %s232 = sadd.s32 %s230, %s231
        %s233 = smul.addr %s232, 4
        %s234 = scalar_lea.vmem %s0, %s233
        %s235 = smul.u32 41, %s20
      $region36: #{res_block.9} parent=31 // pred_fallthru
        _
      // Predicated region
      $region37: #{res_block.9} parent=31 // pred_check
        %p236 = pneg %p116
      $region38: #{res_block.9} parent=31 // pred_check_branch
        %238 = sbr.rel (%p236) target = $region40
      $region39: #{res_block.9} parent=31 // pred_region
        %s239 = smul.u32 41, %s20
        %p240 = scmp.lt.s32.totalorder %s19, 1
        %s241 = scalar_select %p240, %s19, 1
        %p242 = scmp.lt.s32.totalorder %s239, 40
        %s243 = scalar_select %p242, %s239, 40
        %s244 = smul.addr %s241, 41
        %s245 = sadd.s32 %s243, %s244
        %s246 = smul.addr %s245, 4
        %s247 = scalar_lea.vmem %s3, %s246
        %s248 = smul.u32 41, %s20
      $region40: #{res_block.9} parent=31 // pred_fallthru
        _
    $region32: #{res_block.9} parent=5 // pred_fallthru
      _
    %p249 = scmp.le.s32.totalorder 1, %s12
    %p250 = scmp.lt.s32.totalorder %s12, 3
    %p251 = pnand %p249, %p250
    %p252 = pneg %p251
    // Predicated region
    $region41: #{res_block.9} parent=5 // pred_check
      _
    $region42: #{res_block.9} parent=5 // pred_check_branch
      %254 = sbr.rel (%p251) target = $region44
    $region43: #{res_block.9} parent=5 // pred_region
      %s255 = ssub.s32 %s12, 1
      %s256 = smul.u32 41, %s22
      %p257 = scmp.lt.s32.totalorder %s21, 1
      %s258 = scalar_select %p257, %s21, 1
      %p259 = scmp.lt.s32.totalorder %s256, 40
      %s260 = scalar_select %p259, %s256, 40
      %s261 = smul.addr %s258, 41
      %s262 = sadd.s32 %s260, %s261
      %s263 = smul.addr %s262, 4
      %s264 = scalar_lea.vmem %s0, %s263
      %p265 = pneg %p52
      %p266 = pneg %p49
      %p267 = pneg %p73
      %p268 = pneg %p70
      %p269 = pneg %p94
      %p270 = pneg %p91
      %s271 = smul.u32 41, %s22
      %p272 = scmp.lt.s32.totalorder %s21, 1
      %s273 = scalar_select %p272, %s21, 1
      %p274 = scmp.lt.s32.totalorder %s271, 40
      %s275 = scalar_select %p274, %s271, 40
      %s276 = smul.addr %s273, 41
      %s277 = sadd.s32 %s275, %s276
      %s278 = smul.addr %s277, 4
      %s279 = scalar_lea.vmem %s3, %s278
      %p280 = pneg %p122
      %p281 = pneg %p119
      %p282 = pneg %p143
      %p283 = pneg %p140
      %p284 = pneg %p164
      %p285 = pneg %p161
      %p286 = pneg %p192
      %p287 = pneg %p189
      %s288 = smul.u32 41, %s22
      %p289 = scmp.lt.s32.totalorder %s21, 1
      %s290 = scalar_select %p289, %s21, 1
      %p291 = scmp.lt.s32.totalorder %s288, 40
      %s292 = scalar_select %p291, %s288, 40
      %s293 = smul.addr %s290, 41
      %s294 = sadd.s32 %s292, %s293
      %s295 = smul.addr %s294, 8
      %s296 = scalar_lea.vmem %s6, %s295
      %s297 = smul.u32 41, %s22
      %p298 = scmp.lt.s32.totalorder %s21, 1
      %s299 = scalar_select %p298, %s21, 1
      %p300 = scmp.lt.s32.totalorder %s297, 40
      %s301 = scalar_select %p300, %s297, 40
      %s302 = smul.addr %s299, 41
      %s303 = sadd.s32 %s301, %s302
      %s304 = smul.addr %s303, 4
      %s305 = scalar_lea.vmem %s0, %s304
      %s306 = smul.u32 41, %s22
      %s307 = smul.u32 41, %s22
      %p308 = scmp.lt.s32.totalorder %s21, 1
      %s309 = scalar_select %p308, %s21, 1
      %p310 = scmp.lt.s32.totalorder %s307, 40
      %s311 = scalar_select %p310, %s307, 40
      %s312 = smul.addr %s309, 41
      %s313 = sadd.s32 %s311, %s312
      %s314 = smul.addr %s313, 4
      %s315 = scalar_lea.vmem %s3, %s314
      %s316 = smul.u32 41, %s22
      %s317 = smul.u32 41, %s22
      %p318 = scmp.lt.s32.totalorder %s21, 1
      %s319 = scalar_select %p318, %s21, 1
      %p320 = scmp.lt.s32.totalorder %s317, 40
      %s321 = scalar_select %p320, %s317, 40
      %s322 = smul.addr %s319, 41
      %s323 = sadd.s32 %s321, %s322
      %s324 = smul.addr %s323, 8
      %s325 = scalar_lea.vmem %s6, %s324
      %s326 = smul.u32 41, %s22
      %v327 = vld [vmem:[%s305] sm:$0xf]
      %v328 = vld [vmem:[%s305 + $0x4] sm:$0xf]
      %v329 = vld [vmem:[%s305 + $0x8] sm:$0xf]
      %v330 = vld [vmem:[%s305 + $0xc] sm:$0xf]
      %v331 = vld [vmem:[%s305 + $0x10] sm:$0xf]
      %v332 = vld [vmem:[%s305 + $0x14] sm:$0xf]
      %v333 = vld [vmem:[%s305 + $0x18] sm:$0xf]
      %v334 = vld [vmem:[%s305 + $0x1c] sm:$0xf]
      %v335 = vld [vmem:[%s305 + $0x20] sm:$0xf]
      %v336 = vld [vmem:[%s305 + $0x24] sm:$0xf]
      %v337 = vld [vmem:[%s305 + $0x28] sm:$0xf]
      %v338 = vld [vmem:[%s305 + $0x2c] sm:$0xf]
      %v339 = vld [vmem:[%s305 + $0x30] sm:$0xf]
      %v340 = vld [vmem:[%s305 + $0x34] sm:$0xf]
      %v341 = vld [vmem:[%s305 + $0x38] sm:$0xf]
      %v342 = vld [vmem:[%s305 + $0x3c] sm:$0xf]
      %v343 = vld [vmem:[%s305 + $0x40] sm:$0xf]
      %v344 = vld [vmem:[%s305 + $0x44] sm:$0xf]
      %v345 = vld [vmem:[%s305 + $0x48] sm:$0xf]
      %v346 = vld [vmem:[%s305 + $0x4c] sm:$0xf]
      %v347 = vld [vmem:[%s305 + $0x50] sm:$0xf]
      %v348 = vld [vmem:[%s305 + $0x54] sm:$0xf]
      %v349 = vld [vmem:[%s305 + $0x58] sm:$0xf]
      %v350 = vld [vmem:[%s305 + $0x5c] sm:$0xf]
      %v351 = vld [vmem:[%s305 + $0x60] sm:$0xf]
      %v352 = vld [vmem:[%s305 + $0x64] sm:$0xf]
      %v353 = vld [vmem:[%s305 + $0x68] sm:$0xf]
      %v354 = vld [vmem:[%s305 + $0x6c] sm:$0xf]
      %v355 = vld [vmem:[%s305 + $0x70] sm:$0xf]
      %v356 = vld [vmem:[%s305 + $0x74] sm:$0xf]
      %v357 = vld [vmem:[%s305 + $0x78] sm:$0xf]
      %v358 = vld [vmem:[%s305 + $0x7c] sm:$0xf]
      %v359 = vld [vmem:[%s305 + $0x80] sm:$0xf]
      %v360 = vld [vmem:[%s305 + $0x84] sm:$0xf]
      %v361 = vld [vmem:[%s305 + $0x88] sm:$0xf]
      %v362 = vld [vmem:[%s305 + $0x8c] sm:$0xf]
      %v363 = vld [vmem:[%s305 + $0x90] sm:$0xf]
      %v364 = vld [vmem:[%s305 + $0x94] sm:$0xf]
      %v365 = vld [vmem:[%s305 + $0x98] sm:$0xf]
      %v366 = vld [vmem:[%s305 + $0x9c] sm:$0xf]
      %v367 = vld [vmem:[%s305 + $0xa0] sm:$0xf]
      %v368 = vunpack.c.l.bf16 %v327
      %v369 = vunpack.c.l.bf16 %v328
      %v370 = vunpack.c.l.bf16 %v329
      %v371 = vunpack.c.l.bf16 %v330
      %v372 = vunpack.c.l.bf16 %v331
      %v373 = vunpack.c.l.bf16 %v332
      %v374 = vunpack.c.l.bf16 %v333
      %v375 = vunpack.c.l.bf16 %v334
      %v376 = vunpack.c.l.bf16 %v335
      %v377 = vunpack.c.l.bf16 %v336
      %v378 = vunpack.c.l.bf16 %v337
      %v379 = vunpack.c.l.bf16 %v338
      %v380 = vunpack.c.l.bf16 %v339
      %v381 = vunpack.c.l.bf16 %v340
      %v382 = vunpack.c.l.bf16 %v341
      %v383 = vunpack.c.l.bf16 %v342
      %v384 = vunpack.c.l.bf16 %v343
      %v385 = vunpack.c.l.bf16 %v344
      %v386 = vunpack.c.l.bf16 %v345
      %v387 = vunpack.c.l.bf16 %v346
      %v388 = vunpack.c.l.bf16 %v347
      %v389 = vunpack.c.l.bf16 %v348
      %v390 = vunpack.c.l.bf16 %v349
      %v391 = vunpack.c.l.bf16 %v350
      %v392 = vunpack.c.l.bf16 %v351
      %v393 = vunpack.c.l.bf16 %v352
      %v394 = vunpack.c.l.bf16 %v353
      %v395 = vunpack.c.l.bf16 %v354
      %v396 = vunpack.c.l.bf16 %v355
      %v397 = vunpack.c.l.bf16 %v356
      %v398 = vunpack.c.l.bf16 %v357
      %v399 = vunpack.c.l.bf16 %v358
      %v400 = vunpack.c.l.bf16 %v359
      %v401 = vunpack.c.l.bf16 %v360
      %v402 = vunpack.c.l.bf16 %v361
      %v403 = vunpack.c.l.bf16 %v362
      %v404 = vunpack.c.l.bf16 %v363
      %v405 = vunpack.c.l.bf16 %v364
      %v406 = vunpack.c.l.bf16 %v365
      %v407 = vunpack.c.l.bf16 %v366
      %v408 = vunpack.c.l.bf16 %v367
      %v409 = vld [vmem:[%s1] sm:$0x1]
      %v411 = vperm.slane %v409, 0
      %v413 = vmul.f32 %v368, %v411
      %v414 = vmul.f32 %v369, %v411
      %v415 = vmul.f32 %v370, %v411
      %v416 = vmul.f32 %v371, %v411
      %v417 = vmul.f32 %v372, %v411
      %v418 = vmul.f32 %v373, %v411
      %v419 = vmul.f32 %v374, %v411
      %v420 = vmul.f32 %v375, %v411
      %v421 = vmul.f32 %v376, %v411
      %v422 = vmul.f32 %v377, %v411
      %v423 = vmul.f32 %v378, %v411
      %v424 = vmul.f32 %v379, %v411
      %v425 = vmul.f32 %v380, %v411
      %v426 = vmul.f32 %v381, %v411
      %v427 = vmul.f32 %v382, %v411
      %v428 = vmul.f32 %v383, %v411
      %v429 = vmul.f32 %v384, %v411
      %v430 = vmul.f32 %v385, %v411
      %v431 = vmul.f32 %v386, %v411
      %v432 = vmul.f32 %v387, %v411
      %v433 = vmul.f32 %v388, %v411
      %v434 = vmul.f32 %v389, %v411
      %v435 = vmul.f32 %v390, %v411
      %v436 = vmul.f32 %v391, %v411
      %v437 = vmul.f32 %v392, %v411
      %v438 = vmul.f32 %v393, %v411
      %v439 = vmul.f32 %v394, %v411
      %v440 = vmul.f32 %v395, %v411
      %v441 = vmul.f32 %v396, %v411
      %v442 = vmul.f32 %v397, %v411
      %v443 = vmul.f32 %v398, %v411
      %v444 = vmul.f32 %v399, %v411
      %v445 = vmul.f32 %v400, %v411
      %v446 = vmul.f32 %v401, %v411
      %v447 = vmul.f32 %v402, %v411
      %v448 = vmul.f32 %v403, %v411
      %v449 = vmul.f32 %v404, %v411
      %v450 = vmul.f32 %v405, %v411
      %v451 = vmul.f32 %v406, %v411
      %v452 = vmul.f32 %v407, %v411
      %v453 = vmul.f32 %v408, %v411
      %v454 = vld [vmem:[%s2] sm:$0x1]
      %v456 = vperm.slane %v454, 0
      %v458 = vadd.f32 %v413, %v456
      %v459 = vadd.f32 %v414, %v456
      %v460 = vadd.f32 %v415, %v456
      %v461 = vadd.f32 %v416, %v456
      %v462 = vadd.f32 %v417, %v456
      %v463 = vadd.f32 %v418, %v456
      %v464 = vadd.f32 %v419, %v456
      %v465 = vadd.f32 %v420, %v456
      %v466 = vadd.f32 %v421, %v456
      %v467 = vadd.f32 %v422, %v456
      %v468 = vadd.f32 %v423, %v456
      %v469 = vadd.f32 %v424, %v456
      %v470 = vadd.f32 %v425, %v456
      %v471 = vadd.f32 %v426, %v456
      %v472 = vadd.f32 %v427, %v456
      %v473 = vadd.f32 %v428, %v456
      %v474 = vadd.f32 %v429, %v456
      %v475 = vadd.f32 %v430, %v456
      %v476 = vadd.f32 %v431, %v456
      %v477 = vadd.f32 %v432, %v456
      %v478 = vadd.f32 %v433, %v456
      %v479 = vadd.f32 %v434, %v456
      %v480 = vadd.f32 %v435, %v456
      %v481 = vadd.f32 %v436, %v456
      %v482 = vadd.f32 %v437, %v456
      %v483 = vadd.f32 %v438, %v456
      %v484 = vadd.f32 %v439, %v456
      %v485 = vadd.f32 %v440, %v456
      %v486 = vadd.f32 %v441, %v456
      %v487 = vadd.f32 %v442, %v456
      %v488 = vadd.f32 %v443, %v456
      %v489 = vadd.f32 %v444, %v456
      %v490 = vadd.f32 %v445, %v456
      %v491 = vadd.f32 %v446, %v456
      %v492 = vadd.f32 %v447, %v456
      %v493 = vadd.f32 %v448, %v456
      %v494 = vadd.f32 %v449, %v456
      %v495 = vadd.f32 %v450, %v456
      %v496 = vadd.f32 %v451, %v456
      %v497 = vadd.f32 %v452, %v456
      %v498 = vadd.f32 %v453, %v456
      %v499 = vld [vmem:[%s315] sm:$0xf]
      %v500 = vld [vmem:[%s315 + $0x4] sm:$0xf]
      %v501 = vld [vmem:[%s315 + $0x8] sm:$0xf]
      %v502 = vld [vmem:[%s315 + $0xc] sm:$0xf]
      %v503 = vld [vmem:[%s315 + $0x10] sm:$0xf]
      %v504 = vld [vmem:[%s315 + $0x14] sm:$0xf]
      %v505 = vld [vmem:[%s315 + $0x18] sm:$0xf]
      %v506 = vld [vmem:[%s315 + $0x1c] sm:$0xf]
      %v507 = vld [vmem:[%s315 + $0x20] sm:$0xf]
      %v508 = vld [vmem:[%s315 + $0x24] sm:$0xf]
      %v509 = vld [vmem:[%s315 + $0x28] sm:$0xf]
      %v510 = vld [vmem:[%s315 + $0x2c] sm:$0xf]
      %v511 = vld [vmem:[%s315 + $0x30] sm:$0xf]
      %v512 = vld [vmem:[%s315 + $0x34] sm:$0xf]
      %v513 = vld [vmem:[%s315 + $0x38] sm:$0xf]
      %v514 = vld [vmem:[%s315 + $0x3c] sm:$0xf]
      %v515 = vld [vmem:[%s315 + $0x40] sm:$0xf]
      %v516 = vld [vmem:[%s315 + $0x44] sm:$0xf]
      %v517 = vld [vmem:[%s315 + $0x48] sm:$0xf]
      %v518 = vld [vmem:[%s315 + $0x4c] sm:$0xf]
      %v519 = vld [vmem:[%s315 + $0x50] sm:$0xf]
      %v520 = vld [vmem:[%s315 + $0x54] sm:$0xf]
      %v521 = vld [vmem:[%s315 + $0x58] sm:$0xf]
      %v522 = vld [vmem:[%s315 + $0x5c] sm:$0xf]
      %v523 = vld [vmem:[%s315 + $0x60] sm:$0xf]
      %v524 = vld [vmem:[%s315 + $0x64] sm:$0xf]
      %v525 = vld [vmem:[%s315 + $0x68] sm:$0xf]
      %v526 = vld [vmem:[%s315 + $0x6c] sm:$0xf]
      %v527 = vld [vmem:[%s315 + $0x70] sm:$0xf]
      %v528 = vld [vmem:[%s315 + $0x74] sm:$0xf]
      %v529 = vld [vmem:[%s315 + $0x78] sm:$0xf]
      %v530 = vld [vmem:[%s315 + $0x7c] sm:$0xf]
      %v531 = vld [vmem:[%s315 + $0x80] sm:$0xf]
      %v532 = vld [vmem:[%s315 + $0x84] sm:$0xf]
      %v533 = vld [vmem:[%s315 + $0x88] sm:$0xf]
      %v534 = vld [vmem:[%s315 + $0x8c] sm:$0xf]
      %v535 = vld [vmem:[%s315 + $0x90] sm:$0xf]
      %v536 = vld [vmem:[%s315 + $0x94] sm:$0xf]
      %v537 = vld [vmem:[%s315 + $0x98] sm:$0xf]
      %v538 = vld [vmem:[%s315 + $0x9c] sm:$0xf]
      %v539 = vld [vmem:[%s315 + $0xa0] sm:$0xf]
      %v540 = vunpack.c.l.bf16 %v499
      %v541 = vunpack.c.l.bf16 %v500
      %v542 = vunpack.c.l.bf16 %v501
      %v543 = vunpack.c.l.bf16 %v502
      %v544 = vunpack.c.l.bf16 %v503
      %v545 = vunpack.c.l.bf16 %v504
      %v546 = vunpack.c.l.bf16 %v505
      %v547 = vunpack.c.l.bf16 %v506
      %v548 = vunpack.c.l.bf16 %v507
      %v549 = vunpack.c.l.bf16 %v508
      %v550 = vunpack.c.l.bf16 %v509
      %v551 = vunpack.c.l.bf16 %v510
      %v552 = vunpack.c.l.bf16 %v511
      %v553 = vunpack.c.l.bf16 %v512
      %v554 = vunpack.c.l.bf16 %v513
      %v555 = vunpack.c.l.bf16 %v514
      %v556 = vunpack.c.l.bf16 %v515
      %v557 = vunpack.c.l.bf16 %v516
      %v558 = vunpack.c.l.bf16 %v517
      %v559 = vunpack.c.l.bf16 %v518
      %v560 = vunpack.c.l.bf16 %v519
      %v561 = vunpack.c.l.bf16 %v520
      %v562 = vunpack.c.l.bf16 %v521
      %v563 = vunpack.c.l.bf16 %v522
      %v564 = vunpack.c.l.bf16 %v523
      %v565 = vunpack.c.l.bf16 %v524
      %v566 = vunpack.c.l.bf16 %v525
      %v567 = vunpack.c.l.bf16 %v526
      %v568 = vunpack.c.l.bf16 %v527
      %v569 = vunpack.c.l.bf16 %v528
      %v570 = vunpack.c.l.bf16 %v529
      %v571 = vunpack.c.l.bf16 %v530
      %v572 = vunpack.c.l.bf16 %v531
      %v573 = vunpack.c.l.bf16 %v532
      %v574 = vunpack.c.l.bf16 %v533
      %v575 = vunpack.c.l.bf16 %v534
      %v576 = vunpack.c.l.bf16 %v535
      %v577 = vunpack.c.l.bf16 %v536
      %v578 = vunpack.c.l.bf16 %v537
      %v579 = vunpack.c.l.bf16 %v538
      %v580 = vunpack.c.l.bf16 %v539
      %v581 = vld [vmem:[%s4] sm:$0x1]
      %v583 = vperm.slane %v581, 0
      %v585 = vmul.f32 %v540, %v583
      %v586 = vmul.f32 %v541, %v583
      %v587 = vmul.f32 %v542, %v583
      %v588 = vmul.f32 %v543, %v583
      %v589 = vmul.f32 %v544, %v583
      %v590 = vmul.f32 %v545, %v583
      %v591 = vmul.f32 %v546, %v583
      %v592 = vmul.f32 %v547, %v583
      %v593 = vmul.f32 %v548, %v583
      %v594 = vmul.f32 %v549, %v583
      %v595 = vmul.f32 %v550, %v583
      %v596 = vmul.f32 %v551, %v583
      %v597 = vmul.f32 %v552, %v583
      %v598 = vmul.f32 %v553, %v583
      %v599 = vmul.f32 %v554, %v583
      %v600 = vmul.f32 %v555, %v583
      %v601 = vmul.f32 %v556, %v583
      %v602 = vmul.f32 %v557, %v583
      %v603 = vmul.f32 %v558, %v583
      %v604 = vmul.f32 %v559, %v583
      %v605 = vmul.f32 %v560, %v583
      %v606 = vmul.f32 %v561, %v583
      %v607 = vmul.f32 %v562, %v583
      %v608 = vmul.f32 %v563, %v583
      %v609 = vmul.f32 %v564, %v583
      %v610 = vmul.f32 %v565, %v583
      %v611 = vmul.f32 %v566, %v583
      %v612 = vmul.f32 %v567, %v583
      %v613 = vmul.f32 %v568, %v583
      %v614 = vmul.f32 %v569, %v583
      %v615 = vmul.f32 %v570, %v583
      %v616 = vmul.f32 %v571, %v583
      %v617 = vmul.f32 %v572, %v583
      %v618 = vmul.f32 %v573, %v583
      %v619 = vmul.f32 %v574, %v583
      %v620 = vmul.f32 %v575, %v583
      %v621 = vmul.f32 %v576, %v583
      %v622 = vmul.f32 %v577, %v583
      %v623 = vmul.f32 %v578, %v583
      %v624 = vmul.f32 %v579, %v583
      %v625 = vmul.f32 %v580, %v583
      %v626 = vld [vmem:[%s5] sm:$0x1]
      %v628 = vperm.slane %v626, 0
      %v630 = vadd.f32 %v585, %v628
      %v631 = vadd.f32 %v586, %v628
      %v632 = vadd.f32 %v587, %v628
      %v633 = vadd.f32 %v588, %v628
      %v634 = vadd.f32 %v589, %v628
      %v635 = vadd.f32 %v590, %v628
      %v636 = vadd.f32 %v591, %v628
      %v637 = vadd.f32 %v592, %v628
      %v638 = vadd.f32 %v593, %v628
      %v639 = vadd.f32 %v594, %v628
      %v640 = vadd.f32 %v595, %v628
      %v641 = vadd.f32 %v596, %v628
      %v642 = vadd.f32 %v597, %v628
      %v643 = vadd.f32 %v598, %v628
      %v644 = vadd.f32 %v599, %v628
      %v645 = vadd.f32 %v600, %v628
      %v646 = vadd.f32 %v601, %v628
      %v647 = vadd.f32 %v602, %v628
      %v648 = vadd.f32 %v603, %v628
      %v649 = vadd.f32 %v604, %v628
      %v650 = vadd.f32 %v605, %v628
      %v651 = vadd.f32 %v606, %v628
      %v652 = vadd.f32 %v607, %v628
      %v653 = vadd.f32 %v608, %v628
      %v654 = vadd.f32 %v609, %v628
      %v655 = vadd.f32 %v610, %v628
      %v656 = vadd.f32 %v611, %v628
      %v657 = vadd.f32 %v612, %v628
      %v658 = vadd.f32 %v613, %v628
      %v659 = vadd.f32 %v614, %v628
      %v660 = vadd.f32 %v615, %v628
      %v661 = vadd.f32 %v616, %v628
      %v662 = vadd.f32 %v617, %v628
      %v663 = vadd.f32 %v618, %v628
      %v664 = vadd.f32 %v619, %v628
      %v665 = vadd.f32 %v620, %v628
      %v666 = vadd.f32 %v621, %v628
      %v667 = vadd.f32 %v622, %v628
      %v668 = vadd.f32 %v623, %v628
      %v669 = vadd.f32 %v624, %v628
      %v670 = vadd.f32 %v625, %v628
      %v671 = vadd.f32 %v458, %v630
      %v672 = vadd.f32 %v459, %v631
      %v673 = vadd.f32 %v460, %v632
      %v674 = vadd.f32 %v461, %v633
      %v675 = vadd.f32 %v462, %v634
      %v676 = vadd.f32 %v463, %v635
      %v677 = vadd.f32 %v464, %v636
      %v678 = vadd.f32 %v465, %v637
      %v679 = vadd.f32 %v466, %v638
      %v680 = vadd.f32 %v467, %v639
      %v681 = vadd.f32 %v468, %v640
      %v682 = vadd.f32 %v469, %v641
      %v683 = vadd.f32 %v470, %v642
      %v684 = vadd.f32 %v471, %v643
      %v685 = vadd.f32 %v472, %v644
      %v686 = vadd.f32 %v473, %v645
      %v687 = vadd.f32 %v474, %v646
      %v688 = vadd.f32 %v475, %v647
      %v689 = vadd.f32 %v476, %v648
      %v690 = vadd.f32 %v477, %v649
      %v691 = vadd.f32 %v478, %v650
      %v692 = vadd.f32 %v479, %v651
      %v693 = vadd.f32 %v480, %v652
      %v694 = vadd.f32 %v481, %v653
      %v695 = vadd.f32 %v482, %v654
      %v696 = vadd.f32 %v483, %v655
      %v697 = vadd.f32 %v484, %v656
      %v698 = vadd.f32 %v485, %v657
      %v699 = vadd.f32 %v486, %v658
      %v700 = vadd.f32 %v487, %v659
      %v701 = vadd.f32 %v488, %v660
      %v702 = vadd.f32 %v489, %v661
      %v703 = vadd.f32 %v490, %v662
      %v704 = vadd.f32 %v491, %v663
      %v705 = vadd.f32 %v492, %v664
      %v706 = vadd.f32 %v493, %v665
      %v707 = vadd.f32 %v494, %v666
      %v708 = vadd.f32 %v495, %v667
      %v709 = vadd.f32 %v496, %v668
      %v710 = vadd.f32 %v497, %v669
      %v711 = vadd.f32 %v498, %v670
      %v712 = vmax.f32 %v671, 0.0
      %v713 = vmax.f32 %v672, 0.0
      %v714 = vmax.f32 %v673, 0.0
      %v715 = vmax.f32 %v674, 0.0
      %v716 = vmax.f32 %v675, 0.0
      %v717 = vmax.f32 %v676, 0.0
      %v718 = vmax.f32 %v677, 0.0
      %v719 = vmax.f32 %v678, 0.0
      %v720 = vmax.f32 %v679, 0.0
      %v721 = vmax.f32 %v680, 0.0
      %v722 = vmax.f32 %v681, 0.0
      %v723 = vmax.f32 %v682, 0.0
      %v724 = vmax.f32 %v683, 0.0
      %v725 = vmax.f32 %v684, 0.0
      %v726 = vmax.f32 %v685, 0.0
      %v727 = vmax.f32 %v686, 0.0
      %v728 = vmax.f32 %v687, 0.0
      %v729 = vmax.f32 %v688, 0.0
      %v730 = vmax.f32 %v689, 0.0
      %v731 = vmax.f32 %v690, 0.0
      %v732 = vmax.f32 %v691, 0.0
      %v733 = vmax.f32 %v692, 0.0
      %v734 = vmax.f32 %v693, 0.0
      %v735 = vmax.f32 %v694, 0.0
      %v736 = vmax.f32 %v695, 0.0
      %v737 = vmax.f32 %v696, 0.0
      %v738 = vmax.f32 %v697, 0.0
      %v739 = vmax.f32 %v698, 0.0
      %v740 = vmax.f32 %v699, 0.0
      %v741 = vmax.f32 %v700, 0.0
      %v742 = vmax.f32 %v701, 0.0
      %v743 = vmax.f32 %v702, 0.0
      %v744 = vmax.f32 %v703, 0.0
      %v745 = vmax.f32 %v704, 0.0
      %v746 = vmax.f32 %v705, 0.0
      %v747 = vmax.f32 %v706, 0.0
      %v748 = vmax.f32 %v707, 0.0
      %v749 = vmax.f32 %v708, 0.0
      %v750 = vmax.f32 %v709, 0.0
      %v751 = vmax.f32 %v710, 0.0
      %v752 = vmax.f32 %v711, 0.0
      %753 = vst [vmem:[%s325] sm:$0xff] %v712
      %754 = vst [vmem:[%s325 + $0x8] sm:$0xff] %v713
      %755 = vst [vmem:[%s325 + $0x10] sm:$0xff] %v714
      %756 = vst [vmem:[%s325 + $0x18] sm:$0xff] %v715
      %757 = vst [vmem:[%s325 + $0x20] sm:$0xff] %v716
      %758 = vst [vmem:[%s325 + $0x28] sm:$0xff] %v717
      %759 = vst [vmem:[%s325 + $0x30] sm:$0xff] %v718
      %760 = vst [vmem:[%s325 + $0x38] sm:$0xff] %v719
      %761 = vst [vmem:[%s325 + $0x40] sm:$0xff] %v720
      %762 = vst [vmem:[%s325 + $0x48] sm:$0xff] %v721
      %763 = vst [vmem:[%s325 + $0x50] sm:$0xff] %v722
      %764 = vst [vmem:[%s325 + $0x58] sm:$0xff] %v723
      %765 = vst [vmem:[%s325 + $0x60] sm:$0xff] %v724
      %766 = vst [vmem:[%s325 + $0x68] sm:$0xff] %v725
      %767 = vst [vmem:[%s325 + $0x70] sm:$0xff] %v726
      %768 = vst [vmem:[%s325 + $0x78] sm:$0xff] %v727
      %769 = vst [vmem:[%s325 + $0x80] sm:$0xff] %v728
      %770 = vst [vmem:[%s325 + $0x88] sm:$0xff] %v729
      %771 = vst [vmem:[%s325 + $0x90] sm:$0xff] %v730
      %772 = vst [vmem:[%s325 + $0x98] sm:$0xff] %v731
      %773 = vst [vmem:[%s325 + $0xa0] sm:$0xff] %v732
      %774 = vst [vmem:[%s325 + $0xa8] sm:$0xff] %v733
      %775 = vst [vmem:[%s325 + $0xb0] sm:$0xff] %v734
      %776 = vst [vmem:[%s325 + $0xb8] sm:$0xff] %v735
      %777 = vst [vmem:[%s325 + $0xc0] sm:$0xff] %v736
      %778 = vst [vmem:[%s325 + $0xc8] sm:$0xff] %v737
      %779 = vst [vmem:[%s325 + $0xd0] sm:$0xff] %v738
      %780 = vst [vmem:[%s325 + $0xd8] sm:$0xff] %v739
      %781 = vst [vmem:[%s325 + $0xe0] sm:$0xff] %v740
      %782 = vst [vmem:[%s325 + $0xe8] sm:$0xff] %v741
      %783 = vst [vmem:[%s325 + $0xf0] sm:$0xff] %v742
      %784 = vst [vmem:[%s325 + $0xf8] sm:$0xff] %v743
      %785 = vst [vmem:[%s325 + $0x100] sm:$0xff] %v744
      %786 = vst [vmem:[%s325 + $0x108] sm:$0xff] %v745
      %787 = vst [vmem:[%s325 + $0x110] sm:$0xff] %v746
      %788 = vst [vmem:[%s325 + $0x118] sm:$0xff] %v747
      %789 = vst [vmem:[%s325 + $0x120] sm:$0xff] %v748
      %790 = vst [vmem:[%s325 + $0x128] sm:$0xff] %v749
      %791 = vst [vmem:[%s325 + $0x130] sm:$0xff] %v750
      %792 = vst [vmem:[%s325 + $0x138] sm:$0xff] %v751
      %793 = vst [vmem:[%s325 + $0x140] sm:$0xff] %v752
      %s794 = smul.u32 41, %s22
      %p795 = scmp.lt.s32.totalorder %s21, 1
      %s796 = scalar_select %p795, %s21, 1
      %p797 = scmp.lt.s32.totalorder %s794, 40
      %s798 = scalar_select %p797, %s794, 40
      %s799 = smul.addr %s796, 41
      %s800 = sadd.s32 %s798, %s799
      %s801 = smul.addr %s800, 8
      %s802 = scalar_lea.vmem %s6, %s801
      // Predicated region
      $region45: #{res_block.9} parent=43 // pred_check
        %p803 = pneg %p189
      $region46: #{res_block.9} parent=43 // pred_check_branch
        %805 = sbr.rel (%p803) target = $region48
      $region47: #{res_block.9} parent=43 // pred_region
        %s806 = smul.u32 41, %s22
      $region48: #{res_block.9} parent=43 // pred_fallthru
        _
    $region44: #{res_block.9} parent=5 // pred_fallthru
      _
    %p807 = scmp.le.s32.totalorder 2, %s12
    // Predicated region
    $region49: #{res_block.9} parent=5 // pred_check
      %p808 = pneg %p807
    $region50: #{res_block.9} parent=5 // pred_check_branch
      %810 = sbr.rel (%p808) target = $region52
    $region51: #{res_block.9} parent=5 // pred_region
      %s811 = ssub.s32 %s12, 2
      // Predicated region
      $region53: #{res_block.9} parent=51 // pred_check
        %p812 = pneg %p195
      $region54: #{res_block.9} parent=51 // pred_check_branch
        %814 = sbr.rel (%p812) target = $region56
      $region55: #{res_block.9} parent=51 // pred_region
        %s815 = smul.u32 41, %s24
        %p816 = scmp.lt.s32.totalorder %s23, 1
        %s817 = scalar_select %p816, %s23, 1
        %p818 = scmp.lt.s32.totalorder %s815, 40
        %s819 = scalar_select %p818, %s815, 40
        %s820 = smul.addr %s817, 41
        %s821 = sadd.s32 %s819, %s820
        %s822 = smul.addr %s821, 8
        %s823 = scalar_lea.vmem %s6, %s822
      $region56: #{res_block.9} parent=51 // pred_fallthru
        _
    $region52: #{res_block.9} parent=5 // pred_fallthru
      _
  $region6: #{res_block.9} parent=0 // loop_footer
    %s16 = sadd.s32 1, %s12
  $region7: #{res_block.9} parent=0 // loop_footer_branch
    %11 = sbr.rel target = $region3
  $region8: #{res_block.9} parent=0 // loop_exit
    _

// kernel: res_block.5
$region0: #{res_block.5}
  #allocation0 [shape = 'u32[]', space=smem, size = 0x4, offset = 0x4, fixed_abs, tag = 'smem constant byte address 0x4 - core index']
  #allocation1 [shape = 'u32[72,128]{1,0:T(1,128)}', space=vmem, size = 0x9000, scoped, tag = 'internal scratch']
  %s0 = inlined_call_operand.vmem [shape: bf16[2,984,4], index: 0, kind: input, shape index: {}]
  %s1 = inlined_call_operand.vmem [shape: bf16[9,4,128], index: 1, kind: input, shape index: {}]
  %s2 = inlined_call_operand.vmem [shape: f32[984,1], index: 2, kind: input, shape index: {}]
  %s3 = inlined_call_operand.vmem [shape: bf16[2,328,128], index: 3, kind: output, shape index: {0}]
  %s4 = inlined_call_operand.vmem [shape: f32[2,1,2,128], index: 4, kind: output, shape index: {1}]
  %5 = xla_tuple %s3, %s4
  %s6 = sld [smem:[#allocation0]]
  $region53: #{res_block.5} parent=0
    _
  %s8 = ssub.s32 1, %s6
  %s9 = scalar_select 0, %s8, %s6
  loop: start=0, step=1, limit=4
  $region2: #{res_block.5} parent=0 // loop_pre_header
    _
  $region3: #{res_block.5} parent=0 // loop_header
    %s11 = sphi 0, %s15
    %p12 = scmp.ge.s32.totalorder %s11, 4
    %s18 = sphi 0, %s30
    %s19 = sphi 0, %s26
    %s20 = sphi 0, %s18
    %s21 = sphi 0, %s19
    %s22 = sphi 0, %s20
    %s23 = sphi 0, %s21
    %s33 = sphi 0, %s35
    %s36 = sphi 0, %s33
    %s37 = sphi 0, %s36
    %s53 = sphi 0, %s37
    %s57 = sphi 0, %s57
    %s59 = sphi 0, %s57
    %s60 = sphi 0, %s59
    %s74 = sphi 0, %s60
    %s82 = sphi 0, %s84
    %s85 = sphi 0, %s82
    %s86 = sphi 0, %s85
    %s102 = sphi 0, %s86
    %s110 = sphi 0, %s112
    %s113 = sphi 0, %s110
    %s114 = sphi 0, %s113
    %s130 = sphi 0, %s114
    %s138 = sphi 0, %s140
    %s141 = sphi 0, %s138
    %s142 = sphi 0, %s141
    %s158 = sphi 0, %s142
  $region4: #{res_block.5} parent=0 // loop_header_branch
    %14 = sbr.rel (%p12) target = $region8
  $region5: #{res_block.5} parent=0 // loop_body
    %s16 = ssub.s32 %s11, 1
    %s17 = ssub.s32 %s11, 2
    %s24 = sadd.s32 1, %s19
    %p25 = scmp.ge.s32.totalorder %s24, 1
    %s26 = scalar_select %p25, 0, %s24
    %s27 = sadd.s32 1, %s18
    %s28 = scalar_select %p25, %s27, %s18
    %p29 = scmp.ge.s32.totalorder %s28, 2
    %s30 = scalar_select %p29, 0, %s28
    %s31 = ssub.s32 %s18, %s30
    %p32 = scmp.eq.s32.totalorder %s31, 0
    %s34 = sadd.s32 %s33, 1
    %s35 = scalar_select %p32, %s33, %s34
    %p38 = pneg %p32
    %p39 = scmp.eq.s32.totalorder %s11, 1
    %p40 = por %p38, %p39
    %p41 = scmp.ne.s32.totalorder %s33, %s36
    %p42 = scmp.eq.s32.totalorder %s11, 0
    %p43 = por %p41, %p42
    %p44 = scmp.ne.s32.totalorder %s33, %s36
    %p45 = scmp.eq.s32.totalorder %s16, 1
    %p46 = por %p44, %p45
    %p47 = scmp.ne.s32.totalorder %s36, %s37
    %p48 = scmp.eq.s32.totalorder %s16, 0
    %p49 = por %p47, %p48
    %p50 = scmp.ne.s32.totalorder %s36, %s37
    %p51 = scmp.eq.s32.totalorder %s17, 1
    %p52 = por %p50, %p51
    %p54 = scmp.ne.s32.totalorder %s37, %s53
    %p55 = scmp.eq.s32.totalorder %s17, 0
    %p56 = por %p54, %p55
    %s58 = sadd.s32 %s57, 1
    %p61 = scmp.eq.s32.totalorder %s11, 1
    %p62 = scmp.ne.s32.totalorder %s57, %s59
    %p63 = scmp.eq.s32.totalorder %s11, 0
    %p64 = por %p62, %p63
    %p65 = scmp.ne.s32.totalorder %s57, %s59
    %p66 = scmp.eq.s32.totalorder %s16, 1
    %p67 = por %p65, %p66
    %p68 = scmp.ne.s32.totalorder %s59, %s60
    %p69 = scmp.eq.s32.totalorder %s16, 0
    %p70 = por %p68, %p69
    %p71 = scmp.ne.s32.totalorder %s59, %s60
    %p72 = scmp.eq.s32.totalorder %s17, 1
    %p73 = por %p71, %p72
    %p75 = scmp.ne.s32.totalorder %s60, %s74
    %p76 = scmp.eq.s32.totalorder %s17, 0
    %p77 = por %p75, %p76
    %s78 = sadd.s32 %s19, 1
    %s79 = sadd.s32 %s26, 1
    %s80 = ssub.s32 %s78, %s79
    %p81 = scmp.eq.s32.totalorder %s80, 0
    %s83 = sadd.s32 %s82, 1
    %s84 = scalar_select %p81, %s82, %s83
    %p87 = pneg %p81
    %p88 = scmp.eq.s32.totalorder %s11, 1
    %p89 = por %p87, %p88
    %p90 = scmp.ne.s32.totalorder %s82, %s85
    %p91 = scmp.eq.s32.totalorder %s11, 0
    %p92 = por %p90, %p91
    %p93 = scmp.ne.s32.totalorder %s82, %s85
    %p94 = scmp.eq.s32.totalorder %s16, 1
    %p95 = por %p93, %p94
    %p96 = scmp.ne.s32.totalorder %s85, %s86
    %p97 = scmp.eq.s32.totalorder %s16, 0
    %p98 = por %p96, %p97
    %p99 = scmp.ne.s32.totalorder %s85, %s86
    %p100 = scmp.eq.s32.totalorder %s17, 1
    %p101 = por %p99, %p100
    %p103 = scmp.ne.s32.totalorder %s86, %s102
    %p104 = scmp.eq.s32.totalorder %s17, 0
    %p105 = por %p103, %p104
    %s106 = ssub.s32 %s18, %s30
    %s107 = ssub.s32 %s19, %s26
    %s108 = sor.u32 %s106, %s107
    %p109 = scmp.eq.s32.totalorder %s108, 0
    %s111 = sadd.s32 %s110, 1
    %s112 = scalar_select %p109, %s110, %s111
    %p115 = pneg %p109
    %p116 = scmp.eq.s32.totalorder %s11, 1
    %p117 = por %p115, %p116
    %p118 = scmp.ne.s32.totalorder %s110, %s113
    %p119 = scmp.eq.s32.totalorder %s11, 0
    %p120 = por %p118, %p119
    %p121 = scmp.ne.s32.totalorder %s110, %s113
    %p122 = scmp.eq.s32.totalorder %s16, 1
    %p123 = por %p121, %p122
    %p124 = scmp.ne.s32.totalorder %s113, %s114
    %p125 = scmp.eq.s32.totalorder %s16, 0
    %p126 = por %p124, %p125
    %p127 = scmp.ne.s32.totalorder %s113, %s114
    %p128 = scmp.eq.s32.totalorder %s17, 1
    %p129 = por %p127, %p128
    %p131 = scmp.ne.s32.totalorder %s114, %s130
    %p132 = scmp.eq.s32.totalorder %s17, 0
    %p133 = por %p131, %p132
    %s134 = ssub.s32 %s18, %s30
    %s135 = ssub.s32 %s19, %s26
    %s136 = sor.u32 %s134, %s135
    %p137 = scmp.eq.s32.totalorder %s136, 0
    %s139 = sadd.s32 %s138, 1
    %s140 = scalar_select %p137, %s138, %s139
    %p143 = pneg %p137
    %p144 = scmp.eq.s32.totalorder %s11, 1
    %p145 = por %p143, %p144
    %p146 = scmp.ne.s32.totalorder %s138, %s141
    %p147 = scmp.eq.s32.totalorder %s11, 0
    %p148 = por %p146, %p147
    %p149 = scmp.ne.s32.totalorder %s138, %s141
    %p150 = scmp.eq.s32.totalorder %s16, 1
    %p151 = por %p149, %p150
    %p152 = scmp.ne.s32.totalorder %s141, %s142
    %p153 = scmp.eq.s32.totalorder %s16, 0
    %p154 = por %p152, %p153
    %p155 = scmp.ne.s32.totalorder %s141, %s142
    %p156 = scmp.eq.s32.totalorder %s17, 1
    %p157 = por %p155, %p156
    %p159 = scmp.ne.s32.totalorder %s142, %s158
    %p160 = scmp.eq.s32.totalorder %s17, 0
    %p161 = por %p159, %p160
    %p162 = scmp.le.s32.totalorder 1, %s11
    %p163 = scmp.lt.s32.totalorder %s11, 3
    %p164 = pnand %p162, %p163
    %p165 = pneg %p164
    // Predicated region
    $region9: #{res_block.5} parent=5 // pred_check
      _
    $region10: #{res_block.5} parent=5 // pred_check_branch
      %167 = sbr.rel (%p164) target = $region12
    $region11: #{res_block.5} parent=5 // pred_region
      %s168 = ssub.s32 %s11, 1
      // Predicated region
      $region13: #{res_block.5} parent=11 // pred_check
        %p169 = pneg %p70
      $region14: #{res_block.5} parent=11 // pred_check_branch
        %171 = sbr.rel (%p169) target = $region16
      $region15: #{res_block.5} parent=11 // pred_region
        _
      $region16: #{res_block.5} parent=11 // pred_fallthru
        _
      // Predicated region
      $region17: #{res_block.5} parent=11 // pred_check
        %p172 = pneg %p98
      $region18: #{res_block.5} parent=11 // pred_check_branch
        %174 = sbr.rel (%p172) target = $region20
      $region19: #{res_block.5} parent=11 // pred_region
        %s175 = sadd.s32 %s21, 1
        %s176 = smul.u32 41, %s175
        %p177 = scmp.lt.s32.totalorder %s176, 122
        %s178 = scalar_select %p177, %s176, 122
        %s179 = smul.addr %s178, 8
        %s180 = scalar_lea.vmem %s2, %s179
        %s181 = sadd.s32 %s21, 1
        %s182 = smul.u32 41, %s181
      $region20: #{res_block.5} parent=11 // pred_fallthru
        _
    $region12: #{res_block.5} parent=5 // pred_fallthru
      _
    %p183 = scmp.lt.s32.totalorder %s11, 2
    // Predicated region
    $region21: #{res_block.5} parent=5 // pred_check
      %p184 = pneg %p183
    $region22: #{res_block.5} parent=5 // pred_check_branch
      %186 = sbr.rel (%p184) target = $region24
    $region23: #{res_block.5} parent=5 // pred_region
      // Predicated region
      $region25: #{res_block.5} parent=23 // pred_check
        %p187 = pneg %p43
      $region26: #{res_block.5} parent=23 // pred_check_branch
        %189 = sbr.rel (%p187) target = $region28
      $region27: #{res_block.5} parent=23 // pred_region
        %p190 = scmp.lt.s32.totalorder %s18, 1
        %s191 = scalar_select %p190, %s18, 1
        %s192 = smul.addr %s191, 123
        %s193 = smul.addr %s192, 4
        %s194 = scalar_lea.vmem %s0, %s193
      $region28: #{res_block.5} parent=23 // pred_fallthru
        _
    $region24: #{res_block.5} parent=5 // pred_fallthru
      _
    %p195 = scmp.le.s32.totalorder 1, %s11
    %p196 = scmp.lt.s32.totalorder %s11, 3
    %p197 = pnand %p195, %p196
    %p198 = pneg %p197
    // Predicated region
    $region29: #{res_block.5} parent=5 // pred_check
      _
    $region30: #{res_block.5} parent=5 // pred_check_branch
      %200 = sbr.rel (%p197) target = $region32
    $region31: #{res_block.5} parent=5 // pred_region
      %s201 = ssub.s32 %s11, 1
      %p202 = scmp.lt.s32.totalorder %s20, 1
      %s203 = scalar_select %p202, %s20, 1
      %s204 = smul.addr %s203, 123
      %s205 = smul.addr %s204, 4
      %s206 = scalar_lea.vmem %s0, %s205
      %p207 = pneg %p49
      %p208 = pneg %p46
      %p209 = pneg %p70
      %p210 = pneg %p67
      %s211 = sadd.s32 %s21, 1
      %s212 = smul.u32 41, %s211
      %p213 = scmp.lt.s32.totalorder %s212, 122
      %s214 = scalar_select %p213, %s212, 122
      %s215 = smul.addr %s214, 8
      %s216 = scalar_lea.vmem %s2, %s215
      %p217 = pneg %p98
      %p218 = pneg %p95
      %p219 = pneg %p126
      %p220 = pneg %p123
      %s221 = smul.u32 41, %s21
      %p222 = scmp.lt.s32.totalorder %s20, 1
      %s223 = scalar_select %p222, %s20, 1
      %p224 = scmp.lt.s32.totalorder %s221, 40
      %s225 = scalar_select %p224, %s221, 40
      %s226 = smul.addr %s223, 41
      %s227 = sadd.s32 %s225, %s226
      %s228 = smul.addr %s227, 4
      %s229 = scalar_lea.vmem %s3, %s228
      %p230 = pneg %p154
      %p231 = pneg %p151
      %p232 = scmp.lt.s32.totalorder %s20, 1
      %s233 = scalar_select %p232, %s20, 1
      %p234 = scmp.lt.s32.totalorder %s21, 0
      %s235 = scalar_select %p234, %s21, 0
      %s236 = sadd.s32 %s235, %s233
      %s237 = smul.addr %s236, 2
      %s238 = scalar_lea.vmem %s4, %s237
      %p239 = scmp.lt.s32.totalorder %s20, 1
      %s240 = scalar_select %p239, %s20, 1
      %s241 = smul.addr %s240, 123
      %s242 = smul.addr %s241, 4
      %s243 = scalar_lea.vmem %s0, %s242
      %s244 = sadd.s32 %s21, 1
      %s245 = smul.u32 41, %s244
      %p246 = scmp.lt.s32.totalorder %s245, 122
      %s247 = scalar_select %p246, %s245, 122
      %s248 = smul.addr %s247, 8
      %s249 = scalar_lea.vmem %s2, %s248
      %s250 = sadd.s32 %s21, 1
      %s251 = smul.u32 41, %s250
      %s252 = smul.u32 41, %s21
      %p253 = scmp.lt.s32.totalorder %s20, 1
      %s254 = scalar_select %p253, %s20, 1
      %p255 = scmp.lt.s32.totalorder %s252, 40
      %s256 = scalar_select %p255, %s252, 40
      %s257 = smul.addr %s254, 41
      %s258 = sadd.s32 %s256, %s257
      %s259 = smul.addr %s258, 4
      %s260 = scalar_lea.vmem %s3, %s259
      %s261 = smul.u32 41, %s21
      %p262 = scmp.lt.s32.totalorder %s20, 1
      %s263 = scalar_select %p262, %s20, 1
      %p264 = scmp.lt.s32.totalorder %s21, 0
      %s265 = scalar_select %p264, %s21, 0
      %s266 = sadd.s32 %s265, %s263
      %s267 = smul.addr %s266, 2
      %s268 = scalar_lea.vmem %s4, %s267
      %s270 = smul.u32 %s21, 328
      %s271 = sadd.s32 %s270, 304
      %s272 = sshra.s32 %s271, 3
      %s273 = sand.u32 %s271, 7
      %s274 = smul.addr %s272, 4
      %s275 = scalar_lea.vmem %s243, %s274
      %v276 = vld [vmem:[%s275] sm:$0xf]
      %v277 = vld [vmem:[%s275 + $0x4] sm:$0xf]
      %v278 = vld [vmem:[%s275 + $0x8] sm:$0xf]
      %v279 = vld [vmem:[%s275 + $0xc] sm:$0xf]
      %v280 = vld [vmem:[%s275 + $0x10] sm:$0xf]
      %v281 = vld [vmem:[%s275 + $0x14] sm:$0xf]
      %v282 = vld [vmem:[%s275 + $0x18] sm:$0xf]
      %v283 = vld [vmem:[%s275 + $0x1c] sm:$0xf]
      %v284 = vld [vmem:[%s275 + $0x20] sm:$0xf]
      %v285 = vld [vmem:[%s275 + $0x24] sm:$0xf]
      %v286 = vld [vmem:[%s275 + $0x28] sm:$0xf]
      %v287 = vld [vmem:[%s275 + $0x2c] sm:$0xf]
      %v288 = vld [vmem:[%s275 + $0x30] sm:$0xf]
      %v289 = vld [vmem:[%s275 + $0x34] sm:$0xf]
      %v290 = vld [vmem:[%s275 + $0x38] sm:$0xf]
      %v291 = vld [vmem:[%s275 + $0x3c] sm:$0xf]
      %v292 = vld [vmem:[%s275 + $0x40] sm:$0xf]
      %v293 = vld [vmem:[%s275 + $0x44] sm:$0xf]
      %v294 = vld [vmem:[%s275 + $0x48] sm:$0xf]
      %v295 = vld [vmem:[%s275 + $0x4c] sm:$0xf]
      %v296 = vld [vmem:[%s275 + $0x50] sm:$0xf]
      %v297 = vld [vmem:[%s275 + $0x54] sm:$0xf]
      %v298 = vld [vmem:[%s275 + $0x58] sm:$0xf]
      %v299 = vld [vmem:[%s275 + $0x5c] sm:$0xf]
      %v300 = vld [vmem:[%s275 + $0x60] sm:$0xf]
      %v301 = vld [vmem:[%s275 + $0x64] sm:$0xf]
      %v302 = vld [vmem:[%s275 + $0x68] sm:$0xf]
      %v303 = vld [vmem:[%s275 + $0x6c] sm:$0xf]
      %v304 = vld [vmem:[%s275 + $0x70] sm:$0xf]
      %v305 = vld [vmem:[%s275 + $0x74] sm:$0xf]
      %v306 = vld [vmem:[%s275 + $0x78] sm:$0xf]
      %v307 = vld [vmem:[%s275 + $0x7c] sm:$0xf]
      %v308 = vld [vmem:[%s275 + $0x80] sm:$0xf]
      %v309 = vld [vmem:[%s275 + $0x84] sm:$0xf]
      %v310 = vld [vmem:[%s275 + $0x88] sm:$0xf]
      %v311 = vld [vmem:[%s275 + $0x8c] sm:$0xf]
      %v312 = vld [vmem:[%s275 + $0x90] sm:$0xf]
      %v313 = vld [vmem:[%s275 + $0x94] sm:$0xf]
      %v314 = vld [vmem:[%s275 + $0x98] sm:$0xf]
      %v315 = vld [vmem:[%s275 + $0x9c] sm:$0xf]
      %v316 = vld [vmem:[%s275 + $0xa0] sm:$0xf]
      %v317 = vld [vmem:[%s275 + $0xa4] sm:$0xf]
      %v318 = vld [vmem:[%s1] sm:$0x3]
      %s319 = scalar_lea.vmem %s1, 2
      %v320 = vld [vmem:[%s319] sm:$0x3]
      %v363 = vunpack.c.l.b16 %v276
      %v364 = vunpack.c.l.b16 %v277
      %v365 = vunpack.c.l.b16 %v278
      %v366 = vunpack.c.l.b16 %v279
      %v367 = vunpack.c.l.b16 %v280
      %v368 = vunpack.c.l.b16 %v281
      %v369 = vunpack.c.l.b16 %v282
      %v370 = vunpack.c.l.b16 %v283
      %v371 = vunpack.c.l.b16 %v284
      %v372 = vunpack.c.l.b16 %v285
      %v373 = vunpack.c.l.b16 %v286
      %v374 = vunpack.c.l.b16 %v287
      %v375 = vunpack.c.l.b16 %v288
      %v376 = vunpack.c.l.b16 %v289
      %v377 = vunpack.c.l.b16 %v290
      %v378 = vunpack.c.l.b16 %v291
      %v379 = vunpack.c.l.b16 %v292
      %v380 = vunpack.c.l.b16 %v293
      %v381 = vunpack.c.l.b16 %v294
      %v382 = vunpack.c.l.b16 %v295
      %v383 = vunpack.c.l.b16 %v296
      %v384 = vunpack.c.l.b16 %v297
      %v385 = vunpack.c.l.b16 %v298
      %v386 = vunpack.c.l.b16 %v299
      %v387 = vunpack.c.l.b16 %v300
      %v388 = vunpack.c.l.b16 %v301
      %v389 = vunpack.c.l.b16 %v302
      %v390 = vunpack.c.l.b16 %v303
      %v391 = vunpack.c.l.b16 %v304
      %v392 = vunpack.c.l.b16 %v305
      %v393 = vunpack.c.l.b16 %v306
      %v394 = vunpack.c.l.b16 %v307
      %v395 = vunpack.c.l.b16 %v308
      %v396 = vunpack.c.l.b16 %v309
      %v397 = vunpack.c.l.b16 %v310
      %v398 = vunpack.c.l.b16 %v311
      %v399 = vunpack.c.l.b16 %v312
      %v400 = vunpack.c.l.b16 %v313
      %v401 = vunpack.c.l.b16 %v314
      %v402 = vunpack.c.l.b16 %v315
      %v403 = vunpack.c.l.b16 %v316
      %v404 = vunpack.c.l.b16 %v317
      %v405 = vpack.c.b16 %v364, %v363
      %v406 = vpack.c.b16 %v366, %v365
      %v407 = vpack.c.b16 %v368, %v367
      %v408 = vpack.c.b16 %v370, %v369
      %v409 = vpack.c.b16 %v372, %v371
      %v410 = vpack.c.b16 %v374, %v373
      %v411 = vpack.c.b16 %v376, %v375
      %v412 = vpack.c.b16 %v378, %v377
      %v413 = vpack.c.b16 %v380, %v379
      %v414 = vpack.c.b16 %v382, %v381
      %v415 = vpack.c.b16 %v384, %v383
      %v416 = vpack.c.b16 %v386, %v385
      %v417 = vpack.c.b16 %v388, %v387
      %v418 = vpack.c.b16 %v390, %v389
      %v419 = vpack.c.b16 %v392, %v391
      %v420 = vpack.c.b16 %v394, %v393
      %v421 = vpack.c.b16 %v396, %v395
      %v422 = vpack.c.b16 %v398, %v397
      %v423 = vpack.c.b16 %v400, %v399
      %v424 = vpack.c.b16 %v402, %v401
      %v425 = vpack.c.b16 %v404, %v403
      %vm426 = vcmask 1044480
      %v427 = vrot.slane %v405, 3
      %v428 = vrot.slane %v406, 3
      %v429 = vsel %vm426, %v427, %v428
      %v430 = vrot.slane %v407, 3
      %v431 = vsel %vm426, %v428, %v430
      %v432 = vrot.slane %v408, 3
      %v433 = vsel %vm426, %v430, %v432
      %v434 = vrot.slane %v409, 3
      %v435 = vsel %vm426, %v432, %v434
      %v436 = vrot.slane %v410, 3
      %v437 = vsel %vm426, %v434, %v436
      %v438 = vrot.slane %v411, 3
      %v439 = vsel %vm426, %v436, %v438
      %v440 = vrot.slane %v412, 3
      %v441 = vsel %vm426, %v438, %v440
      %v442 = vrot.slane %v413, 3
      %v443 = vsel %vm426, %v440, %v442
      %v444 = vrot.slane %v414, 3
      %v445 = vsel %vm426, %v442, %v444
      %v446 = vrot.slane %v415, 3
      %v447 = vsel %vm426, %v444, %v446
      %v448 = vrot.slane %v416, 3
      %v449 = vsel %vm426, %v446, %v448
      %v450 = vrot.slane %v417, 3
      %v451 = vsel %vm426, %v448, %v450
      %v452 = vrot.slane %v418, 3
      %v453 = vsel %vm426, %v450, %v452
      %v454 = vrot.slane %v419, 3
      %v455 = vsel %vm426, %v452, %v454
      %v456 = vrot.slane %v420, 3
      %v457 = vsel %vm426, %v454, %v456
      %v458 = vrot.slane %v421, 3
      %v459 = vsel %vm426, %v456, %v458
      %v460 = vrot.slane %v422, 3
      %v461 = vsel %vm426, %v458, %v460
      %v462 = vrot.slane %v423, 3
      %v463 = vsel %vm426, %v460, %v462
      %v464 = vrot.slane %v424, 3
      %v465 = vsel %vm426, %v462, %v464
      %v466 = vrot.slane %v425, 3
      %v467 = vsel %vm426, %v464, %v466
      %vm468 = vcmask 31744
      %v470 = vsel %vm468, %v429, 0
      %v473 = vsel %vm468, %v431, 0
      %v476 = vsel %vm468, %v433, 0
      %v479 = vsel %vm468, %v435, 0
      %v482 = vsel %vm468, %v437, 0
      %v485 = vsel %vm468, %v439, 0
      %v488 = vsel %vm468, %v441, 0
      %v491 = vsel %vm468, %v443, 0
      %v494 = vsel %vm468, %v445, 0
      %v497 = vsel %vm468, %v447, 0
      %v500 = vsel %vm468, %v449, 0
      %v503 = vsel %vm468, %v451, 0
      %v506 = vsel %vm468, %v453, 0
      %v509 = vsel %vm468, %v455, 0
      %v512 = vsel %vm468, %v457, 0
      %v515 = vsel %vm468, %v459, 0
      %v518 = vsel %vm468, %v461, 0
      %v521 = vsel %vm468, %v463, 0
      %v524 = vsel %vm468, %v465, 0
      %v527 = vsel %vm468, %v467, 0
      %v530 = vsel %vm468, %v466, 0
      %vm532 = vcmask 1041408
      %v534 = vsel %vm532, %v320, 0
      %536 = vmatpush.bf16.msra.mxu0 0
      %537 = vmatpush.bf16.msra.mxu0 0
      %538 = vmatpush.bf16.msra.mxu0 0
      %539 = vmatpush.bf16.msra.mxu0 0
      %540 = vmatpush.bf16.msra.mxu0 0
      %541 = vmatpush.bf16.msra.mxu0 0
      %542 = vmatpush.bf16.msra.mxu0 0
      %543 = vmatpush.bf16.msra.mxu0 %v534
      %544 = vmatmul.bf16.gmra.mxu0 %v470
      %v545 = vpop.f32.mrf.mxu0
      %v546 = vadd.f32 0.0, %v545
      %v547 = vpop.f32.mrf.mxu0
      %v548 = vadd.f32 0.0, %v547
      %549 = vmatmul.bf16.gmra.mxu0 %v473
      %v550 = vpop.f32.mrf.mxu0
      %v551 = vadd.f32 0.0, %v550
      %v552 = vpop.f32.mrf.mxu0
      %v553 = vadd.f32 0.0, %v552
      %554 = vmatmul.bf16.gmra.mxu0 %v476
      %v555 = vpop.f32.mrf.mxu0
      %v556 = vadd.f32 0.0, %v555
      %v557 = vpop.f32.mrf.mxu0
      %v558 = vadd.f32 0.0, %v557
      %559 = vmatmul.bf16.gmra.mxu0 %v479
      %v560 = vpop.f32.mrf.mxu0
      %v561 = vadd.f32 0.0, %v560
      %v562 = vpop.f32.mrf.mxu0
      %v563 = vadd.f32 0.0, %v562
      %564 = vmatmul.bf16.gmra.mxu0 %v482
      %v565 = vpop.f32.mrf.mxu0
      %v566 = vadd.f32 0.0, %v565
      %v567 = vpop.f32.mrf.mxu0
      %v568 = vadd.f32 0.0, %v567
      %569 = vmatmul.bf16.gmra.mxu0 %v485
      %v570 = vpop.f32.mrf.mxu0
      %v571 = vadd.f32 0.0, %v570
      %v572 = vpop.f32.mrf.mxu0
      %v573 = vadd.f32 0.0, %v572
      %574 = vmatmul.bf16.gmra.mxu0 %v488
      %v575 = vpop.f32.mrf.mxu0
      %v576 = vadd.f32 0.0, %v575
      %v577 = vpop.f32.mrf.mxu0
      %v578 = vadd.f32 0.0, %v577
      %579 = vmatmul.bf16.gmra.mxu0 %v491
      %v580 = vpop.f32.mrf.mxu0
      %v581 = vadd.f32 0.0, %v580
      %v582 = vpop.f32.mrf.mxu0
      %v583 = vadd.f32 0.0, %v582
      %584 = vmatmul.bf16.gmra.mxu0 %v494
      %v585 = vpop.f32.mrf.mxu0
      %v586 = vadd.f32 0.0, %v585
      %v587 = vpop.f32.mrf.mxu0
      %v588 = vadd.f32 0.0, %v587
      %589 = vmatmul.bf16.gmra.mxu0 %v497
      %v590 = vpop.f32.mrf.mxu0
      %v591 = vadd.f32 0.0, %v590
      %v592 = vpop.f32.mrf.mxu0
      %v593 = vadd.f32 0.0, %v592
      %594 = vmatmul.bf16.gmra.mxu0 %v500
      %v595 = vpop.f32.mrf.mxu0
      %v596 = vadd.f32 0.0, %v595
      %v597 = vpop.f32.mrf.mxu0
      %v598 = vadd.f32 0.0, %v597
      %599 = vmatmul.bf16.gmra.mxu0 %v503
      %v600 = vpop.f32.mrf.mxu0
      %v601 = vadd.f32 0.0, %v600
      %v602 = vpop.f32.mrf.mxu0
      %v603 = vadd.f32 0.0, %v602
      %604 = vmatmul.bf16.gmra.mxu0 %v506
      %v605 = vpop.f32.mrf.mxu0
      %v606 = vadd.f32 0.0, %v605
      %v607 = vpop.f32.mrf.mxu0
      %v608 = vadd.f32 0.0, %v607
      %609 = vmatmul.bf16.gmra.mxu0 %v509
      %v610 = vpop.f32.mrf.mxu0
      %v611 = vadd.f32 0.0, %v610
      %v612 = vpop.f32.mrf.mxu0
      %v613 = vadd.f32 0.0, %v612
      %614 = vmatmul.bf16.gmra.mxu0 %v512
      %v615 = vpop.f32.mrf.mxu0
      %v616 = vadd.f32 0.0, %v615
      %v617 = vpop.f32.mrf.mxu0
      %v618 = vadd.f32 0.0, %v617
      %619 = vmatmul.bf16.gmra.mxu0 %v515
      %v620 = vpop.f32.mrf.mxu0
      %v621 = vadd.f32 0.0, %v620
      %v622 = vpop.f32.mrf.mxu0
      %v623 = vadd.f32 0.0, %v622
      %624 = vmatmul.bf16.gmra.mxu0 %v518
      %v625 = vpop.f32.mrf.mxu0
      %v626 = vadd.f32 0.0, %v625
      %v627 = vpop.f32.mrf.mxu0
      %v628 = vadd.f32 0.0, %v627
      %629 = vmatmul.bf16.gmra.mxu0 %v521
      %v630 = vpop.f32.mrf.mxu0
      %v631 = vadd.f32 0.0, %v630
      %v632 = vpop.f32.mrf.mxu0
      %v633 = vadd.f32 0.0, %v632
      %634 = vmatmul.bf16.gmra.mxu0 %v524
      %v635 = vpop.f32.mrf.mxu0
      %v636 = vadd.f32 0.0, %v635
      %v637 = vpop.f32.mrf.mxu0
      %v638 = vadd.f32 0.0, %v637
      %639 = vmatmul.bf16.gmra.mxu0 %v527
      %v640 = vpop.f32.mrf.mxu0
      %v641 = vadd.f32 0.0, %v640
      %v642 = vpop.f32.mrf.mxu0
      %v643 = vadd.f32 0.0, %v642
      %644 = vmatmul.bf16.gmra.mxu0 %v530
      %v645 = vpop.f32.mrf.mxu0
      %v646 = vadd.f32 0.0, %v645
      %v647 = vpop.f32.mrf.mxu0
      %648 = vdwg.mxu0
      %vm649 = vsmask.f32 5376
      %v651 = vshrl.u32 %v405, 16
      %v653 = vrot.slane %v651, 2
      %v654 = vshll.u32 %v405, 16
      %v656 = vrot.slane %v654, 3
      %v657 = vor.u32 %v653, %v656
      %v659 = vshrl.u32 %v406, 16
      %v661 = vrot.slane %v659, 2
      %v662 = vshll.u32 %v406, 16
      %v664 = vrot.slane %v662, 3
      %v665 = vor.u32 %v661, %v664
      %v666 = vsel %vm649, %v657, %v665
      %v668 = vshrl.u32 %v407, 16
      %v670 = vrot.slane %v668, 2
      %v671 = vshll.u32 %v407, 16
      %v673 = vrot.slane %v671, 3
      %v674 = vor.u32 %v670, %v673
      %v675 = vsel %vm649, %v665, %v674
      %v677 = vshrl.u32 %v408, 16
      %v679 = vrot.slane %v677, 2
      %v680 = vshll.u32 %v408, 16
      %v682 = vrot.slane %v680, 3
      %v683 = vor.u32 %v679, %v682
      %v684 = vsel %vm649, %v674, %v683
      %v686 = vshrl.u32 %v409, 16
      %v688 = vrot.slane %v686, 2
      %v689 = vshll.u32 %v409, 16
      %v691 = vrot.slane %v689, 3
      %v692 = vor.u32 %v688, %v691
      %v693 = vsel %vm649, %v683, %v692
      %v695 = vshrl.u32 %v410, 16
      %v697 = vrot.slane %v695, 2
      %v698 = vshll.u32 %v410, 16
      %v700 = vrot.slane %v698, 3
      %v701 = vor.u32 %v697, %v700
      %v702 = vsel %vm649, %v692, %v701
      %v704 = vshrl.u32 %v411, 16
      %v706 = vrot.slane %v704, 2
      %v707 = vshll.u32 %v411, 16
      %v709 = vrot.slane %v707, 3
      %v710 = vor.u32 %v706, %v709
      %v711 = vsel %vm649, %v701, %v710
      %v713 = vshrl.u32 %v412, 16
      %v715 = vrot.slane %v713, 2
      %v716 = vshll.u32 %v412, 16
      %v718 = vrot.slane %v716, 3
      %v719 = vor.u32 %v715, %v718
      %v720 = vsel %vm649, %v710, %v719
      %v722 = vshrl.u32 %v413, 16
      %v724 = vrot.slane %v722, 2
      %v725 = vshll.u32 %v413, 16
      %v727 = vrot.slane %v725, 3
      %v728 = vor.u32 %v724, %v727
      %v729 = vsel %vm649, %v719, %v728
      %v731 = vshrl.u32 %v414, 16
      %v733 = vrot.slane %v731, 2
      %v734 = vshll.u32 %v414, 16
      %v736 = vrot.slane %v734, 3
      %v737 = vor.u32 %v733, %v736
      %v738 = vsel %vm649, %v728, %v737
      %v740 = vshrl.u32 %v415, 16
      %v742 = vrot.slane %v740, 2
      %v743 = vshll.u32 %v415, 16
      %v745 = vrot.slane %v743, 3
      %v746 = vor.u32 %v742, %v745
      %v747 = vsel %vm649, %v737, %v746
      %v749 = vshrl.u32 %v416, 16
      %v751 = vrot.slane %v749, 2
      %v752 = vshll.u32 %v416, 16
      %v754 = vrot.slane %v752, 3
      %v755 = vor.u32 %v751, %v754
      %v756 = vsel %vm649, %v746, %v755
      %v758 = vshrl.u32 %v417, 16
      %v760 = vrot.slane %v758, 2
      %v761 = vshll.u32 %v417, 16
      %v763 = vrot.slane %v761, 3
      %v764 = vor.u32 %v760, %v763
      %v765 = vsel %vm649, %v755, %v764
      %v767 = vshrl.u32 %v418, 16
      %v769 = vrot.slane %v767, 2
      %v770 = vshll.u32 %v418, 16
      %v772 = vrot.slane %v770, 3
      %v773 = vor.u32 %v769, %v772
      %v774 = vsel %vm649, %v764, %v773
      %v776 = vshrl.u32 %v419, 16
      %v778 = vrot.slane %v776, 2
      %v779 = vshll.u32 %v419, 16
      %v781 = vrot.slane %v779, 3
      %v782 = vor.u32 %v778, %v781
      %v783 = vsel %vm649, %v773, %v782
      %v785 = vshrl.u32 %v420, 16
      %v787 = vrot.slane %v785, 2
      %v788 = vshll.u32 %v420, 16
      %v790 = vrot.slane %v788, 3
      %v791 = vor.u32 %v787, %v790
      %v792 = vsel %vm649, %v782, %v791
      %v794 = vshrl.u32 %v421, 16
      %v796 = vrot.slane %v794, 2
      %v797 = vshll.u32 %v421, 16
      %v799 = vrot.slane %v797, 3
      %v800 = vor.u32 %v796, %v799
      %v801 = vsel %vm649, %v791, %v800
      %v803 = vshrl.u32 %v422, 16
      %v805 = vrot.slane %v803, 2
      %v806 = vshll.u32 %v422, 16
      %v808 = vrot.slane %v806, 3
      %v809 = vor.u32 %v805, %v808
      %v810 = vsel %vm649, %v800, %v809
      %v812 = vshrl.u32 %v423, 16
      %v814 = vrot.slane %v812, 2
      %v815 = vshll.u32 %v423, 16
      %v817 = vrot.slane %v815, 3
      %v818 = vor.u32 %v814, %v817
      %v819 = vsel %vm649, %v809, %v818
      %v821 = vshrl.u32 %v424, 16
      %v823 = vrot.slane %v821, 2
      %v824 = vshll.u32 %v424, 16
      %v826 = vrot.slane %v824, 3
      %v827 = vor.u32 %v823, %v826
      %v828 = vsel %vm649, %v818, %v827
      %v830 = vshrl.u32 %v425, 16
      %v832 = vrot.slane %v830, 2
      %v833 = vshll.u32 %v425, 16
      %v835 = vrot.slane %v833, 3
      %v836 = vor.u32 %v832, %v835
      %v837 = vsel %vm649, %v827, %v836
      %v839 = vsel %vm468, %v666, 0
      %v842 = vsel %vm468, %v675, 0
      %v845 = vsel %vm468, %v684, 0
      %v848 = vsel %vm468, %v693, 0
      %v851 = vsel %vm468, %v702, 0
      %v854 = vsel %vm468, %v711, 0
      %v857 = vsel %vm468, %v720, 0
      %v860 = vsel %vm468, %v729, 0
      %v863 = vsel %vm468, %v738, 0
      %v866 = vsel %vm468, %v747, 0
      %v869 = vsel %vm468, %v756, 0
      %v872 = vsel %vm468, %v765, 0
      %v875 = vsel %vm468, %v774, 0
      %v878 = vsel %vm468, %v783, 0
      %v881 = vsel %vm468, %v792, 0
      %v884 = vsel %vm468, %v801, 0
      %v887 = vsel %vm468, %v810, 0
      %v890 = vsel %vm468, %v819, 0
      %v893 = vsel %vm468, %v828, 0
      %v896 = vsel %vm468, %v837, 0
      %v899 = vsel %vm468, %v836, 0
      %v902 = vsel %vm532, %v318, 0
      %904 = vmatpush.bf16.msra.mxu0 0
      %905 = vmatpush.bf16.msra.mxu0 0
      %906 = vmatpush.bf16.msra.mxu0 0
      %907 = vmatpush.bf16.msra.mxu0 0
      %908 = vmatpush.bf16.msra.mxu0 0
      %909 = vmatpush.bf16.msra.mxu0 0
      %910 = vmatpush.bf16.msra.mxu0 0
      %911 = vmatpush.bf16.msra.mxu0 %v902
      %912 = vmatmul.bf16.gmra.mxu0 %v839
      %v913 = vpop.f32.mrf.mxu0
      %v914 = vadd.f32 %v546, %v913
      %v915 = vpop.f32.mrf.mxu0
      %v916 = vadd.f32 %v548, %v915
      %917 = vmatmul.bf16.gmra.mxu0 %v842
      %v918 = vpop.f32.mrf.mxu0
      %v919 = vadd.f32 %v551, %v918
      %v920 = vpop.f32.mrf.mxu0
      %v921 = vadd.f32 %v553, %v920
      %922 = vmatmul.bf16.gmra.mxu0 %v845
      %v923 = vpop.f32.mrf.mxu0
      %v924 = vadd.f32 %v556, %v923
      %v925 = vpop.f32.mrf.mxu0
      %v926 = vadd.f32 %v558, %v925
      %927 = vmatmul.bf16.gmra.mxu0 %v848
      %v928 = vpop.f32.mrf.mxu0
      %v929 = vadd.f32 %v561, %v928
      %v930 = vpop.f32.mrf.mxu0
      %v931 = vadd.f32 %v563, %v930
      %932 = vmatmul.bf16.gmra.mxu0 %v851
      %v933 = vpop.f32.mrf.mxu0
      %v934 = vadd.f32 %v566, %v933
      %v935 = vpop.f32.mrf.mxu0
      %v936 = vadd.f32 %v568, %v935
      %937 = vmatmul.bf16.gmra.mxu0 %v854
      %v938 = vpop.f32.mrf.mxu0
      %v939 = vadd.f32 %v571, %v938
      %v940 = vpop.f32.mrf.mxu0
      %v941 = vadd.f32 %v573, %v940
      %942 = vmatmul.bf16.gmra.mxu0 %v857
      %v943 = vpop.f32.mrf.mxu0
      %v944 = vadd.f32 %v576, %v943
      %v945 = vpop.f32.mrf.mxu0
      %v946 = vadd.f32 %v578, %v945
      %947 = vmatmul.bf16.gmra.mxu0 %v860
      %v948 = vpop.f32.mrf.mxu0
      %v949 = vadd.f32 %v581, %v948
      %v950 = vpop.f32.mrf.mxu0
      %v951 = vadd.f32 %v583, %v950
      %952 = vmatmul.bf16.gmra.mxu0 %v863
      %v953 = vpop.f32.mrf.mxu0
      %v954 = vadd.f32 %v586, %v953
      %v955 = vpop.f32.mrf.mxu0
      %v956 = vadd.f32 %v588, %v955
      %957 = vmatmul.bf16.gmra.mxu0 %v866
      %v958 = vpop.f32.mrf.mxu0
      %v959 = vadd.f32 %v591, %v958
      %v960 = vpop.f32.mrf.mxu0
      %v961 = vadd.f32 %v593, %v960
      %962 = vmatmul.bf16.gmra.mxu0 %v869
      %v963 = vpop.f32.mrf.mxu0
      %v964 = vadd.f32 %v596, %v963
      %v965 = vpop.f32.mrf.mxu0
      %v966 = vadd.f32 %v598, %v965
      %967 = vmatmul.bf16.gmra.mxu0 %v872
      %v968 = vpop.f32.mrf.mxu0
      %v969 = vadd.f32 %v601, %v968
      %v970 = vpop.f32.mrf.mxu0
      %v971 = vadd.f32 %v603, %v970
      %972 = vmatmul.bf16.gmra.mxu0 %v875
      %v973 = vpop.f32.mrf.mxu0
      %v974 = vadd.f32 %v606, %v973
      %v975 = vpop.f32.mrf.mxu0
      %v976 = vadd.f32 %v608, %v975
      %977 = vmatmul.bf16.gmra.mxu0 %v878
      %v978 = vpop.f32.mrf.mxu0
      %v979 = vadd.f32 %v611, %v978
      %v980 = vpop.f32.mrf.mxu0
      %v981 = vadd.f32 %v613, %v980
      %982 = vmatmul.bf16.gmra.mxu0 %v881
      %v983 = vpop.f32.mrf.mxu0
      %v984 = vadd.f32 %v616, %v983
      %v985 = vpop.f32.mrf.mxu0
      %v986 = vadd.f32 %v618, %v985
      %987 = vmatmul.bf16.gmra.mxu0 %v884
      %v988 = vpop.f32.mrf.mxu0
      %v989 = vadd.f32 %v621, %v988
      %v990 = vpop.f32.mrf.mxu0
      %v991 = vadd.f32 %v623, %v990
      %992 = vmatmul.bf16.gmra.mxu0 %v887
      %v993 = vpop.f32.mrf.mxu0
      %v994 = vadd.f32 %v626, %v993
      %v995 = vpop.f32.mrf.mxu0
      %v996 = vadd.f32 %v628, %v995
      %997 = vmatmul.bf16.gmra.mxu0 %v890
      %v998 = vpop.f32.mrf.mxu0
      %v999 = vadd.f32 %v631, %v998
      %v1000 = vpop.f32.mrf.mxu0
      %v1001 = vadd.f32 %v633, %v1000
      %1002 = vmatmul.bf16.gmra.mxu0 %v893
      %v1003 = vpop.f32.mrf.mxu0
      %v1004 = vadd.f32 %v636, %v1003
      %v1005 = vpop.f32.mrf.mxu0
      %v1006 = vadd.f32 %v638, %v1005
      %1007 = vmatmul.bf16.gmra.mxu0 %v896
      %v1008 = vpop.f32.mrf.mxu0
      %v1009 = vadd.f32 %v641, %v1008
      %v1010 = vpop.f32.mrf.mxu0
      %v1011 = vadd.f32 %v643, %v1010
      %1012 = vmatmul.bf16.gmra.mxu0 %v899
      %v1013 = vpop.f32.mrf.mxu0
      %v1014 = vadd.f32 %v646, %v1013
      %v1015 = vpop.f32.mrf.mxu0
      %1016 = vdwg.mxu0
      %s1017 = scalar_lea.vmem %s1, 4
      %v1018 = vld [vmem:[%s1017] sm:$0x3]
      %vm1019 = vsmask.f32 4352
      %v1020 = vrot.slane %v651, 3
      %v1021 = vrot.slane %v654, 4
      %v1022 = vor.u32 %v1020, %v1021
      %v1023 = vrot.slane %v659, 3
      %v1024 = vrot.slane %v662, 4
      %v1025 = vor.u32 %v1023, %v1024
      %v1026 = vsel %vm1019, %v1022, %v1025
      %v1027 = vrot.slane %v668, 3
      %v1028 = vrot.slane %v671, 4
      %v1029 = vor.u32 %v1027, %v1028
      %v1030 = vsel %vm1019, %v1025, %v1029
      %v1031 = vrot.slane %v677, 3
      %v1032 = vrot.slane %v680, 4
      %v1033 = vor.u32 %v1031, %v1032
      %v1034 = vsel %vm1019, %v1029, %v1033
      %v1035 = vrot.slane %v686, 3
      %v1036 = vrot.slane %v689, 4
      %v1037 = vor.u32 %v1035, %v1036
      %v1038 = vsel %vm1019, %v1033, %v1037
      %v1039 = vrot.slane %v695, 3
      %v1040 = vrot.slane %v698, 4
      %v1041 = vor.u32 %v1039, %v1040
      %v1042 = vsel %vm1019, %v1037, %v1041
      %v1043 = vrot.slane %v704, 3
      %v1044 = vrot.slane %v707, 4
      %v1045 = vor.u32 %v1043, %v1044
      %v1046 = vsel %vm1019, %v1041, %v1045
      %v1047 = vrot.slane %v713, 3
      %v1048 = vrot.slane %v716, 4
      %v1049 = vor.u32 %v1047, %v1048
      %v1050 = vsel %vm1019, %v1045, %v1049
      %v1051 = vrot.slane %v722, 3
      %v1052 = vrot.slane %v725, 4
      %v1053 = vor.u32 %v1051, %v1052
      %v1054 = vsel %vm1019, %v1049, %v1053
      %v1055 = vrot.slane %v731, 3
      %v1056 = vrot.slane %v734, 4
      %v1057 = vor.u32 %v1055, %v1056
      %v1058 = vsel %vm1019, %v1053, %v1057
      %v1059 = vrot.slane %v740, 3
      %v1060 = vrot.slane %v743, 4
      %v1061 = vor.u32 %v1059, %v1060
      %v1062 = vsel %vm1019, %v1057, %v1061
      %v1063 = vrot.slane %v749, 3
      %v1064 = vrot.slane %v752, 4
      %v1065 = vor.u32 %v1063, %v1064
      %v1066 = vsel %vm1019, %v1061, %v1065
      %v1067 = vrot.slane %v758, 3
      %v1068 = vrot.slane %v761, 4
      %v1069 = vor.u32 %v1067, %v1068
      %v1070 = vsel %vm1019, %v1065, %v1069
      %v1071 = vrot.slane %v767, 3
      %v1072 = vrot.slane %v770, 4
      %v1073 = vor.u32 %v1071, %v1072
      %v1074 = vsel %vm1019, %v1069, %v1073
      %v1075 = vrot.slane %v776, 3
      %v1076 = vrot.slane %v779, 4
      %v1077 = vor.u32 %v1075, %v1076
      %v1078 = vsel %vm1019, %v1073, %v1077
      %v1079 = vrot.slane %v785, 3
      %v1080 = vrot.slane %v788, 4
      %v1081 = vor.u32 %v1079, %v1080
      %v1082 = vsel %vm1019, %v1077, %v1081
      %v1083 = vrot.slane %v794, 3
      %v1084 = vrot.slane %v797, 4
      %v1085 = vor.u32 %v1083, %v1084
      %v1086 = vsel %vm1019, %v1081, %v1085
      %v1087 = vrot.slane %v803, 3
      %v1088 = vrot.slane %v806, 4
      %v1089 = vor.u32 %v1087, %v1088
      %v1090 = vsel %vm1019, %v1085, %v1089
      %v1091 = vrot.slane %v812, 3
      %v1092 = vrot.slane %v815, 4
      %v1093 = vor.u32 %v1091, %v1092
      %v1094 = vsel %vm1019, %v1089, %v1093
      %v1095 = vrot.slane %v821, 3
      %v1096 = vrot.slane %v824, 4
      %v1097 = vor.u32 %v1095, %v1096
      %v1098 = vsel %vm1019, %v1093, %v1097
      %v1099 = vrot.slane %v830, 3
      %v1100 = vrot.slane %v833, 4
      %v1101 = vor.u32 %v1099, %v1100
      %v1102 = vsel %vm1019, %v1097, %v1101
      %v1104 = vsel %vm468, %v1026, 0
      %v1107 = vsel %vm468, %v1030, 0
      %v1110 = vsel %vm468, %v1034, 0
      %v1113 = vsel %vm468, %v1038, 0
      %v1116 = vsel %vm468, %v1042, 0
      %v1119 = vsel %vm468, %v1046, 0
      %v1122 = vsel %vm468, %v1050, 0
      %v1125 = vsel %vm468, %v1054, 0
      %v1128 = vsel %vm468, %v1058, 0
      %v1131 = vsel %vm468, %v1062, 0
      %v1134 = vsel %vm468, %v1066, 0
      %v1137 = vsel %vm468, %v1070, 0
      %v1140 = vsel %vm468, %v1074, 0
      %v1143 = vsel %vm468, %v1078, 0
      %v1146 = vsel %vm468, %v1082, 0
      %v1149 = vsel %vm468, %v1086, 0
      %v1152 = vsel %vm468, %v1090, 0
      %v1155 = vsel %vm468, %v1094, 0
      %v1158 = vsel %vm468, %v1098, 0
      %v1161 = vsel %vm468, %v1102, 0
      %v1164 = vsel %vm468, %v1101, 0
      %v1167 = vsel %vm532, %v1018, 0
      %1169 = vmatpush.bf16.msra.mxu0 0
      %1170 = vmatpush.bf16.msra.mxu0 0
      %1171 = vmatpush.bf16.msra.mxu0 0
      %1172 = vmatpush.bf16.msra.mxu0 0
      %1173 = vmatpush.bf16.msra.mxu0 0
      %1174 = vmatpush.bf16.msra.mxu0 0
      %1175 = vmatpush.bf16.msra.mxu0 0
      %1176 = vmatpush.bf16.msra.mxu0 %v1167
      %1177 = vmatmul.bf16.gmra.mxu0 %v1104
      %v1178 = vpop.f32.mrf.mxu0
      %v1179 = vadd.f32 0.0, %v1178
      %v1180 = vpop.f32.mrf.mxu0
      %v1181 = vadd.f32 0.0, %v1180
      %1182 = vmatmul.bf16.gmra.mxu0 %v1107
      %v1183 = vpop.f32.mrf.mxu0
      %v1184 = vadd.f32 0.0, %v1183
      %v1185 = vpop.f32.mrf.mxu0
      %v1186 = vadd.f32 0.0, %v1185
      %1187 = vmatmul.bf16.gmra.mxu0 %v1110
      %v1188 = vpop.f32.mrf.mxu0
      %v1189 = vadd.f32 0.0, %v1188
      %v1190 = vpop.f32.mrf.mxu0
      %v1191 = vadd.f32 0.0, %v1190
      %1192 = vmatmul.bf16.gmra.mxu0 %v1113
      %v1193 = vpop.f32.mrf.mxu0
      %v1194 = vadd.f32 0.0, %v1193
      %v1195 = vpop.f32.mrf.mxu0
      %v1196 = vadd.f32 0.0, %v1195
      %1197 = vmatmul.bf16.gmra.mxu0 %v1116
      %v1198 = vpop.f32.mrf.mxu0
      %v1199 = vadd.f32 0.0, %v1198
      %v1200 = vpop.f32.mrf.mxu0
      %v1201 = vadd.f32 0.0, %v1200
      %1202 = vmatmul.bf16.gmra.mxu0 %v1119
      %v1203 = vpop.f32.mrf.mxu0
      %v1204 = vadd.f32 0.0, %v1203
      %v1205 = vpop.f32.mrf.mxu0
      %v1206 = vadd.f32 0.0, %v1205
      %1207 = vmatmul.bf16.gmra.mxu0 %v1122
      %v1208 = vpop.f32.mrf.mxu0
      %v1209 = vadd.f32 0.0, %v1208
      %v1210 = vpop.f32.mrf.mxu0
      %v1211 = vadd.f32 0.0, %v1210
      %1212 = vmatmul.bf16.gmra.mxu0 %v1125
      %v1213 = vpop.f32.mrf.mxu0
      %v1214 = vadd.f32 0.0, %v1213
      %v1215 = vpop.f32.mrf.mxu0
      %v1216 = vadd.f32 0.0, %v1215
      %1217 = vmatmul.bf16.gmra.mxu0 %v1128
      %v1218 = vpop.f32.mrf.mxu0
      %v1219 = vadd.f32 0.0, %v1218
      %v1220 = vpop.f32.mrf.mxu0
      %v1221 = vadd.f32 0.0, %v1220
      %1222 = vmatmul.bf16.gmra.mxu0 %v1131
      %v1223 = vpop.f32.mrf.mxu0
      %v1224 = vadd.f32 0.0, %v1223
      %v1225 = vpop.f32.mrf.mxu0
      %v1226 = vadd.f32 0.0, %v1225
      %1227 = vmatmul.bf16.gmra.mxu0 %v1134
      %v1228 = vpop.f32.mrf.mxu0
      %v1229 = vadd.f32 0.0, %v1228
      %v1230 = vpop.f32.mrf.mxu0
      %v1231 = vadd.f32 0.0, %v1230
      %1232 = vmatmul.bf16.gmra.mxu0 %v1137
      %v1233 = vpop.f32.mrf.mxu0
      %v1234 = vadd.f32 0.0, %v1233
      %v1235 = vpop.f32.mrf.mxu0
      %v1236 = vadd.f32 0.0, %v1235
      %1237 = vmatmul.bf16.gmra.mxu0 %v1140
      %v1238 = vpop.f32.mrf.mxu0
      %v1239 = vadd.f32 0.0, %v1238
      %v1240 = vpop.f32.mrf.mxu0
      %v1241 = vadd.f32 0.0, %v1240
      %1242 = vmatmul.bf16.gmra.mxu0 %v1143
      %v1243 = vpop.f32.mrf.mxu0
      %v1244 = vadd.f32 0.0, %v1243
      %v1245 = vpop.f32.mrf.mxu0
      %v1246 = vadd.f32 0.0, %v1245
      %1247 = vmatmul.bf16.gmra.mxu0 %v1146
      %v1248 = vpop.f32.mrf.mxu0
      %v1249 = vadd.f32 0.0, %v1248
      %v1250 = vpop.f32.mrf.mxu0
      %v1251 = vadd.f32 0.0, %v1250
      %1252 = vmatmul.bf16.gmra.mxu0 %v1149
      %v1253 = vpop.f32.mrf.mxu0
      %v1254 = vadd.f32 0.0, %v1253
      %v1255 = vpop.f32.mrf.mxu0
      %v1256 = vadd.f32 0.0, %v1255
      %1257 = vmatmul.bf16.gmra.mxu0 %v1152
      %v1258 = vpop.f32.mrf.mxu0
      %v1259 = vadd.f32 0.0, %v1258
      %v1260 = vpop.f32.mrf.mxu0
      %v1261 = vadd.f32 0.0, %v1260
      %1262 = vmatmul.bf16.gmra.mxu0 %v1155
      %v1263 = vpop.f32.mrf.mxu0
      %v1264 = vadd.f32 0.0, %v1263
      %v1265 = vpop.f32.mrf.mxu0
      %v1266 = vadd.f32 0.0, %v1265
      %1267 = vmatmul.bf16.gmra.mxu0 %v1158
      %v1268 = vpop.f32.mrf.mxu0
      %v1269 = vadd.f32 0.0, %v1268
      %v1270 = vpop.f32.mrf.mxu0
      %v1271 = vadd.f32 0.0, %v1270
      %1272 = vmatmul.bf16.gmra.mxu0 %v1161
      %v1273 = vpop.f32.mrf.mxu0
      %v1274 = vadd.f32 0.0, %v1273
      %v1275 = vpop.f32.mrf.mxu0
      %v1276 = vadd.f32 0.0, %v1275
      %1277 = vmatmul.bf16.gmra.mxu0 %v1164
      %v1278 = vpop.f32.mrf.mxu0
      %v1279 = vadd.f32 0.0, %v1278
      %v1280 = vpop.f32.mrf.mxu0
      %1281 = vdwg.mxu0
      %v1282 = vadd.f32 %v914, %v1179
      %v1283 = vadd.f32 %v916, %v1181
      %v1284 = vadd.f32 %v919, %v1184
      %v1285 = vadd.f32 %v921, %v1186
      %v1286 = vadd.f32 %v924, %v1189
      %v1287 = vadd.f32 %v926, %v1191
      %v1288 = vadd.f32 %v929, %v1194
      %v1289 = vadd.f32 %v931, %v1196
      %v1290 = vadd.f32 %v934, %v1199
      %v1291 = vadd.f32 %v936, %v1201
      %v1292 = vadd.f32 %v939, %v1204
      %v1293 = vadd.f32 %v941, %v1206
      %v1294 = vadd.f32 %v944, %v1209
      %v1295 = vadd.f32 %v946, %v1211
      %v1296 = vadd.f32 %v949, %v1214
      %v1297 = vadd.f32 %v951, %v1216
      %v1298 = vadd.f32 %v954, %v1219
      %v1299 = vadd.f32 %v956, %v1221
      %v1300 = vadd.f32 %v959, %v1224
      %v1301 = vadd.f32 %v961, %v1226
      %v1302 = vadd.f32 %v964, %v1229
      %v1303 = vadd.f32 %v966, %v1231
      %v1304 = vadd.f32 %v969, %v1234
      %v1305 = vadd.f32 %v971, %v1236
      %v1306 = vadd.f32 %v974, %v1239
      %v1307 = vadd.f32 %v976, %v1241
      %v1308 = vadd.f32 %v979, %v1244
      %v1309 = vadd.f32 %v981, %v1246
      %v1310 = vadd.f32 %v984, %v1249
      %v1311 = vadd.f32 %v986, %v1251
      %v1312 = vadd.f32 %v989, %v1254
      %v1313 = vadd.f32 %v991, %v1256
      %v1314 = vadd.f32 %v994, %v1259
      %v1315 = vadd.f32 %v996, %v1261
      %v1316 = vadd.f32 %v999, %v1264
      %v1317 = vadd.f32 %v1001, %v1266
      %v1318 = vadd.f32 %v1004, %v1269
      %v1319 = vadd.f32 %v1006, %v1271
      %v1320 = vadd.f32 %v1009, %v1274
      %v1321 = vadd.f32 %v1011, %v1276
      %v1322 = vadd.f32 %v1014, %v1279
      %s1323 = sadd.s32 %s270, 320
      %s1324 = sshra.s32 %s1323, 3
      %s1325 = sand.u32 %s1323, 7
      %s1326 = smul.addr %s1324, 4
      %s1327 = scalar_lea.vmem %s243, %s1326
      %v1328 = vld [vmem:[%s1327] sm:$0xf]
      %v1329 = vld [vmem:[%s1327 + $0x4] sm:$0xf]
      %v1330 = vld [vmem:[%s1327 + $0x8] sm:$0xf]
      %v1331 = vld [vmem:[%s1327 + $0xc] sm:$0xf]
      %v1332 = vld [vmem:[%s1327 + $0x10] sm:$0xf]
      %v1333 = vld [vmem:[%s1327 + $0x14] sm:$0xf]
      %v1334 = vld [vmem:[%s1327 + $0x18] sm:$0xf]
      %v1335 = vld [vmem:[%s1327 + $0x1c] sm:$0xf]
      %v1336 = vld [vmem:[%s1327 + $0x20] sm:$0xf]
      %v1337 = vld [vmem:[%s1327 + $0x24] sm:$0xf]
      %v1338 = vld [vmem:[%s1327 + $0x28] sm:$0xf]
      %v1339 = vld [vmem:[%s1327 + $0x2c] sm:$0xf]
      %v1340 = vld [vmem:[%s1327 + $0x30] sm:$0xf]
      %v1341 = vld [vmem:[%s1327 + $0x34] sm:$0xf]
      %v1342 = vld [vmem:[%s1327 + $0x38] sm:$0xf]
      %v1343 = vld [vmem:[%s1327 + $0x3c] sm:$0xf]
      %v1344 = vld [vmem:[%s1327 + $0x40] sm:$0xf]
      %v1345 = vld [vmem:[%s1327 + $0x44] sm:$0xf]
      %v1346 = vld [vmem:[%s1327 + $0x48] sm:$0xf]
      %v1347 = vld [vmem:[%s1327 + $0x4c] sm:$0xf]
      %v1348 = vld [vmem:[%s1327 + $0x50] sm:$0xf]
      %v1349 = vld [vmem:[%s1327 + $0x54] sm:$0xf]
      %v1350 = vld [vmem:[%s1327 + $0x58] sm:$0xf]
      %v1351 = vld [vmem:[%s1327 + $0x5c] sm:$0xf]
      %v1352 = vld [vmem:[%s1327 + $0x60] sm:$0xf]
      %v1353 = vld [vmem:[%s1327 + $0x64] sm:$0xf]
      %v1354 = vld [vmem:[%s1327 + $0x68] sm:$0xf]
      %v1355 = vld [vmem:[%s1327 + $0x6c] sm:$0xf]
      %v1356 = vld [vmem:[%s1327 + $0x70] sm:$0xf]
      %v1357 = vld [vmem:[%s1327 + $0x74] sm:$0xf]
      %v1358 = vld [vmem:[%s1327 + $0x78] sm:$0xf]
      %v1359 = vld [vmem:[%s1327 + $0x7c] sm:$0xf]
      %v1360 = vld [vmem:[%s1327 + $0x80] sm:$0xf]
      %v1361 = vld [vmem:[%s1327 + $0x84] sm:$0xf]
      %v1362 = vld [vmem:[%s1327 + $0x88] sm:$0xf]
      %v1363 = vld [vmem:[%s1327 + $0x8c] sm:$0xf]
      %v1364 = vld [vmem:[%s1327 + $0x90] sm:$0xf]
      %v1365 = vld [vmem:[%s1327 + $0x94] sm:$0xf]
      %v1366 = vld [vmem:[%s1327 + $0x98] sm:$0xf]
      %v1367 = vld [vmem:[%s1327 + $0x9c] sm:$0xf]
      %v1368 = vld [vmem:[%s1327 + $0xa0] sm:$0xf]
      %v1369 = vld [vmem:[%s1327 + $0xa4] sm:$0xf]
      %s1370 = scalar_lea.vmem %s1, 6
      %v1371 = vld [vmem:[%s1370] sm:$0x3]
      %v1414 = vunpack.c.l.b16 %v1328
      %v1415 = vunpack.c.l.b16 %v1329
      %v1416 = vunpack.c.l.b16 %v1330
      %v1417 = vunpack.c.l.b16 %v1331
      %v1418 = vunpack.c.l.b16 %v1332
      %v1419 = vunpack.c.l.b16 %v1333
      %v1420 = vunpack.c.l.b16 %v1334
      %v1421 = vunpack.c.l.b16 %v1335
      %v1422 = vunpack.c.l.b16 %v1336
      %v1423 = vunpack.c.l.b16 %v1337
      %v1424 = vunpack.c.l.b16 %v1338
      %v1425 = vunpack.c.l.b16 %v1339
      %v1426 = vunpack.c.l.b16 %v1340
      %v1427 = vunpack.c.l.b16 %v1341
      %v1428 = vunpack.c.l.b16 %v1342
      %v1429 = vunpack.c.l.b16 %v1343
      %v1430 = vunpack.c.l.b16 %v1344
      %v1431 = vunpack.c.l.b16 %v1345
      %v1432 = vunpack.c.l.b16 %v1346
      %v1433 = vunpack.c.l.b16 %v1347
      %v1434 = vunpack.c.l.b16 %v1348
      %v1435 = vunpack.c.l.b16 %v1349
      %v1436 = vunpack.c.l.b16 %v1350
      %v1437 = vunpack.c.l.b16 %v1351
      %v1438 = vunpack.c.l.b16 %v1352
      %v1439 = vunpack.c.l.b16 %v1353
      %v1440 = vunpack.c.l.b16 %v1354
      %v1441 = vunpack.c.l.b16 %v1355
      %v1442 = vunpack.c.l.b16 %v1356
      %v1443 = vunpack.c.l.b16 %v1357
      %v1444 = vunpack.c.l.b16 %v1358
      %v1445 = vunpack.c.l.b16 %v1359
      %v1446 = vunpack.c.l.b16 %v1360
      %v1447 = vunpack.c.l.b16 %v1361
      %v1448 = vunpack.c.l.b16 %v1362
      %v1449 = vunpack.c.l.b16 %v1363
      %v1450 = vunpack.c.l.b16 %v1364
      %v1451 = vunpack.c.l.b16 %v1365
      %v1452 = vunpack.c.l.b16 %v1366
      %v1453 = vunpack.c.l.b16 %v1367
      %v1454 = vunpack.c.l.b16 %v1368
      %v1455 = vunpack.c.l.b16 %v1369
      %v1456 = vpack.c.b16 %v1415, %v1414
      %v1457 = vpack.c.b16 %v1417, %v1416
      %v1458 = vpack.c.b16 %v1419, %v1418
      %v1459 = vpack.c.b16 %v1421, %v1420
      %v1460 = vpack.c.b16 %v1423, %v1422
      %v1461 = vpack.c.b16 %v1425, %v1424
      %v1462 = vpack.c.b16 %v1427, %v1426
      %v1463 = vpack.c.b16 %v1429, %v1428
      %v1464 = vpack.c.b16 %v1431, %v1430
      %v1465 = vpack.c.b16 %v1433, %v1432
      %v1466 = vpack.c.b16 %v1435, %v1434
      %v1467 = vpack.c.b16 %v1437, %v1436
      %v1468 = vpack.c.b16 %v1439, %v1438
      %v1469 = vpack.c.b16 %v1441, %v1440
      %v1470 = vpack.c.b16 %v1443, %v1442
      %v1471 = vpack.c.b16 %v1445, %v1444
      %v1472 = vpack.c.b16 %v1447, %v1446
      %v1473 = vpack.c.b16 %v1449, %v1448
      %v1474 = vpack.c.b16 %v1451, %v1450
      %v1475 = vpack.c.b16 %v1453, %v1452
      %v1476 = vpack.c.b16 %v1455, %v1454
      %v1478 = vshrl.u32 %v1456, 16
      %v1480 = vrot.slane %v1478, 3
      %v1481 = vshll.u32 %v1456, 16
      %v1483 = vrot.slane %v1481, 4
      %v1484 = vor.u32 %v1480, %v1483
      %v1486 = vshrl.u32 %v1457, 16
      %v1488 = vrot.slane %v1486, 3
      %v1489 = vshll.u32 %v1457, 16
      %v1491 = vrot.slane %v1489, 4
      %v1492 = vor.u32 %v1488, %v1491
      %v1493 = vsel %vm1019, %v1484, %v1492
      %v1495 = vshrl.u32 %v1458, 16
      %v1497 = vrot.slane %v1495, 3
      %v1498 = vshll.u32 %v1458, 16
      %v1500 = vrot.slane %v1498, 4
      %v1501 = vor.u32 %v1497, %v1500
      %v1502 = vsel %vm1019, %v1492, %v1501
      %v1504 = vshrl.u32 %v1459, 16
      %v1506 = vrot.slane %v1504, 3
      %v1507 = vshll.u32 %v1459, 16
      %v1509 = vrot.slane %v1507, 4
      %v1510 = vor.u32 %v1506, %v1509
      %v1511 = vsel %vm1019, %v1501, %v1510
      %v1513 = vshrl.u32 %v1460, 16
      %v1515 = vrot.slane %v1513, 3
      %v1516 = vshll.u32 %v1460, 16
      %v1518 = vrot.slane %v1516, 4
      %v1519 = vor.u32 %v1515, %v1518
      %v1520 = vsel %vm1019, %v1510, %v1519
      %v1522 = vshrl.u32 %v1461, 16
      %v1524 = vrot.slane %v1522, 3
      %v1525 = vshll.u32 %v1461, 16
      %v1527 = vrot.slane %v1525, 4
      %v1528 = vor.u32 %v1524, %v1527
      %v1529 = vsel %vm1019, %v1519, %v1528
      %v1531 = vshrl.u32 %v1462, 16
      %v1533 = vrot.slane %v1531, 3
      %v1534 = vshll.u32 %v1462, 16
      %v1536 = vrot.slane %v1534, 4
      %v1537 = vor.u32 %v1533, %v1536
      %v1538 = vsel %vm1019, %v1528, %v1537
      %v1540 = vshrl.u32 %v1463, 16
      %v1542 = vrot.slane %v1540, 3
      %v1543 = vshll.u32 %v1463, 16
      %v1545 = vrot.slane %v1543, 4
      %v1546 = vor.u32 %v1542, %v1545
      %v1547 = vsel %vm1019, %v1537, %v1546
      %v1549 = vshrl.u32 %v1464, 16
      %v1551 = vrot.slane %v1549, 3
      %v1552 = vshll.u32 %v1464, 16
      %v1554 = vrot.slane %v1552, 4
      %v1555 = vor.u32 %v1551, %v1554
      %v1556 = vsel %vm1019, %v1546, %v1555
      %v1558 = vshrl.u32 %v1465, 16
      %v1560 = vrot.slane %v1558, 3
      %v1561 = vshll.u32 %v1465, 16
      %v1563 = vrot.slane %v1561, 4
      %v1564 = vor.u32 %v1560, %v1563
      %v1565 = vsel %vm1019, %v1555, %v1564
      %v1567 = vshrl.u32 %v1466, 16
      %v1569 = vrot.slane %v1567, 3
      %v1570 = vshll.u32 %v1466, 16
      %v1572 = vrot.slane %v1570, 4
      %v1573 = vor.u32 %v1569, %v1572
      %v1574 = vsel %vm1019, %v1564, %v1573
      %v1576 = vshrl.u32 %v1467, 16
      %v1578 = vrot.slane %v1576, 3
      %v1579 = vshll.u32 %v1467, 16
      %v1581 = vrot.slane %v1579, 4
      %v1582 = vor.u32 %v1578, %v1581
      %v1583 = vsel %vm1019, %v1573, %v1582
      %v1585 = vshrl.u32 %v1468, 16
      %v1587 = vrot.slane %v1585, 3
      %v1588 = vshll.u32 %v1468, 16
      %v1590 = vrot.slane %v1588, 4
      %v1591 = vor.u32 %v1587, %v1590
      %v1592 = vsel %vm1019, %v1582, %v1591
      %v1594 = vshrl.u32 %v1469, 16
      %v1596 = vrot.slane %v1594, 3
      %v1597 = vshll.u32 %v1469, 16
      %v1599 = vrot.slane %v1597, 4
      %v1600 = vor.u32 %v1596, %v1599
      %v1601 = vsel %vm1019, %v1591, %v1600
      %v1603 = vshrl.u32 %v1470, 16
      %v1605 = vrot.slane %v1603, 3
      %v1606 = vshll.u32 %v1470, 16
      %v1608 = vrot.slane %v1606, 4
      %v1609 = vor.u32 %v1605, %v1608
      %v1610 = vsel %vm1019, %v1600, %v1609
      %v1612 = vshrl.u32 %v1471, 16
      %v1614 = vrot.slane %v1612, 3
      %v1615 = vshll.u32 %v1471, 16
      %v1617 = vrot.slane %v1615, 4
      %v1618 = vor.u32 %v1614, %v1617
      %v1619 = vsel %vm1019, %v1609, %v1618
      %v1621 = vshrl.u32 %v1472, 16
      %v1623 = vrot.slane %v1621, 3
      %v1624 = vshll.u32 %v1472, 16
      %v1626 = vrot.slane %v1624, 4
      %v1627 = vor.u32 %v1623, %v1626
      %v1628 = vsel %vm1019, %v1618, %v1627
      %v1630 = vshrl.u32 %v1473, 16
      %v1632 = vrot.slane %v1630, 3
      %v1633 = vshll.u32 %v1473, 16
      %v1635 = vrot.slane %v1633, 4
      %v1636 = vor.u32 %v1632, %v1635
      %v1637 = vsel %vm1019, %v1627, %v1636
      %v1639 = vshrl.u32 %v1474, 16
      %v1641 = vrot.slane %v1639, 3
      %v1642 = vshll.u32 %v1474, 16
      %v1644 = vrot.slane %v1642, 4
      %v1645 = vor.u32 %v1641, %v1644
      %v1646 = vsel %vm1019, %v1636, %v1645
      %v1648 = vshrl.u32 %v1475, 16
      %v1650 = vrot.slane %v1648, 3
      %v1651 = vshll.u32 %v1475, 16
      %v1653 = vrot.slane %v1651, 4
      %v1654 = vor.u32 %v1650, %v1653
      %v1655 = vsel %vm1019, %v1645, %v1654
      %v1657 = vshrl.u32 %v1476, 16
      %v1659 = vrot.slane %v1657, 3
      %v1660 = vshll.u32 %v1476, 16
      %v1662 = vrot.slane %v1660, 4
      %v1663 = vor.u32 %v1659, %v1662
      %v1664 = vsel %vm1019, %v1654, %v1663
      %v1666 = vsel %vm468, %v1493, 0
      %v1669 = vsel %vm468, %v1502, 0
      %v1672 = vsel %vm468, %v1511, 0
      %v1675 = vsel %vm468, %v1520, 0
      %v1678 = vsel %vm468, %v1529, 0
      %v1681 = vsel %vm468, %v1538, 0
      %v1684 = vsel %vm468, %v1547, 0
      %v1687 = vsel %vm468, %v1556, 0
      %v1690 = vsel %vm468, %v1565, 0
      %v1693 = vsel %vm468, %v1574, 0
      %v1696 = vsel %vm468, %v1583, 0
      %v1699 = vsel %vm468, %v1592, 0
      %v1702 = vsel %vm468, %v1601, 0
      %v1705 = vsel %vm468, %v1610, 0
      %v1708 = vsel %vm468, %v1619, 0
      %v1711 = vsel %vm468, %v1628, 0
      %v1714 = vsel %vm468, %v1637, 0
      %v1717 = vsel %vm468, %v1646, 0
      %v1720 = vsel %vm468, %v1655, 0
      %v1723 = vsel %vm468, %v1664, 0
      %v1726 = vsel %vm468, %v1663, 0
      %v1729 = vsel %vm532, %v1371, 0
      %1731 = vmatpush.bf16.msra.mxu0 0
      %1732 = vmatpush.bf16.msra.mxu0 0
      %1733 = vmatpush.bf16.msra.mxu0 0
      %1734 = vmatpush.bf16.msra.mxu0 0
      %1735 = vmatpush.bf16.msra.mxu0 0
      %1736 = vmatpush.bf16.msra.mxu0 0
      %1737 = vmatpush.bf16.msra.mxu0 0
      %1738 = vmatpush.bf16.msra.mxu0 %v1729
      %1739 = vmatmul.bf16.gmra.mxu0 %v1666
      %v1740 = vpop.f32.mrf.mxu0
      %v1741 = vadd.f32 0.0, %v1740
      %v1742 = vpop.f32.mrf.mxu0
      %v1743 = vadd.f32 0.0, %v1742
      %1744 = vmatmul.bf16.gmra.mxu0 %v1669
      %v1745 = vpop.f32.mrf.mxu0
      %v1746 = vadd.f32 0.0, %v1745
      %v1747 = vpop.f32.mrf.mxu0
      %v1748 = vadd.f32 0.0, %v1747
      %1749 = vmatmul.bf16.gmra.mxu0 %v1672
      %v1750 = vpop.f32.mrf.mxu0
      %v1751 = vadd.f32 0.0, %v1750
      %v1752 = vpop.f32.mrf.mxu0
      %v1753 = vadd.f32 0.0, %v1752
      %1754 = vmatmul.bf16.gmra.mxu0 %v1675
      %v1755 = vpop.f32.mrf.mxu0
      %v1756 = vadd.f32 0.0, %v1755
      %v1757 = vpop.f32.mrf.mxu0
      %v1758 = vadd.f32 0.0, %v1757
      %1759 = vmatmul.bf16.gmra.mxu0 %v1678
      %v1760 = vpop.f32.mrf.mxu0
      %v1761 = vadd.f32 0.0, %v1760
      %v1762 = vpop.f32.mrf.mxu0
      %v1763 = vadd.f32 0.0, %v1762
      %1764 = vmatmul.bf16.gmra.mxu0 %v1681
      %v1765 = vpop.f32.mrf.mxu0
      %v1766 = vadd.f32 0.0, %v1765
      %v1767 = vpop.f32.mrf.mxu0
      %v1768 = vadd.f32 0.0, %v1767
      %1769 = vmatmul.bf16.gmra.mxu0 %v1684
      %v1770 = vpop.f32.mrf.mxu0
      %v1771 = vadd.f32 0.0, %v1770
      %v1772 = vpop.f32.mrf.mxu0
      %v1773 = vadd.f32 0.0, %v1772
      %1774 = vmatmul.bf16.gmra.mxu0 %v1687
      %v1775 = vpop.f32.mrf.mxu0
      %v1776 = vadd.f32 0.0, %v1775
      %v1777 = vpop.f32.mrf.mxu0
      %v1778 = vadd.f32 0.0, %v1777
      %1779 = vmatmul.bf16.gmra.mxu0 %v1690
      %v1780 = vpop.f32.mrf.mxu0
      %v1781 = vadd.f32 0.0, %v1780
      %v1782 = vpop.f32.mrf.mxu0
      %v1783 = vadd.f32 0.0, %v1782
      %1784 = vmatmul.bf16.gmra.mxu0 %v1693
      %v1785 = vpop.f32.mrf.mxu0
      %v1786 = vadd.f32 0.0, %v1785
      %v1787 = vpop.f32.mrf.mxu0
      %v1788 = vadd.f32 0.0, %v1787
      %1789 = vmatmul.bf16.gmra.mxu0 %v1696
      %v1790 = vpop.f32.mrf.mxu0
      %v1791 = vadd.f32 0.0, %v1790
      %v1792 = vpop.f32.mrf.mxu0
      %v1793 = vadd.f32 0.0, %v1792
      %1794 = vmatmul.bf16.gmra.mxu0 %v1699
      %v1795 = vpop.f32.mrf.mxu0
      %v1796 = vadd.f32 0.0, %v1795
      %v1797 = vpop.f32.mrf.mxu0
      %v1798 = vadd.f32 0.0, %v1797
      %1799 = vmatmul.bf16.gmra.mxu0 %v1702
      %v1800 = vpop.f32.mrf.mxu0
      %v1801 = vadd.f32 0.0, %v1800
      %v1802 = vpop.f32.mrf.mxu0
      %v1803 = vadd.f32 0.0, %v1802
      %1804 = vmatmul.bf16.gmra.mxu0 %v1705
      %v1805 = vpop.f32.mrf.mxu0
      %v1806 = vadd.f32 0.0, %v1805
      %v1807 = vpop.f32.mrf.mxu0
      %v1808 = vadd.f32 0.0, %v1807
      %1809 = vmatmul.bf16.gmra.mxu0 %v1708
      %v1810 = vpop.f32.mrf.mxu0
      %v1811 = vadd.f32 0.0, %v1810
      %v1812 = vpop.f32.mrf.mxu0
      %v1813 = vadd.f32 0.0, %v1812
      %1814 = vmatmul.bf16.gmra.mxu0 %v1711
      %v1815 = vpop.f32.mrf.mxu0
      %v1816 = vadd.f32 0.0, %v1815
      %v1817 = vpop.f32.mrf.mxu0
      %v1818 = vadd.f32 0.0, %v1817
      %1819 = vmatmul.bf16.gmra.mxu0 %v1714
      %v1820 = vpop.f32.mrf.mxu0
      %v1821 = vadd.f32 0.0, %v1820
      %v1822 = vpop.f32.mrf.mxu0
      %v1823 = vadd.f32 0.0, %v1822
      %1824 = vmatmul.bf16.gmra.mxu0 %v1717
      %v1825 = vpop.f32.mrf.mxu0
      %v1826 = vadd.f32 0.0, %v1825
      %v1827 = vpop.f32.mrf.mxu0
      %v1828 = vadd.f32 0.0, %v1827
      %1829 = vmatmul.bf16.gmra.mxu0 %v1720
      %v1830 = vpop.f32.mrf.mxu0
      %v1831 = vadd.f32 0.0, %v1830
      %v1832 = vpop.f32.mrf.mxu0
      %v1833 = vadd.f32 0.0, %v1832
      %1834 = vmatmul.bf16.gmra.mxu0 %v1723
      %v1835 = vpop.f32.mrf.mxu0
      %v1836 = vadd.f32 0.0, %v1835
      %v1837 = vpop.f32.mrf.mxu0
      %v1838 = vadd.f32 0.0, %v1837
      %1839 = vmatmul.bf16.gmra.mxu0 %v1726
      %v1840 = vpop.f32.mrf.mxu0
      %v1841 = vadd.f32 0.0, %v1840
      %v1842 = vpop.f32.mrf.mxu0
      %1843 = vdwg.mxu0
      %v1844 = vadd.f32 %v1282, %v1741
      %v1845 = vadd.f32 %v1283, %v1743
      %v1846 = vadd.f32 %v1284, %v1746
      %v1847 = vadd.f32 %v1285, %v1748
      %v1848 = vadd.f32 %v1286, %v1751
      %v1849 = vadd.f32 %v1287, %v1753
      %v1850 = vadd.f32 %v1288, %v1756
      %v1851 = vadd.f32 %v1289, %v1758
      %v1852 = vadd.f32 %v1290, %v1761
      %v1853 = vadd.f32 %v1291, %v1763
      %v1854 = vadd.f32 %v1292, %v1766
      %v1855 = vadd.f32 %v1293, %v1768
      %v1856 = vadd.f32 %v1294, %v1771
      %v1857 = vadd.f32 %v1295, %v1773
      %v1858 = vadd.f32 %v1296, %v1776
      %v1859 = vadd.f32 %v1297, %v1778
      %v1860 = vadd.f32 %v1298, %v1781
      %v1861 = vadd.f32 %v1299, %v1783
      %v1862 = vadd.f32 %v1300, %v1786
      %v1863 = vadd.f32 %v1301, %v1788
      %v1864 = vadd.f32 %v1302, %v1791
      %v1865 = vadd.f32 %v1303, %v1793
      %v1866 = vadd.f32 %v1304, %v1796
      %v1867 = vadd.f32 %v1305, %v1798
      %v1868 = vadd.f32 %v1306, %v1801
      %v1869 = vadd.f32 %v1307, %v1803
      %v1870 = vadd.f32 %v1308, %v1806
      %v1871 = vadd.f32 %v1309, %v1808
      %v1872 = vadd.f32 %v1310, %v1811
      %v1873 = vadd.f32 %v1311, %v1813
      %v1874 = vadd.f32 %v1312, %v1816
      %v1875 = vadd.f32 %v1313, %v1818
      %v1876 = vadd.f32 %v1314, %v1821
      %v1877 = vadd.f32 %v1315, %v1823
      %v1878 = vadd.f32 %v1316, %v1826
      %v1879 = vadd.f32 %v1317, %v1828
      %v1880 = vadd.f32 %v1318, %v1831
      %v1881 = vadd.f32 %v1319, %v1833
      %v1882 = vadd.f32 %v1320, %v1836
      %v1883 = vadd.f32 %v1321, %v1838
      %v1884 = vadd.f32 %v1322, %v1841
      %s1885 = sadd.s32 %s270, 328
      %s1886 = sshra.s32 %s1885, 3
      %s1887 = sand.u32 %s1885, 7
      %s1888 = smul.addr %s1886, 4
      %s1889 = scalar_lea.vmem %s243, %s1888
      %v1890 = vld [vmem:[%s1889] sm:$0xf]
      %v1891 = vld [vmem:[%s1889 + $0x4] sm:$0xf]
      %v1892 = vld [vmem:[%s1889 + $0x8] sm:$0xf]
      %v1893 = vld [vmem:[%s1889 + $0xc] sm:$0xf]
      %v1894 = vld [vmem:[%s1889 + $0x10] sm:$0xf]
      %v1895 = vld [vmem:[%s1889 + $0x14] sm:$0xf]
      %v1896 = vld [vmem:[%s1889 + $0x18] sm:$0xf]
      %v1897 = vld [vmem:[%s1889 + $0x1c] sm:$0xf]
      %v1898 = vld [vmem:[%s1889 + $0x20] sm:$0xf]
      %v1899 = vld [vmem:[%s1889 + $0x24] sm:$0xf]
      %v1900 = vld [vmem:[%s1889 + $0x28] sm:$0xf]
      %v1901 = vld [vmem:[%s1889 + $0x2c] sm:$0xf]
      %v1902 = vld [vmem:[%s1889 + $0x30] sm:$0xf]
      %v1903 = vld [vmem:[%s1889 + $0x34] sm:$0xf]
      %v1904 = vld [vmem:[%s1889 + $0x38] sm:$0xf]
      %v1905 = vld [vmem:[%s1889 + $0x3c] sm:$0xf]
      %v1906 = vld [vmem:[%s1889 + $0x40] sm:$0xf]
      %v1907 = vld [vmem:[%s1889 + $0x44] sm:$0xf]
      %v1908 = vld [vmem:[%s1889 + $0x48] sm:$0xf]
      %v1909 = vld [vmem:[%s1889 + $0x4c] sm:$0xf]
      %v1910 = vld [vmem:[%s1889 + $0x50] sm:$0xf]
      %v1911 = vld [vmem:[%s1889 + $0x54] sm:$0xf]
      %v1912 = vld [vmem:[%s1889 + $0x58] sm:$0xf]
      %v1913 = vld [vmem:[%s1889 + $0x5c] sm:$0xf]
      %v1914 = vld [vmem:[%s1889 + $0x60] sm:$0xf]
      %v1915 = vld [vmem:[%s1889 + $0x64] sm:$0xf]
      %v1916 = vld [vmem:[%s1889 + $0x68] sm:$0xf]
      %v1917 = vld [vmem:[%s1889 + $0x6c] sm:$0xf]
      %v1918 = vld [vmem:[%s1889 + $0x70] sm:$0xf]
      %v1919 = vld [vmem:[%s1889 + $0x74] sm:$0xf]
      %v1920 = vld [vmem:[%s1889 + $0x78] sm:$0xf]
      %v1921 = vld [vmem:[%s1889 + $0x7c] sm:$0xf]
      %v1922 = vld [vmem:[%s1889 + $0x80] sm:$0xf]
      %v1923 = vld [vmem:[%s1889 + $0x84] sm:$0xf]
      %v1924 = vld [vmem:[%s1889 + $0x88] sm:$0xf]
      %v1925 = vld [vmem:[%s1889 + $0x8c] sm:$0xf]
      %v1926 = vld [vmem:[%s1889 + $0x90] sm:$0xf]
      %v1927 = vld [vmem:[%s1889 + $0x94] sm:$0xf]
      %v1928 = vld [vmem:[%s1889 + $0x98] sm:$0xf]
      %v1929 = vld [vmem:[%s1889 + $0x9c] sm:$0xf]
      %v1930 = vld [vmem:[%s1889 + $0xa0] sm:$0xf]
      %v1931 = vld [vmem:[%s1889 + $0xa4] sm:$0xf]
      %s1932 = scalar_lea.vmem %s1, 8
      %v1933 = vld [vmem:[%s1932] sm:$0x3]
      %v1975 = vunpack.c.l.b16 %v1890
      %v1976 = vunpack.c.l.b16 %v1891
      %v1977 = vunpack.c.l.b16 %v1892
      %v1978 = vunpack.c.l.b16 %v1893
      %v1979 = vunpack.c.l.b16 %v1894
      %v1980 = vunpack.c.l.b16 %v1895
      %v1981 = vunpack.c.l.b16 %v1896
      %v1982 = vunpack.c.l.b16 %v1897
      %v1983 = vunpack.c.l.b16 %v1898
      %v1984 = vunpack.c.l.b16 %v1899
      %v1985 = vunpack.c.l.b16 %v1900
      %v1986 = vunpack.c.l.b16 %v1901
      %v1987 = vunpack.c.l.b16 %v1902
      %v1988 = vunpack.c.l.b16 %v1903
      %v1989 = vunpack.c.l.b16 %v1904
      %v1990 = vunpack.c.l.b16 %v1905
      %v1991 = vunpack.c.l.b16 %v1906
      %v1992 = vunpack.c.l.b16 %v1907
      %v1993 = vunpack.c.l.b16 %v1908
      %v1994 = vunpack.c.l.b16 %v1909
      %v1995 = vunpack.c.l.b16 %v1910
      %v1996 = vunpack.c.l.b16 %v1911
      %v1997 = vunpack.c.l.b16 %v1912
      %v1998 = vunpack.c.l.b16 %v1913
      %v1999 = vunpack.c.l.b16 %v1914
      %v2000 = vunpack.c.l.b16 %v1915
      %v2001 = vunpack.c.l.b16 %v1916
      %v2002 = vunpack.c.l.b16 %v1917
      %v2003 = vunpack.c.l.b16 %v1918
      %v2004 = vunpack.c.l.b16 %v1919
      %v2005 = vunpack.c.l.b16 %v1920
      %v2006 = vunpack.c.l.b16 %v1921
      %v2007 = vunpack.c.l.b16 %v1922
      %v2008 = vunpack.c.l.b16 %v1923
      %v2009 = vunpack.c.l.b16 %v1924
      %v2010 = vunpack.c.l.b16 %v1925
      %v2011 = vunpack.c.l.b16 %v1926
      %v2012 = vunpack.c.l.b16 %v1927
      %v2013 = vunpack.c.l.b16 %v1928
      %v2014 = vunpack.c.l.b16 %v1929
      %v2015 = vunpack.c.l.b16 %v1930
      %v2016 = vpack.c.b16 %v1976, %v1975
      %v2017 = vpack.c.b16 %v1978, %v1977
      %v2018 = vpack.c.b16 %v1980, %v1979
      %v2019 = vpack.c.b16 %v1982, %v1981
      %v2020 = vpack.c.b16 %v1984, %v1983
      %v2021 = vpack.c.b16 %v1986, %v1985
      %v2022 = vpack.c.b16 %v1988, %v1987
      %v2023 = vpack.c.b16 %v1990, %v1989
      %v2024 = vpack.c.b16 %v1992, %v1991
      %v2025 = vpack.c.b16 %v1994, %v1993
      %v2026 = vpack.c.b16 %v1996, %v1995
      %v2027 = vpack.c.b16 %v1998, %v1997
      %v2028 = vpack.c.b16 %v2000, %v1999
      %v2029 = vpack.c.b16 %v2002, %v2001
      %v2030 = vpack.c.b16 %v2004, %v2003
      %v2031 = vpack.c.b16 %v2006, %v2005
      %v2032 = vpack.c.b16 %v2008, %v2007
      %v2033 = vpack.c.b16 %v2010, %v2009
      %v2034 = vpack.c.b16 %v2012, %v2011
      %v2035 = vpack.c.b16 %v2014, %v2013
      %v2036 = vpack.c.b16 %v2015, %v2015
      %v2038 = vsel %vm468, %v2016, 0
      %v2041 = vsel %vm468, %v2017, 0
      %v2044 = vsel %vm468, %v2018, 0
      %v2047 = vsel %vm468, %v2019, 0
      %v2050 = vsel %vm468, %v2020, 0
      %v2053 = vsel %vm468, %v2021, 0
      %v2056 = vsel %vm468, %v2022, 0
      %v2059 = vsel %vm468, %v2023, 0
      %v2062 = vsel %vm468, %v2024, 0
      %v2065 = vsel %vm468, %v2025, 0
      %v2068 = vsel %vm468, %v2026, 0
      %v2071 = vsel %vm468, %v2027, 0
      %v2074 = vsel %vm468, %v2028, 0
      %v2077 = vsel %vm468, %v2029, 0
      %v2080 = vsel %vm468, %v2030, 0
      %v2083 = vsel %vm468, %v2031, 0
      %v2086 = vsel %vm468, %v2032, 0
      %v2089 = vsel %vm468, %v2033, 0
      %v2092 = vsel %vm468, %v2034, 0
      %v2095 = vsel %vm468, %v2035, 0
      %v2098 = vsel %vm468, %v2036, 0
      %v2101 = vsel %vm532, %v1933, 0
      %2103 = vmatpush.bf16.msra.mxu0 0
      %2104 = vmatpush.bf16.msra.mxu0 0
      %2105 = vmatpush.bf16.msra.mxu0 0
      %2106 = vmatpush.bf16.msra.mxu0 0
      %2107 = vmatpush.bf16.msra.mxu0 0
      %2108 = vmatpush.bf16.msra.mxu0 0
      %2109 = vmatpush.bf16.msra.mxu0 0
      %2110 = vmatpush.bf16.msra.mxu0 %v2101
      %2111 = vmatmul.bf16.gmra.mxu0 %v2038
      %v2112 = vpop.f32.mrf.mxu0
      %v2113 = vadd.f32 0.0, %v2112
      %v2114 = vpop.f32.mrf.mxu0
      %v2115 = vadd.f32 0.0, %v2114
      %2116 = vmatmul.bf16.gmra.mxu0 %v2041
      %v2117 = vpop.f32.mrf.mxu0
      %v2118 = vadd.f32 0.0, %v2117
      %v2119 = vpop.f32.mrf.mxu0
      %v2120 = vadd.f32 0.0, %v2119
      %2121 = vmatmul.bf16.gmra.mxu0 %v2044
      %v2122 = vpop.f32.mrf.mxu0
      %v2123 = vadd.f32 0.0, %v2122
      %v2124 = vpop.f32.mrf.mxu0
      %v2125 = vadd.f32 0.0, %v2124
      %2126 = vmatmul.bf16.gmra.mxu0 %v2047
      %v2127 = vpop.f32.mrf.mxu0
      %v2128 = vadd.f32 0.0, %v2127
      %v2129 = vpop.f32.mrf.mxu0
      %v2130 = vadd.f32 0.0, %v2129
      %2131 = vmatmul.bf16.gmra.mxu0 %v2050
      %v2132 = vpop.f32.mrf.mxu0
      %v2133 = vadd.f32 0.0, %v2132
      %v2134 = vpop.f32.mrf.mxu0
      %v2135 = vadd.f32 0.0, %v2134
      %2136 = vmatmul.bf16.gmra.mxu0 %v2053
      %v2137 = vpop.f32.mrf.mxu0
      %v2138 = vadd.f32 0.0, %v2137
      %v2139 = vpop.f32.mrf.mxu0
      %v2140 = vadd.f32 0.0, %v2139
      %2141 = vmatmul.bf16.gmra.mxu0 %v2056
      %v2142 = vpop.f32.mrf.mxu0
      %v2143 = vadd.f32 0.0, %v2142
      %v2144 = vpop.f32.mrf.mxu0
      %v2145 = vadd.f32 0.0, %v2144
      %2146 = vmatmul.bf16.gmra.mxu0 %v2059
      %v2147 = vpop.f32.mrf.mxu0
      %v2148 = vadd.f32 0.0, %v2147
      %v2149 = vpop.f32.mrf.mxu0
      %v2150 = vadd.f32 0.0, %v2149
      %2151 = vmatmul.bf16.gmra.mxu0 %v2062
      %v2152 = vpop.f32.mrf.mxu0
      %v2153 = vadd.f32 0.0, %v2152
      %v2154 = vpop.f32.mrf.mxu0
      %v2155 = vadd.f32 0.0, %v2154
      %2156 = vmatmul.bf16.gmra.mxu0 %v2065
      %v2157 = vpop.f32.mrf.mxu0
      %v2158 = vadd.f32 0.0, %v2157
      %v2159 = vpop.f32.mrf.mxu0
      %v2160 = vadd.f32 0.0, %v2159
      %2161 = vmatmul.bf16.gmra.mxu0 %v2068
      %v2162 = vpop.f32.mrf.mxu0
      %v2163 = vadd.f32 0.0, %v2162
      %v2164 = vpop.f32.mrf.mxu0
      %v2165 = vadd.f32 0.0, %v2164
      %2166 = vmatmul.bf16.gmra.mxu0 %v2071
      %v2167 = vpop.f32.mrf.mxu0
      %v2168 = vadd.f32 0.0, %v2167
      %v2169 = vpop.f32.mrf.mxu0
      %v2170 = vadd.f32 0.0, %v2169
      %2171 = vmatmul.bf16.gmra.mxu0 %v2074
      %v2172 = vpop.f32.mrf.mxu0
      %v2173 = vadd.f32 0.0, %v2172
      %v2174 = vpop.f32.mrf.mxu0
      %v2175 = vadd.f32 0.0, %v2174
      %2176 = vmatmul.bf16.gmra.mxu0 %v2077
      %v2177 = vpop.f32.mrf.mxu0
      %v2178 = vadd.f32 0.0, %v2177
      %v2179 = vpop.f32.mrf.mxu0
      %v2180 = vadd.f32 0.0, %v2179
      %2181 = vmatmul.bf16.gmra.mxu0 %v2080
      %v2182 = vpop.f32.mrf.mxu0
      %v2183 = vadd.f32 0.0, %v2182
      %v2184 = vpop.f32.mrf.mxu0
      %v2185 = vadd.f32 0.0, %v2184
      %2186 = vmatmul.bf16.gmra.mxu0 %v2083
      %v2187 = vpop.f32.mrf.mxu0
      %v2188 = vadd.f32 0.0, %v2187
      %v2189 = vpop.f32.mrf.mxu0
      %v2190 = vadd.f32 0.0, %v2189
      %2191 = vmatmul.bf16.gmra.mxu0 %v2086
      %v2192 = vpop.f32.mrf.mxu0
      %v2193 = vadd.f32 0.0, %v2192
      %v2194 = vpop.f32.mrf.mxu0
      %v2195 = vadd.f32 0.0, %v2194
      %2196 = vmatmul.bf16.gmra.mxu0 %v2089
      %v2197 = vpop.f32.mrf.mxu0
      %v2198 = vadd.f32 0.0, %v2197
      %v2199 = vpop.f32.mrf.mxu0
      %v2200 = vadd.f32 0.0, %v2199
      %2201 = vmatmul.bf16.gmra.mxu0 %v2092
      %v2202 = vpop.f32.mrf.mxu0
      %v2203 = vadd.f32 0.0, %v2202
      %v2204 = vpop.f32.mrf.mxu0
      %v2205 = vadd.f32 0.0, %v2204
      %2206 = vmatmul.bf16.gmra.mxu0 %v2095
      %v2207 = vpop.f32.mrf.mxu0
      %v2208 = vadd.f32 0.0, %v2207
      %v2209 = vpop.f32.mrf.mxu0
      %v2210 = vadd.f32 0.0, %v2209
      %2211 = vmatmul.bf16.gmra.mxu0 %v2098
      %v2212 = vpop.f32.mrf.mxu0
      %v2213 = vadd.f32 0.0, %v2212
      %v2214 = vpop.f32.mrf.mxu0
      %2215 = vdwg.mxu0
      %v2216 = vadd.f32 %v1844, %v2113
      %v2217 = vadd.f32 %v1845, %v2115
      %v2218 = vadd.f32 %v1846, %v2118
      %v2219 = vadd.f32 %v1847, %v2120
      %v2220 = vadd.f32 %v1848, %v2123
      %v2221 = vadd.f32 %v1849, %v2125
      %v2222 = vadd.f32 %v1850, %v2128
      %v2223 = vadd.f32 %v1851, %v2130
      %v2224 = vadd.f32 %v1852, %v2133
      %v2225 = vadd.f32 %v1853, %v2135
      %v2226 = vadd.f32 %v1854, %v2138
      %v2227 = vadd.f32 %v1855, %v2140
      %v2228 = vadd.f32 %v1856, %v2143
      %v2229 = vadd.f32 %v1857, %v2145
      %v2230 = vadd.f32 %v1858, %v2148
      %v2231 = vadd.f32 %v1859, %v2150
      %v2232 = vadd.f32 %v1860, %v2153
      %v2233 = vadd.f32 %v1861, %v2155
      %v2234 = vadd.f32 %v1862, %v2158
      %v2235 = vadd.f32 %v1863, %v2160
      %v2236 = vadd.f32 %v1864, %v2163
      %v2237 = vadd.f32 %v1865, %v2165
      %v2238 = vadd.f32 %v1866, %v2168
      %v2239 = vadd.f32 %v1867, %v2170
      %v2240 = vadd.f32 %v1868, %v2173
      %v2241 = vadd.f32 %v1869, %v2175
      %v2242 = vadd.f32 %v1870, %v2178
      %v2243 = vadd.f32 %v1871, %v2180
      %v2244 = vadd.f32 %v1872, %v2183
      %v2245 = vadd.f32 %v1873, %v2185
      %v2246 = vadd.f32 %v1874, %v2188
      %v2247 = vadd.f32 %v1875, %v2190
      %v2248 = vadd.f32 %v1876, %v2193
      %v2249 = vadd.f32 %v1877, %v2195
      %v2250 = vadd.f32 %v1878, %v2198
      %v2251 = vadd.f32 %v1879, %v2200
      %v2252 = vadd.f32 %v1880, %v2203
      %v2253 = vadd.f32 %v1881, %v2205
      %v2254 = vadd.f32 %v1882, %v2208
      %v2255 = vadd.f32 %v1883, %v2210
      %v2256 = vadd.f32 %v1884, %v2213
      %s2257 = scalar_lea.vmem %s1, 10
      %v2258 = vld [vmem:[%s2257] sm:$0x3]
      %v2260 = vunpack.c.l.b16 %v1931
      %v2261 = vpack.c.b16 %v2260, %v2015
      %vm2262 = vsmask.f32 7424
      %v2263 = vshrl.u32 %v2016, 16
      %v2265 = vshll.u32 %v2016, 16
      %v2267 = vrot.slane %v2265, 1
      %v2268 = vor.u32 %v2263, %v2267
      %v2269 = vshll.u32 %v2017, 16
      %v2271 = vrot.slane %v2269, 1
      %v2272 = vsel %vm2262, %v2268, %v2271
      %v2273 = vshrl.u32 %v2017, 16
      %v2275 = vor.u32 %v2273, %v2271
      %v2276 = vshll.u32 %v2018, 16
      %v2278 = vrot.slane %v2276, 1
      %v2279 = vsel %vm2262, %v2275, %v2278
      %v2280 = vshrl.u32 %v2018, 16
      %v2282 = vor.u32 %v2280, %v2278
      %v2283 = vshll.u32 %v2019, 16
      %v2285 = vrot.slane %v2283, 1
      %v2286 = vsel %vm2262, %v2282, %v2285
      %v2287 = vshrl.u32 %v2019, 16
      %v2289 = vor.u32 %v2287, %v2285
      %v2290 = vshll.u32 %v2020, 16
      %v2292 = vrot.slane %v2290, 1
      %v2293 = vsel %vm2262, %v2289, %v2292
      %v2294 = vshrl.u32 %v2020, 16
      %v2296 = vor.u32 %v2294, %v2292
      %v2297 = vshll.u32 %v2021, 16
      %v2299 = vrot.slane %v2297, 1
      %v2300 = vsel %vm2262, %v2296, %v2299
      %v2301 = vshrl.u32 %v2021, 16
      %v2303 = vor.u32 %v2301, %v2299
      %v2304 = vshll.u32 %v2022, 16
      %v2306 = vrot.slane %v2304, 1
      %v2307 = vsel %vm2262, %v2303, %v2306
      %v2308 = vshrl.u32 %v2022, 16
      %v2310 = vor.u32 %v2308, %v2306
      %v2311 = vshll.u32 %v2023, 16
      %v2313 = vrot.slane %v2311, 1
      %v2314 = vsel %vm2262, %v2310, %v2313
      %v2315 = vshrl.u32 %v2023, 16
      %v2317 = vor.u32 %v2315, %v2313
      %v2318 = vshll.u32 %v2024, 16
      %v2320 = vrot.slane %v2318, 1
      %v2321 = vsel %vm2262, %v2317, %v2320
      %v2322 = vshrl.u32 %v2024, 16
      %v2324 = vor.u32 %v2322, %v2320
      %v2325 = vshll.u32 %v2025, 16
      %v2327 = vrot.slane %v2325, 1
      %v2328 = vsel %vm2262, %v2324, %v2327
      %v2329 = vshrl.u32 %v2025, 16
      %v2331 = vor.u32 %v2329, %v2327
      %v2332 = vshll.u32 %v2026, 16
      %v2334 = vrot.slane %v2332, 1
      %v2335 = vsel %vm2262, %v2331, %v2334
      %v2336 = vshrl.u32 %v2026, 16
      %v2338 = vor.u32 %v2336, %v2334
      %v2339 = vshll.u32 %v2027, 16
      %v2341 = vrot.slane %v2339, 1
      %v2342 = vsel %vm2262, %v2338, %v2341
      %v2343 = vshrl.u32 %v2027, 16
      %v2345 = vor.u32 %v2343, %v2341
      %v2346 = vshll.u32 %v2028, 16
      %v2348 = vrot.slane %v2346, 1
      %v2349 = vsel %vm2262, %v2345, %v2348
      %v2350 = vshrl.u32 %v2028, 16
      %v2352 = vor.u32 %v2350, %v2348
      %v2353 = vshll.u32 %v2029, 16
      %v2355 = vrot.slane %v2353, 1
      %v2356 = vsel %vm2262, %v2352, %v2355
      %v2357 = vshrl.u32 %v2029, 16
      %v2359 = vor.u32 %v2357, %v2355
      %v2360 = vshll.u32 %v2030, 16
      %v2362 = vrot.slane %v2360, 1
      %v2363 = vsel %vm2262, %v2359, %v2362
      %v2364 = vshrl.u32 %v2030, 16
      %v2366 = vor.u32 %v2364, %v2362
      %v2367 = vshll.u32 %v2031, 16
      %v2369 = vrot.slane %v2367, 1
      %v2370 = vsel %vm2262, %v2366, %v2369
      %v2371 = vshrl.u32 %v2031, 16
      %v2373 = vor.u32 %v2371, %v2369
      %v2374 = vshll.u32 %v2032, 16
      %v2376 = vrot.slane %v2374, 1
      %v2377 = vsel %vm2262, %v2373, %v2376
      %v2378 = vshrl.u32 %v2032, 16
      %v2380 = vor.u32 %v2378, %v2376
      %v2381 = vshll.u32 %v2033, 16
      %v2383 = vrot.slane %v2381, 1
      %v2384 = vsel %vm2262, %v2380, %v2383
      %v2385 = vshrl.u32 %v2033, 16
      %v2387 = vor.u32 %v2385, %v2383
      %v2388 = vshll.u32 %v2034, 16
      %v2390 = vrot.slane %v2388, 1
      %v2391 = vsel %vm2262, %v2387, %v2390
      %v2392 = vshrl.u32 %v2034, 16
      %v2394 = vor.u32 %v2392, %v2390
      %v2395 = vshll.u32 %v2035, 16
      %v2397 = vrot.slane %v2395, 1
      %v2398 = vsel %vm2262, %v2394, %v2397
      %v2399 = vshrl.u32 %v2035, 16
      %v2401 = vor.u32 %v2399, %v2397
      %v2403 = vshll.u32 %v2261, 16
      %v2405 = vrot.slane %v2403, 1
      %v2406 = vsel %vm2262, %v2401, %v2405
      %v2407 = vshrl.u32 %v2261, 16
      %v2409 = vor.u32 %v2407, %v2405
      %v2411 = vsel %vm468, %v2272, 0
      %v2414 = vsel %vm468, %v2279, 0
      %v2417 = vsel %vm468, %v2286, 0
      %v2420 = vsel %vm468, %v2293, 0
      %v2423 = vsel %vm468, %v2300, 0
      %v2426 = vsel %vm468, %v2307, 0
      %v2429 = vsel %vm468, %v2314, 0
      %v2432 = vsel %vm468, %v2321, 0
      %v2435 = vsel %vm468, %v2328, 0
      %v2438 = vsel %vm468, %v2335, 0
      %v2441 = vsel %vm468, %v2342, 0
      %v2444 = vsel %vm468, %v2349, 0
      %v2447 = vsel %vm468, %v2356, 0
      %v2450 = vsel %vm468, %v2363, 0
      %v2453 = vsel %vm468, %v2370, 0
      %v2456 = vsel %vm468, %v2377, 0
      %v2459 = vsel %vm468, %v2384, 0
      %v2462 = vsel %vm468, %v2391, 0
      %v2465 = vsel %vm468, %v2398, 0
      %v2468 = vsel %vm468, %v2406, 0
      %v2471 = vsel %vm468, %v2409, 0
      %v2474 = vsel %vm532, %v2258, 0
      %2476 = vmatpush.bf16.msra.mxu0 0
      %2477 = vmatpush.bf16.msra.mxu0 0
      %2478 = vmatpush.bf16.msra.mxu0 0
      %2479 = vmatpush.bf16.msra.mxu0 0
      %2480 = vmatpush.bf16.msra.mxu0 0
      %2481 = vmatpush.bf16.msra.mxu0 0
      %2482 = vmatpush.bf16.msra.mxu0 0
      %2483 = vmatpush.bf16.msra.mxu0 %v2474
      %2484 = vmatmul.bf16.gmra.mxu0 %v2411
      %v2485 = vpop.f32.mrf.mxu0
      %v2486 = vadd.f32 0.0, %v2485
      %v2487 = vpop.f32.mrf.mxu0
      %v2488 = vadd.f32 0.0, %v2487
      %2489 = vmatmul.bf16.gmra.mxu0 %v2414
      %v2490 = vpop.f32.mrf.mxu0
      %v2491 = vadd.f32 0.0, %v2490
      %v2492 = vpop.f32.mrf.mxu0
      %v2493 = vadd.f32 0.0, %v2492
      %2494 = vmatmul.bf16.gmra.mxu0 %v2417
      %v2495 = vpop.f32.mrf.mxu0
      %v2496 = vadd.f32 0.0, %v2495
      %v2497 = vpop.f32.mrf.mxu0
      %v2498 = vadd.f32 0.0, %v2497
      %2499 = vmatmul.bf16.gmra.mxu0 %v2420
      %v2500 = vpop.f32.mrf.mxu0
      %v2501 = vadd.f32 0.0, %v2500
      %v2502 = vpop.f32.mrf.mxu0
      %v2503 = vadd.f32 0.0, %v2502
      %2504 = vmatmul.bf16.gmra.mxu0 %v2423
      %v2505 = vpop.f32.mrf.mxu0
      %v2506 = vadd.f32 0.0, %v2505
      %v2507 = vpop.f32.mrf.mxu0
      %v2508 = vadd.f32 0.0, %v2507
      %2509 = vmatmul.bf16.gmra.mxu0 %v2426
      %v2510 = vpop.f32.mrf.mxu0
      %v2511 = vadd.f32 0.0, %v2510
      %v2512 = vpop.f32.mrf.mxu0
      %v2513 = vadd.f32 0.0, %v2512
      %2514 = vmatmul.bf16.gmra.mxu0 %v2429
      %v2515 = vpop.f32.mrf.mxu0
      %v2516 = vadd.f32 0.0, %v2515
      %v2517 = vpop.f32.mrf.mxu0
      %v2518 = vadd.f32 0.0, %v2517
      %2519 = vmatmul.bf16.gmra.mxu0 %v2432
      %v2520 = vpop.f32.mrf.mxu0
      %v2521 = vadd.f32 0.0, %v2520
      %v2522 = vpop.f32.mrf.mxu0
      %v2523 = vadd.f32 0.0, %v2522
      %2524 = vmatmul.bf16.gmra.mxu0 %v2435
      %v2525 = vpop.f32.mrf.mxu0
      %v2526 = vadd.f32 0.0, %v2525
      %v2527 = vpop.f32.mrf.mxu0
      %v2528 = vadd.f32 0.0, %v2527
      %2529 = vmatmul.bf16.gmra.mxu0 %v2438
      %v2530 = vpop.f32.mrf.mxu0
      %v2531 = vadd.f32 0.0, %v2530
      %v2532 = vpop.f32.mrf.mxu0
      %v2533 = vadd.f32 0.0, %v2532
      %2534 = vmatmul.bf16.gmra.mxu0 %v2441
      %v2535 = vpop.f32.mrf.mxu0
      %v2536 = vadd.f32 0.0, %v2535
      %v2537 = vpop.f32.mrf.mxu0
      %v2538 = vadd.f32 0.0, %v2537
      %2539 = vmatmul.bf16.gmra.mxu0 %v2444
      %v2540 = vpop.f32.mrf.mxu0
      %v2541 = vadd.f32 0.0, %v2540
      %v2542 = vpop.f32.mrf.mxu0
      %v2543 = vadd.f32 0.0, %v2542
      %2544 = vmatmul.bf16.gmra.mxu0 %v2447
      %v2545 = vpop.f32.mrf.mxu0
      %v2546 = vadd.f32 0.0, %v2545
      %v2547 = vpop.f32.mrf.mxu0
      %v2548 = vadd.f32 0.0, %v2547
      %2549 = vmatmul.bf16.gmra.mxu0 %v2450
      %v2550 = vpop.f32.mrf.mxu0
      %v2551 = vadd.f32 0.0, %v2550
      %v2552 = vpop.f32.mrf.mxu0
      %v2553 = vadd.f32 0.0, %v2552
      %2554 = vmatmul.bf16.gmra.mxu0 %v2453
      %v2555 = vpop.f32.mrf.mxu0
      %v2556 = vadd.f32 0.0, %v2555
      %v2557 = vpop.f32.mrf.mxu0
      %v2558 = vadd.f32 0.0, %v2557
      %2559 = vmatmul.bf16.gmra.mxu0 %v2456
      %v2560 = vpop.f32.mrf.mxu0
      %v2561 = vadd.f32 0.0, %v2560
      %v2562 = vpop.f32.mrf.mxu0
      %v2563 = vadd.f32 0.0, %v2562
      %2564 = vmatmul.bf16.gmra.mxu0 %v2459
      %v2565 = vpop.f32.mrf.mxu0
      %v2566 = vadd.f32 0.0, %v2565
      %v2567 = vpop.f32.mrf.mxu0
      %v2568 = vadd.f32 0.0, %v2567
      %2569 = vmatmul.bf16.gmra.mxu0 %v2462
      %v2570 = vpop.f32.mrf.mxu0
      %v2571 = vadd.f32 0.0, %v2570
      %v2572 = vpop.f32.mrf.mxu0
      %v2573 = vadd.f32 0.0, %v2572
      %2574 = vmatmul.bf16.gmra.mxu0 %v2465
      %v2575 = vpop.f32.mrf.mxu0
      %v2576 = vadd.f32 0.0, %v2575
      %v2577 = vpop.f32.mrf.mxu0
      %v2578 = vadd.f32 0.0, %v2577
      %2579 = vmatmul.bf16.gmra.mxu0 %v2468
      %v2580 = vpop.f32.mrf.mxu0
      %v2581 = vadd.f32 0.0, %v2580
      %v2582 = vpop.f32.mrf.mxu0
      %v2583 = vadd.f32 0.0, %v2582
      %2584 = vmatmul.bf16.gmra.mxu0 %v2471
      %v2585 = vpop.f32.mrf.mxu0
      %v2586 = vadd.f32 0.0, %v2585
      %v2587 = vpop.f32.mrf.mxu0
      %2588 = vdwg.mxu0
      %v2589 = vadd.f32 %v2216, %v2486
      %v2590 = vadd.f32 %v2217, %v2488
      %v2591 = vadd.f32 %v2218, %v2491
      %v2592 = vadd.f32 %v2219, %v2493
      %v2593 = vadd.f32 %v2220, %v2496
      %v2594 = vadd.f32 %v2221, %v2498
      %v2595 = vadd.f32 %v2222, %v2501
      %v2596 = vadd.f32 %v2223, %v2503
      %v2597 = vadd.f32 %v2224, %v2506
      %v2598 = vadd.f32 %v2225, %v2508
      %v2599 = vadd.f32 %v2226, %v2511
      %v2600 = vadd.f32 %v2227, %v2513
      %v2601 = vadd.f32 %v2228, %v2516
      %v2602 = vadd.f32 %v2229, %v2518
      %v2603 = vadd.f32 %v2230, %v2521
      %v2604 = vadd.f32 %v2231, %v2523
      %v2605 = vadd.f32 %v2232, %v2526
      %v2606 = vadd.f32 %v2233, %v2528
      %v2607 = vadd.f32 %v2234, %v2531
      %v2608 = vadd.f32 %v2235, %v2533
      %v2609 = vadd.f32 %v2236, %v2536
      %v2610 = vadd.f32 %v2237, %v2538
      %v2611 = vadd.f32 %v2238, %v2541
      %v2612 = vadd.f32 %v2239, %v2543
      %v2613 = vadd.f32 %v2240, %v2546
      %v2614 = vadd.f32 %v2241, %v2548
      %v2615 = vadd.f32 %v2242, %v2551
      %v2616 = vadd.f32 %v2243, %v2553
      %v2617 = vadd.f32 %v2244, %v2556
      %v2618 = vadd.f32 %v2245, %v2558
      %v2619 = vadd.f32 %v2246, %v2561
      %v2620 = vadd.f32 %v2247, %v2563
      %v2621 = vadd.f32 %v2248, %v2566
      %v2622 = vadd.f32 %v2249, %v2568
      %v2623 = vadd.f32 %v2250, %v2571
      %v2624 = vadd.f32 %v2251, %v2573
      %v2625 = vadd.f32 %v2252, %v2576
      %v2626 = vadd.f32 %v2253, %v2578
      %v2627 = vadd.f32 %v2254, %v2581
      %v2628 = vadd.f32 %v2255, %v2583
      %v2629 = vadd.f32 %v2256, %v2586
      %s2630 = sadd.s32 %s270, 344
      %s2631 = sshra.s32 %s2630, 3
      %s2632 = sand.u32 %s2630, 7
      %s2633 = smul.addr %s2631, 4
      %s2634 = scalar_lea.vmem %s243, %s2633
      %v2635 = vld [vmem:[%s2634] sm:$0xf]
      %v2636 = vld [vmem:[%s2634 + $0x4] sm:$0xf]
      %v2637 = vld [vmem:[%s2634 + $0x8] sm:$0xf]
      %v2638 = vld [vmem:[%s2634 + $0xc] sm:$0xf]
      %v2639 = vld [vmem:[%s2634 + $0x10] sm:$0xf]
      %v2640 = vld [vmem:[%s2634 + $0x14] sm:$0xf]
      %v2641 = vld [vmem:[%s2634 + $0x18] sm:$0xf]
      %v2642 = vld [vmem:[%s2634 + $0x1c] sm:$0xf]
      %v2643 = vld [vmem:[%s2634 + $0x20] sm:$0xf]
      %v2644 = vld [vmem:[%s2634 + $0x24] sm:$0xf]
      %v2645 = vld [vmem:[%s2634 + $0x28] sm:$0xf]
      %v2646 = vld [vmem:[%s2634 + $0x2c] sm:$0xf]
      %v2647 = vld [vmem:[%s2634 + $0x30] sm:$0xf]
      %v2648 = vld [vmem:[%s2634 + $0x34] sm:$0xf]
      %v2649 = vld [vmem:[%s2634 + $0x38] sm:$0xf]
      %v2650 = vld [vmem:[%s2634 + $0x3c] sm:$0xf]
      %v2651 = vld [vmem:[%s2634 + $0x40] sm:$0xf]
      %v2652 = vld [vmem:[%s2634 + $0x44] sm:$0xf]
      %v2653 = vld [vmem:[%s2634 + $0x48] sm:$0xf]
      %v2654 = vld [vmem:[%s2634 + $0x4c] sm:$0xf]
      %v2655 = vld [vmem:[%s2634 + $0x50] sm:$0xf]
      %v2656 = vld [vmem:[%s2634 + $0x54] sm:$0xf]
      %v2657 = vld [vmem:[%s2634 + $0x58] sm:$0xf]
      %v2658 = vld [vmem:[%s2634 + $0x5c] sm:$0xf]
      %v2659 = vld [vmem:[%s2634 + $0x60] sm:$0xf]
      %v2660 = vld [vmem:[%s2634 + $0x64] sm:$0xf]
      %v2661 = vld [vmem:[%s2634 + $0x68] sm:$0xf]
      %v2662 = vld [vmem:[%s2634 + $0x6c] sm:$0xf]
      %v2663 = vld [vmem:[%s2634 + $0x70] sm:$0xf]
      %v2664 = vld [vmem:[%s2634 + $0x74] sm:$0xf]
      %v2665 = vld [vmem:[%s2634 + $0x78] sm:$0xf]
      %v2666 = vld [vmem:[%s2634 + $0x7c] sm:$0xf]
      %v2667 = vld [vmem:[%s2634 + $0x80] sm:$0xf]
      %v2668 = vld [vmem:[%s2634 + $0x84] sm:$0xf]
      %v2669 = vld [vmem:[%s2634 + $0x88] sm:$0xf]
      %v2670 = vld [vmem:[%s2634 + $0x8c] sm:$0xf]
      %v2671 = vld [vmem:[%s2634 + $0x90] sm:$0xf]
      %v2672 = vld [vmem:[%s2634 + $0x94] sm:$0xf]
      %v2673 = vld [vmem:[%s2634 + $0x98] sm:$0xf]
      %v2674 = vld [vmem:[%s2634 + $0x9c] sm:$0xf]
      %v2675 = vld [vmem:[%s2634 + $0xa0] sm:$0xf]
      %v2676 = vld [vmem:[%s2634 + $0xa4] sm:$0xf]
      %s2677 = scalar_lea.vmem %s1, 12
      %v2678 = vld [vmem:[%s2677] sm:$0x3]
      %v2721 = vunpack.c.l.b16 %v2635
      %v2722 = vunpack.c.l.b16 %v2636
      %v2723 = vunpack.c.l.b16 %v2637
      %v2724 = vunpack.c.l.b16 %v2638
      %v2725 = vunpack.c.l.b16 %v2639
      %v2726 = vunpack.c.l.b16 %v2640
      %v2727 = vunpack.c.l.b16 %v2641
      %v2728 = vunpack.c.l.b16 %v2642
      %v2729 = vunpack.c.l.b16 %v2643
      %v2730 = vunpack.c.l.b16 %v2644
      %v2731 = vunpack.c.l.b16 %v2645
      %v2732 = vunpack.c.l.b16 %v2646
      %v2733 = vunpack.c.l.b16 %v2647
      %v2734 = vunpack.c.l.b16 %v2648
      %v2735 = vunpack.c.l.b16 %v2649
      %v2736 = vunpack.c.l.b16 %v2650
      %v2737 = vunpack.c.l.b16 %v2651
      %v2738 = vunpack.c.l.b16 %v2652
      %v2739 = vunpack.c.l.b16 %v2653
      %v2740 = vunpack.c.l.b16 %v2654
      %v2741 = vunpack.c.l.b16 %v2655
      %v2742 = vunpack.c.l.b16 %v2656
      %v2743 = vunpack.c.l.b16 %v2657
      %v2744 = vunpack.c.l.b16 %v2658
      %v2745 = vunpack.c.l.b16 %v2659
      %v2746 = vunpack.c.l.b16 %v2660
      %v2747 = vunpack.c.l.b16 %v2661
      %v2748 = vunpack.c.l.b16 %v2662
      %v2749 = vunpack.c.l.b16 %v2663
      %v2750 = vunpack.c.l.b16 %v2664
      %v2751 = vunpack.c.l.b16 %v2665
      %v2752 = vunpack.c.l.b16 %v2666
      %v2753 = vunpack.c.l.b16 %v2667
      %v2754 = vunpack.c.l.b16 %v2668
      %v2755 = vunpack.c.l.b16 %v2669
      %v2756 = vunpack.c.l.b16 %v2670
      %v2757 = vunpack.c.l.b16 %v2671
      %v2758 = vunpack.c.l.b16 %v2672
      %v2759 = vunpack.c.l.b16 %v2673
      %v2760 = vunpack.c.l.b16 %v2674
      %v2761 = vunpack.c.l.b16 %v2675
      %v2762 = vunpack.c.l.b16 %v2676
      %v2763 = vpack.c.b16 %v2722, %v2721
      %v2764 = vpack.c.b16 %v2724, %v2723
      %v2765 = vpack.c.b16 %v2726, %v2725
      %v2766 = vpack.c.b16 %v2728, %v2727
      %v2767 = vpack.c.b16 %v2730, %v2729
      %v2768 = vpack.c.b16 %v2732, %v2731
      %v2769 = vpack.c.b16 %v2734, %v2733
      %v2770 = vpack.c.b16 %v2736, %v2735
      %v2771 = vpack.c.b16 %v2738, %v2737
      %v2772 = vpack.c.b16 %v2740, %v2739
      %v2773 = vpack.c.b16 %v2742, %v2741
      %v2774 = vpack.c.b16 %v2744, %v2743
      %v2775 = vpack.c.b16 %v2746, %v2745
      %v2776 = vpack.c.b16 %v2748, %v2747
      %v2777 = vpack.c.b16 %v2750, %v2749
      %v2778 = vpack.c.b16 %v2752, %v2751
      %v2779 = vpack.c.b16 %v2754, %v2753
      %v2780 = vpack.c.b16 %v2756, %v2755
      %v2781 = vpack.c.b16 %v2758, %v2757
      %v2782 = vpack.c.b16 %v2760, %v2759
      %v2783 = vpack.c.b16 %v2762, %v2761
      %v2785 = vshrl.u32 %v2763, 16
      %v2787 = vshll.u32 %v2763, 16
      %v2789 = vrot.slane %v2787, 1
      %v2790 = vor.u32 %v2785, %v2789
      %v2792 = vshll.u32 %v2764, 16
      %v2794 = vrot.slane %v2792, 1
      %v2795 = vsel %vm2262, %v2790, %v2794
      %v2796 = vshrl.u32 %v2764, 16
      %v2798 = vor.u32 %v2796, %v2794
      %v2800 = vshll.u32 %v2765, 16
      %v2802 = vrot.slane %v2800, 1
      %v2803 = vsel %vm2262, %v2798, %v2802
      %v2804 = vshrl.u32 %v2765, 16
      %v2806 = vor.u32 %v2804, %v2802
      %v2808 = vshll.u32 %v2766, 16
      %v2810 = vrot.slane %v2808, 1
      %v2811 = vsel %vm2262, %v2806, %v2810
      %v2812 = vshrl.u32 %v2766, 16
      %v2814 = vor.u32 %v2812, %v2810
      %v2816 = vshll.u32 %v2767, 16
      %v2818 = vrot.slane %v2816, 1
      %v2819 = vsel %vm2262, %v2814, %v2818
      %v2820 = vshrl.u32 %v2767, 16
      %v2822 = vor.u32 %v2820, %v2818
      %v2824 = vshll.u32 %v2768, 16
      %v2826 = vrot.slane %v2824, 1
      %v2827 = vsel %vm2262, %v2822, %v2826
      %v2828 = vshrl.u32 %v2768, 16
      %v2830 = vor.u32 %v2828, %v2826
      %v2832 = vshll.u32 %v2769, 16
      %v2834 = vrot.slane %v2832, 1
      %v2835 = vsel %vm2262, %v2830, %v2834
      %v2836 = vshrl.u32 %v2769, 16
      %v2838 = vor.u32 %v2836, %v2834
      %v2840 = vshll.u32 %v2770, 16
      %v2842 = vrot.slane %v2840, 1
      %v2843 = vsel %vm2262, %v2838, %v2842
      %v2844 = vshrl.u32 %v2770, 16
      %v2846 = vor.u32 %v2844, %v2842
      %v2848 = vshll.u32 %v2771, 16
      %v2850 = vrot.slane %v2848, 1
      %v2851 = vsel %vm2262, %v2846, %v2850
      %v2852 = vshrl.u32 %v2771, 16
      %v2854 = vor.u32 %v2852, %v2850
      %v2856 = vshll.u32 %v2772, 16
      %v2858 = vrot.slane %v2856, 1
      %v2859 = vsel %vm2262, %v2854, %v2858
      %v2860 = vshrl.u32 %v2772, 16
      %v2862 = vor.u32 %v2860, %v2858
      %v2864 = vshll.u32 %v2773, 16
      %v2866 = vrot.slane %v2864, 1
      %v2867 = vsel %vm2262, %v2862, %v2866
      %v2868 = vshrl.u32 %v2773, 16
      %v2870 = vor.u32 %v2868, %v2866
      %v2872 = vshll.u32 %v2774, 16
      %v2874 = vrot.slane %v2872, 1
      %v2875 = vsel %vm2262, %v2870, %v2874
      %v2876 = vshrl.u32 %v2774, 16
      %v2878 = vor.u32 %v2876, %v2874
      %v2880 = vshll.u32 %v2775, 16
      %v2882 = vrot.slane %v2880, 1
      %v2883 = vsel %vm2262, %v2878, %v2882
      %v2884 = vshrl.u32 %v2775, 16
      %v2886 = vor.u32 %v2884, %v2882
      %v2888 = vshll.u32 %v2776, 16
      %v2890 = vrot.slane %v2888, 1
      %v2891 = vsel %vm2262, %v2886, %v2890
      %v2892 = vshrl.u32 %v2776, 16
      %v2894 = vor.u32 %v2892, %v2890
      %v2896 = vshll.u32 %v2777, 16
      %v2898 = vrot.slane %v2896, 1
      %v2899 = vsel %vm2262, %v2894, %v2898
      %v2900 = vshrl.u32 %v2777, 16
      %v2902 = vor.u32 %v2900, %v2898
      %v2904 = vshll.u32 %v2778, 16
      %v2906 = vrot.slane %v2904, 1
      %v2907 = vsel %vm2262, %v2902, %v2906
      %v2908 = vshrl.u32 %v2778, 16
      %v2910 = vor.u32 %v2908, %v2906
      %v2912 = vshll.u32 %v2779, 16
      %v2914 = vrot.slane %v2912, 1
      %v2915 = vsel %vm2262, %v2910, %v2914
      %v2916 = vshrl.u32 %v2779, 16
      %v2918 = vor.u32 %v2916, %v2914
      %v2920 = vshll.u32 %v2780, 16
      %v2922 = vrot.slane %v2920, 1
      %v2923 = vsel %vm2262, %v2918, %v2922
      %v2924 = vshrl.u32 %v2780, 16
      %v2926 = vor.u32 %v2924, %v2922
      %v2928 = vshll.u32 %v2781, 16
      %v2930 = vrot.slane %v2928, 1
      %v2931 = vsel %vm2262, %v2926, %v2930
      %v2932 = vshrl.u32 %v2781, 16
      %v2934 = vor.u32 %v2932, %v2930
      %v2936 = vshll.u32 %v2782, 16
      %v2938 = vrot.slane %v2936, 1
      %v2939 = vsel %vm2262, %v2934, %v2938
      %v2940 = vshrl.u32 %v2782, 16
      %v2942 = vor.u32 %v2940, %v2938
      %v2944 = vshll.u32 %v2783, 16
      %v2946 = vrot.slane %v2944, 1
      %v2947 = vsel %vm2262, %v2942, %v2946
      %v2948 = vshrl.u32 %v2783, 16
      %v2950 = vor.u32 %v2948, %v2946
      %v2952 = vsel %vm468, %v2795, 0
      %v2955 = vsel %vm468, %v2803, 0
      %v2958 = vsel %vm468, %v2811, 0
      %v2961 = vsel %vm468, %v2819, 0
      %v2964 = vsel %vm468, %v2827, 0
      %v2967 = vsel %vm468, %v2835, 0
      %v2970 = vsel %vm468, %v2843, 0
      %v2973 = vsel %vm468, %v2851, 0
      %v2976 = vsel %vm468, %v2859, 0
      %v2979 = vsel %vm468, %v2867, 0
      %v2982 = vsel %vm468, %v2875, 0
      %v2985 = vsel %vm468, %v2883, 0
      %v2988 = vsel %vm468, %v2891, 0
      %v2991 = vsel %vm468, %v2899, 0
      %v2994 = vsel %vm468, %v2907, 0
      %v2997 = vsel %vm468, %v2915, 0
      %v3000 = vsel %vm468, %v2923, 0
      %v3003 = vsel %vm468, %v2931, 0
      %v3006 = vsel %vm468, %v2939, 0
      %v3009 = vsel %vm468, %v2947, 0
      %v3012 = vsel %vm468, %v2950, 0
      %v3015 = vsel %vm532, %v2678, 0
      %3017 = vmatpush.bf16.msra.mxu0 0
      %3018 = vmatpush.bf16.msra.mxu0 0
      %3019 = vmatpush.bf16.msra.mxu0 0
      %3020 = vmatpush.bf16.msra.mxu0 0
      %3021 = vmatpush.bf16.msra.mxu0 0
      %3022 = vmatpush.bf16.msra.mxu0 0
      %3023 = vmatpush.bf16.msra.mxu0 0
      %3024 = vmatpush.bf16.msra.mxu0 %v3015
      %3025 = vmatmul.bf16.gmra.mxu0 %v2952
      %v3026 = vpop.f32.mrf.mxu0
      %v3027 = vadd.f32 0.0, %v3026
      %v3028 = vpop.f32.mrf.mxu0
      %v3029 = vadd.f32 0.0, %v3028
      %3030 = vmatmul.bf16.gmra.mxu0 %v2955
      %v3031 = vpop.f32.mrf.mxu0
      %v3032 = vadd.f32 0.0, %v3031
      %v3033 = vpop.f32.mrf.mxu0
      %v3034 = vadd.f32 0.0, %v3033
      %3035 = vmatmul.bf16.gmra.mxu0 %v2958
      %v3036 = vpop.f32.mrf.mxu0
      %v3037 = vadd.f32 0.0, %v3036
      %v3038 = vpop.f32.mrf.mxu0
      %v3039 = vadd.f32 0.0, %v3038
      %3040 = vmatmul.bf16.gmra.mxu0 %v2961
      %v3041 = vpop.f32.mrf.mxu0
      %v3042 = vadd.f32 0.0, %v3041
      %v3043 = vpop.f32.mrf.mxu0
      %v3044 = vadd.f32 0.0, %v3043
      %3045 = vmatmul.bf16.gmra.mxu0 %v2964
      %v3046 = vpop.f32.mrf.mxu0
      %v3047 = vadd.f32 0.0, %v3046
      %v3048 = vpop.f32.mrf.mxu0
      %v3049 = vadd.f32 0.0, %v3048
      %3050 = vmatmul.bf16.gmra.mxu0 %v2967
      %v3051 = vpop.f32.mrf.mxu0
      %v3052 = vadd.f32 0.0, %v3051
      %v3053 = vpop.f32.mrf.mxu0
      %v3054 = vadd.f32 0.0, %v3053
      %3055 = vmatmul.bf16.gmra.mxu0 %v2970
      %v3056 = vpop.f32.mrf.mxu0
      %v3057 = vadd.f32 0.0, %v3056
      %v3058 = vpop.f32.mrf.mxu0
      %v3059 = vadd.f32 0.0, %v3058
      %3060 = vmatmul.bf16.gmra.mxu0 %v2973
      %v3061 = vpop.f32.mrf.mxu0
      %v3062 = vadd.f32 0.0, %v3061
      %v3063 = vpop.f32.mrf.mxu0
      %v3064 = vadd.f32 0.0, %v3063
      %3065 = vmatmul.bf16.gmra.mxu0 %v2976
      %v3066 = vpop.f32.mrf.mxu0
      %v3067 = vadd.f32 0.0, %v3066
      %v3068 = vpop.f32.mrf.mxu0
      %v3069 = vadd.f32 0.0, %v3068
      %3070 = vmatmul.bf16.gmra.mxu0 %v2979
      %v3071 = vpop.f32.mrf.mxu0
      %v3072 = vadd.f32 0.0, %v3071
      %v3073 = vpop.f32.mrf.mxu0
      %v3074 = vadd.f32 0.0, %v3073
      %3075 = vmatmul.bf16.gmra.mxu0 %v2982
      %v3076 = vpop.f32.mrf.mxu0
      %v3077 = vadd.f32 0.0, %v3076
      %v3078 = vpop.f32.mrf.mxu0
      %v3079 = vadd.f32 0.0, %v3078
      %3080 = vmatmul.bf16.gmra.mxu0 %v2985
      %v3081 = vpop.f32.mrf.mxu0
      %v3082 = vadd.f32 0.0, %v3081
      %v3083 = vpop.f32.mrf.mxu0
      %v3084 = vadd.f32 0.0, %v3083
      %3085 = vmatmul.bf16.gmra.mxu0 %v2988
      %v3086 = vpop.f32.mrf.mxu0
      %v3087 = vadd.f32 0.0, %v3086
      %v3088 = vpop.f32.mrf.mxu0
      %v3089 = vadd.f32 0.0, %v3088
      %3090 = vmatmul.bf16.gmra.mxu0 %v2991
      %v3091 = vpop.f32.mrf.mxu0
      %v3092 = vadd.f32 0.0, %v3091
      %v3093 = vpop.f32.mrf.mxu0
      %v3094 = vadd.f32 0.0, %v3093
      %3095 = vmatmul.bf16.gmra.mxu0 %v2994
      %v3096 = vpop.f32.mrf.mxu0
      %v3097 = vadd.f32 0.0, %v3096
      %v3098 = vpop.f32.mrf.mxu0
      %v3099 = vadd.f32 0.0, %v3098
      %3100 = vmatmul.bf16.gmra.mxu0 %v2997
      %v3101 = vpop.f32.mrf.mxu0
      %v3102 = vadd.f32 0.0, %v3101
      %v3103 = vpop.f32.mrf.mxu0
      %v3104 = vadd.f32 0.0, %v3103
      %3105 = vmatmul.bf16.gmra.mxu0 %v3000
      %v3106 = vpop.f32.mrf.mxu0
      %v3107 = vadd.f32 0.0, %v3106
      %v3108 = vpop.f32.mrf.mxu0
      %v3109 = vadd.f32 0.0, %v3108
      %3110 = vmatmul.bf16.gmra.mxu0 %v3003
      %v3111 = vpop.f32.mrf.mxu0
      %v3112 = vadd.f32 0.0, %v3111
      %v3113 = vpop.f32.mrf.mxu0
      %v3114 = vadd.f32 0.0, %v3113
      %3115 = vmatmul.bf16.gmra.mxu0 %v3006
      %v3116 = vpop.f32.mrf.mxu0
      %v3117 = vadd.f32 0.0, %v3116
      %v3118 = vpop.f32.mrf.mxu0
      %v3119 = vadd.f32 0.0, %v3118
      %3120 = vmatmul.bf16.gmra.mxu0 %v3009
      %v3121 = vpop.f32.mrf.mxu0
      %v3122 = vadd.f32 0.0, %v3121
      %v3123 = vpop.f32.mrf.mxu0
      %v3124 = vadd.f32 0.0, %v3123
      %3125 = vmatmul.bf16.gmra.mxu0 %v3012
      %v3126 = vpop.f32.mrf.mxu0
      %v3127 = vadd.f32 0.0, %v3126
      %v3128 = vpop.f32.mrf.mxu0
      %3129 = vdwg.mxu0
      %v3130 = vadd.f32 %v2589, %v3027
      %v3131 = vadd.f32 %v2590, %v3029
      %v3132 = vadd.f32 %v2591, %v3032
      %v3133 = vadd.f32 %v2592, %v3034
      %v3134 = vadd.f32 %v2593, %v3037
      %v3135 = vadd.f32 %v2594, %v3039
      %v3136 = vadd.f32 %v2595, %v3042
      %v3137 = vadd.f32 %v2596, %v3044
      %v3138 = vadd.f32 %v2597, %v3047
      %v3139 = vadd.f32 %v2598, %v3049
      %v3140 = vadd.f32 %v2599, %v3052
      %v3141 = vadd.f32 %v2600, %v3054
      %v3142 = vadd.f32 %v2601, %v3057
      %v3143 = vadd.f32 %v2602, %v3059
      %v3144 = vadd.f32 %v2603, %v3062
      %v3145 = vadd.f32 %v2604, %v3064
      %v3146 = vadd.f32 %v2605, %v3067
      %v3147 = vadd.f32 %v2606, %v3069
      %v3148 = vadd.f32 %v2607, %v3072
      %v3149 = vadd.f32 %v2608, %v3074
      %v3150 = vadd.f32 %v2609, %v3077
      %v3151 = vadd.f32 %v2610, %v3079
      %v3152 = vadd.f32 %v2611, %v3082
      %v3153 = vadd.f32 %v2612, %v3084
      %v3154 = vadd.f32 %v2613, %v3087
      %v3155 = vadd.f32 %v2614, %v3089
      %v3156 = vadd.f32 %v2615, %v3092
      %v3157 = vadd.f32 %v2616, %v3094
      %v3158 = vadd.f32 %v2617, %v3097
      %v3159 = vadd.f32 %v2618, %v3099
      %v3160 = vadd.f32 %v2619, %v3102
      %v3161 = vadd.f32 %v2620, %v3104
      %v3162 = vadd.f32 %v2621, %v3107
      %v3163 = vadd.f32 %v2622, %v3109
      %v3164 = vadd.f32 %v2623, %v3112
      %v3165 = vadd.f32 %v2624, %v3114
      %v3166 = vadd.f32 %v2625, %v3117
      %v3167 = vadd.f32 %v2626, %v3119
      %v3168 = vadd.f32 %v2627, %v3122
      %v3169 = vadd.f32 %v2628, %v3124
      %v3170 = vadd.f32 %v2629, %v3127
      %s3171 = scalar_lea.vmem %s1, 14
      %v3172 = vld [vmem:[%s3171] sm:$0x3]
      %vm3173 = vcmask 1046528
      %v3174 = vrot.slane %v2763, 1
      %v3175 = vrot.slane %v2764, 1
      %v3176 = vsel %vm3173, %v3174, %v3175
      %v3177 = vrot.slane %v2765, 1
      %v3178 = vsel %vm3173, %v3175, %v3177
      %v3179 = vrot.slane %v2766, 1
      %v3180 = vsel %vm3173, %v3177, %v3179
      %v3181 = vrot.slane %v2767, 1
      %v3182 = vsel %vm3173, %v3179, %v3181
      %v3183 = vrot.slane %v2768, 1
      %v3184 = vsel %vm3173, %v3181, %v3183
      %v3185 = vrot.slane %v2769, 1
      %v3186 = vsel %vm3173, %v3183, %v3185
      %v3187 = vrot.slane %v2770, 1
      %v3188 = vsel %vm3173, %v3185, %v3187
      %v3189 = vrot.slane %v2771, 1
      %v3190 = vsel %vm3173, %v3187, %v3189
      %v3191 = vrot.slane %v2772, 1
      %v3192 = vsel %vm3173, %v3189, %v3191
      %v3193 = vrot.slane %v2773, 1
      %v3194 = vsel %vm3173, %v3191, %v3193
      %v3195 = vrot.slane %v2774, 1
      %v3196 = vsel %vm3173, %v3193, %v3195
      %v3197 = vrot.slane %v2775, 1
      %v3198 = vsel %vm3173, %v3195, %v3197
      %v3199 = vrot.slane %v2776, 1
      %v3200 = vsel %vm3173, %v3197, %v3199
      %v3201 = vrot.slane %v2777, 1
      %v3202 = vsel %vm3173, %v3199, %v3201
      %v3203 = vrot.slane %v2778, 1
      %v3204 = vsel %vm3173, %v3201, %v3203
      %v3205 = vrot.slane %v2779, 1
      %v3206 = vsel %vm3173, %v3203, %v3205
      %v3207 = vrot.slane %v2780, 1
      %v3208 = vsel %vm3173, %v3205, %v3207
      %v3209 = vrot.slane %v2781, 1
      %v3210 = vsel %vm3173, %v3207, %v3209
      %v3211 = vrot.slane %v2782, 1
      %v3212 = vsel %vm3173, %v3209, %v3211
      %v3213 = vrot.slane %v2783, 1
      %v3214 = vsel %vm3173, %v3211, %v3213
      %v3216 = vsel %vm468, %v3176, 0
      %v3219 = vsel %vm468, %v3178, 0
      %v3222 = vsel %vm468, %v3180, 0
      %v3225 = vsel %vm468, %v3182, 0
      %v3228 = vsel %vm468, %v3184, 0
      %v3231 = vsel %vm468, %v3186, 0
      %v3234 = vsel %vm468, %v3188, 0
      %v3237 = vsel %vm468, %v3190, 0
      %v3240 = vsel %vm468, %v3192, 0
      %v3243 = vsel %vm468, %v3194, 0
      %v3246 = vsel %vm468, %v3196, 0
      %v3249 = vsel %vm468, %v3198, 0
      %v3252 = vsel %vm468, %v3200, 0
      %v3255 = vsel %vm468, %v3202, 0
      %v3258 = vsel %vm468, %v3204, 0
      %v3261 = vsel %vm468, %v3206, 0
      %v3264 = vsel %vm468, %v3208, 0
      %v3267 = vsel %vm468, %v3210, 0
      %v3270 = vsel %vm468, %v3212, 0
      %v3273 = vsel %vm468, %v3214, 0
      %v3276 = vsel %vm468, %v3213, 0
      %v3279 = vsel %vm532, %v3172, 0
      %3281 = vmatpush.bf16.msra.mxu0 0
      %3282 = vmatpush.bf16.msra.mxu0 0
      %3283 = vmatpush.bf16.msra.mxu0 0
      %3284 = vmatpush.bf16.msra.mxu0 0
      %3285 = vmatpush.bf16.msra.mxu0 0
      %3286 = vmatpush.bf16.msra.mxu0 0
      %3287 = vmatpush.bf16.msra.mxu0 0
      %3288 = vmatpush.bf16.msra.mxu0 %v3279
      %3289 = vmatmul.bf16.gmra.mxu0 %v3216
      %v3290 = vpop.f32.mrf.mxu0
      %v3291 = vadd.f32 0.0, %v3290
      %v3292 = vpop.f32.mrf.mxu0
      %v3293 = vadd.f32 0.0, %v3292
      %3294 = vmatmul.bf16.gmra.mxu0 %v3219
      %v3295 = vpop.f32.mrf.mxu0
      %v3296 = vadd.f32 0.0, %v3295
      %v3297 = vpop.f32.mrf.mxu0
      %v3298 = vadd.f32 0.0, %v3297
      %3299 = vmatmul.bf16.gmra.mxu0 %v3222
      %v3300 = vpop.f32.mrf.mxu0
      %v3301 = vadd.f32 0.0, %v3300
      %v3302 = vpop.f32.mrf.mxu0
      %v3303 = vadd.f32 0.0, %v3302
      %3304 = vmatmul.bf16.gmra.mxu0 %v3225
      %v3305 = vpop.f32.mrf.mxu0
      %v3306 = vadd.f32 0.0, %v3305
      %v3307 = vpop.f32.mrf.mxu0
      %v3308 = vadd.f32 0.0, %v3307
      %3309 = vmatmul.bf16.gmra.mxu0 %v3228
      %v3310 = vpop.f32.mrf.mxu0
      %v3311 = vadd.f32 0.0, %v3310
      %v3312 = vpop.f32.mrf.mxu0
      %v3313 = vadd.f32 0.0, %v3312
      %3314 = vmatmul.bf16.gmra.mxu0 %v3231
      %v3315 = vpop.f32.mrf.mxu0
      %v3316 = vadd.f32 0.0, %v3315
      %v3317 = vpop.f32.mrf.mxu0
      %v3318 = vadd.f32 0.0, %v3317
      %3319 = vmatmul.bf16.gmra.mxu0 %v3234
      %v3320 = vpop.f32.mrf.mxu0
      %v3321 = vadd.f32 0.0, %v3320
      %v3322 = vpop.f32.mrf.mxu0
      %v3323 = vadd.f32 0.0, %v3322
      %3324 = vmatmul.bf16.gmra.mxu0 %v3237
      %v3325 = vpop.f32.mrf.mxu0
      %v3326 = vadd.f32 0.0, %v3325
      %v3327 = vpop.f32.mrf.mxu0
      %v3328 = vadd.f32 0.0, %v3327
      %3329 = vmatmul.bf16.gmra.mxu0 %v3240
      %v3330 = vpop.f32.mrf.mxu0
      %v3331 = vadd.f32 0.0, %v3330
      %v3332 = vpop.f32.mrf.mxu0
      %v3333 = vadd.f32 0.0, %v3332
      %3334 = vmatmul.bf16.gmra.mxu0 %v3243
      %v3335 = vpop.f32.mrf.mxu0
      %v3336 = vadd.f32 0.0, %v3335
      %v3337 = vpop.f32.mrf.mxu0
      %v3338 = vadd.f32 0.0, %v3337
      %3339 = vmatmul.bf16.gmra.mxu0 %v3246
      %v3340 = vpop.f32.mrf.mxu0
      %v3341 = vadd.f32 0.0, %v3340
      %v3342 = vpop.f32.mrf.mxu0
      %v3343 = vadd.f32 0.0, %v3342
      %3344 = vmatmul.bf16.gmra.mxu0 %v3249
      %v3345 = vpop.f32.mrf.mxu0
      %v3346 = vadd.f32 0.0, %v3345
      %v3347 = vpop.f32.mrf.mxu0
      %v3348 = vadd.f32 0.0, %v3347
      %3349 = vmatmul.bf16.gmra.mxu0 %v3252
      %v3350 = vpop.f32.mrf.mxu0
      %v3351 = vadd.f32 0.0, %v3350
      %v3352 = vpop.f32.mrf.mxu0
      %v3353 = vadd.f32 0.0, %v3352
      %3354 = vmatmul.bf16.gmra.mxu0 %v3255
      %v3355 = vpop.f32.mrf.mxu0
      %v3356 = vadd.f32 0.0, %v3355
      %v3357 = vpop.f32.mrf.mxu0
      %v3358 = vadd.f32 0.0, %v3357
      %3359 = vmatmul.bf16.gmra.mxu0 %v3258
      %v3360 = vpop.f32.mrf.mxu0
      %v3361 = vadd.f32 0.0, %v3360
      %v3362 = vpop.f32.mrf.mxu0
      %v3363 = vadd.f32 0.0, %v3362
      %3364 = vmatmul.bf16.gmra.mxu0 %v3261
      %v3365 = vpop.f32.mrf.mxu0
      %v3366 = vadd.f32 0.0, %v3365
      %v3367 = vpop.f32.mrf.mxu0
      %v3368 = vadd.f32 0.0, %v3367
      %3369 = vmatmul.bf16.gmra.mxu0 %v3264
      %v3370 = vpop.f32.mrf.mxu0
      %v3371 = vadd.f32 0.0, %v3370
      %v3372 = vpop.f32.mrf.mxu0
      %v3373 = vadd.f32 0.0, %v3372
      %3374 = vmatmul.bf16.gmra.mxu0 %v3267
      %v3375 = vpop.f32.mrf.mxu0
      %v3376 = vadd.f32 0.0, %v3375
      %v3377 = vpop.f32.mrf.mxu0
      %v3378 = vadd.f32 0.0, %v3377
      %3379 = vmatmul.bf16.gmra.mxu0 %v3270
      %v3380 = vpop.f32.mrf.mxu0
      %v3381 = vadd.f32 0.0, %v3380
      %v3382 = vpop.f32.mrf.mxu0
      %v3383 = vadd.f32 0.0, %v3382
      %3384 = vmatmul.bf16.gmra.mxu0 %v3273
      %v3385 = vpop.f32.mrf.mxu0
      %v3386 = vadd.f32 0.0, %v3385
      %v3387 = vpop.f32.mrf.mxu0
      %v3388 = vadd.f32 0.0, %v3387
      %3389 = vmatmul.bf16.gmra.mxu0 %v3276
      %v3390 = vpop.f32.mrf.mxu0
      %v3391 = vadd.f32 0.0, %v3390
      %v3392 = vpop.f32.mrf.mxu0
      %3393 = vdwg.mxu0
      %v3394 = vadd.f32 %v3130, %v3291
      %v3395 = vadd.f32 %v3131, %v3293
      %v3396 = vadd.f32 %v3132, %v3296
      %v3397 = vadd.f32 %v3133, %v3298
      %v3398 = vadd.f32 %v3134, %v3301
      %v3399 = vadd.f32 %v3135, %v3303
      %v3400 = vadd.f32 %v3136, %v3306
      %v3401 = vadd.f32 %v3137, %v3308
      %v3402 = vadd.f32 %v3138, %v3311
      %v3403 = vadd.f32 %v3139, %v3313
      %v3404 = vadd.f32 %v3140, %v3316
      %v3405 = vadd.f32 %v3141, %v3318
      %v3406 = vadd.f32 %v3142, %v3321
      %v3407 = vadd.f32 %v3143, %v3323
      %v3408 = vadd.f32 %v3144, %v3326
      %v3409 = vadd.f32 %v3145, %v3328
      %v3410 = vadd.f32 %v3146, %v3331
      %v3411 = vadd.f32 %v3147, %v3333
      %v3412 = vadd.f32 %v3148, %v3336
      %v3413 = vadd.f32 %v3149, %v3338
      %v3414 = vadd.f32 %v3150, %v3341
      %v3415 = vadd.f32 %v3151, %v3343
      %v3416 = vadd.f32 %v3152, %v3346
      %v3417 = vadd.f32 %v3153, %v3348
      %v3418 = vadd.f32 %v3154, %v3351
      %v3419 = vadd.f32 %v3155, %v3353
      %v3420 = vadd.f32 %v3156, %v3356
      %v3421 = vadd.f32 %v3157, %v3358
      %v3422 = vadd.f32 %v3158, %v3361
      %v3423 = vadd.f32 %v3159, %v3363
      %v3424 = vadd.f32 %v3160, %v3366
      %v3425 = vadd.f32 %v3161, %v3368
      %v3426 = vadd.f32 %v3162, %v3371
      %v3427 = vadd.f32 %v3163, %v3373
      %v3428 = vadd.f32 %v3164, %v3376
      %v3429 = vadd.f32 %v3165, %v3378
      %v3430 = vadd.f32 %v3166, %v3381
      %v3431 = vadd.f32 %v3167, %v3383
      %v3432 = vadd.f32 %v3168, %v3386
      %v3433 = vadd.f32 %v3169, %v3388
      %v3434 = vadd.f32 %v3170, %v3391
      %s3435 = scalar_lea.vmem %s1, 16
      %v3436 = vld [vmem:[%s3435] sm:$0x3]
      %vm3437 = vsmask.f32 6400
      %v3438 = vrot.slane %v2785, 1
      %v3439 = vrot.slane %v2787, 2
      %v3440 = vor.u32 %v3438, %v3439
      %v3441 = vrot.slane %v2796, 1
      %v3442 = vrot.slane %v2792, 2
      %v3443 = vor.u32 %v3441, %v3442
      %v3444 = vsel %vm3437, %v3440, %v3443
      %v3445 = vrot.slane %v2804, 1
      %v3446 = vrot.slane %v2800, 2
      %v3447 = vor.u32 %v3445, %v3446
      %v3448 = vsel %vm3437, %v3443, %v3447
      %v3449 = vrot.slane %v2812, 1
      %v3450 = vrot.slane %v2808, 2
      %v3451 = vor.u32 %v3449, %v3450
      %v3452 = vsel %vm3437, %v3447, %v3451
      %v3453 = vrot.slane %v2820, 1
      %v3454 = vrot.slane %v2816, 2
      %v3455 = vor.u32 %v3453, %v3454
      %v3456 = vsel %vm3437, %v3451, %v3455
      %v3457 = vrot.slane %v2828, 1
      %v3458 = vrot.slane %v2824, 2
      %v3459 = vor.u32 %v3457, %v3458
      %v3460 = vsel %vm3437, %v3455, %v3459
      %v3461 = vrot.slane %v2836, 1
      %v3462 = vrot.slane %v2832, 2
      %v3463 = vor.u32 %v3461, %v3462
      %v3464 = vsel %vm3437, %v3459, %v3463
      %v3465 = vrot.slane %v2844, 1
      %v3466 = vrot.slane %v2840, 2
      %v3467 = vor.u32 %v3465, %v3466
      %v3468 = vsel %vm3437, %v3463, %v3467
      %v3469 = vrot.slane %v2852, 1
      %v3470 = vrot.slane %v2848, 2
      %v3471 = vor.u32 %v3469, %v3470
      %v3472 = vsel %vm3437, %v3467, %v3471
      %v3473 = vrot.slane %v2860, 1
      %v3474 = vrot.slane %v2856, 2
      %v3475 = vor.u32 %v3473, %v3474
      %v3476 = vsel %vm3437, %v3471, %v3475
      %v3477 = vrot.slane %v2868, 1
      %v3478 = vrot.slane %v2864, 2
      %v3479 = vor.u32 %v3477, %v3478
      %v3480 = vsel %vm3437, %v3475, %v3479
      %v3481 = vrot.slane %v2876, 1
      %v3482 = vrot.slane %v2872, 2
      %v3483 = vor.u32 %v3481, %v3482
      %v3484 = vsel %vm3437, %v3479, %v3483
      %v3485 = vrot.slane %v2884, 1
      %v3486 = vrot.slane %v2880, 2
      %v3487 = vor.u32 %v3485, %v3486
      %v3488 = vsel %vm3437, %v3483, %v3487
      %v3489 = vrot.slane %v2892, 1
      %v3490 = vrot.slane %v2888, 2
      %v3491 = vor.u32 %v3489, %v3490
      %v3492 = vsel %vm3437, %v3487, %v3491
      %v3493 = vrot.slane %v2900, 1
      %v3494 = vrot.slane %v2896, 2
      %v3495 = vor.u32 %v3493, %v3494
      %v3496 = vsel %vm3437, %v3491, %v3495
      %v3497 = vrot.slane %v2908, 1
      %v3498 = vrot.slane %v2904, 2
      %v3499 = vor.u32 %v3497, %v3498
      %v3500 = vsel %vm3437, %v3495, %v3499
      %v3501 = vrot.slane %v2916, 1
      %v3502 = vrot.slane %v2912, 2
      %v3503 = vor.u32 %v3501, %v3502
      %v3504 = vsel %vm3437, %v3499, %v3503
      %v3505 = vrot.slane %v2924, 1
      %v3506 = vrot.slane %v2920, 2
      %v3507 = vor.u32 %v3505, %v3506
      %v3508 = vsel %vm3437, %v3503, %v3507
      %v3509 = vrot.slane %v2932, 1
      %v3510 = vrot.slane %v2928, 2
      %v3511 = vor.u32 %v3509, %v3510
      %v3512 = vsel %vm3437, %v3507, %v3511
      %v3513 = vrot.slane %v2940, 1
      %v3514 = vrot.slane %v2936, 2
      %v3515 = vor.u32 %v3513, %v3514
      %v3516 = vsel %vm3437, %v3511, %v3515
      %v3517 = vrot.slane %v2948, 1
      %v3518 = vrot.slane %v2944, 2
      %v3519 = vor.u32 %v3517, %v3518
      %v3520 = vsel %vm3437, %v3515, %v3519
      %v3522 = vsel %vm468, %v3444, 0
      %v3525 = vsel %vm468, %v3448, 0
      %v3528 = vsel %vm468, %v3452, 0
      %v3531 = vsel %vm468, %v3456, 0
      %v3534 = vsel %vm468, %v3460, 0
      %v3537 = vsel %vm468, %v3464, 0
      %v3540 = vsel %vm468, %v3468, 0
      %v3543 = vsel %vm468, %v3472, 0
      %v3546 = vsel %vm468, %v3476, 0
      %v3549 = vsel %vm468, %v3480, 0
      %v3552 = vsel %vm468, %v3484, 0
      %v3555 = vsel %vm468, %v3488, 0
      %v3558 = vsel %vm468, %v3492, 0
      %v3561 = vsel %vm468, %v3496, 0
      %v3564 = vsel %vm468, %v3500, 0
      %v3567 = vsel %vm468, %v3504, 0
      %v3570 = vsel %vm468, %v3508, 0
      %v3573 = vsel %vm468, %v3512, 0
      %v3576 = vsel %vm468, %v3516, 0
      %v3579 = vsel %vm468, %v3520, 0
      %v3582 = vsel %vm468, %v3519, 0
      %v3585 = vsel %vm532, %v3436, 0
      %3587 = vmatpush.bf16.msra.mxu0 0
      %3588 = vmatpush.bf16.msra.mxu0 0
      %3589 = vmatpush.bf16.msra.mxu0 0
      %3590 = vmatpush.bf16.msra.mxu0 0
      %3591 = vmatpush.bf16.msra.mxu0 0
      %3592 = vmatpush.bf16.msra.mxu0 0
      %3593 = vmatpush.bf16.msra.mxu0 0
      %3594 = vmatpush.bf16.msra.mxu0 %v3585
      %3595 = vmatmul.bf16.gmra.mxu0 %v3522
      %v3596 = vpop.f32.mrf.mxu0
      %v3597 = vadd.f32 0.0, %v3596
      %v3598 = vpop.f32.mrf.mxu0
      %v3599 = vadd.f32 0.0, %v3598
      %3600 = vmatmul.bf16.gmra.mxu0 %v3525
      %v3601 = vpop.f32.mrf.mxu0
      %v3602 = vadd.f32 0.0, %v3601
      %v3603 = vpop.f32.mrf.mxu0
      %v3604 = vadd.f32 0.0, %v3603
      %3605 = vmatmul.bf16.gmra.mxu0 %v3528
      %v3606 = vpop.f32.mrf.mxu0
      %v3607 = vadd.f32 0.0, %v3606
      %v3608 = vpop.f32.mrf.mxu0
      %v3609 = vadd.f32 0.0, %v3608
      %3610 = vmatmul.bf16.gmra.mxu0 %v3531
      %v3611 = vpop.f32.mrf.mxu0
      %v3612 = vadd.f32 0.0, %v3611
      %v3613 = vpop.f32.mrf.mxu0
      %v3614 = vadd.f32 0.0, %v3613
      %3615 = vmatmul.bf16.gmra.mxu0 %v3534
      %v3616 = vpop.f32.mrf.mxu0
      %v3617 = vadd.f32 0.0, %v3616
      %v3618 = vpop.f32.mrf.mxu0
      %v3619 = vadd.f32 0.0, %v3618
      %3620 = vmatmul.bf16.gmra.mxu0 %v3537
      %v3621 = vpop.f32.mrf.mxu0
      %v3622 = vadd.f32 0.0, %v3621
      %v3623 = vpop.f32.mrf.mxu0
      %v3624 = vadd.f32 0.0, %v3623
      %3625 = vmatmul.bf16.gmra.mxu0 %v3540
      %v3626 = vpop.f32.mrf.mxu0
      %v3627 = vadd.f32 0.0, %v3626
      %v3628 = vpop.f32.mrf.mxu0
      %v3629 = vadd.f32 0.0, %v3628
      %3630 = vmatmul.bf16.gmra.mxu0 %v3543
      %v3631 = vpop.f32.mrf.mxu0
      %v3632 = vadd.f32 0.0, %v3631
      %v3633 = vpop.f32.mrf.mxu0
      %v3634 = vadd.f32 0.0, %v3633
      %3635 = vmatmul.bf16.gmra.mxu0 %v3546
      %v3636 = vpop.f32.mrf.mxu0
      %v3637 = vadd.f32 0.0, %v3636
      %v3638 = vpop.f32.mrf.mxu0
      %v3639 = vadd.f32 0.0, %v3638
      %3640 = vmatmul.bf16.gmra.mxu0 %v3549
      %v3641 = vpop.f32.mrf.mxu0
      %v3642 = vadd.f32 0.0, %v3641
      %v3643 = vpop.f32.mrf.mxu0
      %v3644 = vadd.f32 0.0, %v3643
      %3645 = vmatmul.bf16.gmra.mxu0 %v3552
      %v3646 = vpop.f32.mrf.mxu0
      %v3647 = vadd.f32 0.0, %v3646
      %v3648 = vpop.f32.mrf.mxu0
      %v3649 = vadd.f32 0.0, %v3648
      %3650 = vmatmul.bf16.gmra.mxu0 %v3555
      %v3651 = vpop.f32.mrf.mxu0
      %v3652 = vadd.f32 0.0, %v3651
      %v3653 = vpop.f32.mrf.mxu0
      %v3654 = vadd.f32 0.0, %v3653
      %3655 = vmatmul.bf16.gmra.mxu0 %v3558
      %v3656 = vpop.f32.mrf.mxu0
      %v3657 = vadd.f32 0.0, %v3656
      %v3658 = vpop.f32.mrf.mxu0
      %v3659 = vadd.f32 0.0, %v3658
      %3660 = vmatmul.bf16.gmra.mxu0 %v3561
      %v3661 = vpop.f32.mrf.mxu0
      %v3662 = vadd.f32 0.0, %v3661
      %v3663 = vpop.f32.mrf.mxu0
      %v3664 = vadd.f32 0.0, %v3663
      %3665 = vmatmul.bf16.gmra.mxu0 %v3564
      %v3666 = vpop.f32.mrf.mxu0
      %v3667 = vadd.f32 0.0, %v3666
      %v3668 = vpop.f32.mrf.mxu0
      %v3669 = vadd.f32 0.0, %v3668
      %3670 = vmatmul.bf16.gmra.mxu0 %v3567
      %v3671 = vpop.f32.mrf.mxu0
      %v3672 = vadd.f32 0.0, %v3671
      %v3673 = vpop.f32.mrf.mxu0
      %v3674 = vadd.f32 0.0, %v3673
      %3675 = vmatmul.bf16.gmra.mxu0 %v3570
      %v3676 = vpop.f32.mrf.mxu0
      %v3677 = vadd.f32 0.0, %v3676
      %v3678 = vpop.f32.mrf.mxu0
      %v3679 = vadd.f32 0.0, %v3678
      %3680 = vmatmul.bf16.gmra.mxu0 %v3573
      %v3681 = vpop.f32.mrf.mxu0
      %v3682 = vadd.f32 0.0, %v3681
      %v3683 = vpop.f32.mrf.mxu0
      %v3684 = vadd.f32 0.0, %v3683
      %3685 = vmatmul.bf16.gmra.mxu0 %v3576
      %v3686 = vpop.f32.mrf.mxu0
      %v3687 = vadd.f32 0.0, %v3686
      %v3688 = vpop.f32.mrf.mxu0
      %v3689 = vadd.f32 0.0, %v3688
      %3690 = vmatmul.bf16.gmra.mxu0 %v3579
      %v3691 = vpop.f32.mrf.mxu0
      %v3692 = vadd.f32 0.0, %v3691
      %v3693 = vpop.f32.mrf.mxu0
      %v3694 = vadd.f32 0.0, %v3693
      %3695 = vmatmul.bf16.gmra.mxu0 %v3582
      %v3696 = vpop.f32.mrf.mxu0
      %v3697 = vadd.f32 0.0, %v3696
      %v3698 = vpop.f32.mrf.mxu0
      %3699 = vdwg.mxu0
      %v3700 = vadd.f32 %v3394, %v3597
      %v3701 = vadd.f32 %v3395, %v3599
      %v3702 = vadd.f32 %v3396, %v3602
      %v3703 = vadd.f32 %v3397, %v3604
      %v3704 = vadd.f32 %v3398, %v3607
      %v3705 = vadd.f32 %v3399, %v3609
      %v3706 = vadd.f32 %v3400, %v3612
      %v3707 = vadd.f32 %v3401, %v3614
      %v3708 = vadd.f32 %v3402, %v3617
      %v3709 = vadd.f32 %v3403, %v3619
      %v3710 = vadd.f32 %v3404, %v3622
      %v3711 = vadd.f32 %v3405, %v3624
      %v3712 = vadd.f32 %v3406, %v3627
      %v3713 = vadd.f32 %v3407, %v3629
      %v3714 = vadd.f32 %v3408, %v3632
      %v3715 = vadd.f32 %v3409, %v3634
      %v3716 = vadd.f32 %v3410, %v3637
      %v3717 = vadd.f32 %v3411, %v3639
      %v3718 = vadd.f32 %v3412, %v3642
      %v3719 = vadd.f32 %v3413, %v3644
      %v3720 = vadd.f32 %v3414, %v3647
      %v3721 = vadd.f32 %v3415, %v3649
      %v3722 = vadd.f32 %v3416, %v3652
      %v3723 = vadd.f32 %v3417, %v3654
      %v3724 = vadd.f32 %v3418, %v3657
      %v3725 = vadd.f32 %v3419, %v3659
      %v3726 = vadd.f32 %v3420, %v3662
      %v3727 = vadd.f32 %v3421, %v3664
      %v3728 = vadd.f32 %v3422, %v3667
      %v3729 = vadd.f32 %v3423, %v3669
      %v3730 = vadd.f32 %v3424, %v3672
      %v3731 = vadd.f32 %v3425, %v3674
      %v3732 = vadd.f32 %v3426, %v3677
      %v3733 = vadd.f32 %v3427, %v3679
      %v3734 = vadd.f32 %v3428, %v3682
      %v3735 = vadd.f32 %v3429, %v3684
      %v3736 = vadd.f32 %v3430, %v3687
      %v3737 = vadd.f32 %v3431, %v3689
      %v3738 = vadd.f32 %v3432, %v3692
      %v3739 = vadd.f32 %v3433, %v3694
      %v3740 = vadd.f32 %v3434, %v3697
      %v3741 = vpack.c.bf16 %v3700, %v3700
      %v3742 = vpack.c.bf16 %v3701, %v3701
      %v3743 = vpack.c.bf16 %v3702, %v3702
      %v3744 = vpack.c.bf16 %v3703, %v3703
      %v3745 = vpack.c.bf16 %v3704, %v3704
      %v3746 = vpack.c.bf16 %v3705, %v3705
      %v3747 = vpack.c.bf16 %v3706, %v3706
      %v3748 = vpack.c.bf16 %v3707, %v3707
      %v3749 = vpack.c.bf16 %v3708, %v3708
      %v3750 = vpack.c.bf16 %v3709, %v3709
      %v3751 = vpack.c.bf16 %v3710, %v3710
      %v3752 = vpack.c.bf16 %v3711, %v3711
      %v3753 = vpack.c.bf16 %v3712, %v3712
      %v3754 = vpack.c.bf16 %v3713, %v3713
      %v3755 = vpack.c.bf16 %v3714, %v3714
      %v3756 = vpack.c.bf16 %v3715, %v3715
      %v3757 = vpack.c.bf16 %v3716, %v3716
      %v3758 = vpack.c.bf16 %v3717, %v3717
      %v3759 = vpack.c.bf16 %v3718, %v3718
      %v3760 = vpack.c.bf16 %v3719, %v3719
      %v3761 = vpack.c.bf16 %v3720, %v3720
      %v3762 = vpack.c.bf16 %v3721, %v3721
      %v3763 = vpack.c.bf16 %v3722, %v3722
      %v3764 = vpack.c.bf16 %v3723, %v3723
      %v3765 = vpack.c.bf16 %v3724, %v3724
      %v3766 = vpack.c.bf16 %v3725, %v3725
      %v3767 = vpack.c.bf16 %v3726, %v3726
      %v3768 = vpack.c.bf16 %v3727, %v3727
      %v3769 = vpack.c.bf16 %v3728, %v3728
      %v3770 = vpack.c.bf16 %v3729, %v3729
      %v3771 = vpack.c.bf16 %v3730, %v3730
      %v3772 = vpack.c.bf16 %v3731, %v3731
      %v3773 = vpack.c.bf16 %v3732, %v3732
      %v3774 = vpack.c.bf16 %v3733, %v3733
      %v3775 = vpack.c.bf16 %v3734, %v3734
      %v3776 = vpack.c.bf16 %v3735, %v3735
      %v3777 = vpack.c.bf16 %v3736, %v3736
      %v3778 = vpack.c.bf16 %v3737, %v3737
      %v3779 = vpack.c.bf16 %v3738, %v3738
      %v3780 = vpack.c.bf16 %v3739, %v3739
      %v3781 = vpack.c.bf16 %v3740, %v3740
      %3782 = vst [vmem:[%s260] sm:$0xf] %v3741
      %3783 = vst [vmem:[%s260 + $0x4] sm:$0xf] %v3742
      %3784 = vst [vmem:[%s260 + $0x8] sm:$0xf] %v3743
      %3785 = vst [vmem:[%s260 + $0xc] sm:$0xf] %v3744
      %3786 = vst [vmem:[%s260 + $0x10] sm:$0xf] %v3745
      %3787 = vst [vmem:[%s260 + $0x14] sm:$0xf] %v3746
      %3788 = vst [vmem:[%s260 + $0x18] sm:$0xf] %v3747
      %3789 = vst [vmem:[%s260 + $0x1c] sm:$0xf] %v3748
      %3790 = vst [vmem:[%s260 + $0x20] sm:$0xf] %v3749
      %3791 = vst [vmem:[%s260 + $0x24] sm:$0xf] %v3750
      %3792 = vst [vmem:[%s260 + $0x28] sm:$0xf] %v3751
      %3793 = vst [vmem:[%s260 + $0x2c] sm:$0xf] %v3752
      %3794 = vst [vmem:[%s260 + $0x30] sm:$0xf] %v3753
      %3795 = vst [vmem:[%s260 + $0x34] sm:$0xf] %v3754
      %3796 = vst [vmem:[%s260 + $0x38] sm:$0xf] %v3755
      %3797 = vst [vmem:[%s260 + $0x3c] sm:$0xf] %v3756
      %3798 = vst [vmem:[%s260 + $0x40] sm:$0xf] %v3757
      %3799 = vst [vmem:[%s260 + $0x44] sm:$0xf] %v3758
      %3800 = vst [vmem:[%s260 + $0x48] sm:$0xf] %v3759
      %3801 = vst [vmem:[%s260 + $0x4c] sm:$0xf] %v3760
      %3802 = vst [vmem:[%s260 + $0x50] sm:$0xf] %v3761
      %3803 = vst [vmem:[%s260 + $0x54] sm:$0xf] %v3762
      %3804 = vst [vmem:[%s260 + $0x58] sm:$0xf] %v3763
      %3805 = vst [vmem:[%s260 + $0x5c] sm:$0xf] %v3764
      %3806 = vst [vmem:[%s260 + $0x60] sm:$0xf] %v3765
      %3807 = vst [vmem:[%s260 + $0x64] sm:$0xf] %v3766
      %3808 = vst [vmem:[%s260 + $0x68] sm:$0xf] %v3767
      %3809 = vst [vmem:[%s260 + $0x6c] sm:$0xf] %v3768
      %3810 = vst [vmem:[%s260 + $0x70] sm:$0xf] %v3769
      %3811 = vst [vmem:[%s260 + $0x74] sm:$0xf] %v3770
      %3812 = vst [vmem:[%s260 + $0x78] sm:$0xf] %v3771
      %3813 = vst [vmem:[%s260 + $0x7c] sm:$0xf] %v3772
      %3814 = vst [vmem:[%s260 + $0x80] sm:$0xf] %v3773
      %3815 = vst [vmem:[%s260 + $0x84] sm:$0xf] %v3774
      %3816 = vst [vmem:[%s260 + $0x88] sm:$0xf] %v3775
      %3817 = vst [vmem:[%s260 + $0x8c] sm:$0xf] %v3776
      %3818 = vst [vmem:[%s260 + $0x90] sm:$0xf] %v3777
      %3819 = vst [vmem:[%s260 + $0x94] sm:$0xf] %v3778
      %3820 = vst [vmem:[%s260 + $0x98] sm:$0xf] %v3779
      %3821 = vst [vmem:[%s260 + $0x9c] sm:$0xf] %v3780
      %3822 = vst [vmem:[%s260 + $0xa0] sm:$0xf] %v3781
      %v3823 = vld [vmem:[%s249] sm:$0xff]
      %v3824 = vld [vmem:[%s249 + $0x8] sm:$0xff]
      %v3825 = vld [vmem:[%s249 + $0x10] sm:$0xff]
      %v3826 = vld [vmem:[%s249 + $0x18] sm:$0xff]
      %v3827 = vld [vmem:[%s249 + $0x20] sm:$0xff]
      %v3828 = vld [vmem:[%s249 + $0x28] sm:$0xff]
      %v3829 = vld [vmem:[%s249 + $0x30] sm:$0xff]
      %v3830 = vld [vmem:[%s249 + $0x38] sm:$0xff]
      %v3831 = vld [vmem:[%s249 + $0x40] sm:$0xff]
      %v3832 = vld [vmem:[%s249 + $0x48] sm:$0xff]
      %v3833 = vld [vmem:[%s249 + $0x50] sm:$0xff]
      %v3834 = vld [vmem:[%s249 + $0x58] sm:$0xff]
      %v3835 = vld [vmem:[%s249 + $0x60] sm:$0xff]
      %v3836 = vld [vmem:[%s249 + $0x68] sm:$0xff]
      %v3837 = vld [vmem:[%s249 + $0x70] sm:$0xff]
      %v3838 = vld [vmem:[%s249 + $0x78] sm:$0xff]
      %v3839 = vld [vmem:[%s249 + $0x80] sm:$0xff]
      %v3840 = vld [vmem:[%s249 + $0x88] sm:$0xff]
      %v3841 = vld [vmem:[%s249 + $0x90] sm:$0xff]
      %v3842 = vld [vmem:[%s249 + $0x98] sm:$0xff]
      %v3843 = vld [vmem:[%s249 + $0xa0] sm:$0xff]
      %v3844 = vld [vmem:[%s249 + $0xa8] sm:$0xff]
      %v3845 = vld [vmem:[%s249 + $0xb0] sm:$0xff]
      %v3846 = vld [vmem:[%s249 + $0xb8] sm:$0xff]
      %v3847 = vld [vmem:[%s249 + $0xc0] sm:$0xff]
      %v3848 = vld [vmem:[%s249 + $0xc8] sm:$0xff]
      %v3849 = vld [vmem:[%s249 + $0xd0] sm:$0xff]
      %v3850 = vld [vmem:[%s249 + $0xd8] sm:$0xff]
      %v3851 = vld [vmem:[%s249 + $0xe0] sm:$0xff]
      %v3852 = vld [vmem:[%s249 + $0xe8] sm:$0xff]
      %v3853 = vld [vmem:[%s249 + $0xf0] sm:$0xff]
      %v3854 = vld [vmem:[%s249 + $0xf8] sm:$0xff]
      %v3855 = vld [vmem:[%s249 + $0x100] sm:$0xff]
      %v3856 = vld [vmem:[%s249 + $0x108] sm:$0xff]
      %v3857 = vld [vmem:[%s249 + $0x110] sm:$0xff]
      %v3858 = vld [vmem:[%s249 + $0x118] sm:$0xff]
      %v3859 = vld [vmem:[%s249 + $0x120] sm:$0xff]
      %v3860 = vld [vmem:[%s249 + $0x128] sm:$0xff]
      %v3861 = vld [vmem:[%s249 + $0x130] sm:$0xff]
      %v3862 = vld [vmem:[%s249 + $0x138] sm:$0xff]
      %v3863 = vld [vmem:[%s249 + $0x140] sm:$0xff]
      %3865 = vset.pattern.permute.xlu0 0
      %3866 = vperm.xlu0 %3865, %v3823
      %v3867 = vpop.permute.xlu0 %3866
      %3870 = vset.pattern.permute.xlu0 0
      %3871 = vperm.xlu0 %3870, %v3824
      %v3872 = vpop.permute.xlu0 %3871
      %3875 = vset.pattern.permute.xlu0 0
      %3876 = vperm.xlu0 %3875, %v3825
      %v3877 = vpop.permute.xlu0 %3876
      %3880 = vset.pattern.permute.xlu0 0
      %3881 = vperm.xlu0 %3880, %v3826
      %v3882 = vpop.permute.xlu0 %3881
      %3885 = vset.pattern.permute.xlu0 0
      %3886 = vperm.xlu0 %3885, %v3827
      %v3887 = vpop.permute.xlu0 %3886
      %3890 = vset.pattern.permute.xlu0 0
      %3891 = vperm.xlu0 %3890, %v3828
      %v3892 = vpop.permute.xlu0 %3891
      %3895 = vset.pattern.permute.xlu0 0
      %3896 = vperm.xlu0 %3895, %v3829
      %v3897 = vpop.permute.xlu0 %3896
      %3900 = vset.pattern.permute.xlu0 0
      %3901 = vperm.xlu0 %3900, %v3830
      %v3902 = vpop.permute.xlu0 %3901
      %3905 = vset.pattern.permute.xlu0 0
      %3906 = vperm.xlu0 %3905, %v3831
      %v3907 = vpop.permute.xlu0 %3906
      %3910 = vset.pattern.permute.xlu0 0
      %3911 = vperm.xlu0 %3910, %v3832
      %v3912 = vpop.permute.xlu0 %3911
      %3915 = vset.pattern.permute.xlu0 0
      %3916 = vperm.xlu0 %3915, %v3833
      %v3917 = vpop.permute.xlu0 %3916
      %3920 = vset.pattern.permute.xlu0 0
      %3921 = vperm.xlu0 %3920, %v3834
      %v3922 = vpop.permute.xlu0 %3921
      %3925 = vset.pattern.permute.xlu0 0
      %3926 = vperm.xlu0 %3925, %v3835
      %v3927 = vpop.permute.xlu0 %3926
      %3930 = vset.pattern.permute.xlu0 0
      %3931 = vperm.xlu0 %3930, %v3836
      %v3932 = vpop.permute.xlu0 %3931
      %3935 = vset.pattern.permute.xlu0 0
      %3936 = vperm.xlu0 %3935, %v3837
      %v3937 = vpop.permute.xlu0 %3936
      %3940 = vset.pattern.permute.xlu0 0
      %3941 = vperm.xlu0 %3940, %v3838
      %v3942 = vpop.permute.xlu0 %3941
      %3945 = vset.pattern.permute.xlu0 0
      %3946 = vperm.xlu0 %3945, %v3839
      %v3947 = vpop.permute.xlu0 %3946
      %3950 = vset.pattern.permute.xlu0 0
      %3951 = vperm.xlu0 %3950, %v3840
      %v3952 = vpop.permute.xlu0 %3951
      %3955 = vset.pattern.permute.xlu0 0
      %3956 = vperm.xlu0 %3955, %v3841
      %v3957 = vpop.permute.xlu0 %3956
      %3960 = vset.pattern.permute.xlu0 0
      %3961 = vperm.xlu0 %3960, %v3842
      %v3962 = vpop.permute.xlu0 %3961
      %3965 = vset.pattern.permute.xlu0 0
      %3966 = vperm.xlu0 %3965, %v3843
      %v3967 = vpop.permute.xlu0 %3966
      %3970 = vset.pattern.permute.xlu0 0
      %3971 = vperm.xlu0 %3970, %v3844
      %v3972 = vpop.permute.xlu0 %3971
      %3975 = vset.pattern.permute.xlu0 0
      %3976 = vperm.xlu0 %3975, %v3845
      %v3977 = vpop.permute.xlu0 %3976
      %3980 = vset.pattern.permute.xlu0 0
      %3981 = vperm.xlu0 %3980, %v3846
      %v3982 = vpop.permute.xlu0 %3981
      %3985 = vset.pattern.permute.xlu0 0
      %3986 = vperm.xlu0 %3985, %v3847
      %v3987 = vpop.permute.xlu0 %3986
      %3990 = vset.pattern.permute.xlu0 0
      %3991 = vperm.xlu0 %3990, %v3848
      %v3992 = vpop.permute.xlu0 %3991
      %3995 = vset.pattern.permute.xlu0 0
      %3996 = vperm.xlu0 %3995, %v3849
      %v3997 = vpop.permute.xlu0 %3996
      %4000 = vset.pattern.permute.xlu0 0
      %4001 = vperm.xlu0 %4000, %v3850
      %v4002 = vpop.permute.xlu0 %4001
      %4005 = vset.pattern.permute.xlu0 0
      %4006 = vperm.xlu0 %4005, %v3851
      %v4007 = vpop.permute.xlu0 %4006
      %4010 = vset.pattern.permute.xlu0 0
      %4011 = vperm.xlu0 %4010, %v3852
      %v4012 = vpop.permute.xlu0 %4011
      %4015 = vset.pattern.permute.xlu0 0
      %4016 = vperm.xlu0 %4015, %v3853
      %v4017 = vpop.permute.xlu0 %4016
      %4020 = vset.pattern.permute.xlu0 0
      %4021 = vperm.xlu0 %4020, %v3854
      %v4022 = vpop.permute.xlu0 %4021
      %4025 = vset.pattern.permute.xlu0 0
      %4026 = vperm.xlu0 %4025, %v3855
      %v4027 = vpop.permute.xlu0 %4026
      %4030 = vset.pattern.permute.xlu0 0
      %4031 = vperm.xlu0 %4030, %v3856
      %v4032 = vpop.permute.xlu0 %4031
      %4035 = vset.pattern.permute.xlu0 0
      %4036 = vperm.xlu0 %4035, %v3857
      %v4037 = vpop.permute.xlu0 %4036
      %4040 = vset.pattern.permute.xlu0 0
      %4041 = vperm.xlu0 %4040, %v3858
      %v4042 = vpop.permute.xlu0 %4041
      %4045 = vset.pattern.permute.xlu0 0
      %4046 = vperm.xlu0 %4045, %v3859
      %v4047 = vpop.permute.xlu0 %4046
      %4050 = vset.pattern.permute.xlu0 0
      %4051 = vperm.xlu0 %4050, %v3860
      %v4052 = vpop.permute.xlu0 %4051
      %4055 = vset.pattern.permute.xlu0 0
      %4056 = vperm.xlu0 %4055, %v3861
      %v4057 = vpop.permute.xlu0 %4056
      %4060 = vset.pattern.permute.xlu0 0
      %4061 = vperm.xlu0 %4060, %v3862
      %v4062 = vpop.permute.xlu0 %4061
      %4065 = vset.pattern.permute.xlu0 0
      %4066 = vperm.xlu0 %4065, %v3863
      %v4067 = vpop.permute.xlu0 %4066
      %v4069 = vmul.f32 %v3700, %v3867
      %v4070 = vmul.f32 %v3701, %v3872
      %v4071 = vmul.f32 %v3702, %v3877
      %v4072 = vmul.f32 %v3703, %v3882
      %v4073 = vmul.f32 %v3704, %v3887
      %v4074 = vmul.f32 %v3705, %v3892
      %v4075 = vmul.f32 %v3706, %v3897
      %v4076 = vmul.f32 %v3707, %v3902
      %v4077 = vmul.f32 %v3708, %v3907
      %v4078 = vmul.f32 %v3709, %v3912
      %v4079 = vmul.f32 %v3710, %v3917
      %v4080 = vmul.f32 %v3711, %v3922
      %v4081 = vmul.f32 %v3712, %v3927
      %v4082 = vmul.f32 %v3713, %v3932
      %v4083 = vmul.f32 %v3714, %v3937
      %v4084 = vmul.f32 %v3715, %v3942
      %v4085 = vmul.f32 %v3716, %v3947
      %v4086 = vmul.f32 %v3717, %v3952
      %v4087 = vmul.f32 %v3718, %v3957
      %v4088 = vmul.f32 %v3719, %v3962
      %v4089 = vmul.f32 %v3720, %v3967
      %v4090 = vmul.f32 %v3721, %v3972
      %v4091 = vmul.f32 %v3722, %v3977
      %v4092 = vmul.f32 %v3723, %v3982
      %v4093 = vmul.f32 %v3724, %v3987
      %v4094 = vmul.f32 %v3725, %v3992
      %v4095 = vmul.f32 %v3726, %v3997
      %v4096 = vmul.f32 %v3727, %v4002
      %v4097 = vmul.f32 %v3728, %v4007
      %v4098 = vmul.f32 %v3729, %v4012
      %v4099 = vmul.f32 %v3730, %v4017
      %v4100 = vmul.f32 %v3731, %v4022
      %v4101 = vmul.f32 %v3732, %v4027
      %v4102 = vmul.f32 %v3733, %v4032
      %v4103 = vmul.f32 %v3734, %v4037
      %v4104 = vmul.f32 %v3735, %v4042
      %v4105 = vmul.f32 %v3736, %v4047
      %v4106 = vmul.f32 %v3737, %v4052
      %v4107 = vmul.f32 %v3738, %v4057
      %v4108 = vmul.f32 %v3739, %v4062
      %v4109 = vmul.f32 %v3740, %v4067
      %v4110 = vadd.f32 %v4069, %v4070
      %v4111 = vadd.f32 %v4110, %v4071
      %v4112 = vadd.f32 %v4111, %v4072
      %v4113 = vadd.f32 %v4112, %v4073
      %v4114 = vadd.f32 %v4113, %v4074
      %v4115 = vadd.f32 %v4114, %v4075
      %v4116 = vadd.f32 %v4115, %v4076
      %v4117 = vadd.f32 %v4116, %v4077
      %v4118 = vadd.f32 %v4117, %v4078
      %v4119 = vadd.f32 %v4118, %v4079
      %v4120 = vadd.f32 %v4119, %v4080
      %v4121 = vadd.f32 %v4120, %v4081
      %v4122 = vadd.f32 %v4121, %v4082
      %v4123 = vadd.f32 %v4122, %v4083
      %v4124 = vadd.f32 %v4123, %v4084
      %v4125 = vadd.f32 %v4124, %v4085
      %v4126 = vadd.f32 %v4125, %v4086
      %v4127 = vadd.f32 %v4126, %v4087
      %v4128 = vadd.f32 %v4127, %v4088
      %v4129 = vadd.f32 %v4128, %v4089
      %v4130 = vadd.f32 %v4129, %v4090
      %v4131 = vadd.f32 %v4130, %v4091
      %v4132 = vadd.f32 %v4131, %v4092
      %v4133 = vadd.f32 %v4132, %v4093
      %v4134 = vadd.f32 %v4133, %v4094
      %v4135 = vadd.f32 %v4134, %v4095
      %v4136 = vadd.f32 %v4135, %v4096
      %v4137 = vadd.f32 %v4136, %v4097
      %v4138 = vadd.f32 %v4137, %v4098
      %v4139 = vadd.f32 %v4138, %v4099
      %v4140 = vadd.f32 %v4139, %v4100
      %v4141 = vadd.f32 %v4140, %v4101
      %v4142 = vadd.f32 %v4141, %v4102
      %v4143 = vadd.f32 %v4142, %v4103
      %v4144 = vadd.f32 %v4143, %v4104
      %v4145 = vadd.f32 %v4144, %v4105
      %v4146 = vadd.f32 %v4145, %v4106
      %v4147 = vadd.f32 %v4146, %v4107
      %v4148 = vadd.f32 %v4147, %v4108
      %v4149 = vadd.f32 %v4148, %v4109
      %v4150 = vrot.slane %v4149, 4
      %v4151 = vadd.f32 %v4149, %v4150
      %v4152 = vrot.slane %v4151, 2
      %v4153 = vadd.f32 %v4151, %v4152
      %v4154 = vrot.slane %v4153, 1
      %v4155 = vadd.f32 %v4153, %v4154
      %v4156 = vmul.f32 %v4069, %v3700
      %v4157 = vmul.f32 %v4070, %v3701
      %v4158 = vmul.f32 %v4071, %v3702
      %v4159 = vmul.f32 %v4072, %v3703
      %v4160 = vmul.f32 %v4073, %v3704
      %v4161 = vmul.f32 %v4074, %v3705
      %v4162 = vmul.f32 %v4075, %v3706
      %v4163 = vmul.f32 %v4076, %v3707
      %v4164 = vmul.f32 %v4077, %v3708
      %v4165 = vmul.f32 %v4078, %v3709
      %v4166 = vmul.f32 %v4079, %v3710
      %v4167 = vmul.f32 %v4080, %v3711
      %v4168 = vmul.f32 %v4081, %v3712
      %v4169 = vmul.f32 %v4082, %v3713
      %v4170 = vmul.f32 %v4083, %v3714
      %v4171 = vmul.f32 %v4084, %v3715
      %v4172 = vmul.f32 %v4085, %v3716
      %v4173 = vmul.f32 %v4086, %v3717
      %v4174 = vmul.f32 %v4087, %v3718
      %v4175 = vmul.f32 %v4088, %v3719
      %v4176 = vmul.f32 %v4089, %v3720
      %v4177 = vmul.f32 %v4090, %v3721
      %v4178 = vmul.f32 %v4091, %v3722
      %v4179 = vmul.f32 %v4092, %v3723
      %v4180 = vmul.f32 %v4093, %v3724
      %v4181 = vmul.f32 %v4094, %v3725
      %v4182 = vmul.f32 %v4095, %v3726
      %v4183 = vmul.f32 %v4096, %v3727
      %v4184 = vmul.f32 %v4097, %v3728
      %v4185 = vmul.f32 %v4098, %v3729
      %v4186 = vmul.f32 %v4099, %v3730
      %v4187 = vmul.f32 %v4100, %v3731
      %v4188 = vmul.f32 %v4101, %v3732
      %v4189 = vmul.f32 %v4102, %v3733
      %v4190 = vmul.f32 %v4103, %v3734
      %v4191 = vmul.f32 %v4104, %v3735
      %v4192 = vmul.f32 %v4105, %v3736
      %v4193 = vmul.f32 %v4106, %v3737
      %v4194 = vmul.f32 %v4107, %v3738
      %v4195 = vmul.f32 %v4108, %v3739
      %v4196 = vmul.f32 %v4109, %v3740
      %v4197 = vadd.f32 %v4156, %v4157
      %v4198 = vadd.f32 %v4197, %v4158
      %v4199 = vadd.f32 %v4198, %v4159
      %v4200 = vadd.f32 %v4199, %v4160
      %v4201 = vadd.f32 %v4200, %v4161
      %v4202 = vadd.f32 %v4201, %v4162
      %v4203 = vadd.f32 %v4202, %v4163
      %v4204 = vadd.f32 %v4203, %v4164
      %v4205 = vadd.f32 %v4204, %v4165
      %v4206 = vadd.f32 %v4205, %v4166
      %v4207 = vadd.f32 %v4206, %v4167
      %v4208 = vadd.f32 %v4207, %v4168
      %v4209 = vadd.f32 %v4208, %v4169
      %v4210 = vadd.f32 %v4209, %v4170
      %v4211 = vadd.f32 %v4210, %v4171
      %v4212 = vadd.f32 %v4211, %v4172
      %v4213 = vadd.f32 %v4212, %v4173
      %v4214 = vadd.f32 %v4213, %v4174
      %v4215 = vadd.f32 %v4214, %v4175
      %v4216 = vadd.f32 %v4215, %v4176
      %v4217 = vadd.f32 %v4216, %v4177
      %v4218 = vadd.f32 %v4217, %v4178
      %v4219 = vadd.f32 %v4218, %v4179
      %v4220 = vadd.f32 %v4219, %v4180
      %v4221 = vadd.f32 %v4220, %v4181
      %v4222 = vadd.f32 %v4221, %v4182
      %v4223 = vadd.f32 %v4222, %v4183
      %v4224 = vadd.f32 %v4223, %v4184
      %v4225 = vadd.f32 %v4224, %v4185
      %v4226 = vadd.f32 %v4225, %v4186
      %v4227 = vadd.f32 %v4226, %v4187
      %v4228 = vadd.f32 %v4227, %v4188
      %v4229 = vadd.f32 %v4228, %v4189
      %v4230 = vadd.f32 %v4229, %v4190
      %v4231 = vadd.f32 %v4230, %v4191
      %v4232 = vadd.f32 %v4231, %v4192
      %v4233 = vadd.f32 %v4232, %v4193
      %v4234 = vadd.f32 %v4233, %v4194
      %v4235 = vadd.f32 %v4234, %v4195
      %v4236 = vadd.f32 %v4235, %v4196
      %v4237 = vrot.slane %v4236, 4
      %v4238 = vadd.f32 %v4236, %v4237
      %v4239 = vrot.slane %v4238, 2
      %v4240 = vadd.f32 %v4238, %v4239
      %v4241 = vrot.slane %v4240, 1
      %v4242 = vadd.f32 %v4240, %v4241
      %vm4243 = vcmask 1040384
      %v4244 = vsel %vm4243, %v4155, %v4242
      %4245 = vst [vmem:[%s268] sm:$0x3] %v4244
      %s4246 = smul.u32 41, %s21
      %p4247 = scmp.lt.s32.totalorder %s20, 1
      %s4248 = scalar_select %p4247, %s20, 1
      %p4249 = scmp.lt.s32.totalorder %s4246, 40
      %s4250 = scalar_select %p4249, %s4246, 40
      %s4251 = smul.addr %s4248, 41
      %s4252 = sadd.s32 %s4250, %s4251
      %s4253 = smul.addr %s4252, 4
      %s4254 = scalar_lea.vmem %s3, %s4253
      %p4255 = scmp.lt.s32.totalorder %s20, 1
      %s4256 = scalar_select %p4255, %s20, 1
      %p4257 = scmp.lt.s32.totalorder %s21, 0
      %s4258 = scalar_select %p4257, %s21, 0
      %s4259 = sadd.s32 %s4258, %s4256
      %s4260 = smul.addr %s4259, 2
      %s4261 = scalar_lea.vmem %s4, %s4260
      // Predicated region
      $region33: #{res_block.5} parent=31 // pred_check
        %p4262 = pneg %p123
      $region34: #{res_block.5} parent=31 // pred_check_branch
        %4264 = sbr.rel (%p4262) target = $region36
      $region35: #{res_block.5} parent=31 // pred_region
        %s4265 = smul.u32 41, %s21
      $region36: #{res_block.5} parent=31 // pred_fallthru
        _
      // Predicated region
      $region37: #{res_block.5} parent=31 // pred_check
        %p4266 = pneg %p151
      $region38: #{res_block.5} parent=31 // pred_check_branch
        %4268 = sbr.rel (%p4266) target = $region40
      $region39: #{res_block.5} parent=31 // pred_region
        _
      $region40: #{res_block.5} parent=31 // pred_fallthru
        _
    $region32: #{res_block.5} parent=5 // pred_fallthru
      _
    %p4269 = scmp.le.s32.totalorder 2, %s11
    // Predicated region
    $region41: #{res_block.5} parent=5 // pred_check
      %p4270 = pneg %p4269
    $region42: #{res_block.5} parent=5 // pred_check_branch
      %4272 = sbr.rel (%p4270) target = $region44
    $region43: #{res_block.5} parent=5 // pred_region
      %s4273 = ssub.s32 %s11, 2
      // Predicated region
      $region45: #{res_block.5} parent=43 // pred_check
        %p4274 = pneg %p129
      $region46: #{res_block.5} parent=43 // pred_check_branch
        %4276 = sbr.rel (%p4274) target = $region48
      $region47: #{res_block.5} parent=43 // pred_region
        %s4277 = smul.u32 41, %s23
        %p4278 = scmp.lt.s32.totalorder %s22, 1
        %s4279 = scalar_select %p4278, %s22, 1
        %p4280 = scmp.lt.s32.totalorder %s4277, 40
        %s4281 = scalar_select %p4280, %s4277, 40
        %s4282 = smul.addr %s4279, 41
        %s4283 = sadd.s32 %s4281, %s4282
        %s4284 = smul.addr %s4283, 4
        %s4285 = scalar_lea.vmem %s3, %s4284
      $region48: #{res_block.5} parent=43 // pred_fallthru
        _
      // Predicated region
      $region49: #{res_block.5} parent=43 // pred_check
        %p4286 = pneg %p157
      $region50: #{res_block.5} parent=43 // pred_check_branch
        %4288 = sbr.rel (%p4286) target = $region52
      $region51: #{res_block.5} parent=43 // pred_region
        %p4289 = scmp.lt.s32.totalorder %s22, 1
        %s4290 = scalar_select %p4289, %s22, 1
        %p4291 = scmp.lt.s32.totalorder %s23, 0
        %s4292 = scalar_select %p4291, %s23, 0
        %s4293 = sadd.s32 %s4292, %s4290
        %s4294 = smul.addr %s4293, 2
        %s4295 = scalar_lea.vmem %s4, %s4294
      $region52: #{res_block.5} parent=43 // pred_fallthru
        _
    $region44: #{res_block.5} parent=5 // pred_fallthru
      _
  $region6: #{res_block.5} parent=0 // loop_footer
    %s15 = sadd.s32 1, %s11
  $region7: #{res_block.5} parent=0 // loop_footer_branch
    %10 = sbr.rel target = $region3
  $region8: #{res_block.5} parent=0 // loop_exit
    _

// kernel: res_block.7
$region0: #{res_block.7}
  #allocation0 [shape = 'u32[]', space=smem, size = 0x4, offset = 0x4, fixed_abs, tag = 'smem constant byte address 0x4 - core index']
  #allocation1 [shape = 'u32[72,128]{1,0:T(1,128)}', space=vmem, size = 0x9000, scoped, tag = 'internal scratch']
  %s0 = inlined_call_operand.vmem [shape: bf16[2,984,128], index: 0, kind: input, shape index: {}]
  %s1 = inlined_call_operand.vmem [shape: bf16[9,128,128], index: 1, kind: input, shape index: {}]
  %s2 = inlined_call_operand.vmem [shape: f32[984,1], index: 2, kind: input, shape index: {}]
  %s3 = inlined_call_operand.vmem [shape: bf16[2,328,128], index: 3, kind: output, shape index: {0}]
  %s4 = inlined_call_operand.vmem [shape: f32[2,1,2,128], index: 4, kind: output, shape index: {1}]
  %5 = xla_tuple %s3, %s4
  %s6 = sld [smem:[#allocation0]]
  $region53: #{res_block.7} parent=0
    _
  %s8 = ssub.s32 1, %s6
  %s9 = scalar_select 0, %s8, %s6
  loop: start=0, step=1, limit=4
  $region2: #{res_block.7} parent=0 // loop_pre_header
    _
  $region3: #{res_block.7} parent=0 // loop_header
    %s11 = sphi 0, %s15
    %p12 = scmp.ge.s32.totalorder %s11, 4
    %s18 = sphi 0, %s30
    %s19 = sphi 0, %s26
    %s20 = sphi 0, %s18
    %s21 = sphi 0, %s19
    %s22 = sphi 0, %s20
    %s23 = sphi 0, %s21
    %s33 = sphi 0, %s35
    %s36 = sphi 0, %s33
    %s37 = sphi 0, %s36
    %s53 = sphi 0, %s37
    %s57 = sphi 0, %s57
    %s59 = sphi 0, %s57
    %s60 = sphi 0, %s59
    %s74 = sphi 0, %s60
    %s82 = sphi 0, %s84
    %s85 = sphi 0, %s82
    %s86 = sphi 0, %s85
    %s102 = sphi 0, %s86
    %s110 = sphi 0, %s112
    %s113 = sphi 0, %s110
    %s114 = sphi 0, %s113
    %s130 = sphi 0, %s114
    %s138 = sphi 0, %s140
    %s141 = sphi 0, %s138
    %s142 = sphi 0, %s141
    %s158 = sphi 0, %s142
  $region4: #{res_block.7} parent=0 // loop_header_branch
    %14 = sbr.rel (%p12) target = $region8
  $region5: #{res_block.7} parent=0 // loop_body
    %s16 = ssub.s32 %s11, 1
    %s17 = ssub.s32 %s11, 2
    %s24 = sadd.s32 1, %s19
    %p25 = scmp.ge.s32.totalorder %s24, 1
    %s26 = scalar_select %p25, 0, %s24
    %s27 = sadd.s32 1, %s18
    %s28 = scalar_select %p25, %s27, %s18
    %p29 = scmp.ge.s32.totalorder %s28, 2
    %s30 = scalar_select %p29, 0, %s28
    %s31 = ssub.s32 %s18, %s30
    %p32 = scmp.eq.s32.totalorder %s31, 0
    %s34 = sadd.s32 %s33, 1
    %s35 = scalar_select %p32, %s33, %s34
    %p38 = pneg %p32
    %p39 = scmp.eq.s32.totalorder %s11, 1
    %p40 = por %p38, %p39
    %p41 = scmp.ne.s32.totalorder %s33, %s36
    %p42 = scmp.eq.s32.totalorder %s11, 0
    %p43 = por %p41, %p42
    %p44 = scmp.ne.s32.totalorder %s33, %s36
    %p45 = scmp.eq.s32.totalorder %s16, 1
    %p46 = por %p44, %p45
    %p47 = scmp.ne.s32.totalorder %s36, %s37
    %p48 = scmp.eq.s32.totalorder %s16, 0
    %p49 = por %p47, %p48
    %p50 = scmp.ne.s32.totalorder %s36, %s37
    %p51 = scmp.eq.s32.totalorder %s17, 1
    %p52 = por %p50, %p51
    %p54 = scmp.ne.s32.totalorder %s37, %s53
    %p55 = scmp.eq.s32.totalorder %s17, 0
    %p56 = por %p54, %p55
    %s58 = sadd.s32 %s57, 1
    %p61 = scmp.eq.s32.totalorder %s11, 1
    %p62 = scmp.ne.s32.totalorder %s57, %s59
    %p63 = scmp.eq.s32.totalorder %s11, 0
    %p64 = por %p62, %p63
    %p65 = scmp.ne.s32.totalorder %s57, %s59
    %p66 = scmp.eq.s32.totalorder %s16, 1
    %p67 = por %p65, %p66
    %p68 = scmp.ne.s32.totalorder %s59, %s60
    %p69 = scmp.eq.s32.totalorder %s16, 0
    %p70 = por %p68, %p69
    %p71 = scmp.ne.s32.totalorder %s59, %s60
    %p72 = scmp.eq.s32.totalorder %s17, 1
    %p73 = por %p71, %p72
    %p75 = scmp.ne.s32.totalorder %s60, %s74
    %p76 = scmp.eq.s32.totalorder %s17, 0
    %p77 = por %p75, %p76
    %s78 = sadd.s32 %s19, 1
    %s79 = sadd.s32 %s26, 1
    %s80 = ssub.s32 %s78, %s79
    %p81 = scmp.eq.s32.totalorder %s80, 0
    %s83 = sadd.s32 %s82, 1
    %s84 = scalar_select %p81, %s82, %s83
    %p87 = pneg %p81
    %p88 = scmp.eq.s32.totalorder %s11, 1
    %p89 = por %p87, %p88
    %p90 = scmp.ne.s32.totalorder %s82, %s85
    %p91 = scmp.eq.s32.totalorder %s11, 0
    %p92 = por %p90, %p91
    %p93 = scmp.ne.s32.totalorder %s82, %s85
    %p94 = scmp.eq.s32.totalorder %s16, 1
    %p95 = por %p93, %p94
    %p96 = scmp.ne.s32.totalorder %s85, %s86
    %p97 = scmp.eq.s32.totalorder %s16, 0
    %p98 = por %p96, %p97
    %p99 = scmp.ne.s32.totalorder %s85, %s86
    %p100 = scmp.eq.s32.totalorder %s17, 1
    %p101 = por %p99, %p100
    %p103 = scmp.ne.s32.totalorder %s86, %s102
    %p104 = scmp.eq.s32.totalorder %s17, 0
    %p105 = por %p103, %p104
    %s106 = ssub.s32 %s18, %s30
    %s107 = ssub.s32 %s19, %s26
    %s108 = sor.u32 %s106, %s107
    %p109 = scmp.eq.s32.totalorder %s108, 0
    %s111 = sadd.s32 %s110, 1
    %s112 = scalar_select %p109, %s110, %s111
    %p115 = pneg %p109
    %p116 = scmp.eq.s32.totalorder %s11, 1
    %p117 = por %p115, %p116
    %p118 = scmp.ne.s32.totalorder %s110, %s113
    %p119 = scmp.eq.s32.totalorder %s11, 0
    %p120 = por %p118, %p119
    %p121 = scmp.ne.s32.totalorder %s110, %s113
    %p122 = scmp.eq.s32.totalorder %s16, 1
    %p123 = por %p121, %p122
    %p124 = scmp.ne.s32.totalorder %s113, %s114
    %p125 = scmp.eq.s32.totalorder %s16, 0
    %p126 = por %p124, %p125
    %p127 = scmp.ne.s32.totalorder %s113, %s114
    %p128 = scmp.eq.s32.totalorder %s17, 1
    %p129 = por %p127, %p128
    %p131 = scmp.ne.s32.totalorder %s114, %s130
    %p132 = scmp.eq.s32.totalorder %s17, 0
    %p133 = por %p131, %p132
    %s134 = ssub.s32 %s18, %s30
    %s135 = ssub.s32 %s19, %s26
    %s136 = sor.u32 %s134, %s135
    %p137 = scmp.eq.s32.totalorder %s136, 0
    %s139 = sadd.s32 %s138, 1
    %s140 = scalar_select %p137, %s138, %s139
    %p143 = pneg %p137
    %p144 = scmp.eq.s32.totalorder %s11, 1
    %p145 = por %p143, %p144
    %p146 = scmp.ne.s32.totalorder %s138, %s141
    %p147 = scmp.eq.s32.totalorder %s11, 0
    %p148 = por %p146, %p147
    %p149 = scmp.ne.s32.totalorder %s138, %s141
    %p150 = scmp.eq.s32.totalorder %s16, 1
    %p151 = por %p149, %p150
    %p152 = scmp.ne.s32.totalorder %s141, %s142
    %p153 = scmp.eq.s32.totalorder %s16, 0
    %p154 = por %p152, %p153
    %p155 = scmp.ne.s32.totalorder %s141, %s142
    %p156 = scmp.eq.s32.totalorder %s17, 1
    %p157 = por %p155, %p156
    %p159 = scmp.ne.s32.totalorder %s142, %s158
    %p160 = scmp.eq.s32.totalorder %s17, 0
    %p161 = por %p159, %p160
    %p162 = scmp.le.s32.totalorder 1, %s11
    %p163 = scmp.lt.s32.totalorder %s11, 3
    %p164 = pnand %p162, %p163
    %p165 = pneg %p164
    // Predicated region
    $region9: #{res_block.7} parent=5 // pred_check
      _
    $region10: #{res_block.7} parent=5 // pred_check_branch
      %167 = sbr.rel (%p164) target = $region12
    $region11: #{res_block.7} parent=5 // pred_region
      %s168 = ssub.s32 %s11, 1
      // Predicated region
      $region13: #{res_block.7} parent=11 // pred_check
        %p169 = pneg %p70
      $region14: #{res_block.7} parent=11 // pred_check_branch
        %171 = sbr.rel (%p169) target = $region16
      $region15: #{res_block.7} parent=11 // pred_region
        _
      $region16: #{res_block.7} parent=11 // pred_fallthru
        _
      // Predicated region
      $region17: #{res_block.7} parent=11 // pred_check
        %p172 = pneg %p98
      $region18: #{res_block.7} parent=11 // pred_check_branch
        %174 = sbr.rel (%p172) target = $region20
      $region19: #{res_block.7} parent=11 // pred_region
        %s175 = sadd.s32 %s21, 1
        %s176 = smul.u32 41, %s175
        %p177 = scmp.lt.s32.totalorder %s176, 122
        %s178 = scalar_select %p177, %s176, 122
        %s179 = smul.addr %s178, 8
        %s180 = scalar_lea.vmem %s2, %s179
        %s181 = sadd.s32 %s21, 1
        %s182 = smul.u32 41, %s181
      $region20: #{res_block.7} parent=11 // pred_fallthru
        _
    $region12: #{res_block.7} parent=5 // pred_fallthru
      _
    %p183 = scmp.lt.s32.totalorder %s11, 2
    // Predicated region
    $region21: #{res_block.7} parent=5 // pred_check
      %p184 = pneg %p183
    $region22: #{res_block.7} parent=5 // pred_check_branch
      %186 = sbr.rel (%p184) target = $region24
    $region23: #{res_block.7} parent=5 // pred_region
      // Predicated region
      $region25: #{res_block.7} parent=23 // pred_check
        %p187 = pneg %p43
      $region26: #{res_block.7} parent=23 // pred_check_branch
        %189 = sbr.rel (%p187) target = $region28
      $region27: #{res_block.7} parent=23 // pred_region
        %p190 = scmp.lt.s32.totalorder %s18, 1
        %s191 = scalar_select %p190, %s18, 1
        %s192 = smul.addr %s191, 123
        %s193 = smul.addr %s192, 4
        %s194 = scalar_lea.vmem %s0, %s193
      $region28: #{res_block.7} parent=23 // pred_fallthru
        _
    $region24: #{res_block.7} parent=5 // pred_fallthru
      _
    %p195 = scmp.le.s32.totalorder 1, %s11
    %p196 = scmp.lt.s32.totalorder %s11, 3
    %p197 = pnand %p195, %p196
    %p198 = pneg %p197
    // Predicated region
    $region29: #{res_block.7} parent=5 // pred_check
      _
    $region30: #{res_block.7} parent=5 // pred_check_branch
      %200 = sbr.rel (%p197) target = $region32
    $region31: #{res_block.7} parent=5 // pred_region
      %s201 = ssub.s32 %s11, 1
      %p202 = scmp.lt.s32.totalorder %s20, 1
      %s203 = scalar_select %p202, %s20, 1
      %s204 = smul.addr %s203, 123
      %s205 = smul.addr %s204, 4
      %s206 = scalar_lea.vmem %s0, %s205
      %p207 = pneg %p49
      %p208 = pneg %p46
      %p209 = pneg %p70
      %p210 = pneg %p67
      %s211 = sadd.s32 %s21, 1
      %s212 = smul.u32 41, %s211
      %p213 = scmp.lt.s32.totalorder %s212, 122
      %s214 = scalar_select %p213, %s212, 122
      %s215 = smul.addr %s214, 8
      %s216 = scalar_lea.vmem %s2, %s215
      %p217 = pneg %p98
      %p218 = pneg %p95
      %p219 = pneg %p126
      %p220 = pneg %p123
      %s221 = smul.u32 41, %s21
      %p222 = scmp.lt.s32.totalorder %s20, 1
      %s223 = scalar_select %p222, %s20, 1
      %p224 = scmp.lt.s32.totalorder %s221, 40
      %s225 = scalar_select %p224, %s221, 40
      %s226 = smul.addr %s223, 41
      %s227 = sadd.s32 %s225, %s226
      %s228 = smul.addr %s227, 4
      %s229 = scalar_lea.vmem %s3, %s228
      %p230 = pneg %p154
      %p231 = pneg %p151
      %p232 = scmp.lt.s32.totalorder %s20, 1
      %s233 = scalar_select %p232, %s20, 1
      %p234 = scmp.lt.s32.totalorder %s21, 0
      %s235 = scalar_select %p234, %s21, 0
      %s236 = sadd.s32 %s235, %s233
      %s237 = smul.addr %s236, 2
      %s238 = scalar_lea.vmem %s4, %s237
      %p239 = scmp.lt.s32.totalorder %s20, 1
      %s240 = scalar_select %p239, %s20, 1
      %s241 = smul.addr %s240, 123
      %s242 = smul.addr %s241, 4
      %s243 = scalar_lea.vmem %s0, %s242
      %s244 = sadd.s32 %s21, 1
      %s245 = smul.u32 41, %s244
      %p246 = scmp.lt.s32.totalorder %s245, 122
      %s247 = scalar_select %p246, %s245, 122
      %s248 = smul.addr %s247, 8
      %s249 = scalar_lea.vmem %s2, %s248
      %s250 = sadd.s32 %s21, 1
      %s251 = smul.u32 41, %s250
      %s252 = smul.u32 41, %s21
      %p253 = scmp.lt.s32.totalorder %s20, 1
      %s254 = scalar_select %p253, %s20, 1
      %p255 = scmp.lt.s32.totalorder %s252, 40
      %s256 = scalar_select %p255, %s252, 40
      %s257 = smul.addr %s254, 41
      %s258 = sadd.s32 %s256, %s257
      %s259 = smul.addr %s258, 4
      %s260 = scalar_lea.vmem %s3, %s259
      %s261 = smul.u32 41, %s21
      %p262 = scmp.lt.s32.totalorder %s20, 1
      %s263 = scalar_select %p262, %s20, 1
      %p264 = scmp.lt.s32.totalorder %s21, 0
      %s265 = scalar_select %p264, %s21, 0
      %s266 = sadd.s32 %s265, %s263
      %s267 = smul.addr %s266, 2
      %s268 = scalar_lea.vmem %s4, %s267
      %s269 = smul.u32 %s21, 328
      %s270 = sadd.s32 %s269, 304
      %s271 = sshra.s32 %s270, 3
      %s272 = sand.u32 %s270, 7
      %s273 = smul.addr %s271, 4
      %s274 = scalar_lea.vmem %s243, %s273
      %v275 = vld [vmem:[%s274] sm:$0xf]
      %v276 = vld [vmem:[%s274 + $0x4] sm:$0xf]
      %v277 = vld [vmem:[%s274 + $0x8] sm:$0xf]
      %v278 = vld [vmem:[%s274 + $0xc] sm:$0xf]
      %v279 = vld [vmem:[%s274 + $0x10] sm:$0xf]
      %v280 = vld [vmem:[%s274 + $0x14] sm:$0xf]
      %v281 = vld [vmem:[%s274 + $0x18] sm:$0xf]
      %v282 = vld [vmem:[%s274 + $0x1c] sm:$0xf]
      %v283 = vld [vmem:[%s274 + $0x20] sm:$0xf]
      %v284 = vld [vmem:[%s274 + $0x24] sm:$0xf]
      %v285 = vld [vmem:[%s274 + $0x28] sm:$0xf]
      %v286 = vld [vmem:[%s274 + $0x2c] sm:$0xf]
      %v287 = vld [vmem:[%s274 + $0x30] sm:$0xf]
      %v288 = vld [vmem:[%s274 + $0x34] sm:$0xf]
      %v289 = vld [vmem:[%s274 + $0x38] sm:$0xf]
      %v290 = vld [vmem:[%s274 + $0x3c] sm:$0xf]
      %v291 = vld [vmem:[%s274 + $0x40] sm:$0xf]
      %v292 = vld [vmem:[%s274 + $0x44] sm:$0xf]
      %v293 = vld [vmem:[%s274 + $0x48] sm:$0xf]
      %v294 = vld [vmem:[%s274 + $0x4c] sm:$0xf]
      %v295 = vld [vmem:[%s274 + $0x50] sm:$0xf]
      %v296 = vld [vmem:[%s274 + $0x54] sm:$0xf]
      %v297 = vld [vmem:[%s274 + $0x58] sm:$0xf]
      %v298 = vld [vmem:[%s274 + $0x5c] sm:$0xf]
      %v299 = vld [vmem:[%s274 + $0x60] sm:$0xf]
      %v300 = vld [vmem:[%s274 + $0x64] sm:$0xf]
      %v301 = vld [vmem:[%s274 + $0x68] sm:$0xf]
      %v302 = vld [vmem:[%s274 + $0x6c] sm:$0xf]
      %v303 = vld [vmem:[%s274 + $0x70] sm:$0xf]
      %v304 = vld [vmem:[%s274 + $0x74] sm:$0xf]
      %v305 = vld [vmem:[%s274 + $0x78] sm:$0xf]
      %v306 = vld [vmem:[%s274 + $0x7c] sm:$0xf]
      %v307 = vld [vmem:[%s274 + $0x80] sm:$0xf]
      %v308 = vld [vmem:[%s274 + $0x84] sm:$0xf]
      %v309 = vld [vmem:[%s274 + $0x88] sm:$0xf]
      %v310 = vld [vmem:[%s274 + $0x8c] sm:$0xf]
      %v311 = vld [vmem:[%s274 + $0x90] sm:$0xf]
      %v312 = vld [vmem:[%s274 + $0x94] sm:$0xf]
      %v313 = vld [vmem:[%s274 + $0x98] sm:$0xf]
      %v314 = vld [vmem:[%s274 + $0x9c] sm:$0xf]
      %v315 = vld [vmem:[%s274 + $0xa0] sm:$0xf]
      %v316 = vld [vmem:[%s274 + $0xa4] sm:$0xf]
      %v317 = vld [vmem:[%s1] sm:$0xf]
      %v318 = vld [vmem:[%s1 + $0x4] sm:$0xf]
      %v319 = vld [vmem:[%s1 + $0x8] sm:$0xf]
      %v320 = vld [vmem:[%s1 + $0xc] sm:$0xf]
      %v321 = vld [vmem:[%s1 + $0x10] sm:$0xf]
      %v322 = vld [vmem:[%s1 + $0x14] sm:$0xf]
      %v323 = vld [vmem:[%s1 + $0x18] sm:$0xf]
      %v324 = vld [vmem:[%s1 + $0x1c] sm:$0xf]
      %v325 = vld [vmem:[%s1 + $0x20] sm:$0xf]
      %v326 = vld [vmem:[%s1 + $0x24] sm:$0xf]
      %v327 = vld [vmem:[%s1 + $0x28] sm:$0xf]
      %v328 = vld [vmem:[%s1 + $0x2c] sm:$0xf]
      %v329 = vld [vmem:[%s1 + $0x30] sm:$0xf]
      %v330 = vld [vmem:[%s1 + $0x34] sm:$0xf]
      %v331 = vld [vmem:[%s1 + $0x38] sm:$0xf]
      %v332 = vld [vmem:[%s1 + $0x3c] sm:$0xf]
      %s333 = scalar_lea.vmem %s1, 64
      %v334 = vld [vmem:[%s333] sm:$0xf]
      %v335 = vld [vmem:[%s333 + $0x4] sm:$0xf]
      %v336 = vld [vmem:[%s333 + $0x8] sm:$0xf]
      %v337 = vld [vmem:[%s333 + $0xc] sm:$0xf]
      %v338 = vld [vmem:[%s333 + $0x10] sm:$0xf]
      %v339 = vld [vmem:[%s333 + $0x14] sm:$0xf]
      %v340 = vld [vmem:[%s333 + $0x18] sm:$0xf]
      %v341 = vld [vmem:[%s333 + $0x1c] sm:$0xf]
      %v342 = vld [vmem:[%s333 + $0x20] sm:$0xf]
      %v343 = vld [vmem:[%s333 + $0x24] sm:$0xf]
      %v344 = vld [vmem:[%s333 + $0x28] sm:$0xf]
      %v345 = vld [vmem:[%s333 + $0x2c] sm:$0xf]
      %v346 = vld [vmem:[%s333 + $0x30] sm:$0xf]
      %v347 = vld [vmem:[%s333 + $0x34] sm:$0xf]
      %v348 = vld [vmem:[%s333 + $0x38] sm:$0xf]
      %v349 = vld [vmem:[%s333 + $0x3c] sm:$0xf]
      %v392 = vunpack.c.l.b16 %v275
      %v393 = vunpack.c.l.b16 %v276
      %v394 = vunpack.c.l.b16 %v277
      %v395 = vunpack.c.l.b16 %v278
      %v396 = vunpack.c.l.b16 %v279
      %v397 = vunpack.c.l.b16 %v280
      %v398 = vunpack.c.l.b16 %v281
      %v399 = vunpack.c.l.b16 %v282
      %v400 = vunpack.c.l.b16 %v283
      %v401 = vunpack.c.l.b16 %v284
      %v402 = vunpack.c.l.b16 %v285
      %v403 = vunpack.c.l.b16 %v286
      %v404 = vunpack.c.l.b16 %v287
      %v405 = vunpack.c.l.b16 %v288
      %v406 = vunpack.c.l.b16 %v289
      %v407 = vunpack.c.l.b16 %v290
      %v408 = vunpack.c.l.b16 %v291
      %v409 = vunpack.c.l.b16 %v292
      %v410 = vunpack.c.l.b16 %v293
      %v411 = vunpack.c.l.b16 %v294
      %v412 = vunpack.c.l.b16 %v295
      %v413 = vunpack.c.l.b16 %v296
      %v414 = vunpack.c.l.b16 %v297
      %v415 = vunpack.c.l.b16 %v298
      %v416 = vunpack.c.l.b16 %v299
      %v417 = vunpack.c.l.b16 %v300
      %v418 = vunpack.c.l.b16 %v301
      %v419 = vunpack.c.l.b16 %v302
      %v420 = vunpack.c.l.b16 %v303
      %v421 = vunpack.c.l.b16 %v304
      %v422 = vunpack.c.l.b16 %v305
      %v423 = vunpack.c.l.b16 %v306
      %v424 = vunpack.c.l.b16 %v307
      %v425 = vunpack.c.l.b16 %v308
      %v426 = vunpack.c.l.b16 %v309
      %v427 = vunpack.c.l.b16 %v310
      %v428 = vunpack.c.l.b16 %v311
      %v429 = vunpack.c.l.b16 %v312
      %v430 = vunpack.c.l.b16 %v313
      %v431 = vunpack.c.l.b16 %v314
      %v432 = vunpack.c.l.b16 %v315
      %v433 = vunpack.c.l.b16 %v316
      %v434 = vpack.c.b16 %v393, %v392
      %v435 = vpack.c.b16 %v395, %v394
      %v436 = vpack.c.b16 %v397, %v396
      %v437 = vpack.c.b16 %v399, %v398
      %v438 = vpack.c.b16 %v401, %v400
      %v439 = vpack.c.b16 %v403, %v402
      %v440 = vpack.c.b16 %v405, %v404
      %v441 = vpack.c.b16 %v407, %v406
      %v442 = vpack.c.b16 %v409, %v408
      %v443 = vpack.c.b16 %v411, %v410
      %v444 = vpack.c.b16 %v413, %v412
      %v445 = vpack.c.b16 %v415, %v414
      %v446 = vpack.c.b16 %v417, %v416
      %v447 = vpack.c.b16 %v419, %v418
      %v448 = vpack.c.b16 %v421, %v420
      %v449 = vpack.c.b16 %v423, %v422
      %v450 = vpack.c.b16 %v425, %v424
      %v451 = vpack.c.b16 %v427, %v426
      %v452 = vpack.c.b16 %v429, %v428
      %v453 = vpack.c.b16 %v431, %v430
      %v454 = vpack.c.b16 %v433, %v432
      %vm455 = vcmask 1044480
      %v456 = vrot.slane %v434, 3
      %v457 = vrot.slane %v435, 3
      %v458 = vsel %vm455, %v456, %v457
      %v459 = vrot.slane %v436, 3
      %v460 = vsel %vm455, %v457, %v459
      %v461 = vrot.slane %v437, 3
      %v462 = vsel %vm455, %v459, %v461
      %v463 = vrot.slane %v438, 3
      %v464 = vsel %vm455, %v461, %v463
      %v465 = vrot.slane %v439, 3
      %v466 = vsel %vm455, %v463, %v465
      %v467 = vrot.slane %v440, 3
      %v468 = vsel %vm455, %v465, %v467
      %v469 = vrot.slane %v441, 3
      %v470 = vsel %vm455, %v467, %v469
      %v471 = vrot.slane %v442, 3
      %v472 = vsel %vm455, %v469, %v471
      %v473 = vrot.slane %v443, 3
      %v474 = vsel %vm455, %v471, %v473
      %v475 = vrot.slane %v444, 3
      %v476 = vsel %vm455, %v473, %v475
      %v477 = vrot.slane %v445, 3
      %v478 = vsel %vm455, %v475, %v477
      %v479 = vrot.slane %v446, 3
      %v480 = vsel %vm455, %v477, %v479
      %v481 = vrot.slane %v447, 3
      %v482 = vsel %vm455, %v479, %v481
      %v483 = vrot.slane %v448, 3
      %v484 = vsel %vm455, %v481, %v483
      %v485 = vrot.slane %v449, 3
      %v486 = vsel %vm455, %v483, %v485
      %v487 = vrot.slane %v450, 3
      %v488 = vsel %vm455, %v485, %v487
      %v489 = vrot.slane %v451, 3
      %v490 = vsel %vm455, %v487, %v489
      %v491 = vrot.slane %v452, 3
      %v492 = vsel %vm455, %v489, %v491
      %v493 = vrot.slane %v453, 3
      %v494 = vsel %vm455, %v491, %v493
      %v495 = vrot.slane %v454, 3
      %v496 = vsel %vm455, %v493, %v495
      %v534 = vunpack.c.l.b16 %v334
      %v535 = vunpack.c.l.b16 %v335
      %v536 = vunpack.c.l.b16 %v336
      %v537 = vunpack.c.l.b16 %v337
      %v538 = vunpack.c.l.b16 %v338
      %v539 = vunpack.c.l.b16 %v339
      %v540 = vunpack.c.l.b16 %v340
      %v541 = vunpack.c.l.b16 %v341
      %v542 = vunpack.c.l.b16 %v342
      %v543 = vunpack.c.l.b16 %v343
      %v544 = vunpack.c.l.b16 %v344
      %v545 = vunpack.c.l.b16 %v345
      %v546 = vunpack.c.l.b16 %v346
      %v547 = vunpack.c.l.b16 %v347
      %v548 = vunpack.c.l.b16 %v348
      %v549 = vunpack.c.l.b16 %v349
      %v550 = vpack.c.b16 %v535, %v534
      %v551 = vpack.c.b16 %v537, %v536
      %v552 = vpack.c.b16 %v539, %v538
      %v553 = vpack.c.b16 %v541, %v540
      %v554 = vpack.c.b16 %v543, %v542
      %v555 = vpack.c.b16 %v545, %v544
      %v556 = vpack.c.b16 %v547, %v546
      %v557 = vpack.c.b16 %v549, %v548
      %566 = vmatpush.bf16.msra.mxu0 %v557
      %567 = vmatpush.bf16.msra.mxu0 %v556
      %568 = vmatpush.bf16.msra.mxu0 %v555
      %569 = vmatpush.bf16.msra.mxu0 %v554
      %570 = vmatpush.bf16.msra.mxu0 %v553
      %571 = vmatpush.bf16.msra.mxu0 %v552
      %572 = vmatpush.bf16.msra.mxu0 %v551
      %573 = vmatpush.bf16.msra.mxu0 %v550
      %574 = vmatmul.bf16.gmra.mxu0 %v458
      %v575 = vpop.f32.mrf.mxu0
      %v576 = vadd.f32 0.0, %v575
      %v577 = vpop.f32.mrf.mxu0
      %v578 = vadd.f32 0.0, %v577
      %579 = vmatmul.bf16.gmra.mxu0 %v460
      %v580 = vpop.f32.mrf.mxu0
      %v581 = vadd.f32 0.0, %v580
      %v582 = vpop.f32.mrf.mxu0
      %v583 = vadd.f32 0.0, %v582
      %584 = vmatmul.bf16.gmra.mxu0 %v462
      %v585 = vpop.f32.mrf.mxu0
      %v586 = vadd.f32 0.0, %v585
      %v587 = vpop.f32.mrf.mxu0
      %v588 = vadd.f32 0.0, %v587
      %589 = vmatmul.bf16.gmra.mxu0 %v464
      %v590 = vpop.f32.mrf.mxu0
      %v591 = vadd.f32 0.0, %v590
      %v592 = vpop.f32.mrf.mxu0
      %v593 = vadd.f32 0.0, %v592
      %594 = vmatmul.bf16.gmra.mxu0 %v466
      %v595 = vpop.f32.mrf.mxu0
      %v596 = vadd.f32 0.0, %v595
      %v597 = vpop.f32.mrf.mxu0
      %v598 = vadd.f32 0.0, %v597
      %599 = vmatmul.bf16.gmra.mxu0 %v468
      %v600 = vpop.f32.mrf.mxu0
      %v601 = vadd.f32 0.0, %v600
      %v602 = vpop.f32.mrf.mxu0
      %v603 = vadd.f32 0.0, %v602
      %604 = vmatmul.bf16.gmra.mxu0 %v470
      %v605 = vpop.f32.mrf.mxu0
      %v606 = vadd.f32 0.0, %v605
      %v607 = vpop.f32.mrf.mxu0
      %v608 = vadd.f32 0.0, %v607
      %609 = vmatmul.bf16.gmra.mxu0 %v472
      %v610 = vpop.f32.mrf.mxu0
      %v611 = vadd.f32 0.0, %v610
      %v612 = vpop.f32.mrf.mxu0
      %v613 = vadd.f32 0.0, %v612
      %614 = vmatmul.bf16.gmra.mxu0 %v474
      %v615 = vpop.f32.mrf.mxu0
      %v616 = vadd.f32 0.0, %v615
      %v617 = vpop.f32.mrf.mxu0
      %v618 = vadd.f32 0.0, %v617
      %619 = vmatmul.bf16.gmra.mxu0 %v476
      %v620 = vpop.f32.mrf.mxu0
      %v621 = vadd.f32 0.0, %v620
      %v622 = vpop.f32.mrf.mxu0
      %v623 = vadd.f32 0.0, %v622
      %624 = vmatmul.bf16.gmra.mxu0 %v478
      %v625 = vpop.f32.mrf.mxu0
      %v626 = vadd.f32 0.0, %v625
      %v627 = vpop.f32.mrf.mxu0
      %v628 = vadd.f32 0.0, %v627
      %629 = vmatmul.bf16.gmra.mxu0 %v480
      %v630 = vpop.f32.mrf.mxu0
      %v631 = vadd.f32 0.0, %v630
      %v632 = vpop.f32.mrf.mxu0
      %v633 = vadd.f32 0.0, %v632
      %634 = vmatmul.bf16.gmra.mxu0 %v482
      %v635 = vpop.f32.mrf.mxu0
      %v636 = vadd.f32 0.0, %v635
      %v637 = vpop.f32.mrf.mxu0
      %v638 = vadd.f32 0.0, %v637
      %639 = vmatmul.bf16.gmra.mxu0 %v484
      %v640 = vpop.f32.mrf.mxu0
      %v641 = vadd.f32 0.0, %v640
      %v642 = vpop.f32.mrf.mxu0
      %v643 = vadd.f32 0.0, %v642
      %644 = vmatmul.bf16.gmra.mxu0 %v486
      %v645 = vpop.f32.mrf.mxu0
      %v646 = vadd.f32 0.0, %v645
      %v647 = vpop.f32.mrf.mxu0
      %v648 = vadd.f32 0.0, %v647
      %649 = vmatmul.bf16.gmra.mxu0 %v488
      %v650 = vpop.f32.mrf.mxu0
      %v651 = vadd.f32 0.0, %v650
      %v652 = vpop.f32.mrf.mxu0
      %v653 = vadd.f32 0.0, %v652
      %654 = vmatmul.bf16.gmra.mxu0 %v490
      %v655 = vpop.f32.mrf.mxu0
      %v656 = vadd.f32 0.0, %v655
      %v657 = vpop.f32.mrf.mxu0
      %v658 = vadd.f32 0.0, %v657
      %659 = vmatmul.bf16.gmra.mxu0 %v492
      %v660 = vpop.f32.mrf.mxu0
      %v661 = vadd.f32 0.0, %v660
      %v662 = vpop.f32.mrf.mxu0
      %v663 = vadd.f32 0.0, %v662
      %664 = vmatmul.bf16.gmra.mxu0 %v494
      %v665 = vpop.f32.mrf.mxu0
      %v666 = vadd.f32 0.0, %v665
      %v667 = vpop.f32.mrf.mxu0
      %v668 = vadd.f32 0.0, %v667
      %669 = vmatmul.bf16.gmra.mxu0 %v496
      %v670 = vpop.f32.mrf.mxu0
      %v671 = vadd.f32 0.0, %v670
      %v672 = vpop.f32.mrf.mxu0
      %v673 = vadd.f32 0.0, %v672
      %674 = vmatmul.bf16.gmra.mxu0 %v495
      %v675 = vpop.f32.mrf.mxu0
      %v676 = vadd.f32 0.0, %v675
      %v677 = vpop.f32.mrf.mxu0
      %678 = vdwg.mxu0
      %vm679 = vsmask.f32 5376
      %v681 = vshrl.u32 %v434, 16
      %v683 = vrot.slane %v681, 2
      %v684 = vshll.u32 %v434, 16
      %v686 = vrot.slane %v684, 3
      %v687 = vor.u32 %v683, %v686
      %v689 = vshrl.u32 %v435, 16
      %v691 = vrot.slane %v689, 2
      %v692 = vshll.u32 %v435, 16
      %v694 = vrot.slane %v692, 3
      %v695 = vor.u32 %v691, %v694
      %v696 = vsel %vm679, %v687, %v695
      %v698 = vshrl.u32 %v436, 16
      %v700 = vrot.slane %v698, 2
      %v701 = vshll.u32 %v436, 16
      %v703 = vrot.slane %v701, 3
      %v704 = vor.u32 %v700, %v703
      %v705 = vsel %vm679, %v695, %v704
      %v707 = vshrl.u32 %v437, 16
      %v709 = vrot.slane %v707, 2
      %v710 = vshll.u32 %v437, 16
      %v712 = vrot.slane %v710, 3
      %v713 = vor.u32 %v709, %v712
      %v714 = vsel %vm679, %v704, %v713
      %v716 = vshrl.u32 %v438, 16
      %v718 = vrot.slane %v716, 2
      %v719 = vshll.u32 %v438, 16
      %v721 = vrot.slane %v719, 3
      %v722 = vor.u32 %v718, %v721
      %v723 = vsel %vm679, %v713, %v722
      %v725 = vshrl.u32 %v439, 16
      %v727 = vrot.slane %v725, 2
      %v728 = vshll.u32 %v439, 16
      %v730 = vrot.slane %v728, 3
      %v731 = vor.u32 %v727, %v730
      %v732 = vsel %vm679, %v722, %v731
      %v734 = vshrl.u32 %v440, 16
      %v736 = vrot.slane %v734, 2
      %v737 = vshll.u32 %v440, 16
      %v739 = vrot.slane %v737, 3
      %v740 = vor.u32 %v736, %v739
      %v741 = vsel %vm679, %v731, %v740
      %v743 = vshrl.u32 %v441, 16
      %v745 = vrot.slane %v743, 2
      %v746 = vshll.u32 %v441, 16
      %v748 = vrot.slane %v746, 3
      %v749 = vor.u32 %v745, %v748
      %v750 = vsel %vm679, %v740, %v749
      %v752 = vshrl.u32 %v442, 16
      %v754 = vrot.slane %v752, 2
      %v755 = vshll.u32 %v442, 16
      %v757 = vrot.slane %v755, 3
      %v758 = vor.u32 %v754, %v757
      %v759 = vsel %vm679, %v749, %v758
      %v761 = vshrl.u32 %v443, 16
      %v763 = vrot.slane %v761, 2
      %v764 = vshll.u32 %v443, 16
      %v766 = vrot.slane %v764, 3
      %v767 = vor.u32 %v763, %v766
      %v768 = vsel %vm679, %v758, %v767
      %v770 = vshrl.u32 %v444, 16
      %v772 = vrot.slane %v770, 2
      %v773 = vshll.u32 %v444, 16
      %v775 = vrot.slane %v773, 3
      %v776 = vor.u32 %v772, %v775
      %v777 = vsel %vm679, %v767, %v776
      %v779 = vshrl.u32 %v445, 16
      %v781 = vrot.slane %v779, 2
      %v782 = vshll.u32 %v445, 16
      %v784 = vrot.slane %v782, 3
      %v785 = vor.u32 %v781, %v784
      %v786 = vsel %vm679, %v776, %v785
      %v788 = vshrl.u32 %v446, 16
      %v790 = vrot.slane %v788, 2
      %v791 = vshll.u32 %v446, 16
      %v793 = vrot.slane %v791, 3
      %v794 = vor.u32 %v790, %v793
      %v795 = vsel %vm679, %v785, %v794
      %v797 = vshrl.u32 %v447, 16
      %v799 = vrot.slane %v797, 2
      %v800 = vshll.u32 %v447, 16
      %v802 = vrot.slane %v800, 3
      %v803 = vor.u32 %v799, %v802
      %v804 = vsel %vm679, %v794, %v803
      %v806 = vshrl.u32 %v448, 16
      %v808 = vrot.slane %v806, 2
      %v809 = vshll.u32 %v448, 16
      %v811 = vrot.slane %v809, 3
      %v812 = vor.u32 %v808, %v811
      %v813 = vsel %vm679, %v803, %v812
      %v815 = vshrl.u32 %v449, 16
      %v817 = vrot.slane %v815, 2
      %v818 = vshll.u32 %v449, 16
      %v820 = vrot.slane %v818, 3
      %v821 = vor.u32 %v817, %v820
      %v822 = vsel %vm679, %v812, %v821
      %v824 = vshrl.u32 %v450, 16
      %v826 = vrot.slane %v824, 2
      %v827 = vshll.u32 %v450, 16
      %v829 = vrot.slane %v827, 3
      %v830 = vor.u32 %v826, %v829
      %v831 = vsel %vm679, %v821, %v830
      %v833 = vshrl.u32 %v451, 16
      %v835 = vrot.slane %v833, 2
      %v836 = vshll.u32 %v451, 16
      %v838 = vrot.slane %v836, 3
      %v839 = vor.u32 %v835, %v838
      %v840 = vsel %vm679, %v830, %v839
      %v842 = vshrl.u32 %v452, 16
      %v844 = vrot.slane %v842, 2
      %v845 = vshll.u32 %v452, 16
      %v847 = vrot.slane %v845, 3
      %v848 = vor.u32 %v844, %v847
      %v849 = vsel %vm679, %v839, %v848
      %v851 = vshrl.u32 %v453, 16
      %v853 = vrot.slane %v851, 2
      %v854 = vshll.u32 %v453, 16
      %v856 = vrot.slane %v854, 3
      %v857 = vor.u32 %v853, %v856
      %v858 = vsel %vm679, %v848, %v857
      %v860 = vshrl.u32 %v454, 16
      %v862 = vrot.slane %v860, 2
      %v863 = vshll.u32 %v454, 16
      %v865 = vrot.slane %v863, 3
      %v866 = vor.u32 %v862, %v865
      %v867 = vsel %vm679, %v857, %v866
      %v905 = vunpack.c.l.b16 %v317
      %v906 = vunpack.c.l.b16 %v318
      %v907 = vunpack.c.l.b16 %v319
      %v908 = vunpack.c.l.b16 %v320
      %v909 = vunpack.c.l.b16 %v321
      %v910 = vunpack.c.l.b16 %v322
      %v911 = vunpack.c.l.b16 %v323
      %v912 = vunpack.c.l.b16 %v324
      %v913 = vunpack.c.l.b16 %v325
      %v914 = vunpack.c.l.b16 %v326
      %v915 = vunpack.c.l.b16 %v327
      %v916 = vunpack.c.l.b16 %v328
      %v917 = vunpack.c.l.b16 %v329
      %v918 = vunpack.c.l.b16 %v330
      %v919 = vunpack.c.l.b16 %v331
      %v920 = vunpack.c.l.b16 %v332
      %v921 = vpack.c.b16 %v906, %v905
      %v922 = vpack.c.b16 %v908, %v907
      %v923 = vpack.c.b16 %v910, %v909
      %v924 = vpack.c.b16 %v912, %v911
      %v925 = vpack.c.b16 %v914, %v913
      %v926 = vpack.c.b16 %v916, %v915
      %v927 = vpack.c.b16 %v918, %v917
      %v928 = vpack.c.b16 %v920, %v919
      %937 = vmatpush.bf16.msra.mxu0 %v928
      %938 = vmatpush.bf16.msra.mxu0 %v927
      %939 = vmatpush.bf16.msra.mxu0 %v926
      %940 = vmatpush.bf16.msra.mxu0 %v925
      %941 = vmatpush.bf16.msra.mxu0 %v924
      %942 = vmatpush.bf16.msra.mxu0 %v923
      %943 = vmatpush.bf16.msra.mxu0 %v922
      %944 = vmatpush.bf16.msra.mxu0 %v921
      %945 = vmatmul.bf16.gmra.mxu0 %v696
      %v946 = vpop.f32.mrf.mxu0
      %v947 = vadd.f32 %v576, %v946
      %v948 = vpop.f32.mrf.mxu0
      %v949 = vadd.f32 %v578, %v948
      %950 = vmatmul.bf16.gmra.mxu0 %v705
      %v951 = vpop.f32.mrf.mxu0
      %v952 = vadd.f32 %v581, %v951
      %v953 = vpop.f32.mrf.mxu0
      %v954 = vadd.f32 %v583, %v953
      %955 = vmatmul.bf16.gmra.mxu0 %v714
      %v956 = vpop.f32.mrf.mxu0
      %v957 = vadd.f32 %v586, %v956
      %v958 = vpop.f32.mrf.mxu0
      %v959 = vadd.f32 %v588, %v958
      %960 = vmatmul.bf16.gmra.mxu0 %v723
      %v961 = vpop.f32.mrf.mxu0
      %v962 = vadd.f32 %v591, %v961
      %v963 = vpop.f32.mrf.mxu0
      %v964 = vadd.f32 %v593, %v963
      %965 = vmatmul.bf16.gmra.mxu0 %v732
      %v966 = vpop.f32.mrf.mxu0
      %v967 = vadd.f32 %v596, %v966
      %v968 = vpop.f32.mrf.mxu0
      %v969 = vadd.f32 %v598, %v968
      %970 = vmatmul.bf16.gmra.mxu0 %v741
      %v971 = vpop.f32.mrf.mxu0
      %v972 = vadd.f32 %v601, %v971
      %v973 = vpop.f32.mrf.mxu0
      %v974 = vadd.f32 %v603, %v973
      %975 = vmatmul.bf16.gmra.mxu0 %v750
      %v976 = vpop.f32.mrf.mxu0
      %v977 = vadd.f32 %v606, %v976
      %v978 = vpop.f32.mrf.mxu0
      %v979 = vadd.f32 %v608, %v978
      %980 = vmatmul.bf16.gmra.mxu0 %v759
      %v981 = vpop.f32.mrf.mxu0
      %v982 = vadd.f32 %v611, %v981
      %v983 = vpop.f32.mrf.mxu0
      %v984 = vadd.f32 %v613, %v983
      %985 = vmatmul.bf16.gmra.mxu0 %v768
      %v986 = vpop.f32.mrf.mxu0
      %v987 = vadd.f32 %v616, %v986
      %v988 = vpop.f32.mrf.mxu0
      %v989 = vadd.f32 %v618, %v988
      %990 = vmatmul.bf16.gmra.mxu0 %v777
      %v991 = vpop.f32.mrf.mxu0
      %v992 = vadd.f32 %v621, %v991
      %v993 = vpop.f32.mrf.mxu0
      %v994 = vadd.f32 %v623, %v993
      %995 = vmatmul.bf16.gmra.mxu0 %v786
      %v996 = vpop.f32.mrf.mxu0
      %v997 = vadd.f32 %v626, %v996
      %v998 = vpop.f32.mrf.mxu0
      %v999 = vadd.f32 %v628, %v998
      %1000 = vmatmul.bf16.gmra.mxu0 %v795
      %v1001 = vpop.f32.mrf.mxu0
      %v1002 = vadd.f32 %v631, %v1001
      %v1003 = vpop.f32.mrf.mxu0
      %v1004 = vadd.f32 %v633, %v1003
      %1005 = vmatmul.bf16.gmra.mxu0 %v804
      %v1006 = vpop.f32.mrf.mxu0
      %v1007 = vadd.f32 %v636, %v1006
      %v1008 = vpop.f32.mrf.mxu0
      %v1009 = vadd.f32 %v638, %v1008
      %1010 = vmatmul.bf16.gmra.mxu0 %v813
      %v1011 = vpop.f32.mrf.mxu0
      %v1012 = vadd.f32 %v641, %v1011
      %v1013 = vpop.f32.mrf.mxu0
      %v1014 = vadd.f32 %v643, %v1013
      %1015 = vmatmul.bf16.gmra.mxu0 %v822
      %v1016 = vpop.f32.mrf.mxu0
      %v1017 = vadd.f32 %v646, %v1016
      %v1018 = vpop.f32.mrf.mxu0
      %v1019 = vadd.f32 %v648, %v1018
      %1020 = vmatmul.bf16.gmra.mxu0 %v831
      %v1021 = vpop.f32.mrf.mxu0
      %v1022 = vadd.f32 %v651, %v1021
      %v1023 = vpop.f32.mrf.mxu0
      %v1024 = vadd.f32 %v653, %v1023
      %1025 = vmatmul.bf16.gmra.mxu0 %v840
      %v1026 = vpop.f32.mrf.mxu0
      %v1027 = vadd.f32 %v656, %v1026
      %v1028 = vpop.f32.mrf.mxu0
      %v1029 = vadd.f32 %v658, %v1028
      %1030 = vmatmul.bf16.gmra.mxu0 %v849
      %v1031 = vpop.f32.mrf.mxu0
      %v1032 = vadd.f32 %v661, %v1031
      %v1033 = vpop.f32.mrf.mxu0
      %v1034 = vadd.f32 %v663, %v1033
      %1035 = vmatmul.bf16.gmra.mxu0 %v858
      %v1036 = vpop.f32.mrf.mxu0
      %v1037 = vadd.f32 %v666, %v1036
      %v1038 = vpop.f32.mrf.mxu0
      %v1039 = vadd.f32 %v668, %v1038
      %1040 = vmatmul.bf16.gmra.mxu0 %v867
      %v1041 = vpop.f32.mrf.mxu0
      %v1042 = vadd.f32 %v671, %v1041
      %v1043 = vpop.f32.mrf.mxu0
      %v1044 = vadd.f32 %v673, %v1043
      %1045 = vmatmul.bf16.gmra.mxu0 %v866
      %v1046 = vpop.f32.mrf.mxu0
      %v1047 = vadd.f32 %v676, %v1046
      %v1048 = vpop.f32.mrf.mxu0
      %1049 = vdwg.mxu0
      %s1050 = scalar_lea.vmem %s1, 128
      %v1051 = vld [vmem:[%s1050] sm:$0xf]
      %v1052 = vld [vmem:[%s1050 + $0x4] sm:$0xf]
      %v1053 = vld [vmem:[%s1050 + $0x8] sm:$0xf]
      %v1054 = vld [vmem:[%s1050 + $0xc] sm:$0xf]
      %v1055 = vld [vmem:[%s1050 + $0x10] sm:$0xf]
      %v1056 = vld [vmem:[%s1050 + $0x14] sm:$0xf]
      %v1057 = vld [vmem:[%s1050 + $0x18] sm:$0xf]
      %v1058 = vld [vmem:[%s1050 + $0x1c] sm:$0xf]
      %v1059 = vld [vmem:[%s1050 + $0x20] sm:$0xf]
      %v1060 = vld [vmem:[%s1050 + $0x24] sm:$0xf]
      %v1061 = vld [vmem:[%s1050 + $0x28] sm:$0xf]
      %v1062 = vld [vmem:[%s1050 + $0x2c] sm:$0xf]
      %v1063 = vld [vmem:[%s1050 + $0x30] sm:$0xf]
      %v1064 = vld [vmem:[%s1050 + $0x34] sm:$0xf]
      %v1065 = vld [vmem:[%s1050 + $0x38] sm:$0xf]
      %v1066 = vld [vmem:[%s1050 + $0x3c] sm:$0xf]
      %vm1067 = vsmask.f32 4352
      %v1068 = vrot.slane %v681, 3
      %v1069 = vrot.slane %v684, 4
      %v1070 = vor.u32 %v1068, %v1069
      %v1071 = vrot.slane %v689, 3
      %v1072 = vrot.slane %v692, 4
      %v1073 = vor.u32 %v1071, %v1072
      %v1074 = vsel %vm1067, %v1070, %v1073
      %v1075 = vrot.slane %v698, 3
      %v1076 = vrot.slane %v701, 4
      %v1077 = vor.u32 %v1075, %v1076
      %v1078 = vsel %vm1067, %v1073, %v1077
      %v1079 = vrot.slane %v707, 3
      %v1080 = vrot.slane %v710, 4
      %v1081 = vor.u32 %v1079, %v1080
      %v1082 = vsel %vm1067, %v1077, %v1081
      %v1083 = vrot.slane %v716, 3
      %v1084 = vrot.slane %v719, 4
      %v1085 = vor.u32 %v1083, %v1084
      %v1086 = vsel %vm1067, %v1081, %v1085
      %v1087 = vrot.slane %v725, 3
      %v1088 = vrot.slane %v728, 4
      %v1089 = vor.u32 %v1087, %v1088
      %v1090 = vsel %vm1067, %v1085, %v1089
      %v1091 = vrot.slane %v734, 3
      %v1092 = vrot.slane %v737, 4
      %v1093 = vor.u32 %v1091, %v1092
      %v1094 = vsel %vm1067, %v1089, %v1093
      %v1095 = vrot.slane %v743, 3
      %v1096 = vrot.slane %v746, 4
      %v1097 = vor.u32 %v1095, %v1096
      %v1098 = vsel %vm1067, %v1093, %v1097
      %v1099 = vrot.slane %v752, 3
      %v1100 = vrot.slane %v755, 4
      %v1101 = vor.u32 %v1099, %v1100
      %v1102 = vsel %vm1067, %v1097, %v1101
      %v1103 = vrot.slane %v761, 3
      %v1104 = vrot.slane %v764, 4
      %v1105 = vor.u32 %v1103, %v1104
      %v1106 = vsel %vm1067, %v1101, %v1105
      %v1107 = vrot.slane %v770, 3
      %v1108 = vrot.slane %v773, 4
      %v1109 = vor.u32 %v1107, %v1108
      %v1110 = vsel %vm1067, %v1105, %v1109
      %v1111 = vrot.slane %v779, 3
      %v1112 = vrot.slane %v782, 4
      %v1113 = vor.u32 %v1111, %v1112
      %v1114 = vsel %vm1067, %v1109, %v1113
      %v1115 = vrot.slane %v788, 3
      %v1116 = vrot.slane %v791, 4
      %v1117 = vor.u32 %v1115, %v1116
      %v1118 = vsel %vm1067, %v1113, %v1117
      %v1119 = vrot.slane %v797, 3
      %v1120 = vrot.slane %v800, 4
      %v1121 = vor.u32 %v1119, %v1120
      %v1122 = vsel %vm1067, %v1117, %v1121
      %v1123 = vrot.slane %v806, 3
      %v1124 = vrot.slane %v809, 4
      %v1125 = vor.u32 %v1123, %v1124
      %v1126 = vsel %vm1067, %v1121, %v1125
      %v1127 = vrot.slane %v815, 3
      %v1128 = vrot.slane %v818, 4
      %v1129 = vor.u32 %v1127, %v1128
      %v1130 = vsel %vm1067, %v1125, %v1129
      %v1131 = vrot.slane %v824, 3
      %v1132 = vrot.slane %v827, 4
      %v1133 = vor.u32 %v1131, %v1132
      %v1134 = vsel %vm1067, %v1129, %v1133
      %v1135 = vrot.slane %v833, 3
      %v1136 = vrot.slane %v836, 4
      %v1137 = vor.u32 %v1135, %v1136
      %v1138 = vsel %vm1067, %v1133, %v1137
      %v1139 = vrot.slane %v842, 3
      %v1140 = vrot.slane %v845, 4
      %v1141 = vor.u32 %v1139, %v1140
      %v1142 = vsel %vm1067, %v1137, %v1141
      %v1143 = vrot.slane %v851, 3
      %v1144 = vrot.slane %v854, 4
      %v1145 = vor.u32 %v1143, %v1144
      %v1146 = vsel %vm1067, %v1141, %v1145
      %v1147 = vrot.slane %v860, 3
      %v1148 = vrot.slane %v863, 4
      %v1149 = vor.u32 %v1147, %v1148
      %v1150 = vsel %vm1067, %v1145, %v1149
      %v1188 = vunpack.c.l.b16 %v1051
      %v1189 = vunpack.c.l.b16 %v1052
      %v1190 = vunpack.c.l.b16 %v1053
      %v1191 = vunpack.c.l.b16 %v1054
      %v1192 = vunpack.c.l.b16 %v1055
      %v1193 = vunpack.c.l.b16 %v1056
      %v1194 = vunpack.c.l.b16 %v1057
      %v1195 = vunpack.c.l.b16 %v1058
      %v1196 = vunpack.c.l.b16 %v1059
      %v1197 = vunpack.c.l.b16 %v1060
      %v1198 = vunpack.c.l.b16 %v1061
      %v1199 = vunpack.c.l.b16 %v1062
      %v1200 = vunpack.c.l.b16 %v1063
      %v1201 = vunpack.c.l.b16 %v1064
      %v1202 = vunpack.c.l.b16 %v1065
      %v1203 = vunpack.c.l.b16 %v1066
      %v1204 = vpack.c.b16 %v1189, %v1188
      %v1205 = vpack.c.b16 %v1191, %v1190
      %v1206 = vpack.c.b16 %v1193, %v1192
      %v1207 = vpack.c.b16 %v1195, %v1194
      %v1208 = vpack.c.b16 %v1197, %v1196
      %v1209 = vpack.c.b16 %v1199, %v1198
      %v1210 = vpack.c.b16 %v1201, %v1200
      %v1211 = vpack.c.b16 %v1203, %v1202
      %1220 = vmatpush.bf16.msra.mxu0 %v1211
      %1221 = vmatpush.bf16.msra.mxu0 %v1210
      %1222 = vmatpush.bf16.msra.mxu0 %v1209
      %1223 = vmatpush.bf16.msra.mxu0 %v1208
      %1224 = vmatpush.bf16.msra.mxu0 %v1207
      %1225 = vmatpush.bf16.msra.mxu0 %v1206
      %1226 = vmatpush.bf16.msra.mxu0 %v1205
      %1227 = vmatpush.bf16.msra.mxu0 %v1204
      %1228 = vmatmul.bf16.gmra.mxu0 %v1074
      %v1229 = vpop.f32.mrf.mxu0
      %v1230 = vadd.f32 0.0, %v1229
      %v1231 = vpop.f32.mrf.mxu0
      %v1232 = vadd.f32 0.0, %v1231
      %1233 = vmatmul.bf16.gmra.mxu0 %v1078
      %v1234 = vpop.f32.mrf.mxu0
      %v1235 = vadd.f32 0.0, %v1234
      %v1236 = vpop.f32.mrf.mxu0
      %v1237 = vadd.f32 0.0, %v1236
      %1238 = vmatmul.bf16.gmra.mxu0 %v1082
      %v1239 = vpop.f32.mrf.mxu0
      %v1240 = vadd.f32 0.0, %v1239
      %v1241 = vpop.f32.mrf.mxu0
      %v1242 = vadd.f32 0.0, %v1241
      %1243 = vmatmul.bf16.gmra.mxu0 %v1086
      %v1244 = vpop.f32.mrf.mxu0
      %v1245 = vadd.f32 0.0, %v1244
      %v1246 = vpop.f32.mrf.mxu0
      %v1247 = vadd.f32 0.0, %v1246
      %1248 = vmatmul.bf16.gmra.mxu0 %v1090
      %v1249 = vpop.f32.mrf.mxu0
      %v1250 = vadd.f32 0.0, %v1249
      %v1251 = vpop.f32.mrf.mxu0
      %v1252 = vadd.f32 0.0, %v1251
      %1253 = vmatmul.bf16.gmra.mxu0 %v1094
      %v1254 = vpop.f32.mrf.mxu0
      %v1255 = vadd.f32 0.0, %v1254
      %v1256 = vpop.f32.mrf.mxu0
      %v1257 = vadd.f32 0.0, %v1256
      %1258 = vmatmul.bf16.gmra.mxu0 %v1098
      %v1259 = vpop.f32.mrf.mxu0
      %v1260 = vadd.f32 0.0, %v1259
      %v1261 = vpop.f32.mrf.mxu0
      %v1262 = vadd.f32 0.0, %v1261
      %1263 = vmatmul.bf16.gmra.mxu0 %v1102
      %v1264 = vpop.f32.mrf.mxu0
      %v1265 = vadd.f32 0.0, %v1264
      %v1266 = vpop.f32.mrf.mxu0
      %v1267 = vadd.f32 0.0, %v1266
      %1268 = vmatmul.bf16.gmra.mxu0 %v1106
      %v1269 = vpop.f32.mrf.mxu0
      %v1270 = vadd.f32 0.0, %v1269
      %v1271 = vpop.f32.mrf.mxu0
      %v1272 = vadd.f32 0.0, %v1271
      %1273 = vmatmul.bf16.gmra.mxu0 %v1110
      %v1274 = vpop.f32.mrf.mxu0
      %v1275 = vadd.f32 0.0, %v1274
      %v1276 = vpop.f32.mrf.mxu0
      %v1277 = vadd.f32 0.0, %v1276
      %1278 = vmatmul.bf16.gmra.mxu0 %v1114
      %v1279 = vpop.f32.mrf.mxu0
      %v1280 = vadd.f32 0.0, %v1279
      %v1281 = vpop.f32.mrf.mxu0
      %v1282 = vadd.f32 0.0, %v1281
      %1283 = vmatmul.bf16.gmra.mxu0 %v1118
      %v1284 = vpop.f32.mrf.mxu0
      %v1285 = vadd.f32 0.0, %v1284
      %v1286 = vpop.f32.mrf.mxu0
      %v1287 = vadd.f32 0.0, %v1286
      %1288 = vmatmul.bf16.gmra.mxu0 %v1122
      %v1289 = vpop.f32.mrf.mxu0
      %v1290 = vadd.f32 0.0, %v1289
      %v1291 = vpop.f32.mrf.mxu0
      %v1292 = vadd.f32 0.0, %v1291
      %1293 = vmatmul.bf16.gmra.mxu0 %v1126
      %v1294 = vpop.f32.mrf.mxu0
      %v1295 = vadd.f32 0.0, %v1294
      %v1296 = vpop.f32.mrf.mxu0
      %v1297 = vadd.f32 0.0, %v1296
      %1298 = vmatmul.bf16.gmra.mxu0 %v1130
      %v1299 = vpop.f32.mrf.mxu0
      %v1300 = vadd.f32 0.0, %v1299
      %v1301 = vpop.f32.mrf.mxu0
      %v1302 = vadd.f32 0.0, %v1301
      %1303 = vmatmul.bf16.gmra.mxu0 %v1134
      %v1304 = vpop.f32.mrf.mxu0
      %v1305 = vadd.f32 0.0, %v1304
      %v1306 = vpop.f32.mrf.mxu0
      %v1307 = vadd.f32 0.0, %v1306
      %1308 = vmatmul.bf16.gmra.mxu0 %v1138
      %v1309 = vpop.f32.mrf.mxu0
      %v1310 = vadd.f32 0.0, %v1309
      %v1311 = vpop.f32.mrf.mxu0
      %v1312 = vadd.f32 0.0, %v1311
      %1313 = vmatmul.bf16.gmra.mxu0 %v1142
      %v1314 = vpop.f32.mrf.mxu0
      %v1315 = vadd.f32 0.0, %v1314
      %v1316 = vpop.f32.mrf.mxu0
      %v1317 = vadd.f32 0.0, %v1316
      %1318 = vmatmul.bf16.gmra.mxu0 %v1146
      %v1319 = vpop.f32.mrf.mxu0
      %v1320 = vadd.f32 0.0, %v1319
      %v1321 = vpop.f32.mrf.mxu0
      %v1322 = vadd.f32 0.0, %v1321
      %1323 = vmatmul.bf16.gmra.mxu0 %v1150
      %v1324 = vpop.f32.mrf.mxu0
      %v1325 = vadd.f32 0.0, %v1324
      %v1326 = vpop.f32.mrf.mxu0
      %v1327 = vadd.f32 0.0, %v1326
      %1328 = vmatmul.bf16.gmra.mxu0 %v1149
      %v1329 = vpop.f32.mrf.mxu0
      %v1330 = vadd.f32 0.0, %v1329
      %v1331 = vpop.f32.mrf.mxu0
      %1332 = vdwg.mxu0
      %v1333 = vadd.f32 %v947, %v1230
      %v1334 = vadd.f32 %v949, %v1232
      %v1335 = vadd.f32 %v952, %v1235
      %v1336 = vadd.f32 %v954, %v1237
      %v1337 = vadd.f32 %v957, %v1240
      %v1338 = vadd.f32 %v959, %v1242
      %v1339 = vadd.f32 %v962, %v1245
      %v1340 = vadd.f32 %v964, %v1247
      %v1341 = vadd.f32 %v967, %v1250
      %v1342 = vadd.f32 %v969, %v1252
      %v1343 = vadd.f32 %v972, %v1255
      %v1344 = vadd.f32 %v974, %v1257
      %v1345 = vadd.f32 %v977, %v1260
      %v1346 = vadd.f32 %v979, %v1262
      %v1347 = vadd.f32 %v982, %v1265
      %v1348 = vadd.f32 %v984, %v1267
      %v1349 = vadd.f32 %v987, %v1270
      %v1350 = vadd.f32 %v989, %v1272
      %v1351 = vadd.f32 %v992, %v1275
      %v1352 = vadd.f32 %v994, %v1277
      %v1353 = vadd.f32 %v997, %v1280
      %v1354 = vadd.f32 %v999, %v1282
      %v1355 = vadd.f32 %v1002, %v1285
      %v1356 = vadd.f32 %v1004, %v1287
      %v1357 = vadd.f32 %v1007, %v1290
      %v1358 = vadd.f32 %v1009, %v1292
      %v1359 = vadd.f32 %v1012, %v1295
      %v1360 = vadd.f32 %v1014, %v1297
      %v1361 = vadd.f32 %v1017, %v1300
      %v1362 = vadd.f32 %v1019, %v1302
      %v1363 = vadd.f32 %v1022, %v1305
      %v1364 = vadd.f32 %v1024, %v1307
      %v1365 = vadd.f32 %v1027, %v1310
      %v1366 = vadd.f32 %v1029, %v1312
      %v1367 = vadd.f32 %v1032, %v1315
      %v1368 = vadd.f32 %v1034, %v1317
      %v1369 = vadd.f32 %v1037, %v1320
      %v1370 = vadd.f32 %v1039, %v1322
      %v1371 = vadd.f32 %v1042, %v1325
      %v1372 = vadd.f32 %v1044, %v1327
      %v1373 = vadd.f32 %v1047, %v1330
      %s1374 = sadd.s32 %s269, 320
      %s1375 = sshra.s32 %s1374, 3
      %s1376 = sand.u32 %s1374, 7
      %s1377 = smul.addr %s1375, 4
      %s1378 = scalar_lea.vmem %s243, %s1377
      %v1379 = vld [vmem:[%s1378] sm:$0xf]
      %v1380 = vld [vmem:[%s1378 + $0x4] sm:$0xf]
      %v1381 = vld [vmem:[%s1378 + $0x8] sm:$0xf]
      %v1382 = vld [vmem:[%s1378 + $0xc] sm:$0xf]
      %v1383 = vld [vmem:[%s1378 + $0x10] sm:$0xf]
      %v1384 = vld [vmem:[%s1378 + $0x14] sm:$0xf]
      %v1385 = vld [vmem:[%s1378 + $0x18] sm:$0xf]
      %v1386 = vld [vmem:[%s1378 + $0x1c] sm:$0xf]
      %v1387 = vld [vmem:[%s1378 + $0x20] sm:$0xf]
      %v1388 = vld [vmem:[%s1378 + $0x24] sm:$0xf]
      %v1389 = vld [vmem:[%s1378 + $0x28] sm:$0xf]
      %v1390 = vld [vmem:[%s1378 + $0x2c] sm:$0xf]
      %v1391 = vld [vmem:[%s1378 + $0x30] sm:$0xf]
      %v1392 = vld [vmem:[%s1378 + $0x34] sm:$0xf]
      %v1393 = vld [vmem:[%s1378 + $0x38] sm:$0xf]
      %v1394 = vld [vmem:[%s1378 + $0x3c] sm:$0xf]
      %v1395 = vld [vmem:[%s1378 + $0x40] sm:$0xf]
      %v1396 = vld [vmem:[%s1378 + $0x44] sm:$0xf]
      %v1397 = vld [vmem:[%s1378 + $0x48] sm:$0xf]
      %v1398 = vld [vmem:[%s1378 + $0x4c] sm:$0xf]
      %v1399 = vld [vmem:[%s1378 + $0x50] sm:$0xf]
      %v1400 = vld [vmem:[%s1378 + $0x54] sm:$0xf]
      %v1401 = vld [vmem:[%s1378 + $0x58] sm:$0xf]
      %v1402 = vld [vmem:[%s1378 + $0x5c] sm:$0xf]
      %v1403 = vld [vmem:[%s1378 + $0x60] sm:$0xf]
      %v1404 = vld [vmem:[%s1378 + $0x64] sm:$0xf]
      %v1405 = vld [vmem:[%s1378 + $0x68] sm:$0xf]
      %v1406 = vld [vmem:[%s1378 + $0x6c] sm:$0xf]
      %v1407 = vld [vmem:[%s1378 + $0x70] sm:$0xf]
      %v1408 = vld [vmem:[%s1378 + $0x74] sm:$0xf]
      %v1409 = vld [vmem:[%s1378 + $0x78] sm:$0xf]
      %v1410 = vld [vmem:[%s1378 + $0x7c] sm:$0xf]
      %v1411 = vld [vmem:[%s1378 + $0x80] sm:$0xf]
      %v1412 = vld [vmem:[%s1378 + $0x84] sm:$0xf]
      %v1413 = vld [vmem:[%s1378 + $0x88] sm:$0xf]
      %v1414 = vld [vmem:[%s1378 + $0x8c] sm:$0xf]
      %v1415 = vld [vmem:[%s1378 + $0x90] sm:$0xf]
      %v1416 = vld [vmem:[%s1378 + $0x94] sm:$0xf]
      %v1417 = vld [vmem:[%s1378 + $0x98] sm:$0xf]
      %v1418 = vld [vmem:[%s1378 + $0x9c] sm:$0xf]
      %v1419 = vld [vmem:[%s1378 + $0xa0] sm:$0xf]
      %v1420 = vld [vmem:[%s1378 + $0xa4] sm:$0xf]
      %s1421 = scalar_lea.vmem %s1, 192
      %v1422 = vld [vmem:[%s1421] sm:$0xf]
      %v1423 = vld [vmem:[%s1421 + $0x4] sm:$0xf]
      %v1424 = vld [vmem:[%s1421 + $0x8] sm:$0xf]
      %v1425 = vld [vmem:[%s1421 + $0xc] sm:$0xf]
      %v1426 = vld [vmem:[%s1421 + $0x10] sm:$0xf]
      %v1427 = vld [vmem:[%s1421 + $0x14] sm:$0xf]
      %v1428 = vld [vmem:[%s1421 + $0x18] sm:$0xf]
      %v1429 = vld [vmem:[%s1421 + $0x1c] sm:$0xf]
      %v1430 = vld [vmem:[%s1421 + $0x20] sm:$0xf]
      %v1431 = vld [vmem:[%s1421 + $0x24] sm:$0xf]
      %v1432 = vld [vmem:[%s1421 + $0x28] sm:$0xf]
      %v1433 = vld [vmem:[%s1421 + $0x2c] sm:$0xf]
      %v1434 = vld [vmem:[%s1421 + $0x30] sm:$0xf]
      %v1435 = vld [vmem:[%s1421 + $0x34] sm:$0xf]
      %v1436 = vld [vmem:[%s1421 + $0x38] sm:$0xf]
      %v1437 = vld [vmem:[%s1421 + $0x3c] sm:$0xf]
      %v1480 = vunpack.c.l.b16 %v1379
      %v1481 = vunpack.c.l.b16 %v1380
      %v1482 = vunpack.c.l.b16 %v1381
      %v1483 = vunpack.c.l.b16 %v1382
      %v1484 = vunpack.c.l.b16 %v1383
      %v1485 = vunpack.c.l.b16 %v1384
      %v1486 = vunpack.c.l.b16 %v1385
      %v1487 = vunpack.c.l.b16 %v1386
      %v1488 = vunpack.c.l.b16 %v1387
      %v1489 = vunpack.c.l.b16 %v1388
      %v1490 = vunpack.c.l.b16 %v1389
      %v1491 = vunpack.c.l.b16 %v1390
      %v1492 = vunpack.c.l.b16 %v1391
      %v1493 = vunpack.c.l.b16 %v1392
      %v1494 = vunpack.c.l.b16 %v1393
      %v1495 = vunpack.c.l.b16 %v1394
      %v1496 = vunpack.c.l.b16 %v1395
      %v1497 = vunpack.c.l.b16 %v1396
      %v1498 = vunpack.c.l.b16 %v1397
      %v1499 = vunpack.c.l.b16 %v1398
      %v1500 = vunpack.c.l.b16 %v1399
      %v1501 = vunpack.c.l.b16 %v1400
      %v1502 = vunpack.c.l.b16 %v1401
      %v1503 = vunpack.c.l.b16 %v1402
      %v1504 = vunpack.c.l.b16 %v1403
      %v1505 = vunpack.c.l.b16 %v1404
      %v1506 = vunpack.c.l.b16 %v1405
      %v1507 = vunpack.c.l.b16 %v1406
      %v1508 = vunpack.c.l.b16 %v1407
      %v1509 = vunpack.c.l.b16 %v1408
      %v1510 = vunpack.c.l.b16 %v1409
      %v1511 = vunpack.c.l.b16 %v1410
      %v1512 = vunpack.c.l.b16 %v1411
      %v1513 = vunpack.c.l.b16 %v1412
      %v1514 = vunpack.c.l.b16 %v1413
      %v1515 = vunpack.c.l.b16 %v1414
      %v1516 = vunpack.c.l.b16 %v1415
      %v1517 = vunpack.c.l.b16 %v1416
      %v1518 = vunpack.c.l.b16 %v1417
      %v1519 = vunpack.c.l.b16 %v1418
      %v1520 = vunpack.c.l.b16 %v1419
      %v1521 = vunpack.c.l.b16 %v1420
      %v1522 = vpack.c.b16 %v1481, %v1480
      %v1523 = vpack.c.b16 %v1483, %v1482
      %v1524 = vpack.c.b16 %v1485, %v1484
      %v1525 = vpack.c.b16 %v1487, %v1486
      %v1526 = vpack.c.b16 %v1489, %v1488
      %v1527 = vpack.c.b16 %v1491, %v1490
      %v1528 = vpack.c.b16 %v1493, %v1492
      %v1529 = vpack.c.b16 %v1495, %v1494
      %v1530 = vpack.c.b16 %v1497, %v1496
      %v1531 = vpack.c.b16 %v1499, %v1498
      %v1532 = vpack.c.b16 %v1501, %v1500
      %v1533 = vpack.c.b16 %v1503, %v1502
      %v1534 = vpack.c.b16 %v1505, %v1504
      %v1535 = vpack.c.b16 %v1507, %v1506
      %v1536 = vpack.c.b16 %v1509, %v1508
      %v1537 = vpack.c.b16 %v1511, %v1510
      %v1538 = vpack.c.b16 %v1513, %v1512
      %v1539 = vpack.c.b16 %v1515, %v1514
      %v1540 = vpack.c.b16 %v1517, %v1516
      %v1541 = vpack.c.b16 %v1519, %v1518
      %v1542 = vpack.c.b16 %v1521, %v1520
      %v1544 = vshrl.u32 %v1522, 16
      %v1546 = vrot.slane %v1544, 3
      %v1547 = vshll.u32 %v1522, 16
      %v1549 = vrot.slane %v1547, 4
      %v1550 = vor.u32 %v1546, %v1549
      %v1552 = vshrl.u32 %v1523, 16
      %v1554 = vrot.slane %v1552, 3
      %v1555 = vshll.u32 %v1523, 16
      %v1557 = vrot.slane %v1555, 4
      %v1558 = vor.u32 %v1554, %v1557
      %v1559 = vsel %vm1067, %v1550, %v1558
      %v1561 = vshrl.u32 %v1524, 16
      %v1563 = vrot.slane %v1561, 3
      %v1564 = vshll.u32 %v1524, 16
      %v1566 = vrot.slane %v1564, 4
      %v1567 = vor.u32 %v1563, %v1566
      %v1568 = vsel %vm1067, %v1558, %v1567
      %v1570 = vshrl.u32 %v1525, 16
      %v1572 = vrot.slane %v1570, 3
      %v1573 = vshll.u32 %v1525, 16
      %v1575 = vrot.slane %v1573, 4
      %v1576 = vor.u32 %v1572, %v1575
      %v1577 = vsel %vm1067, %v1567, %v1576
      %v1579 = vshrl.u32 %v1526, 16
      %v1581 = vrot.slane %v1579, 3
      %v1582 = vshll.u32 %v1526, 16
      %v1584 = vrot.slane %v1582, 4
      %v1585 = vor.u32 %v1581, %v1584
      %v1586 = vsel %vm1067, %v1576, %v1585
      %v1588 = vshrl.u32 %v1527, 16
      %v1590 = vrot.slane %v1588, 3
      %v1591 = vshll.u32 %v1527, 16
      %v1593 = vrot.slane %v1591, 4
      %v1594 = vor.u32 %v1590, %v1593
      %v1595 = vsel %vm1067, %v1585, %v1594
      %v1597 = vshrl.u32 %v1528, 16
      %v1599 = vrot.slane %v1597, 3
      %v1600 = vshll.u32 %v1528, 16
      %v1602 = vrot.slane %v1600, 4
      %v1603 = vor.u32 %v1599, %v1602
      %v1604 = vsel %vm1067, %v1594, %v1603
      %v1606 = vshrl.u32 %v1529, 16
      %v1608 = vrot.slane %v1606, 3
      %v1609 = vshll.u32 %v1529, 16
      %v1611 = vrot.slane %v1609, 4
      %v1612 = vor.u32 %v1608, %v1611
      %v1613 = vsel %vm1067, %v1603, %v1612
      %v1615 = vshrl.u32 %v1530, 16
      %v1617 = vrot.slane %v1615, 3
      %v1618 = vshll.u32 %v1530, 16
      %v1620 = vrot.slane %v1618, 4
      %v1621 = vor.u32 %v1617, %v1620
      %v1622 = vsel %vm1067, %v1612, %v1621
      %v1624 = vshrl.u32 %v1531, 16
      %v1626 = vrot.slane %v1624, 3
      %v1627 = vshll.u32 %v1531, 16
      %v1629 = vrot.slane %v1627, 4
      %v1630 = vor.u32 %v1626, %v1629
      %v1631 = vsel %vm1067, %v1621, %v1630
      %v1633 = vshrl.u32 %v1532, 16
      %v1635 = vrot.slane %v1633, 3
      %v1636 = vshll.u32 %v1532, 16
      %v1638 = vrot.slane %v1636, 4
      %v1639 = vor.u32 %v1635, %v1638
      %v1640 = vsel %vm1067, %v1630, %v1639
      %v1642 = vshrl.u32 %v1533, 16
      %v1644 = vrot.slane %v1642, 3
      %v1645 = vshll.u32 %v1533, 16
      %v1647 = vrot.slane %v1645, 4
      %v1648 = vor.u32 %v1644, %v1647
      %v1649 = vsel %vm1067, %v1639, %v1648
      %v1651 = vshrl.u32 %v1534, 16
      %v1653 = vrot.slane %v1651, 3
      %v1654 = vshll.u32 %v1534, 16
      %v1656 = vrot.slane %v1654, 4
      %v1657 = vor.u32 %v1653, %v1656
      %v1658 = vsel %vm1067, %v1648, %v1657
      %v1660 = vshrl.u32 %v1535, 16
      %v1662 = vrot.slane %v1660, 3
      %v1663 = vshll.u32 %v1535, 16
      %v1665 = vrot.slane %v1663, 4
      %v1666 = vor.u32 %v1662, %v1665
      %v1667 = vsel %vm1067, %v1657, %v1666
      %v1669 = vshrl.u32 %v1536, 16
      %v1671 = vrot.slane %v1669, 3
      %v1672 = vshll.u32 %v1536, 16
      %v1674 = vrot.slane %v1672, 4
      %v1675 = vor.u32 %v1671, %v1674
      %v1676 = vsel %vm1067, %v1666, %v1675
      %v1678 = vshrl.u32 %v1537, 16
      %v1680 = vrot.slane %v1678, 3
      %v1681 = vshll.u32 %v1537, 16
      %v1683 = vrot.slane %v1681, 4
      %v1684 = vor.u32 %v1680, %v1683
      %v1685 = vsel %vm1067, %v1675, %v1684
      %v1687 = vshrl.u32 %v1538, 16
      %v1689 = vrot.slane %v1687, 3
      %v1690 = vshll.u32 %v1538, 16
      %v1692 = vrot.slane %v1690, 4
      %v1693 = vor.u32 %v1689, %v1692
      %v1694 = vsel %vm1067, %v1684, %v1693
      %v1696 = vshrl.u32 %v1539, 16
      %v1698 = vrot.slane %v1696, 3
      %v1699 = vshll.u32 %v1539, 16
      %v1701 = vrot.slane %v1699, 4
      %v1702 = vor.u32 %v1698, %v1701
      %v1703 = vsel %vm1067, %v1693, %v1702
      %v1705 = vshrl.u32 %v1540, 16
      %v1707 = vrot.slane %v1705, 3
      %v1708 = vshll.u32 %v1540, 16
      %v1710 = vrot.slane %v1708, 4
      %v1711 = vor.u32 %v1707, %v1710
      %v1712 = vsel %vm1067, %v1702, %v1711
      %v1714 = vshrl.u32 %v1541, 16
      %v1716 = vrot.slane %v1714, 3
      %v1717 = vshll.u32 %v1541, 16
      %v1719 = vrot.slane %v1717, 4
      %v1720 = vor.u32 %v1716, %v1719
      %v1721 = vsel %vm1067, %v1711, %v1720
      %v1723 = vshrl.u32 %v1542, 16
      %v1725 = vrot.slane %v1723, 3
      %v1726 = vshll.u32 %v1542, 16
      %v1728 = vrot.slane %v1726, 4
      %v1729 = vor.u32 %v1725, %v1728
      %v1730 = vsel %vm1067, %v1720, %v1729
      %v1768 = vunpack.c.l.b16 %v1422
      %v1769 = vunpack.c.l.b16 %v1423
      %v1770 = vunpack.c.l.b16 %v1424
      %v1771 = vunpack.c.l.b16 %v1425
      %v1772 = vunpack.c.l.b16 %v1426
      %v1773 = vunpack.c.l.b16 %v1427
      %v1774 = vunpack.c.l.b16 %v1428
      %v1775 = vunpack.c.l.b16 %v1429
      %v1776 = vunpack.c.l.b16 %v1430
      %v1777 = vunpack.c.l.b16 %v1431
      %v1778 = vunpack.c.l.b16 %v1432
      %v1779 = vunpack.c.l.b16 %v1433
      %v1780 = vunpack.c.l.b16 %v1434
      %v1781 = vunpack.c.l.b16 %v1435
      %v1782 = vunpack.c.l.b16 %v1436
      %v1783 = vunpack.c.l.b16 %v1437
      %v1784 = vpack.c.b16 %v1769, %v1768
      %v1785 = vpack.c.b16 %v1771, %v1770
      %v1786 = vpack.c.b16 %v1773, %v1772
      %v1787 = vpack.c.b16 %v1775, %v1774
      %v1788 = vpack.c.b16 %v1777, %v1776
      %v1789 = vpack.c.b16 %v1779, %v1778
      %v1790 = vpack.c.b16 %v1781, %v1780
      %v1791 = vpack.c.b16 %v1783, %v1782
      %1800 = vmatpush.bf16.msra.mxu0 %v1791
      %1801 = vmatpush.bf16.msra.mxu0 %v1790
      %1802 = vmatpush.bf16.msra.mxu0 %v1789
      %1803 = vmatpush.bf16.msra.mxu0 %v1788
      %1804 = vmatpush.bf16.msra.mxu0 %v1787
      %1805 = vmatpush.bf16.msra.mxu0 %v1786
      %1806 = vmatpush.bf16.msra.mxu0 %v1785
      %1807 = vmatpush.bf16.msra.mxu0 %v1784
      %1808 = vmatmul.bf16.gmra.mxu0 %v1559
      %v1809 = vpop.f32.mrf.mxu0
      %v1810 = vadd.f32 0.0, %v1809
      %v1811 = vpop.f32.mrf.mxu0
      %v1812 = vadd.f32 0.0, %v1811
      %1813 = vmatmul.bf16.gmra.mxu0 %v1568
      %v1814 = vpop.f32.mrf.mxu0
      %v1815 = vadd.f32 0.0, %v1814
      %v1816 = vpop.f32.mrf.mxu0
      %v1817 = vadd.f32 0.0, %v1816
      %1818 = vmatmul.bf16.gmra.mxu0 %v1577
      %v1819 = vpop.f32.mrf.mxu0
      %v1820 = vadd.f32 0.0, %v1819
      %v1821 = vpop.f32.mrf.mxu0
      %v1822 = vadd.f32 0.0, %v1821
      %1823 = vmatmul.bf16.gmra.mxu0 %v1586
      %v1824 = vpop.f32.mrf.mxu0
      %v1825 = vadd.f32 0.0, %v1824
      %v1826 = vpop.f32.mrf.mxu0
      %v1827 = vadd.f32 0.0, %v1826
      %1828 = vmatmul.bf16.gmra.mxu0 %v1595
      %v1829 = vpop.f32.mrf.mxu0
      %v1830 = vadd.f32 0.0, %v1829
      %v1831 = vpop.f32.mrf.mxu0
      %v1832 = vadd.f32 0.0, %v1831
      %1833 = vmatmul.bf16.gmra.mxu0 %v1604
      %v1834 = vpop.f32.mrf.mxu0
      %v1835 = vadd.f32 0.0, %v1834
      %v1836 = vpop.f32.mrf.mxu0
      %v1837 = vadd.f32 0.0, %v1836
      %1838 = vmatmul.bf16.gmra.mxu0 %v1613
      %v1839 = vpop.f32.mrf.mxu0
      %v1840 = vadd.f32 0.0, %v1839
      %v1841 = vpop.f32.mrf.mxu0
      %v1842 = vadd.f32 0.0, %v1841
      %1843 = vmatmul.bf16.gmra.mxu0 %v1622
      %v1844 = vpop.f32.mrf.mxu0
      %v1845 = vadd.f32 0.0, %v1844
      %v1846 = vpop.f32.mrf.mxu0
      %v1847 = vadd.f32 0.0, %v1846
      %1848 = vmatmul.bf16.gmra.mxu0 %v1631
      %v1849 = vpop.f32.mrf.mxu0
      %v1850 = vadd.f32 0.0, %v1849
      %v1851 = vpop.f32.mrf.mxu0
      %v1852 = vadd.f32 0.0, %v1851
      %1853 = vmatmul.bf16.gmra.mxu0 %v1640
      %v1854 = vpop.f32.mrf.mxu0
      %v1855 = vadd.f32 0.0, %v1854
      %v1856 = vpop.f32.mrf.mxu0
      %v1857 = vadd.f32 0.0, %v1856
      %1858 = vmatmul.bf16.gmra.mxu0 %v1649
      %v1859 = vpop.f32.mrf.mxu0
      %v1860 = vadd.f32 0.0, %v1859
      %v1861 = vpop.f32.mrf.mxu0
      %v1862 = vadd.f32 0.0, %v1861
      %1863 = vmatmul.bf16.gmra.mxu0 %v1658
      %v1864 = vpop.f32.mrf.mxu0
      %v1865 = vadd.f32 0.0, %v1864
      %v1866 = vpop.f32.mrf.mxu0
      %v1867 = vadd.f32 0.0, %v1866
      %1868 = vmatmul.bf16.gmra.mxu0 %v1667
      %v1869 = vpop.f32.mrf.mxu0
      %v1870 = vadd.f32 0.0, %v1869
      %v1871 = vpop.f32.mrf.mxu0
      %v1872 = vadd.f32 0.0, %v1871
      %1873 = vmatmul.bf16.gmra.mxu0 %v1676
      %v1874 = vpop.f32.mrf.mxu0
      %v1875 = vadd.f32 0.0, %v1874
      %v1876 = vpop.f32.mrf.mxu0
      %v1877 = vadd.f32 0.0, %v1876
      %1878 = vmatmul.bf16.gmra.mxu0 %v1685
      %v1879 = vpop.f32.mrf.mxu0
      %v1880 = vadd.f32 0.0, %v1879
      %v1881 = vpop.f32.mrf.mxu0
      %v1882 = vadd.f32 0.0, %v1881
      %1883 = vmatmul.bf16.gmra.mxu0 %v1694
      %v1884 = vpop.f32.mrf.mxu0
      %v1885 = vadd.f32 0.0, %v1884
      %v1886 = vpop.f32.mrf.mxu0
      %v1887 = vadd.f32 0.0, %v1886
      %1888 = vmatmul.bf16.gmra.mxu0 %v1703
      %v1889 = vpop.f32.mrf.mxu0
      %v1890 = vadd.f32 0.0, %v1889
      %v1891 = vpop.f32.mrf.mxu0
      %v1892 = vadd.f32 0.0, %v1891
      %1893 = vmatmul.bf16.gmra.mxu0 %v1712
      %v1894 = vpop.f32.mrf.mxu0
      %v1895 = vadd.f32 0.0, %v1894
      %v1896 = vpop.f32.mrf.mxu0
      %v1897 = vadd.f32 0.0, %v1896
      %1898 = vmatmul.bf16.gmra.mxu0 %v1721
      %v1899 = vpop.f32.mrf.mxu0
      %v1900 = vadd.f32 0.0, %v1899
      %v1901 = vpop.f32.mrf.mxu0
      %v1902 = vadd.f32 0.0, %v1901
      %1903 = vmatmul.bf16.gmra.mxu0 %v1730
      %v1904 = vpop.f32.mrf.mxu0
      %v1905 = vadd.f32 0.0, %v1904
      %v1906 = vpop.f32.mrf.mxu0
      %v1907 = vadd.f32 0.0, %v1906
      %1908 = vmatmul.bf16.gmra.mxu0 %v1729
      %v1909 = vpop.f32.mrf.mxu0
      %v1910 = vadd.f32 0.0, %v1909
      %v1911 = vpop.f32.mrf.mxu0
      %1912 = vdwg.mxu0
      %v1913 = vadd.f32 %v1333, %v1810
      %v1914 = vadd.f32 %v1334, %v1812
      %v1915 = vadd.f32 %v1335, %v1815
      %v1916 = vadd.f32 %v1336, %v1817
      %v1917 = vadd.f32 %v1337, %v1820
      %v1918 = vadd.f32 %v1338, %v1822
      %v1919 = vadd.f32 %v1339, %v1825
      %v1920 = vadd.f32 %v1340, %v1827
      %v1921 = vadd.f32 %v1341, %v1830
      %v1922 = vadd.f32 %v1342, %v1832
      %v1923 = vadd.f32 %v1343, %v1835
      %v1924 = vadd.f32 %v1344, %v1837
      %v1925 = vadd.f32 %v1345, %v1840
      %v1926 = vadd.f32 %v1346, %v1842
      %v1927 = vadd.f32 %v1347, %v1845
      %v1928 = vadd.f32 %v1348, %v1847
      %v1929 = vadd.f32 %v1349, %v1850
      %v1930 = vadd.f32 %v1350, %v1852
      %v1931 = vadd.f32 %v1351, %v1855
      %v1932 = vadd.f32 %v1352, %v1857
      %v1933 = vadd.f32 %v1353, %v1860
      %v1934 = vadd.f32 %v1354, %v1862
      %v1935 = vadd.f32 %v1355, %v1865
      %v1936 = vadd.f32 %v1356, %v1867
      %v1937 = vadd.f32 %v1357, %v1870
      %v1938 = vadd.f32 %v1358, %v1872
      %v1939 = vadd.f32 %v1359, %v1875
      %v1940 = vadd.f32 %v1360, %v1877
      %v1941 = vadd.f32 %v1361, %v1880
      %v1942 = vadd.f32 %v1362, %v1882
      %v1943 = vadd.f32 %v1363, %v1885
      %v1944 = vadd.f32 %v1364, %v1887
      %v1945 = vadd.f32 %v1365, %v1890
      %v1946 = vadd.f32 %v1366, %v1892
      %v1947 = vadd.f32 %v1367, %v1895
      %v1948 = vadd.f32 %v1368, %v1897
      %v1949 = vadd.f32 %v1369, %v1900
      %v1950 = vadd.f32 %v1370, %v1902
      %v1951 = vadd.f32 %v1371, %v1905
      %v1952 = vadd.f32 %v1372, %v1907
      %v1953 = vadd.f32 %v1373, %v1910
      %s1954 = sadd.s32 %s269, 328
      %s1955 = sshra.s32 %s1954, 3
      %s1956 = sand.u32 %s1954, 7
      %s1957 = smul.addr %s1955, 4
      %s1958 = scalar_lea.vmem %s243, %s1957
      %v1959 = vld [vmem:[%s1958] sm:$0xf]
      %v1960 = vld [vmem:[%s1958 + $0x4] sm:$0xf]
      %v1961 = vld [vmem:[%s1958 + $0x8] sm:$0xf]
      %v1962 = vld [vmem:[%s1958 + $0xc] sm:$0xf]
      %v1963 = vld [vmem:[%s1958 + $0x10] sm:$0xf]
      %v1964 = vld [vmem:[%s1958 + $0x14] sm:$0xf]
      %v1965 = vld [vmem:[%s1958 + $0x18] sm:$0xf]
      %v1966 = vld [vmem:[%s1958 + $0x1c] sm:$0xf]
      %v1967 = vld [vmem:[%s1958 + $0x20] sm:$0xf]
      %v1968 = vld [vmem:[%s1958 + $0x24] sm:$0xf]
      %v1969 = vld [vmem:[%s1958 + $0x28] sm:$0xf]
      %v1970 = vld [vmem:[%s1958 + $0x2c] sm:$0xf]
      %v1971 = vld [vmem:[%s1958 + $0x30] sm:$0xf]
      %v1972 = vld [vmem:[%s1958 + $0x34] sm:$0xf]
      %v1973 = vld [vmem:[%s1958 + $0x38] sm:$0xf]
      %v1974 = vld [vmem:[%s1958 + $0x3c] sm:$0xf]
      %v1975 = vld [vmem:[%s1958 + $0x40] sm:$0xf]
      %v1976 = vld [vmem:[%s1958 + $0x44] sm:$0xf]
      %v1977 = vld [vmem:[%s1958 + $0x48] sm:$0xf]
      %v1978 = vld [vmem:[%s1958 + $0x4c] sm:$0xf]
      %v1979 = vld [vmem:[%s1958 + $0x50] sm:$0xf]
      %v1980 = vld [vmem:[%s1958 + $0x54] sm:$0xf]
      %v1981 = vld [vmem:[%s1958 + $0x58] sm:$0xf]
      %v1982 = vld [vmem:[%s1958 + $0x5c] sm:$0xf]
      %v1983 = vld [vmem:[%s1958 + $0x60] sm:$0xf]
      %v1984 = vld [vmem:[%s1958 + $0x64] sm:$0xf]
      %v1985 = vld [vmem:[%s1958 + $0x68] sm:$0xf]
      %v1986 = vld [vmem:[%s1958 + $0x6c] sm:$0xf]
      %v1987 = vld [vmem:[%s1958 + $0x70] sm:$0xf]
      %v1988 = vld [vmem:[%s1958 + $0x74] sm:$0xf]
      %v1989 = vld [vmem:[%s1958 + $0x78] sm:$0xf]
      %v1990 = vld [vmem:[%s1958 + $0x7c] sm:$0xf]
      %v1991 = vld [vmem:[%s1958 + $0x80] sm:$0xf]
      %v1992 = vld [vmem:[%s1958 + $0x84] sm:$0xf]
      %v1993 = vld [vmem:[%s1958 + $0x88] sm:$0xf]
      %v1994 = vld [vmem:[%s1958 + $0x8c] sm:$0xf]
      %v1995 = vld [vmem:[%s1958 + $0x90] sm:$0xf]
      %v1996 = vld [vmem:[%s1958 + $0x94] sm:$0xf]
      %v1997 = vld [vmem:[%s1958 + $0x98] sm:$0xf]
      %v1998 = vld [vmem:[%s1958 + $0x9c] sm:$0xf]
      %v1999 = vld [vmem:[%s1958 + $0xa0] sm:$0xf]
      %v2000 = vld [vmem:[%s1958 + $0xa4] sm:$0xf]
      %s2001 = scalar_lea.vmem %s1, 256
      %v2002 = vld [vmem:[%s2001] sm:$0xf]
      %v2003 = vld [vmem:[%s2001 + $0x4] sm:$0xf]
      %v2004 = vld [vmem:[%s2001 + $0x8] sm:$0xf]
      %v2005 = vld [vmem:[%s2001 + $0xc] sm:$0xf]
      %v2006 = vld [vmem:[%s2001 + $0x10] sm:$0xf]
      %v2007 = vld [vmem:[%s2001 + $0x14] sm:$0xf]
      %v2008 = vld [vmem:[%s2001 + $0x18] sm:$0xf]
      %v2009 = vld [vmem:[%s2001 + $0x1c] sm:$0xf]
      %v2010 = vld [vmem:[%s2001 + $0x20] sm:$0xf]
      %v2011 = vld [vmem:[%s2001 + $0x24] sm:$0xf]
      %v2012 = vld [vmem:[%s2001 + $0x28] sm:$0xf]
      %v2013 = vld [vmem:[%s2001 + $0x2c] sm:$0xf]
      %v2014 = vld [vmem:[%s2001 + $0x30] sm:$0xf]
      %v2015 = vld [vmem:[%s2001 + $0x34] sm:$0xf]
      %v2016 = vld [vmem:[%s2001 + $0x38] sm:$0xf]
      %v2017 = vld [vmem:[%s2001 + $0x3c] sm:$0xf]
      %v2059 = vunpack.c.l.b16 %v1959
      %v2060 = vunpack.c.l.b16 %v1960
      %v2061 = vunpack.c.l.b16 %v1961
      %v2062 = vunpack.c.l.b16 %v1962
      %v2063 = vunpack.c.l.b16 %v1963
      %v2064 = vunpack.c.l.b16 %v1964
      %v2065 = vunpack.c.l.b16 %v1965
      %v2066 = vunpack.c.l.b16 %v1966
      %v2067 = vunpack.c.l.b16 %v1967
      %v2068 = vunpack.c.l.b16 %v1968
      %v2069 = vunpack.c.l.b16 %v1969
      %v2070 = vunpack.c.l.b16 %v1970
      %v2071 = vunpack.c.l.b16 %v1971
      %v2072 = vunpack.c.l.b16 %v1972
      %v2073 = vunpack.c.l.b16 %v1973
      %v2074 = vunpack.c.l.b16 %v1974
      %v2075 = vunpack.c.l.b16 %v1975
      %v2076 = vunpack.c.l.b16 %v1976
      %v2077 = vunpack.c.l.b16 %v1977
      %v2078 = vunpack.c.l.b16 %v1978
      %v2079 = vunpack.c.l.b16 %v1979
      %v2080 = vunpack.c.l.b16 %v1980
      %v2081 = vunpack.c.l.b16 %v1981
      %v2082 = vunpack.c.l.b16 %v1982
      %v2083 = vunpack.c.l.b16 %v1983
      %v2084 = vunpack.c.l.b16 %v1984
      %v2085 = vunpack.c.l.b16 %v1985
      %v2086 = vunpack.c.l.b16 %v1986
      %v2087 = vunpack.c.l.b16 %v1987
      %v2088 = vunpack.c.l.b16 %v1988
      %v2089 = vunpack.c.l.b16 %v1989
      %v2090 = vunpack.c.l.b16 %v1990
      %v2091 = vunpack.c.l.b16 %v1991
      %v2092 = vunpack.c.l.b16 %v1992
      %v2093 = vunpack.c.l.b16 %v1993
      %v2094 = vunpack.c.l.b16 %v1994
      %v2095 = vunpack.c.l.b16 %v1995
      %v2096 = vunpack.c.l.b16 %v1996
      %v2097 = vunpack.c.l.b16 %v1997
      %v2098 = vunpack.c.l.b16 %v1998
      %v2099 = vunpack.c.l.b16 %v1999
      %v2100 = vpack.c.b16 %v2060, %v2059
      %v2101 = vpack.c.b16 %v2062, %v2061
      %v2102 = vpack.c.b16 %v2064, %v2063
      %v2103 = vpack.c.b16 %v2066, %v2065
      %v2104 = vpack.c.b16 %v2068, %v2067
      %v2105 = vpack.c.b16 %v2070, %v2069
      %v2106 = vpack.c.b16 %v2072, %v2071
      %v2107 = vpack.c.b16 %v2074, %v2073
      %v2108 = vpack.c.b16 %v2076, %v2075
      %v2109 = vpack.c.b16 %v2078, %v2077
      %v2110 = vpack.c.b16 %v2080, %v2079
      %v2111 = vpack.c.b16 %v2082, %v2081
      %v2112 = vpack.c.b16 %v2084, %v2083
      %v2113 = vpack.c.b16 %v2086, %v2085
      %v2114 = vpack.c.b16 %v2088, %v2087
      %v2115 = vpack.c.b16 %v2090, %v2089
      %v2116 = vpack.c.b16 %v2092, %v2091
      %v2117 = vpack.c.b16 %v2094, %v2093
      %v2118 = vpack.c.b16 %v2096, %v2095
      %v2119 = vpack.c.b16 %v2098, %v2097
      %v2120 = vpack.c.b16 %v2099, %v2099
      %v2158 = vunpack.c.l.b16 %v2002
      %v2159 = vunpack.c.l.b16 %v2003
      %v2160 = vunpack.c.l.b16 %v2004
      %v2161 = vunpack.c.l.b16 %v2005
      %v2162 = vunpack.c.l.b16 %v2006
      %v2163 = vunpack.c.l.b16 %v2007
      %v2164 = vunpack.c.l.b16 %v2008
      %v2165 = vunpack.c.l.b16 %v2009
      %v2166 = vunpack.c.l.b16 %v2010
      %v2167 = vunpack.c.l.b16 %v2011
      %v2168 = vunpack.c.l.b16 %v2012
      %v2169 = vunpack.c.l.b16 %v2013
      %v2170 = vunpack.c.l.b16 %v2014
      %v2171 = vunpack.c.l.b16 %v2015
      %v2172 = vunpack.c.l.b16 %v2016
      %v2173 = vunpack.c.l.b16 %v2017
      %v2174 = vpack.c.b16 %v2159, %v2158
      %v2175 = vpack.c.b16 %v2161, %v2160
      %v2176 = vpack.c.b16 %v2163, %v2162
      %v2177 = vpack.c.b16 %v2165, %v2164
      %v2178 = vpack.c.b16 %v2167, %v2166
      %v2179 = vpack.c.b16 %v2169, %v2168
      %v2180 = vpack.c.b16 %v2171, %v2170
      %v2181 = vpack.c.b16 %v2173, %v2172
      %2190 = vmatpush.bf16.msra.mxu0 %v2181
      %2191 = vmatpush.bf16.msra.mxu0 %v2180
      %2192 = vmatpush.bf16.msra.mxu0 %v2179
      %2193 = vmatpush.bf16.msra.mxu0 %v2178
      %2194 = vmatpush.bf16.msra.mxu0 %v2177
      %2195 = vmatpush.bf16.msra.mxu0 %v2176
      %2196 = vmatpush.bf16.msra.mxu0 %v2175
      %2197 = vmatpush.bf16.msra.mxu0 %v2174
      %2198 = vmatmul.bf16.gmra.mxu0 %v2100
      %v2199 = vpop.f32.mrf.mxu0
      %v2200 = vadd.f32 0.0, %v2199
      %v2201 = vpop.f32.mrf.mxu0
      %v2202 = vadd.f32 0.0, %v2201
      %2203 = vmatmul.bf16.gmra.mxu0 %v2101
      %v2204 = vpop.f32.mrf.mxu0
      %v2205 = vadd.f32 0.0, %v2204
      %v2206 = vpop.f32.mrf.mxu0
      %v2207 = vadd.f32 0.0, %v2206
      %2208 = vmatmul.bf16.gmra.mxu0 %v2102
      %v2209 = vpop.f32.mrf.mxu0
      %v2210 = vadd.f32 0.0, %v2209
      %v2211 = vpop.f32.mrf.mxu0
      %v2212 = vadd.f32 0.0, %v2211
      %2213 = vmatmul.bf16.gmra.mxu0 %v2103
      %v2214 = vpop.f32.mrf.mxu0
      %v2215 = vadd.f32 0.0, %v2214
      %v2216 = vpop.f32.mrf.mxu0
      %v2217 = vadd.f32 0.0, %v2216
      %2218 = vmatmul.bf16.gmra.mxu0 %v2104
      %v2219 = vpop.f32.mrf.mxu0
      %v2220 = vadd.f32 0.0, %v2219
      %v2221 = vpop.f32.mrf.mxu0
      %v2222 = vadd.f32 0.0, %v2221
      %2223 = vmatmul.bf16.gmra.mxu0 %v2105
      %v2224 = vpop.f32.mrf.mxu0
      %v2225 = vadd.f32 0.0, %v2224
      %v2226 = vpop.f32.mrf.mxu0
      %v2227 = vadd.f32 0.0, %v2226
      %2228 = vmatmul.bf16.gmra.mxu0 %v2106
      %v2229 = vpop.f32.mrf.mxu0
      %v2230 = vadd.f32 0.0, %v2229
      %v2231 = vpop.f32.mrf.mxu0
      %v2232 = vadd.f32 0.0, %v2231
      %2233 = vmatmul.bf16.gmra.mxu0 %v2107
      %v2234 = vpop.f32.mrf.mxu0
      %v2235 = vadd.f32 0.0, %v2234
      %v2236 = vpop.f32.mrf.mxu0
      %v2237 = vadd.f32 0.0, %v2236
      %2238 = vmatmul.bf16.gmra.mxu0 %v2108
      %v2239 = vpop.f32.mrf.mxu0
      %v2240 = vadd.f32 0.0, %v2239
      %v2241 = vpop.f32.mrf.mxu0
      %v2242 = vadd.f32 0.0, %v2241
      %2243 = vmatmul.bf16.gmra.mxu0 %v2109
      %v2244 = vpop.f32.mrf.mxu0
      %v2245 = vadd.f32 0.0, %v2244
      %v2246 = vpop.f32.mrf.mxu0
      %v2247 = vadd.f32 0.0, %v2246
      %2248 = vmatmul.bf16.gmra.mxu0 %v2110
      %v2249 = vpop.f32.mrf.mxu0
      %v2250 = vadd.f32 0.0, %v2249
      %v2251 = vpop.f32.mrf.mxu0
      %v2252 = vadd.f32 0.0, %v2251
      %2253 = vmatmul.bf16.gmra.mxu0 %v2111
      %v2254 = vpop.f32.mrf.mxu0
      %v2255 = vadd.f32 0.0, %v2254
      %v2256 = vpop.f32.mrf.mxu0
      %v2257 = vadd.f32 0.0, %v2256
      %2258 = vmatmul.bf16.gmra.mxu0 %v2112
      %v2259 = vpop.f32.mrf.mxu0
      %v2260 = vadd.f32 0.0, %v2259
      %v2261 = vpop.f32.mrf.mxu0
      %v2262 = vadd.f32 0.0, %v2261
      %2263 = vmatmul.bf16.gmra.mxu0 %v2113
      %v2264 = vpop.f32.mrf.mxu0
      %v2265 = vadd.f32 0.0, %v2264
      %v2266 = vpop.f32.mrf.mxu0
      %v2267 = vadd.f32 0.0, %v2266
      %2268 = vmatmul.bf16.gmra.mxu0 %v2114
      %v2269 = vpop.f32.mrf.mxu0
      %v2270 = vadd.f32 0.0, %v2269
      %v2271 = vpop.f32.mrf.mxu0
      %v2272 = vadd.f32 0.0, %v2271
      %2273 = vmatmul.bf16.gmra.mxu0 %v2115
      %v2274 = vpop.f32.mrf.mxu0
      %v2275 = vadd.f32 0.0, %v2274
      %v2276 = vpop.f32.mrf.mxu0
      %v2277 = vadd.f32 0.0, %v2276
      %2278 = vmatmul.bf16.gmra.mxu0 %v2116
      %v2279 = vpop.f32.mrf.mxu0
      %v2280 = vadd.f32 0.0, %v2279
      %v2281 = vpop.f32.mrf.mxu0
      %v2282 = vadd.f32 0.0, %v2281
      %2283 = vmatmul.bf16.gmra.mxu0 %v2117
      %v2284 = vpop.f32.mrf.mxu0
      %v2285 = vadd.f32 0.0, %v2284
      %v2286 = vpop.f32.mrf.mxu0
      %v2287 = vadd.f32 0.0, %v2286
      %2288 = vmatmul.bf16.gmra.mxu0 %v2118
      %v2289 = vpop.f32.mrf.mxu0
      %v2290 = vadd.f32 0.0, %v2289
      %v2291 = vpop.f32.mrf.mxu0
      %v2292 = vadd.f32 0.0, %v2291
      %2293 = vmatmul.bf16.gmra.mxu0 %v2119
      %v2294 = vpop.f32.mrf.mxu0
      %v2295 = vadd.f32 0.0, %v2294
      %v2296 = vpop.f32.mrf.mxu0
      %v2297 = vadd.f32 0.0, %v2296
      %2298 = vmatmul.bf16.gmra.mxu0 %v2120
      %v2299 = vpop.f32.mrf.mxu0
      %v2300 = vadd.f32 0.0, %v2299
      %v2301 = vpop.f32.mrf.mxu0
      %2302 = vdwg.mxu0
      %v2303 = vadd.f32 %v1913, %v2200
      %v2304 = vadd.f32 %v1914, %v2202
      %v2305 = vadd.f32 %v1915, %v2205
      %v2306 = vadd.f32 %v1916, %v2207
      %v2307 = vadd.f32 %v1917, %v2210
      %v2308 = vadd.f32 %v1918, %v2212
      %v2309 = vadd.f32 %v1919, %v2215
      %v2310 = vadd.f32 %v1920, %v2217
      %v2311 = vadd.f32 %v1921, %v2220
      %v2312 = vadd.f32 %v1922, %v2222
      %v2313 = vadd.f32 %v1923, %v2225
      %v2314 = vadd.f32 %v1924, %v2227
      %v2315 = vadd.f32 %v1925, %v2230
      %v2316 = vadd.f32 %v1926, %v2232
      %v2317 = vadd.f32 %v1927, %v2235
      %v2318 = vadd.f32 %v1928, %v2237
      %v2319 = vadd.f32 %v1929, %v2240
      %v2320 = vadd.f32 %v1930, %v2242
      %v2321 = vadd.f32 %v1931, %v2245
      %v2322 = vadd.f32 %v1932, %v2247
      %v2323 = vadd.f32 %v1933, %v2250
      %v2324 = vadd.f32 %v1934, %v2252
      %v2325 = vadd.f32 %v1935, %v2255
      %v2326 = vadd.f32 %v1936, %v2257
      %v2327 = vadd.f32 %v1937, %v2260
      %v2328 = vadd.f32 %v1938, %v2262
      %v2329 = vadd.f32 %v1939, %v2265
      %v2330 = vadd.f32 %v1940, %v2267
      %v2331 = vadd.f32 %v1941, %v2270
      %v2332 = vadd.f32 %v1942, %v2272
      %v2333 = vadd.f32 %v1943, %v2275
      %v2334 = vadd.f32 %v1944, %v2277
      %v2335 = vadd.f32 %v1945, %v2280
      %v2336 = vadd.f32 %v1946, %v2282
      %v2337 = vadd.f32 %v1947, %v2285
      %v2338 = vadd.f32 %v1948, %v2287
      %v2339 = vadd.f32 %v1949, %v2290
      %v2340 = vadd.f32 %v1950, %v2292
      %v2341 = vadd.f32 %v1951, %v2295
      %v2342 = vadd.f32 %v1952, %v2297
      %v2343 = vadd.f32 %v1953, %v2300
      %s2344 = scalar_lea.vmem %s1, 320
      %v2345 = vld [vmem:[%s2344] sm:$0xf]
      %v2346 = vld [vmem:[%s2344 + $0x4] sm:$0xf]
      %v2347 = vld [vmem:[%s2344 + $0x8] sm:$0xf]
      %v2348 = vld [vmem:[%s2344 + $0xc] sm:$0xf]
      %v2349 = vld [vmem:[%s2344 + $0x10] sm:$0xf]
      %v2350 = vld [vmem:[%s2344 + $0x14] sm:$0xf]
      %v2351 = vld [vmem:[%s2344 + $0x18] sm:$0xf]
      %v2352 = vld [vmem:[%s2344 + $0x1c] sm:$0xf]
      %v2353 = vld [vmem:[%s2344 + $0x20] sm:$0xf]
      %v2354 = vld [vmem:[%s2344 + $0x24] sm:$0xf]
      %v2355 = vld [vmem:[%s2344 + $0x28] sm:$0xf]
      %v2356 = vld [vmem:[%s2344 + $0x2c] sm:$0xf]
      %v2357 = vld [vmem:[%s2344 + $0x30] sm:$0xf]
      %v2358 = vld [vmem:[%s2344 + $0x34] sm:$0xf]
      %v2359 = vld [vmem:[%s2344 + $0x38] sm:$0xf]
      %v2360 = vld [vmem:[%s2344 + $0x3c] sm:$0xf]
      %v2362 = vunpack.c.l.b16 %v2000
      %v2363 = vpack.c.b16 %v2362, %v2099
      %vm2364 = vsmask.f32 7424
      %v2366 = vshrl.u32 %v2100, 16
      %v2368 = vshll.u32 %v2100, 16
      %v2370 = vrot.slane %v2368, 1
      %v2371 = vor.u32 %v2366, %v2370
      %v2373 = vshll.u32 %v2101, 16
      %v2375 = vrot.slane %v2373, 1
      %v2376 = vsel %vm2364, %v2371, %v2375
      %v2377 = vshrl.u32 %v2101, 16
      %v2379 = vor.u32 %v2377, %v2375
      %v2381 = vshll.u32 %v2102, 16
      %v2383 = vrot.slane %v2381, 1
      %v2384 = vsel %vm2364, %v2379, %v2383
      %v2385 = vshrl.u32 %v2102, 16
      %v2387 = vor.u32 %v2385, %v2383
      %v2389 = vshll.u32 %v2103, 16
      %v2391 = vrot.slane %v2389, 1
      %v2392 = vsel %vm2364, %v2387, %v2391
      %v2393 = vshrl.u32 %v2103, 16
      %v2395 = vor.u32 %v2393, %v2391
      %v2397 = vshll.u32 %v2104, 16
      %v2399 = vrot.slane %v2397, 1
      %v2400 = vsel %vm2364, %v2395, %v2399
      %v2401 = vshrl.u32 %v2104, 16
      %v2403 = vor.u32 %v2401, %v2399
      %v2405 = vshll.u32 %v2105, 16
      %v2407 = vrot.slane %v2405, 1
      %v2408 = vsel %vm2364, %v2403, %v2407
      %v2409 = vshrl.u32 %v2105, 16
      %v2411 = vor.u32 %v2409, %v2407
      %v2413 = vshll.u32 %v2106, 16
      %v2415 = vrot.slane %v2413, 1
      %v2416 = vsel %vm2364, %v2411, %v2415
      %v2417 = vshrl.u32 %v2106, 16
      %v2419 = vor.u32 %v2417, %v2415
      %v2421 = vshll.u32 %v2107, 16
      %v2423 = vrot.slane %v2421, 1
      %v2424 = vsel %vm2364, %v2419, %v2423
      %v2425 = vshrl.u32 %v2107, 16
      %v2427 = vor.u32 %v2425, %v2423
      %v2429 = vshll.u32 %v2108, 16
      %v2431 = vrot.slane %v2429, 1
      %v2432 = vsel %vm2364, %v2427, %v2431
      %v2433 = vshrl.u32 %v2108, 16
      %v2435 = vor.u32 %v2433, %v2431
      %v2437 = vshll.u32 %v2109, 16
      %v2439 = vrot.slane %v2437, 1
      %v2440 = vsel %vm2364, %v2435, %v2439
      %v2441 = vshrl.u32 %v2109, 16
      %v2443 = vor.u32 %v2441, %v2439
      %v2445 = vshll.u32 %v2110, 16
      %v2447 = vrot.slane %v2445, 1
      %v2448 = vsel %vm2364, %v2443, %v2447
      %v2449 = vshrl.u32 %v2110, 16
      %v2451 = vor.u32 %v2449, %v2447
      %v2453 = vshll.u32 %v2111, 16
      %v2455 = vrot.slane %v2453, 1
      %v2456 = vsel %vm2364, %v2451, %v2455
      %v2457 = vshrl.u32 %v2111, 16
      %v2459 = vor.u32 %v2457, %v2455
      %v2461 = vshll.u32 %v2112, 16
      %v2463 = vrot.slane %v2461, 1
      %v2464 = vsel %vm2364, %v2459, %v2463
      %v2465 = vshrl.u32 %v2112, 16
      %v2467 = vor.u32 %v2465, %v2463
      %v2469 = vshll.u32 %v2113, 16
      %v2471 = vrot.slane %v2469, 1
      %v2472 = vsel %vm2364, %v2467, %v2471
      %v2473 = vshrl.u32 %v2113, 16
      %v2475 = vor.u32 %v2473, %v2471
      %v2477 = vshll.u32 %v2114, 16
      %v2479 = vrot.slane %v2477, 1
      %v2480 = vsel %vm2364, %v2475, %v2479
      %v2481 = vshrl.u32 %v2114, 16
      %v2483 = vor.u32 %v2481, %v2479
      %v2485 = vshll.u32 %v2115, 16
      %v2487 = vrot.slane %v2485, 1
      %v2488 = vsel %vm2364, %v2483, %v2487
      %v2489 = vshrl.u32 %v2115, 16
      %v2491 = vor.u32 %v2489, %v2487
      %v2493 = vshll.u32 %v2116, 16
      %v2495 = vrot.slane %v2493, 1
      %v2496 = vsel %vm2364, %v2491, %v2495
      %v2497 = vshrl.u32 %v2116, 16
      %v2499 = vor.u32 %v2497, %v2495
      %v2501 = vshll.u32 %v2117, 16
      %v2503 = vrot.slane %v2501, 1
      %v2504 = vsel %vm2364, %v2499, %v2503
      %v2505 = vshrl.u32 %v2117, 16
      %v2507 = vor.u32 %v2505, %v2503
      %v2509 = vshll.u32 %v2118, 16
      %v2511 = vrot.slane %v2509, 1
      %v2512 = vsel %vm2364, %v2507, %v2511
      %v2513 = vshrl.u32 %v2118, 16
      %v2515 = vor.u32 %v2513, %v2511
      %v2517 = vshll.u32 %v2119, 16
      %v2519 = vrot.slane %v2517, 1
      %v2520 = vsel %vm2364, %v2515, %v2519
      %v2521 = vshrl.u32 %v2119, 16
      %v2523 = vor.u32 %v2521, %v2519
      %v2525 = vshll.u32 %v2363, 16
      %v2527 = vrot.slane %v2525, 1
      %v2528 = vsel %vm2364, %v2523, %v2527
      %v2529 = vshrl.u32 %v2363, 16
      %v2531 = vor.u32 %v2529, %v2527
      %v2569 = vunpack.c.l.b16 %v2345
      %v2570 = vunpack.c.l.b16 %v2346
      %v2571 = vunpack.c.l.b16 %v2347
      %v2572 = vunpack.c.l.b16 %v2348
      %v2573 = vunpack.c.l.b16 %v2349
      %v2574 = vunpack.c.l.b16 %v2350
      %v2575 = vunpack.c.l.b16 %v2351
      %v2576 = vunpack.c.l.b16 %v2352
      %v2577 = vunpack.c.l.b16 %v2353
      %v2578 = vunpack.c.l.b16 %v2354
      %v2579 = vunpack.c.l.b16 %v2355
      %v2580 = vunpack.c.l.b16 %v2356
      %v2581 = vunpack.c.l.b16 %v2357
      %v2582 = vunpack.c.l.b16 %v2358
      %v2583 = vunpack.c.l.b16 %v2359
      %v2584 = vunpack.c.l.b16 %v2360
      %v2585 = vpack.c.b16 %v2570, %v2569
      %v2586 = vpack.c.b16 %v2572, %v2571
      %v2587 = vpack.c.b16 %v2574, %v2573
      %v2588 = vpack.c.b16 %v2576, %v2575
      %v2589 = vpack.c.b16 %v2578, %v2577
      %v2590 = vpack.c.b16 %v2580, %v2579
      %v2591 = vpack.c.b16 %v2582, %v2581
      %v2592 = vpack.c.b16 %v2584, %v2583
      %2601 = vmatpush.bf16.msra.mxu0 %v2592
      %2602 = vmatpush.bf16.msra.mxu0 %v2591
      %2603 = vmatpush.bf16.msra.mxu0 %v2590
      %2604 = vmatpush.bf16.msra.mxu0 %v2589
      %2605 = vmatpush.bf16.msra.mxu0 %v2588
      %2606 = vmatpush.bf16.msra.mxu0 %v2587
      %2607 = vmatpush.bf16.msra.mxu0 %v2586
      %2608 = vmatpush.bf16.msra.mxu0 %v2585
      %2609 = vmatmul.bf16.gmra.mxu0 %v2376
      %v2610 = vpop.f32.mrf.mxu0
      %v2611 = vadd.f32 0.0, %v2610
      %v2612 = vpop.f32.mrf.mxu0
      %v2613 = vadd.f32 0.0, %v2612
      %2614 = vmatmul.bf16.gmra.mxu0 %v2384
      %v2615 = vpop.f32.mrf.mxu0
      %v2616 = vadd.f32 0.0, %v2615
      %v2617 = vpop.f32.mrf.mxu0
      %v2618 = vadd.f32 0.0, %v2617
      %2619 = vmatmul.bf16.gmra.mxu0 %v2392
      %v2620 = vpop.f32.mrf.mxu0
      %v2621 = vadd.f32 0.0, %v2620
      %v2622 = vpop.f32.mrf.mxu0
      %v2623 = vadd.f32 0.0, %v2622
      %2624 = vmatmul.bf16.gmra.mxu0 %v2400
      %v2625 = vpop.f32.mrf.mxu0
      %v2626 = vadd.f32 0.0, %v2625
      %v2627 = vpop.f32.mrf.mxu0
      %v2628 = vadd.f32 0.0, %v2627
      %2629 = vmatmul.bf16.gmra.mxu0 %v2408
      %v2630 = vpop.f32.mrf.mxu0
      %v2631 = vadd.f32 0.0, %v2630
      %v2632 = vpop.f32.mrf.mxu0
      %v2633 = vadd.f32 0.0, %v2632
      %2634 = vmatmul.bf16.gmra.mxu0 %v2416
      %v2635 = vpop.f32.mrf.mxu0
      %v2636 = vadd.f32 0.0, %v2635
      %v2637 = vpop.f32.mrf.mxu0
      %v2638 = vadd.f32 0.0, %v2637
      %2639 = vmatmul.bf16.gmra.mxu0 %v2424
      %v2640 = vpop.f32.mrf.mxu0
      %v2641 = vadd.f32 0.0, %v2640
      %v2642 = vpop.f32.mrf.mxu0
      %v2643 = vadd.f32 0.0, %v2642
      %2644 = vmatmul.bf16.gmra.mxu0 %v2432
      %v2645 = vpop.f32.mrf.mxu0
      %v2646 = vadd.f32 0.0, %v2645
      %v2647 = vpop.f32.mrf.mxu0
      %v2648 = vadd.f32 0.0, %v2647
      %2649 = vmatmul.bf16.gmra.mxu0 %v2440
      %v2650 = vpop.f32.mrf.mxu0
      %v2651 = vadd.f32 0.0, %v2650
      %v2652 = vpop.f32.mrf.mxu0
      %v2653 = vadd.f32 0.0, %v2652
      %2654 = vmatmul.bf16.gmra.mxu0 %v2448
      %v2655 = vpop.f32.mrf.mxu0
      %v2656 = vadd.f32 0.0, %v2655
      %v2657 = vpop.f32.mrf.mxu0
      %v2658 = vadd.f32 0.0, %v2657
      %2659 = vmatmul.bf16.gmra.mxu0 %v2456
      %v2660 = vpop.f32.mrf.mxu0
      %v2661 = vadd.f32 0.0, %v2660
      %v2662 = vpop.f32.mrf.mxu0
      %v2663 = vadd.f32 0.0, %v2662
      %2664 = vmatmul.bf16.gmra.mxu0 %v2464
      %v2665 = vpop.f32.mrf.mxu0
      %v2666 = vadd.f32 0.0, %v2665
      %v2667 = vpop.f32.mrf.mxu0
      %v2668 = vadd.f32 0.0, %v2667
      %2669 = vmatmul.bf16.gmra.mxu0 %v2472
      %v2670 = vpop.f32.mrf.mxu0
      %v2671 = vadd.f32 0.0, %v2670
      %v2672 = vpop.f32.mrf.mxu0
      %v2673 = vadd.f32 0.0, %v2672
      %2674 = vmatmul.bf16.gmra.mxu0 %v2480
      %v2675 = vpop.f32.mrf.mxu0
      %v2676 = vadd.f32 0.0, %v2675
      %v2677 = vpop.f32.mrf.mxu0
      %v2678 = vadd.f32 0.0, %v2677
      %2679 = vmatmul.bf16.gmra.mxu0 %v2488
      %v2680 = vpop.f32.mrf.mxu0
      %v2681 = vadd.f32 0.0, %v2680
      %v2682 = vpop.f32.mrf.mxu0
      %v2683 = vadd.f32 0.0, %v2682
      %2684 = vmatmul.bf16.gmra.mxu0 %v2496
      %v2685 = vpop.f32.mrf.mxu0
      %v2686 = vadd.f32 0.0, %v2685
      %v2687 = vpop.f32.mrf.mxu0
      %v2688 = vadd.f32 0.0, %v2687
      %2689 = vmatmul.bf16.gmra.mxu0 %v2504
      %v2690 = vpop.f32.mrf.mxu0
      %v2691 = vadd.f32 0.0, %v2690
      %v2692 = vpop.f32.mrf.mxu0
      %v2693 = vadd.f32 0.0, %v2692
      %2694 = vmatmul.bf16.gmra.mxu0 %v2512
      %v2695 = vpop.f32.mrf.mxu0
      %v2696 = vadd.f32 0.0, %v2695
      %v2697 = vpop.f32.mrf.mxu0
      %v2698 = vadd.f32 0.0, %v2697
      %2699 = vmatmul.bf16.gmra.mxu0 %v2520
      %v2700 = vpop.f32.mrf.mxu0
      %v2701 = vadd.f32 0.0, %v2700
      %v2702 = vpop.f32.mrf.mxu0
      %v2703 = vadd.f32 0.0, %v2702
      %2704 = vmatmul.bf16.gmra.mxu0 %v2528
      %v2705 = vpop.f32.mrf.mxu0
      %v2706 = vadd.f32 0.0, %v2705
      %v2707 = vpop.f32.mrf.mxu0
      %v2708 = vadd.f32 0.0, %v2707
      %2709 = vmatmul.bf16.gmra.mxu0 %v2531
      %v2710 = vpop.f32.mrf.mxu0
      %v2711 = vadd.f32 0.0, %v2710
      %v2712 = vpop.f32.mrf.mxu0
      %2713 = vdwg.mxu0
      %v2714 = vadd.f32 %v2303, %v2611
      %v2715 = vadd.f32 %v2304, %v2613
      %v2716 = vadd.f32 %v2305, %v2616
      %v2717 = vadd.f32 %v2306, %v2618
      %v2718 = vadd.f32 %v2307, %v2621
      %v2719 = vadd.f32 %v2308, %v2623
      %v2720 = vadd.f32 %v2309, %v2626
      %v2721 = vadd.f32 %v2310, %v2628
      %v2722 = vadd.f32 %v2311, %v2631
      %v2723 = vadd.f32 %v2312, %v2633
      %v2724 = vadd.f32 %v2313, %v2636
      %v2725 = vadd.f32 %v2314, %v2638
      %v2726 = vadd.f32 %v2315, %v2641
      %v2727 = vadd.f32 %v2316, %v2643
      %v2728 = vadd.f32 %v2317, %v2646
      %v2729 = vadd.f32 %v2318, %v2648
      %v2730 = vadd.f32 %v2319, %v2651
      %v2731 = vadd.f32 %v2320, %v2653
      %v2732 = vadd.f32 %v2321, %v2656
      %v2733 = vadd.f32 %v2322, %v2658
      %v2734 = vadd.f32 %v2323, %v2661
      %v2735 = vadd.f32 %v2324, %v2663
      %v2736 = vadd.f32 %v2325, %v2666
      %v2737 = vadd.f32 %v2326, %v2668
      %v2738 = vadd.f32 %v2327, %v2671
      %v2739 = vadd.f32 %v2328, %v2673
      %v2740 = vadd.f32 %v2329, %v2676
      %v2741 = vadd.f32 %v2330, %v2678
      %v2742 = vadd.f32 %v2331, %v2681
      %v2743 = vadd.f32 %v2332, %v2683
      %v2744 = vadd.f32 %v2333, %v2686
      %v2745 = vadd.f32 %v2334, %v2688
      %v2746 = vadd.f32 %v2335, %v2691
      %v2747 = vadd.f32 %v2336, %v2693
      %v2748 = vadd.f32 %v2337, %v2696
      %v2749 = vadd.f32 %v2338, %v2698
      %v2750 = vadd.f32 %v2339, %v2701
      %v2751 = vadd.f32 %v2340, %v2703
      %v2752 = vadd.f32 %v2341, %v2706
      %v2753 = vadd.f32 %v2342, %v2708
      %v2754 = vadd.f32 %v2343, %v2711
      %s2755 = sadd.s32 %s269, 344
      %s2756 = sshra.s32 %s2755, 3
      %s2757 = sand.u32 %s2755, 7
      %s2758 = smul.addr %s2756, 4
      %s2759 = scalar_lea.vmem %s243, %s2758
      %v2760 = vld [vmem:[%s2759] sm:$0xf]
      %v2761 = vld [vmem:[%s2759 + $0x4] sm:$0xf]
      %v2762 = vld [vmem:[%s2759 + $0x8] sm:$0xf]
      %v2763 = vld [vmem:[%s2759 + $0xc] sm:$0xf]
      %v2764 = vld [vmem:[%s2759 + $0x10] sm:$0xf]
      %v2765 = vld [vmem:[%s2759 + $0x14] sm:$0xf]
      %v2766 = vld [vmem:[%s2759 + $0x18] sm:$0xf]
      %v2767 = vld [vmem:[%s2759 + $0x1c] sm:$0xf]
      %v2768 = vld [vmem:[%s2759 + $0x20] sm:$0xf]
      %v2769 = vld [vmem:[%s2759 + $0x24] sm:$0xf]
      %v2770 = vld [vmem:[%s2759 + $0x28] sm:$0xf]
      %v2771 = vld [vmem:[%s2759 + $0x2c] sm:$0xf]
      %v2772 = vld [vmem:[%s2759 + $0x30] sm:$0xf]
      %v2773 = vld [vmem:[%s2759 + $0x34] sm:$0xf]
      %v2774 = vld [vmem:[%s2759 + $0x38] sm:$0xf]
      %v2775 = vld [vmem:[%s2759 + $0x3c] sm:$0xf]
      %v2776 = vld [vmem:[%s2759 + $0x40] sm:$0xf]
      %v2777 = vld [vmem:[%s2759 + $0x44] sm:$0xf]
      %v2778 = vld [vmem:[%s2759 + $0x48] sm:$0xf]
      %v2779 = vld [vmem:[%s2759 + $0x4c] sm:$0xf]
      %v2780 = vld [vmem:[%s2759 + $0x50] sm:$0xf]
      %v2781 = vld [vmem:[%s2759 + $0x54] sm:$0xf]
      %v2782 = vld [vmem:[%s2759 + $0x58] sm:$0xf]
      %v2783 = vld [vmem:[%s2759 + $0x5c] sm:$0xf]
      %v2784 = vld [vmem:[%s2759 + $0x60] sm:$0xf]
      %v2785 = vld [vmem:[%s2759 + $0x64] sm:$0xf]
      %v2786 = vld [vmem:[%s2759 + $0x68] sm:$0xf]
      %v2787 = vld [vmem:[%s2759 + $0x6c] sm:$0xf]
      %v2788 = vld [vmem:[%s2759 + $0x70] sm:$0xf]
      %v2789 = vld [vmem:[%s2759 + $0x74] sm:$0xf]
      %v2790 = vld [vmem:[%s2759 + $0x78] sm:$0xf]
      %v2791 = vld [vmem:[%s2759 + $0x7c] sm:$0xf]
      %v2792 = vld [vmem:[%s2759 + $0x80] sm:$0xf]
      %v2793 = vld [vmem:[%s2759 + $0x84] sm:$0xf]
      %v2794 = vld [vmem:[%s2759 + $0x88] sm:$0xf]
      %v2795 = vld [vmem:[%s2759 + $0x8c] sm:$0xf]
      %v2796 = vld [vmem:[%s2759 + $0x90] sm:$0xf]
      %v2797 = vld [vmem:[%s2759 + $0x94] sm:$0xf]
      %v2798 = vld [vmem:[%s2759 + $0x98] sm:$0xf]
      %v2799 = vld [vmem:[%s2759 + $0x9c] sm:$0xf]
      %v2800 = vld [vmem:[%s2759 + $0xa0] sm:$0xf]
      %v2801 = vld [vmem:[%s2759 + $0xa4] sm:$0xf]
      %s2802 = scalar_lea.vmem %s1, 384
      %v2803 = vld [vmem:[%s2802] sm:$0xf]
      %v2804 = vld [vmem:[%s2802 + $0x4] sm:$0xf]
      %v2805 = vld [vmem:[%s2802 + $0x8] sm:$0xf]
      %v2806 = vld [vmem:[%s2802 + $0xc] sm:$0xf]
      %v2807 = vld [vmem:[%s2802 + $0x10] sm:$0xf]
      %v2808 = vld [vmem:[%s2802 + $0x14] sm:$0xf]
      %v2809 = vld [vmem:[%s2802 + $0x18] sm:$0xf]
      %v2810 = vld [vmem:[%s2802 + $0x1c] sm:$0xf]
      %v2811 = vld [vmem:[%s2802 + $0x20] sm:$0xf]
      %v2812 = vld [vmem:[%s2802 + $0x24] sm:$0xf]
      %v2813 = vld [vmem:[%s2802 + $0x28] sm:$0xf]
      %v2814 = vld [vmem:[%s2802 + $0x2c] sm:$0xf]
      %v2815 = vld [vmem:[%s2802 + $0x30] sm:$0xf]
      %v2816 = vld [vmem:[%s2802 + $0x34] sm:$0xf]
      %v2817 = vld [vmem:[%s2802 + $0x38] sm:$0xf]
      %v2818 = vld [vmem:[%s2802 + $0x3c] sm:$0xf]
      %v2861 = vunpack.c.l.b16 %v2760
      %v2862 = vunpack.c.l.b16 %v2761
      %v2863 = vunpack.c.l.b16 %v2762
      %v2864 = vunpack.c.l.b16 %v2763
      %v2865 = vunpack.c.l.b16 %v2764
      %v2866 = vunpack.c.l.b16 %v2765
      %v2867 = vunpack.c.l.b16 %v2766
      %v2868 = vunpack.c.l.b16 %v2767
      %v2869 = vunpack.c.l.b16 %v2768
      %v2870 = vunpack.c.l.b16 %v2769
      %v2871 = vunpack.c.l.b16 %v2770
      %v2872 = vunpack.c.l.b16 %v2771
      %v2873 = vunpack.c.l.b16 %v2772
      %v2874 = vunpack.c.l.b16 %v2773
      %v2875 = vunpack.c.l.b16 %v2774
      %v2876 = vunpack.c.l.b16 %v2775
      %v2877 = vunpack.c.l.b16 %v2776
      %v2878 = vunpack.c.l.b16 %v2777
      %v2879 = vunpack.c.l.b16 %v2778
      %v2880 = vunpack.c.l.b16 %v2779
      %v2881 = vunpack.c.l.b16 %v2780
      %v2882 = vunpack.c.l.b16 %v2781
      %v2883 = vunpack.c.l.b16 %v2782
      %v2884 = vunpack.c.l.b16 %v2783
      %v2885 = vunpack.c.l.b16 %v2784
      %v2886 = vunpack.c.l.b16 %v2785
      %v2887 = vunpack.c.l.b16 %v2786
      %v2888 = vunpack.c.l.b16 %v2787
      %v2889 = vunpack.c.l.b16 %v2788
      %v2890 = vunpack.c.l.b16 %v2789
      %v2891 = vunpack.c.l.b16 %v2790
      %v2892 = vunpack.c.l.b16 %v2791
      %v2893 = vunpack.c.l.b16 %v2792
      %v2894 = vunpack.c.l.b16 %v2793
      %v2895 = vunpack.c.l.b16 %v2794
      %v2896 = vunpack.c.l.b16 %v2795
      %v2897 = vunpack.c.l.b16 %v2796
      %v2898 = vunpack.c.l.b16 %v2797
      %v2899 = vunpack.c.l.b16 %v2798
      %v2900 = vunpack.c.l.b16 %v2799
      %v2901 = vunpack.c.l.b16 %v2800
      %v2902 = vunpack.c.l.b16 %v2801
      %v2903 = vpack.c.b16 %v2862, %v2861
      %v2904 = vpack.c.b16 %v2864, %v2863
      %v2905 = vpack.c.b16 %v2866, %v2865
      %v2906 = vpack.c.b16 %v2868, %v2867
      %v2907 = vpack.c.b16 %v2870, %v2869
      %v2908 = vpack.c.b16 %v2872, %v2871
      %v2909 = vpack.c.b16 %v2874, %v2873
      %v2910 = vpack.c.b16 %v2876, %v2875
      %v2911 = vpack.c.b16 %v2878, %v2877
      %v2912 = vpack.c.b16 %v2880, %v2879
      %v2913 = vpack.c.b16 %v2882, %v2881
      %v2914 = vpack.c.b16 %v2884, %v2883
      %v2915 = vpack.c.b16 %v2886, %v2885
      %v2916 = vpack.c.b16 %v2888, %v2887
      %v2917 = vpack.c.b16 %v2890, %v2889
      %v2918 = vpack.c.b16 %v2892, %v2891
      %v2919 = vpack.c.b16 %v2894, %v2893
      %v2920 = vpack.c.b16 %v2896, %v2895
      %v2921 = vpack.c.b16 %v2898, %v2897
      %v2922 = vpack.c.b16 %v2900, %v2899
      %v2923 = vpack.c.b16 %v2902, %v2901
      %v2925 = vshrl.u32 %v2903, 16
      %v2927 = vshll.u32 %v2903, 16
      %v2929 = vrot.slane %v2927, 1
      %v2930 = vor.u32 %v2925, %v2929
      %v2932 = vshll.u32 %v2904, 16
      %v2934 = vrot.slane %v2932, 1
      %v2935 = vsel %vm2364, %v2930, %v2934
      %v2936 = vshrl.u32 %v2904, 16
      %v2938 = vor.u32 %v2936, %v2934
      %v2940 = vshll.u32 %v2905, 16
      %v2942 = vrot.slane %v2940, 1
      %v2943 = vsel %vm2364, %v2938, %v2942
      %v2944 = vshrl.u32 %v2905, 16
      %v2946 = vor.u32 %v2944, %v2942
      %v2948 = vshll.u32 %v2906, 16
      %v2950 = vrot.slane %v2948, 1
      %v2951 = vsel %vm2364, %v2946, %v2950
      %v2952 = vshrl.u32 %v2906, 16
      %v2954 = vor.u32 %v2952, %v2950
      %v2956 = vshll.u32 %v2907, 16
      %v2958 = vrot.slane %v2956, 1
      %v2959 = vsel %vm2364, %v2954, %v2958
      %v2960 = vshrl.u32 %v2907, 16
      %v2962 = vor.u32 %v2960, %v2958
      %v2964 = vshll.u32 %v2908, 16
      %v2966 = vrot.slane %v2964, 1
      %v2967 = vsel %vm2364, %v2962, %v2966
      %v2968 = vshrl.u32 %v2908, 16
      %v2970 = vor.u32 %v2968, %v2966
      %v2972 = vshll.u32 %v2909, 16
      %v2974 = vrot.slane %v2972, 1
      %v2975 = vsel %vm2364, %v2970, %v2974
      %v2976 = vshrl.u32 %v2909, 16
      %v2978 = vor.u32 %v2976, %v2974
      %v2980 = vshll.u32 %v2910, 16
      %v2982 = vrot.slane %v2980, 1
      %v2983 = vsel %vm2364, %v2978, %v2982
      %v2984 = vshrl.u32 %v2910, 16
      %v2986 = vor.u32 %v2984, %v2982
      %v2988 = vshll.u32 %v2911, 16
      %v2990 = vrot.slane %v2988, 1
      %v2991 = vsel %vm2364, %v2986, %v2990
      %v2992 = vshrl.u32 %v2911, 16
      %v2994 = vor.u32 %v2992, %v2990
      %v2996 = vshll.u32 %v2912, 16
      %v2998 = vrot.slane %v2996, 1
      %v2999 = vsel %vm2364, %v2994, %v2998
      %v3000 = vshrl.u32 %v2912, 16
      %v3002 = vor.u32 %v3000, %v2998
      %v3004 = vshll.u32 %v2913, 16
      %v3006 = vrot.slane %v3004, 1
      %v3007 = vsel %vm2364, %v3002, %v3006
      %v3008 = vshrl.u32 %v2913, 16
      %v3010 = vor.u32 %v3008, %v3006
      %v3012 = vshll.u32 %v2914, 16
      %v3014 = vrot.slane %v3012, 1
      %v3015 = vsel %vm2364, %v3010, %v3014
      %v3016 = vshrl.u32 %v2914, 16
      %v3018 = vor.u32 %v3016, %v3014
      %v3020 = vshll.u32 %v2915, 16
      %v3022 = vrot.slane %v3020, 1
      %v3023 = vsel %vm2364, %v3018, %v3022
      %v3024 = vshrl.u32 %v2915, 16
      %v3026 = vor.u32 %v3024, %v3022
      %v3028 = vshll.u32 %v2916, 16
      %v3030 = vrot.slane %v3028, 1
      %v3031 = vsel %vm2364, %v3026, %v3030
      %v3032 = vshrl.u32 %v2916, 16
      %v3034 = vor.u32 %v3032, %v3030
      %v3036 = vshll.u32 %v2917, 16
      %v3038 = vrot.slane %v3036, 1
      %v3039 = vsel %vm2364, %v3034, %v3038
      %v3040 = vshrl.u32 %v2917, 16
      %v3042 = vor.u32 %v3040, %v3038
      %v3044 = vshll.u32 %v2918, 16
      %v3046 = vrot.slane %v3044, 1
      %v3047 = vsel %vm2364, %v3042, %v3046
      %v3048 = vshrl.u32 %v2918, 16
      %v3050 = vor.u32 %v3048, %v3046
      %v3052 = vshll.u32 %v2919, 16
      %v3054 = vrot.slane %v3052, 1
      %v3055 = vsel %vm2364, %v3050, %v3054
      %v3056 = vshrl.u32 %v2919, 16
      %v3058 = vor.u32 %v3056, %v3054
      %v3060 = vshll.u32 %v2920, 16
      %v3062 = vrot.slane %v3060, 1
      %v3063 = vsel %vm2364, %v3058, %v3062
      %v3064 = vshrl.u32 %v2920, 16
      %v3066 = vor.u32 %v3064, %v3062
      %v3068 = vshll.u32 %v2921, 16
      %v3070 = vrot.slane %v3068, 1
      %v3071 = vsel %vm2364, %v3066, %v3070
      %v3072 = vshrl.u32 %v2921, 16
      %v3074 = vor.u32 %v3072, %v3070
      %v3076 = vshll.u32 %v2922, 16
      %v3078 = vrot.slane %v3076, 1
      %v3079 = vsel %vm2364, %v3074, %v3078
      %v3080 = vshrl.u32 %v2922, 16
      %v3082 = vor.u32 %v3080, %v3078
      %v3084 = vshll.u32 %v2923, 16
      %v3086 = vrot.slane %v3084, 1
      %v3087 = vsel %vm2364, %v3082, %v3086
      %v3088 = vshrl.u32 %v2923, 16
      %v3090 = vor.u32 %v3088, %v3086
      %v3128 = vunpack.c.l.b16 %v2803
      %v3129 = vunpack.c.l.b16 %v2804
      %v3130 = vunpack.c.l.b16 %v2805
      %v3131 = vunpack.c.l.b16 %v2806
      %v3132 = vunpack.c.l.b16 %v2807
      %v3133 = vunpack.c.l.b16 %v2808
      %v3134 = vunpack.c.l.b16 %v2809
      %v3135 = vunpack.c.l.b16 %v2810
      %v3136 = vunpack.c.l.b16 %v2811
      %v3137 = vunpack.c.l.b16 %v2812
      %v3138 = vunpack.c.l.b16 %v2813
      %v3139 = vunpack.c.l.b16 %v2814
      %v3140 = vunpack.c.l.b16 %v2815
      %v3141 = vunpack.c.l.b16 %v2816
      %v3142 = vunpack.c.l.b16 %v2817
      %v3143 = vunpack.c.l.b16 %v2818
      %v3144 = vpack.c.b16 %v3129, %v3128
      %v3145 = vpack.c.b16 %v3131, %v3130
      %v3146 = vpack.c.b16 %v3133, %v3132
      %v3147 = vpack.c.b16 %v3135, %v3134
      %v3148 = vpack.c.b16 %v3137, %v3136
      %v3149 = vpack.c.b16 %v3139, %v3138
      %v3150 = vpack.c.b16 %v3141, %v3140
      %v3151 = vpack.c.b16 %v3143, %v3142
      %3160 = vmatpush.bf16.msra.mxu0 %v3151
      %3161 = vmatpush.bf16.msra.mxu0 %v3150
      %3162 = vmatpush.bf16.msra.mxu0 %v3149
      %3163 = vmatpush.bf16.msra.mxu0 %v3148
      %3164 = vmatpush.bf16.msra.mxu0 %v3147
      %3165 = vmatpush.bf16.msra.mxu0 %v3146
      %3166 = vmatpush.bf16.msra.mxu0 %v3145
      %3167 = vmatpush.bf16.msra.mxu0 %v3144
      %3168 = vmatmul.bf16.gmra.mxu0 %v2935
      %v3169 = vpop.f32.mrf.mxu0
      %v3170 = vadd.f32 0.0, %v3169
      %v3171 = vpop.f32.mrf.mxu0
      %v3172 = vadd.f32 0.0, %v3171
      %3173 = vmatmul.bf16.gmra.mxu0 %v2943
      %v3174 = vpop.f32.mrf.mxu0
      %v3175 = vadd.f32 0.0, %v3174
      %v3176 = vpop.f32.mrf.mxu0
      %v3177 = vadd.f32 0.0, %v3176
      %3178 = vmatmul.bf16.gmra.mxu0 %v2951
      %v3179 = vpop.f32.mrf.mxu0
      %v3180 = vadd.f32 0.0, %v3179
      %v3181 = vpop.f32.mrf.mxu0
      %v3182 = vadd.f32 0.0, %v3181
      %3183 = vmatmul.bf16.gmra.mxu0 %v2959
      %v3184 = vpop.f32.mrf.mxu0
      %v3185 = vadd.f32 0.0, %v3184
      %v3186 = vpop.f32.mrf.mxu0
      %v3187 = vadd.f32 0.0, %v3186
      %3188 = vmatmul.bf16.gmra.mxu0 %v2967
      %v3189 = vpop.f32.mrf.mxu0
      %v3190 = vadd.f32 0.0, %v3189
      %v3191 = vpop.f32.mrf.mxu0
      %v3192 = vadd.f32 0.0, %v3191
      %3193 = vmatmul.bf16.gmra.mxu0 %v2975
      %v3194 = vpop.f32.mrf.mxu0
      %v3195 = vadd.f32 0.0, %v3194
      %v3196 = vpop.f32.mrf.mxu0
      %v3197 = vadd.f32 0.0, %v3196
      %3198 = vmatmul.bf16.gmra.mxu0 %v2983
      %v3199 = vpop.f32.mrf.mxu0
      %v3200 = vadd.f32 0.0, %v3199
      %v3201 = vpop.f32.mrf.mxu0
      %v3202 = vadd.f32 0.0, %v3201
      %3203 = vmatmul.bf16.gmra.mxu0 %v2991
      %v3204 = vpop.f32.mrf.mxu0
      %v3205 = vadd.f32 0.0, %v3204
      %v3206 = vpop.f32.mrf.mxu0
      %v3207 = vadd.f32 0.0, %v3206
      %3208 = vmatmul.bf16.gmra.mxu0 %v2999
      %v3209 = vpop.f32.mrf.mxu0
      %v3210 = vadd.f32 0.0, %v3209
      %v3211 = vpop.f32.mrf.mxu0
      %v3212 = vadd.f32 0.0, %v3211
      %3213 = vmatmul.bf16.gmra.mxu0 %v3007
      %v3214 = vpop.f32.mrf.mxu0
      %v3215 = vadd.f32 0.0, %v3214
      %v3216 = vpop.f32.mrf.mxu0
      %v3217 = vadd.f32 0.0, %v3216
      %3218 = vmatmul.bf16.gmra.mxu0 %v3015
      %v3219 = vpop.f32.mrf.mxu0
      %v3220 = vadd.f32 0.0, %v3219
      %v3221 = vpop.f32.mrf.mxu0
      %v3222 = vadd.f32 0.0, %v3221
      %3223 = vmatmul.bf16.gmra.mxu0 %v3023
      %v3224 = vpop.f32.mrf.mxu0
      %v3225 = vadd.f32 0.0, %v3224
      %v3226 = vpop.f32.mrf.mxu0
      %v3227 = vadd.f32 0.0, %v3226
      %3228 = vmatmul.bf16.gmra.mxu0 %v3031
      %v3229 = vpop.f32.mrf.mxu0
      %v3230 = vadd.f32 0.0, %v3229
      %v3231 = vpop.f32.mrf.mxu0
      %v3232 = vadd.f32 0.0, %v3231
      %3233 = vmatmul.bf16.gmra.mxu0 %v3039
      %v3234 = vpop.f32.mrf.mxu0
      %v3235 = vadd.f32 0.0, %v3234
      %v3236 = vpop.f32.mrf.mxu0
      %v3237 = vadd.f32 0.0, %v3236
      %3238 = vmatmul.bf16.gmra.mxu0 %v3047
      %v3239 = vpop.f32.mrf.mxu0
      %v3240 = vadd.f32 0.0, %v3239
      %v3241 = vpop.f32.mrf.mxu0
      %v3242 = vadd.f32 0.0, %v3241
      %3243 = vmatmul.bf16.gmra.mxu0 %v3055
      %v3244 = vpop.f32.mrf.mxu0
      %v3245 = vadd.f32 0.0, %v3244
      %v3246 = vpop.f32.mrf.mxu0
      %v3247 = vadd.f32 0.0, %v3246
      %3248 = vmatmul.bf16.gmra.mxu0 %v3063
      %v3249 = vpop.f32.mrf.mxu0
      %v3250 = vadd.f32 0.0, %v3249
      %v3251 = vpop.f32.mrf.mxu0
      %v3252 = vadd.f32 0.0, %v3251
      %3253 = vmatmul.bf16.gmra.mxu0 %v3071
      %v3254 = vpop.f32.mrf.mxu0
      %v3255 = vadd.f32 0.0, %v3254
      %v3256 = vpop.f32.mrf.mxu0
      %v3257 = vadd.f32 0.0, %v3256
      %3258 = vmatmul.bf16.gmra.mxu0 %v3079
      %v3259 = vpop.f32.mrf.mxu0
      %v3260 = vadd.f32 0.0, %v3259
      %v3261 = vpop.f32.mrf.mxu0
      %v3262 = vadd.f32 0.0, %v3261
      %3263 = vmatmul.bf16.gmra.mxu0 %v3087
      %v3264 = vpop.f32.mrf.mxu0
      %v3265 = vadd.f32 0.0, %v3264
      %v3266 = vpop.f32.mrf.mxu0
      %v3267 = vadd.f32 0.0, %v3266
      %3268 = vmatmul.bf16.gmra.mxu0 %v3090
      %v3269 = vpop.f32.mrf.mxu0
      %v3270 = vadd.f32 0.0, %v3269
      %v3271 = vpop.f32.mrf.mxu0
      %3272 = vdwg.mxu0
      %v3273 = vadd.f32 %v2714, %v3170
      %v3274 = vadd.f32 %v2715, %v3172
      %v3275 = vadd.f32 %v2716, %v3175
      %v3276 = vadd.f32 %v2717, %v3177
      %v3277 = vadd.f32 %v2718, %v3180
      %v3278 = vadd.f32 %v2719, %v3182
      %v3279 = vadd.f32 %v2720, %v3185
      %v3280 = vadd.f32 %v2721, %v3187
      %v3281 = vadd.f32 %v2722, %v3190
      %v3282 = vadd.f32 %v2723, %v3192
      %v3283 = vadd.f32 %v2724, %v3195
      %v3284 = vadd.f32 %v2725, %v3197
      %v3285 = vadd.f32 %v2726, %v3200
      %v3286 = vadd.f32 %v2727, %v3202
      %v3287 = vadd.f32 %v2728, %v3205
      %v3288 = vadd.f32 %v2729, %v3207
      %v3289 = vadd.f32 %v2730, %v3210
      %v3290 = vadd.f32 %v2731, %v3212
      %v3291 = vadd.f32 %v2732, %v3215
      %v3292 = vadd.f32 %v2733, %v3217
      %v3293 = vadd.f32 %v2734, %v3220
      %v3294 = vadd.f32 %v2735, %v3222
      %v3295 = vadd.f32 %v2736, %v3225
      %v3296 = vadd.f32 %v2737, %v3227
      %v3297 = vadd.f32 %v2738, %v3230
      %v3298 = vadd.f32 %v2739, %v3232
      %v3299 = vadd.f32 %v2740, %v3235
      %v3300 = vadd.f32 %v2741, %v3237
      %v3301 = vadd.f32 %v2742, %v3240
      %v3302 = vadd.f32 %v2743, %v3242
      %v3303 = vadd.f32 %v2744, %v3245
      %v3304 = vadd.f32 %v2745, %v3247
      %v3305 = vadd.f32 %v2746, %v3250
      %v3306 = vadd.f32 %v2747, %v3252
      %v3307 = vadd.f32 %v2748, %v3255
      %v3308 = vadd.f32 %v2749, %v3257
      %v3309 = vadd.f32 %v2750, %v3260
      %v3310 = vadd.f32 %v2751, %v3262
      %v3311 = vadd.f32 %v2752, %v3265
      %v3312 = vadd.f32 %v2753, %v3267
      %v3313 = vadd.f32 %v2754, %v3270
      %s3314 = scalar_lea.vmem %s1, 448
      %v3315 = vld [vmem:[%s3314] sm:$0xf]
      %v3316 = vld [vmem:[%s3314 + $0x4] sm:$0xf]
      %v3317 = vld [vmem:[%s3314 + $0x8] sm:$0xf]
      %v3318 = vld [vmem:[%s3314 + $0xc] sm:$0xf]
      %v3319 = vld [vmem:[%s3314 + $0x10] sm:$0xf]
      %v3320 = vld [vmem:[%s3314 + $0x14] sm:$0xf]
      %v3321 = vld [vmem:[%s3314 + $0x18] sm:$0xf]
      %v3322 = vld [vmem:[%s3314 + $0x1c] sm:$0xf]
      %v3323 = vld [vmem:[%s3314 + $0x20] sm:$0xf]
      %v3324 = vld [vmem:[%s3314 + $0x24] sm:$0xf]
      %v3325 = vld [vmem:[%s3314 + $0x28] sm:$0xf]
      %v3326 = vld [vmem:[%s3314 + $0x2c] sm:$0xf]
      %v3327 = vld [vmem:[%s3314 + $0x30] sm:$0xf]
      %v3328 = vld [vmem:[%s3314 + $0x34] sm:$0xf]
      %v3329 = vld [vmem:[%s3314 + $0x38] sm:$0xf]
      %v3330 = vld [vmem:[%s3314 + $0x3c] sm:$0xf]
      %vm3331 = vcmask 1046528
      %v3332 = vrot.slane %v2903, 1
      %v3333 = vrot.slane %v2904, 1
      %v3334 = vsel %vm3331, %v3332, %v3333
      %v3335 = vrot.slane %v2905, 1
      %v3336 = vsel %vm3331, %v3333, %v3335
      %v3337 = vrot.slane %v2906, 1
      %v3338 = vsel %vm3331, %v3335, %v3337
      %v3339 = vrot.slane %v2907, 1
      %v3340 = vsel %vm3331, %v3337, %v3339
      %v3341 = vrot.slane %v2908, 1
      %v3342 = vsel %vm3331, %v3339, %v3341
      %v3343 = vrot.slane %v2909, 1
      %v3344 = vsel %vm3331, %v3341, %v3343
      %v3345 = vrot.slane %v2910, 1
      %v3346 = vsel %vm3331, %v3343, %v3345
      %v3347 = vrot.slane %v2911, 1
      %v3348 = vsel %vm3331, %v3345, %v3347
      %v3349 = vrot.slane %v2912, 1
      %v3350 = vsel %vm3331, %v3347, %v3349
      %v3351 = vrot.slane %v2913, 1
      %v3352 = vsel %vm3331, %v3349, %v3351
      %v3353 = vrot.slane %v2914, 1
      %v3354 = vsel %vm3331, %v3351, %v3353
      %v3355 = vrot.slane %v2915, 1
      %v3356 = vsel %vm3331, %v3353, %v3355
      %v3357 = vrot.slane %v2916, 1
      %v3358 = vsel %vm3331, %v3355, %v3357
      %v3359 = vrot.slane %v2917, 1
      %v3360 = vsel %vm3331, %v3357, %v3359
      %v3361 = vrot.slane %v2918, 1
      %v3362 = vsel %vm3331, %v3359, %v3361
      %v3363 = vrot.slane %v2919, 1
      %v3364 = vsel %vm3331, %v3361, %v3363
      %v3365 = vrot.slane %v2920, 1
      %v3366 = vsel %vm3331, %v3363, %v3365
      %v3367 = vrot.slane %v2921, 1
      %v3368 = vsel %vm3331, %v3365, %v3367
      %v3369 = vrot.slane %v2922, 1
      %v3370 = vsel %vm3331, %v3367, %v3369
      %v3371 = vrot.slane %v2923, 1
      %v3372 = vsel %vm3331, %v3369, %v3371
      %v3410 = vunpack.c.l.b16 %v3315
      %v3411 = vunpack.c.l.b16 %v3316
      %v3412 = vunpack.c.l.b16 %v3317
      %v3413 = vunpack.c.l.b16 %v3318
      %v3414 = vunpack.c.l.b16 %v3319
      %v3415 = vunpack.c.l.b16 %v3320
      %v3416 = vunpack.c.l.b16 %v3321
      %v3417 = vunpack.c.l.b16 %v3322
      %v3418 = vunpack.c.l.b16 %v3323
      %v3419 = vunpack.c.l.b16 %v3324
      %v3420 = vunpack.c.l.b16 %v3325
      %v3421 = vunpack.c.l.b16 %v3326
      %v3422 = vunpack.c.l.b16 %v3327
      %v3423 = vunpack.c.l.b16 %v3328
      %v3424 = vunpack.c.l.b16 %v3329
      %v3425 = vunpack.c.l.b16 %v3330
      %v3426 = vpack.c.b16 %v3411, %v3410
      %v3427 = vpack.c.b16 %v3413, %v3412
      %v3428 = vpack.c.b16 %v3415, %v3414
      %v3429 = vpack.c.b16 %v3417, %v3416
      %v3430 = vpack.c.b16 %v3419, %v3418
      %v3431 = vpack.c.b16 %v3421, %v3420
      %v3432 = vpack.c.b16 %v3423, %v3422
      %v3433 = vpack.c.b16 %v3425, %v3424
      %3442 = vmatpush.bf16.msra.mxu0 %v3433
      %3443 = vmatpush.bf16.msra.mxu0 %v3432
      %3444 = vmatpush.bf16.msra.mxu0 %v3431
      %3445 = vmatpush.bf16.msra.mxu0 %v3430
      %3446 = vmatpush.bf16.msra.mxu0 %v3429
      %3447 = vmatpush.bf16.msra.mxu0 %v3428
      %3448 = vmatpush.bf16.msra.mxu0 %v3427
      %3449 = vmatpush.bf16.msra.mxu0 %v3426
      %3450 = vmatmul.bf16.gmra.mxu0 %v3334
      %v3451 = vpop.f32.mrf.mxu0
      %v3452 = vadd.f32 0.0, %v3451
      %v3453 = vpop.f32.mrf.mxu0
      %v3454 = vadd.f32 0.0, %v3453
      %3455 = vmatmul.bf16.gmra.mxu0 %v3336
      %v3456 = vpop.f32.mrf.mxu0
      %v3457 = vadd.f32 0.0, %v3456
      %v3458 = vpop.f32.mrf.mxu0
      %v3459 = vadd.f32 0.0, %v3458
      %3460 = vmatmul.bf16.gmra.mxu0 %v3338
      %v3461 = vpop.f32.mrf.mxu0
      %v3462 = vadd.f32 0.0, %v3461
      %v3463 = vpop.f32.mrf.mxu0
      %v3464 = vadd.f32 0.0, %v3463
      %3465 = vmatmul.bf16.gmra.mxu0 %v3340
      %v3466 = vpop.f32.mrf.mxu0
      %v3467 = vadd.f32 0.0, %v3466
      %v3468 = vpop.f32.mrf.mxu0
      %v3469 = vadd.f32 0.0, %v3468
      %3470 = vmatmul.bf16.gmra.mxu0 %v3342
      %v3471 = vpop.f32.mrf.mxu0
      %v3472 = vadd.f32 0.0, %v3471
      %v3473 = vpop.f32.mrf.mxu0
      %v3474 = vadd.f32 0.0, %v3473
      %3475 = vmatmul.bf16.gmra.mxu0 %v3344
      %v3476 = vpop.f32.mrf.mxu0
      %v3477 = vadd.f32 0.0, %v3476
      %v3478 = vpop.f32.mrf.mxu0
      %v3479 = vadd.f32 0.0, %v3478
      %3480 = vmatmul.bf16.gmra.mxu0 %v3346
      %v3481 = vpop.f32.mrf.mxu0
      %v3482 = vadd.f32 0.0, %v3481
      %v3483 = vpop.f32.mrf.mxu0
      %v3484 = vadd.f32 0.0, %v3483
      %3485 = vmatmul.bf16.gmra.mxu0 %v3348
      %v3486 = vpop.f32.mrf.mxu0
      %v3487 = vadd.f32 0.0, %v3486
      %v3488 = vpop.f32.mrf.mxu0
      %v3489 = vadd.f32 0.0, %v3488
      %3490 = vmatmul.bf16.gmra.mxu0 %v3350
      %v3491 = vpop.f32.mrf.mxu0
      %v3492 = vadd.f32 0.0, %v3491
      %v3493 = vpop.f32.mrf.mxu0
      %v3494 = vadd.f32 0.0, %v3493
      %3495 = vmatmul.bf16.gmra.mxu0 %v3352
      %v3496 = vpop.f32.mrf.mxu0
      %v3497 = vadd.f32 0.0, %v3496
      %v3498 = vpop.f32.mrf.mxu0
      %v3499 = vadd.f32 0.0, %v3498
      %3500 = vmatmul.bf16.gmra.mxu0 %v3354
      %v3501 = vpop.f32.mrf.mxu0
      %v3502 = vadd.f32 0.0, %v3501
      %v3503 = vpop.f32.mrf.mxu0
      %v3504 = vadd.f32 0.0, %v3503
      %3505 = vmatmul.bf16.gmra.mxu0 %v3356
      %v3506 = vpop.f32.mrf.mxu0
      %v3507 = vadd.f32 0.0, %v3506
      %v3508 = vpop.f32.mrf.mxu0
      %v3509 = vadd.f32 0.0, %v3508
      %3510 = vmatmul.bf16.gmra.mxu0 %v3358
      %v3511 = vpop.f32.mrf.mxu0
      %v3512 = vadd.f32 0.0, %v3511
      %v3513 = vpop.f32.mrf.mxu0
      %v3514 = vadd.f32 0.0, %v3513
      %3515 = vmatmul.bf16.gmra.mxu0 %v3360
      %v3516 = vpop.f32.mrf.mxu0
      %v3517 = vadd.f32 0.0, %v3516
      %v3518 = vpop.f32.mrf.mxu0
      %v3519 = vadd.f32 0.0, %v3518
      %3520 = vmatmul.bf16.gmra.mxu0 %v3362
      %v3521 = vpop.f32.mrf.mxu0
      %v3522 = vadd.f32 0.0, %v3521
      %v3523 = vpop.f32.mrf.mxu0
      %v3524 = vadd.f32 0.0, %v3523
      %3525 = vmatmul.bf16.gmra.mxu0 %v3364
      %v3526 = vpop.f32.mrf.mxu0
      %v3527 = vadd.f32 0.0, %v3526
      %v3528 = vpop.f32.mrf.mxu0
      %v3529 = vadd.f32 0.0, %v3528
      %3530 = vmatmul.bf16.gmra.mxu0 %v3366
      %v3531 = vpop.f32.mrf.mxu0
      %v3532 = vadd.f32 0.0, %v3531
      %v3533 = vpop.f32.mrf.mxu0
      %v3534 = vadd.f32 0.0, %v3533
      %3535 = vmatmul.bf16.gmra.mxu0 %v3368
      %v3536 = vpop.f32.mrf.mxu0
      %v3537 = vadd.f32 0.0, %v3536
      %v3538 = vpop.f32.mrf.mxu0
      %v3539 = vadd.f32 0.0, %v3538
      %3540 = vmatmul.bf16.gmra.mxu0 %v3370
      %v3541 = vpop.f32.mrf.mxu0
      %v3542 = vadd.f32 0.0, %v3541
      %v3543 = vpop.f32.mrf.mxu0
      %v3544 = vadd.f32 0.0, %v3543
      %3545 = vmatmul.bf16.gmra.mxu0 %v3372
      %v3546 = vpop.f32.mrf.mxu0
      %v3547 = vadd.f32 0.0, %v3546
      %v3548 = vpop.f32.mrf.mxu0
      %v3549 = vadd.f32 0.0, %v3548
      %3550 = vmatmul.bf16.gmra.mxu0 %v3371
      %v3551 = vpop.f32.mrf.mxu0
      %v3552 = vadd.f32 0.0, %v3551
      %v3553 = vpop.f32.mrf.mxu0
      %3554 = vdwg.mxu0
      %v3555 = vadd.f32 %v3273, %v3452
      %v3556 = vadd.f32 %v3274, %v3454
      %v3557 = vadd.f32 %v3275, %v3457
      %v3558 = vadd.f32 %v3276, %v3459
      %v3559 = vadd.f32 %v3277, %v3462
      %v3560 = vadd.f32 %v3278, %v3464
      %v3561 = vadd.f32 %v3279, %v3467
      %v3562 = vadd.f32 %v3280, %v3469
      %v3563 = vadd.f32 %v3281, %v3472
      %v3564 = vadd.f32 %v3282, %v3474
      %v3565 = vadd.f32 %v3283, %v3477
      %v3566 = vadd.f32 %v3284, %v3479
      %v3567 = vadd.f32 %v3285, %v3482
      %v3568 = vadd.f32 %v3286, %v3484
      %v3569 = vadd.f32 %v3287, %v3487
      %v3570 = vadd.f32 %v3288, %v3489
      %v3571 = vadd.f32 %v3289, %v3492
      %v3572 = vadd.f32 %v3290, %v3494
      %v3573 = vadd.f32 %v3291, %v3497
      %v3574 = vadd.f32 %v3292, %v3499
      %v3575 = vadd.f32 %v3293, %v3502
      %v3576 = vadd.f32 %v3294, %v3504
      %v3577 = vadd.f32 %v3295, %v3507
      %v3578 = vadd.f32 %v3296, %v3509
      %v3579 = vadd.f32 %v3297, %v3512
      %v3580 = vadd.f32 %v3298, %v3514
      %v3581 = vadd.f32 %v3299, %v3517
      %v3582 = vadd.f32 %v3300, %v3519
      %v3583 = vadd.f32 %v3301, %v3522
      %v3584 = vadd.f32 %v3302, %v3524
      %v3585 = vadd.f32 %v3303, %v3527
      %v3586 = vadd.f32 %v3304, %v3529
      %v3587 = vadd.f32 %v3305, %v3532
      %v3588 = vadd.f32 %v3306, %v3534
      %v3589 = vadd.f32 %v3307, %v3537
      %v3590 = vadd.f32 %v3308, %v3539
      %v3591 = vadd.f32 %v3309, %v3542
      %v3592 = vadd.f32 %v3310, %v3544
      %v3593 = vadd.f32 %v3311, %v3547
      %v3594 = vadd.f32 %v3312, %v3549
      %v3595 = vadd.f32 %v3313, %v3552
      %s3596 = scalar_lea.vmem %s1, 512
      %v3597 = vld [vmem:[%s3596] sm:$0xf]
      %v3598 = vld [vmem:[%s3596 + $0x4] sm:$0xf]
      %v3599 = vld [vmem:[%s3596 + $0x8] sm:$0xf]
      %v3600 = vld [vmem:[%s3596 + $0xc] sm:$0xf]
      %v3601 = vld [vmem:[%s3596 + $0x10] sm:$0xf]
      %v3602 = vld [vmem:[%s3596 + $0x14] sm:$0xf]
      %v3603 = vld [vmem:[%s3596 + $0x18] sm:$0xf]
      %v3604 = vld [vmem:[%s3596 + $0x1c] sm:$0xf]
      %v3605 = vld [vmem:[%s3596 + $0x20] sm:$0xf]
      %v3606 = vld [vmem:[%s3596 + $0x24] sm:$0xf]
      %v3607 = vld [vmem:[%s3596 + $0x28] sm:$0xf]
      %v3608 = vld [vmem:[%s3596 + $0x2c] sm:$0xf]
      %v3609 = vld [vmem:[%s3596 + $0x30] sm:$0xf]
      %v3610 = vld [vmem:[%s3596 + $0x34] sm:$0xf]
      %v3611 = vld [vmem:[%s3596 + $0x38] sm:$0xf]
      %v3612 = vld [vmem:[%s3596 + $0x3c] sm:$0xf]
      %vm3613 = vsmask.f32 6400
      %v3614 = vrot.slane %v2925, 1
      %v3615 = vrot.slane %v2927, 2
      %v3616 = vor.u32 %v3614, %v3615
      %v3617 = vrot.slane %v2936, 1
      %v3618 = vrot.slane %v2932, 2
      %v3619 = vor.u32 %v3617, %v3618
      %v3620 = vsel %vm3613, %v3616, %v3619
      %v3621 = vrot.slane %v2944, 1
      %v3622 = vrot.slane %v2940, 2
      %v3623 = vor.u32 %v3621, %v3622
      %v3624 = vsel %vm3613, %v3619, %v3623
      %v3625 = vrot.slane %v2952, 1
      %v3626 = vrot.slane %v2948, 2
      %v3627 = vor.u32 %v3625, %v3626
      %v3628 = vsel %vm3613, %v3623, %v3627
      %v3629 = vrot.slane %v2960, 1
      %v3630 = vrot.slane %v2956, 2
      %v3631 = vor.u32 %v3629, %v3630
      %v3632 = vsel %vm3613, %v3627, %v3631
      %v3633 = vrot.slane %v2968, 1
      %v3634 = vrot.slane %v2964, 2
      %v3635 = vor.u32 %v3633, %v3634
      %v3636 = vsel %vm3613, %v3631, %v3635
      %v3637 = vrot.slane %v2976, 1
      %v3638 = vrot.slane %v2972, 2
      %v3639 = vor.u32 %v3637, %v3638
      %v3640 = vsel %vm3613, %v3635, %v3639
      %v3641 = vrot.slane %v2984, 1
      %v3642 = vrot.slane %v2980, 2
      %v3643 = vor.u32 %v3641, %v3642
      %v3644 = vsel %vm3613, %v3639, %v3643
      %v3645 = vrot.slane %v2992, 1
      %v3646 = vrot.slane %v2988, 2
      %v3647 = vor.u32 %v3645, %v3646
      %v3648 = vsel %vm3613, %v3643, %v3647
      %v3649 = vrot.slane %v3000, 1
      %v3650 = vrot.slane %v2996, 2
      %v3651 = vor.u32 %v3649, %v3650
      %v3652 = vsel %vm3613, %v3647, %v3651
      %v3653 = vrot.slane %v3008, 1
      %v3654 = vrot.slane %v3004, 2
      %v3655 = vor.u32 %v3653, %v3654
      %v3656 = vsel %vm3613, %v3651, %v3655
      %v3657 = vrot.slane %v3016, 1
      %v3658 = vrot.slane %v3012, 2
      %v3659 = vor.u32 %v3657, %v3658
      %v3660 = vsel %vm3613, %v3655, %v3659
      %v3661 = vrot.slane %v3024, 1
      %v3662 = vrot.slane %v3020, 2
      %v3663 = vor.u32 %v3661, %v3662
      %v3664 = vsel %vm3613, %v3659, %v3663
      %v3665 = vrot.slane %v3032, 1
      %v3666 = vrot.slane %v3028, 2
      %v3667 = vor.u32 %v3665, %v3666
      %v3668 = vsel %vm3613, %v3663, %v3667
      %v3669 = vrot.slane %v3040, 1
      %v3670 = vrot.slane %v3036, 2
      %v3671 = vor.u32 %v3669, %v3670
      %v3672 = vsel %vm3613, %v3667, %v3671
      %v3673 = vrot.slane %v3048, 1
      %v3674 = vrot.slane %v3044, 2
      %v3675 = vor.u32 %v3673, %v3674
      %v3676 = vsel %vm3613, %v3671, %v3675
      %v3677 = vrot.slane %v3056, 1
      %v3678 = vrot.slane %v3052, 2
      %v3679 = vor.u32 %v3677, %v3678
      %v3680 = vsel %vm3613, %v3675, %v3679
      %v3681 = vrot.slane %v3064, 1
      %v3682 = vrot.slane %v3060, 2
      %v3683 = vor.u32 %v3681, %v3682
      %v3684 = vsel %vm3613, %v3679, %v3683
      %v3685 = vrot.slane %v3072, 1
      %v3686 = vrot.slane %v3068, 2
      %v3687 = vor.u32 %v3685, %v3686
      %v3688 = vsel %vm3613, %v3683, %v3687
      %v3689 = vrot.slane %v3080, 1
      %v3690 = vrot.slane %v3076, 2
      %v3691 = vor.u32 %v3689, %v3690
      %v3692 = vsel %vm3613, %v3687, %v3691
      %v3693 = vrot.slane %v3088, 1
      %v3694 = vrot.slane %v3084, 2
      %v3695 = vor.u32 %v3693, %v3694
      %v3696 = vsel %vm3613, %v3691, %v3695
      %v3734 = vunpack.c.l.b16 %v3597
      %v3735 = vunpack.c.l.b16 %v3598
      %v3736 = vunpack.c.l.b16 %v3599
      %v3737 = vunpack.c.l.b16 %v3600
      %v3738 = vunpack.c.l.b16 %v3601
      %v3739 = vunpack.c.l.b16 %v3602
      %v3740 = vunpack.c.l.b16 %v3603
      %v3741 = vunpack.c.l.b16 %v3604
      %v3742 = vunpack.c.l.b16 %v3605
      %v3743 = vunpack.c.l.b16 %v3606
      %v3744 = vunpack.c.l.b16 %v3607
      %v3745 = vunpack.c.l.b16 %v3608
      %v3746 = vunpack.c.l.b16 %v3609
      %v3747 = vunpack.c.l.b16 %v3610
      %v3748 = vunpack.c.l.b16 %v3611
      %v3749 = vunpack.c.l.b16 %v3612
      %v3750 = vpack.c.b16 %v3735, %v3734
      %v3751 = vpack.c.b16 %v3737, %v3736
      %v3752 = vpack.c.b16 %v3739, %v3738
      %v3753 = vpack.c.b16 %v3741, %v3740
      %v3754 = vpack.c.b16 %v3743, %v3742
      %v3755 = vpack.c.b16 %v3745, %v3744
      %v3756 = vpack.c.b16 %v3747, %v3746
      %v3757 = vpack.c.b16 %v3749, %v3748
      %3766 = vmatpush.bf16.msra.mxu0 %v3757
      %3767 = vmatpush.bf16.msra.mxu0 %v3756
      %3768 = vmatpush.bf16.msra.mxu0 %v3755
      %3769 = vmatpush.bf16.msra.mxu0 %v3754
      %3770 = vmatpush.bf16.msra.mxu0 %v3753
      %3771 = vmatpush.bf16.msra.mxu0 %v3752
      %3772 = vmatpush.bf16.msra.mxu0 %v3751
      %3773 = vmatpush.bf16.msra.mxu0 %v3750
      %3774 = vmatmul.bf16.gmra.mxu0 %v3620
      %v3775 = vpop.f32.mrf.mxu0
      %v3776 = vadd.f32 0.0, %v3775
      %v3777 = vpop.f32.mrf.mxu0
      %v3778 = vadd.f32 0.0, %v3777
      %3779 = vmatmul.bf16.gmra.mxu0 %v3624
      %v3780 = vpop.f32.mrf.mxu0
      %v3781 = vadd.f32 0.0, %v3780
      %v3782 = vpop.f32.mrf.mxu0
      %v3783 = vadd.f32 0.0, %v3782
      %3784 = vmatmul.bf16.gmra.mxu0 %v3628
      %v3785 = vpop.f32.mrf.mxu0
      %v3786 = vadd.f32 0.0, %v3785
      %v3787 = vpop.f32.mrf.mxu0
      %v3788 = vadd.f32 0.0, %v3787
      %3789 = vmatmul.bf16.gmra.mxu0 %v3632
      %v3790 = vpop.f32.mrf.mxu0
      %v3791 = vadd.f32 0.0, %v3790
      %v3792 = vpop.f32.mrf.mxu0
      %v3793 = vadd.f32 0.0, %v3792
      %3794 = vmatmul.bf16.gmra.mxu0 %v3636
      %v3795 = vpop.f32.mrf.mxu0
      %v3796 = vadd.f32 0.0, %v3795
      %v3797 = vpop.f32.mrf.mxu0
      %v3798 = vadd.f32 0.0, %v3797
      %3799 = vmatmul.bf16.gmra.mxu0 %v3640
      %v3800 = vpop.f32.mrf.mxu0
      %v3801 = vadd.f32 0.0, %v3800
      %v3802 = vpop.f32.mrf.mxu0
      %v3803 = vadd.f32 0.0, %v3802
      %3804 = vmatmul.bf16.gmra.mxu0 %v3644
      %v3805 = vpop.f32.mrf.mxu0
      %v3806 = vadd.f32 0.0, %v3805
      %v3807 = vpop.f32.mrf.mxu0
      %v3808 = vadd.f32 0.0, %v3807
      %3809 = vmatmul.bf16.gmra.mxu0 %v3648
      %v3810 = vpop.f32.mrf.mxu0
      %v3811 = vadd.f32 0.0, %v3810
      %v3812 = vpop.f32.mrf.mxu0
      %v3813 = vadd.f32 0.0, %v3812
      %3814 = vmatmul.bf16.gmra.mxu0 %v3652
      %v3815 = vpop.f32.mrf.mxu0
      %v3816 = vadd.f32 0.0, %v3815
      %v3817 = vpop.f32.mrf.mxu0
      %v3818 = vadd.f32 0.0, %v3817
      %3819 = vmatmul.bf16.gmra.mxu0 %v3656
      %v3820 = vpop.f32.mrf.mxu0
      %v3821 = vadd.f32 0.0, %v3820
      %v3822 = vpop.f32.mrf.mxu0
      %v3823 = vadd.f32 0.0, %v3822
      %3824 = vmatmul.bf16.gmra.mxu0 %v3660
      %v3825 = vpop.f32.mrf.mxu0
      %v3826 = vadd.f32 0.0, %v3825
      %v3827 = vpop.f32.mrf.mxu0
      %v3828 = vadd.f32 0.0, %v3827
      %3829 = vmatmul.bf16.gmra.mxu0 %v3664
      %v3830 = vpop.f32.mrf.mxu0
      %v3831 = vadd.f32 0.0, %v3830
      %v3832 = vpop.f32.mrf.mxu0
      %v3833 = vadd.f32 0.0, %v3832
      %3834 = vmatmul.bf16.gmra.mxu0 %v3668
      %v3835 = vpop.f32.mrf.mxu0
      %v3836 = vadd.f32 0.0, %v3835
      %v3837 = vpop.f32.mrf.mxu0
      %v3838 = vadd.f32 0.0, %v3837
      %3839 = vmatmul.bf16.gmra.mxu0 %v3672
      %v3840 = vpop.f32.mrf.mxu0
      %v3841 = vadd.f32 0.0, %v3840
      %v3842 = vpop.f32.mrf.mxu0
      %v3843 = vadd.f32 0.0, %v3842
      %3844 = vmatmul.bf16.gmra.mxu0 %v3676
      %v3845 = vpop.f32.mrf.mxu0
      %v3846 = vadd.f32 0.0, %v3845
      %v3847 = vpop.f32.mrf.mxu0
      %v3848 = vadd.f32 0.0, %v3847
      %3849 = vmatmul.bf16.gmra.mxu0 %v3680
      %v3850 = vpop.f32.mrf.mxu0
      %v3851 = vadd.f32 0.0, %v3850
      %v3852 = vpop.f32.mrf.mxu0
      %v3853 = vadd.f32 0.0, %v3852
      %3854 = vmatmul.bf16.gmra.mxu0 %v3684
      %v3855 = vpop.f32.mrf.mxu0
      %v3856 = vadd.f32 0.0, %v3855
      %v3857 = vpop.f32.mrf.mxu0
      %v3858 = vadd.f32 0.0, %v3857
      %3859 = vmatmul.bf16.gmra.mxu0 %v3688
      %v3860 = vpop.f32.mrf.mxu0
      %v3861 = vadd.f32 0.0, %v3860
      %v3862 = vpop.f32.mrf.mxu0
      %v3863 = vadd.f32 0.0, %v3862
      %3864 = vmatmul.bf16.gmra.mxu0 %v3692
      %v3865 = vpop.f32.mrf.mxu0
      %v3866 = vadd.f32 0.0, %v3865
      %v3867 = vpop.f32.mrf.mxu0
      %v3868 = vadd.f32 0.0, %v3867
      %3869 = vmatmul.bf16.gmra.mxu0 %v3696
      %v3870 = vpop.f32.mrf.mxu0
      %v3871 = vadd.f32 0.0, %v3870
      %v3872 = vpop.f32.mrf.mxu0
      %v3873 = vadd.f32 0.0, %v3872
      %3874 = vmatmul.bf16.gmra.mxu0 %v3695
      %v3875 = vpop.f32.mrf.mxu0
      %v3876 = vadd.f32 0.0, %v3875
      %v3877 = vpop.f32.mrf.mxu0
      %3878 = vdwg.mxu0
      %v3879 = vadd.f32 %v3555, %v3776
      %v3880 = vadd.f32 %v3556, %v3778
      %v3881 = vadd.f32 %v3557, %v3781
      %v3882 = vadd.f32 %v3558, %v3783
      %v3883 = vadd.f32 %v3559, %v3786
      %v3884 = vadd.f32 %v3560, %v3788
      %v3885 = vadd.f32 %v3561, %v3791
      %v3886 = vadd.f32 %v3562, %v3793
      %v3887 = vadd.f32 %v3563, %v3796
      %v3888 = vadd.f32 %v3564, %v3798
      %v3889 = vadd.f32 %v3565, %v3801
      %v3890 = vadd.f32 %v3566, %v3803
      %v3891 = vadd.f32 %v3567, %v3806
      %v3892 = vadd.f32 %v3568, %v3808
      %v3893 = vadd.f32 %v3569, %v3811
      %v3894 = vadd.f32 %v3570, %v3813
      %v3895 = vadd.f32 %v3571, %v3816
      %v3896 = vadd.f32 %v3572, %v3818
      %v3897 = vadd.f32 %v3573, %v3821
      %v3898 = vadd.f32 %v3574, %v3823
      %v3899 = vadd.f32 %v3575, %v3826
      %v3900 = vadd.f32 %v3576, %v3828
      %v3901 = vadd.f32 %v3577, %v3831
      %v3902 = vadd.f32 %v3578, %v3833
      %v3903 = vadd.f32 %v3579, %v3836
      %v3904 = vadd.f32 %v3580, %v3838
      %v3905 = vadd.f32 %v3581, %v3841
      %v3906 = vadd.f32 %v3582, %v3843
      %v3907 = vadd.f32 %v3583, %v3846
      %v3908 = vadd.f32 %v3584, %v3848
      %v3909 = vadd.f32 %v3585, %v3851
      %v3910 = vadd.f32 %v3586, %v3853
      %v3911 = vadd.f32 %v3587, %v3856
      %v3912 = vadd.f32 %v3588, %v3858
      %v3913 = vadd.f32 %v3589, %v3861
      %v3914 = vadd.f32 %v3590, %v3863
      %v3915 = vadd.f32 %v3591, %v3866
      %v3916 = vadd.f32 %v3592, %v3868
      %v3917 = vadd.f32 %v3593, %v3871
      %v3918 = vadd.f32 %v3594, %v3873
      %v3919 = vadd.f32 %v3595, %v3876
      %v3920 = vpack.c.bf16 %v3879, %v3879
      %v3921 = vpack.c.bf16 %v3880, %v3880
      %v3922 = vpack.c.bf16 %v3881, %v3881
      %v3923 = vpack.c.bf16 %v3882, %v3882
      %v3924 = vpack.c.bf16 %v3883, %v3883
      %v3925 = vpack.c.bf16 %v3884, %v3884
      %v3926 = vpack.c.bf16 %v3885, %v3885
      %v3927 = vpack.c.bf16 %v3886, %v3886
      %v3928 = vpack.c.bf16 %v3887, %v3887
      %v3929 = vpack.c.bf16 %v3888, %v3888
      %v3930 = vpack.c.bf16 %v3889, %v3889
      %v3931 = vpack.c.bf16 %v3890, %v3890
      %v3932 = vpack.c.bf16 %v3891, %v3891
      %v3933 = vpack.c.bf16 %v3892, %v3892
      %v3934 = vpack.c.bf16 %v3893, %v3893
      %v3935 = vpack.c.bf16 %v3894, %v3894
      %v3936 = vpack.c.bf16 %v3895, %v3895
      %v3937 = vpack.c.bf16 %v3896, %v3896
      %v3938 = vpack.c.bf16 %v3897, %v3897
      %v3939 = vpack.c.bf16 %v3898, %v3898
      %v3940 = vpack.c.bf16 %v3899, %v3899
      %v3941 = vpack.c.bf16 %v3900, %v3900
      %v3942 = vpack.c.bf16 %v3901, %v3901
      %v3943 = vpack.c.bf16 %v3902, %v3902
      %v3944 = vpack.c.bf16 %v3903, %v3903
      %v3945 = vpack.c.bf16 %v3904, %v3904
      %v3946 = vpack.c.bf16 %v3905, %v3905
      %v3947 = vpack.c.bf16 %v3906, %v3906
      %v3948 = vpack.c.bf16 %v3907, %v3907
      %v3949 = vpack.c.bf16 %v3908, %v3908
      %v3950 = vpack.c.bf16 %v3909, %v3909
      %v3951 = vpack.c.bf16 %v3910, %v3910
      %v3952 = vpack.c.bf16 %v3911, %v3911
      %v3953 = vpack.c.bf16 %v3912, %v3912
      %v3954 = vpack.c.bf16 %v3913, %v3913
      %v3955 = vpack.c.bf16 %v3914, %v3914
      %v3956 = vpack.c.bf16 %v3915, %v3915
      %v3957 = vpack.c.bf16 %v3916, %v3916
      %v3958 = vpack.c.bf16 %v3917, %v3917
      %v3959 = vpack.c.bf16 %v3918, %v3918
      %v3960 = vpack.c.bf16 %v3919, %v3919
      %3961 = vst [vmem:[%s260] sm:$0xf] %v3920
      %3962 = vst [vmem:[%s260 + $0x4] sm:$0xf] %v3921
      %3963 = vst [vmem:[%s260 + $0x8] sm:$0xf] %v3922
      %3964 = vst [vmem:[%s260 + $0xc] sm:$0xf] %v3923
      %3965 = vst [vmem:[%s260 + $0x10] sm:$0xf] %v3924
      %3966 = vst [vmem:[%s260 + $0x14] sm:$0xf] %v3925
      %3967 = vst [vmem:[%s260 + $0x18] sm:$0xf] %v3926
      %3968 = vst [vmem:[%s260 + $0x1c] sm:$0xf] %v3927
      %3969 = vst [vmem:[%s260 + $0x20] sm:$0xf] %v3928
      %3970 = vst [vmem:[%s260 + $0x24] sm:$0xf] %v3929
      %3971 = vst [vmem:[%s260 + $0x28] sm:$0xf] %v3930
      %3972 = vst [vmem:[%s260 + $0x2c] sm:$0xf] %v3931
      %3973 = vst [vmem:[%s260 + $0x30] sm:$0xf] %v3932
      %3974 = vst [vmem:[%s260 + $0x34] sm:$0xf] %v3933
      %3975 = vst [vmem:[%s260 + $0x38] sm:$0xf] %v3934
      %3976 = vst [vmem:[%s260 + $0x3c] sm:$0xf] %v3935
      %3977 = vst [vmem:[%s260 + $0x40] sm:$0xf] %v3936
      %3978 = vst [vmem:[%s260 + $0x44] sm:$0xf] %v3937
      %3979 = vst [vmem:[%s260 + $0x48] sm:$0xf] %v3938
      %3980 = vst [vmem:[%s260 + $0x4c] sm:$0xf] %v3939
      %3981 = vst [vmem:[%s260 + $0x50] sm:$0xf] %v3940
      %3982 = vst [vmem:[%s260 + $0x54] sm:$0xf] %v3941
      %3983 = vst [vmem:[%s260 + $0x58] sm:$0xf] %v3942
      %3984 = vst [vmem:[%s260 + $0x5c] sm:$0xf] %v3943
      %3985 = vst [vmem:[%s260 + $0x60] sm:$0xf] %v3944
      %3986 = vst [vmem:[%s260 + $0x64] sm:$0xf] %v3945
      %3987 = vst [vmem:[%s260 + $0x68] sm:$0xf] %v3946
      %3988 = vst [vmem:[%s260 + $0x6c] sm:$0xf] %v3947
      %3989 = vst [vmem:[%s260 + $0x70] sm:$0xf] %v3948
      %3990 = vst [vmem:[%s260 + $0x74] sm:$0xf] %v3949
      %3991 = vst [vmem:[%s260 + $0x78] sm:$0xf] %v3950
      %3992 = vst [vmem:[%s260 + $0x7c] sm:$0xf] %v3951
      %3993 = vst [vmem:[%s260 + $0x80] sm:$0xf] %v3952
      %3994 = vst [vmem:[%s260 + $0x84] sm:$0xf] %v3953
      %3995 = vst [vmem:[%s260 + $0x88] sm:$0xf] %v3954
      %3996 = vst [vmem:[%s260 + $0x8c] sm:$0xf] %v3955
      %3997 = vst [vmem:[%s260 + $0x90] sm:$0xf] %v3956
      %3998 = vst [vmem:[%s260 + $0x94] sm:$0xf] %v3957
      %3999 = vst [vmem:[%s260 + $0x98] sm:$0xf] %v3958
      %4000 = vst [vmem:[%s260 + $0x9c] sm:$0xf] %v3959
      %4001 = vst [vmem:[%s260 + $0xa0] sm:$0xf] %v3960
      %v4002 = vld [vmem:[%s249] sm:$0xff]
      %v4003 = vld [vmem:[%s249 + $0x8] sm:$0xff]
      %v4004 = vld [vmem:[%s249 + $0x10] sm:$0xff]
      %v4005 = vld [vmem:[%s249 + $0x18] sm:$0xff]
      %v4006 = vld [vmem:[%s249 + $0x20] sm:$0xff]
      %v4007 = vld [vmem:[%s249 + $0x28] sm:$0xff]
      %v4008 = vld [vmem:[%s249 + $0x30] sm:$0xff]
      %v4009 = vld [vmem:[%s249 + $0x38] sm:$0xff]
      %v4010 = vld [vmem:[%s249 + $0x40] sm:$0xff]
      %v4011 = vld [vmem:[%s249 + $0x48] sm:$0xff]
      %v4012 = vld [vmem:[%s249 + $0x50] sm:$0xff]
      %v4013 = vld [vmem:[%s249 + $0x58] sm:$0xff]
      %v4014 = vld [vmem:[%s249 + $0x60] sm:$0xff]
      %v4015 = vld [vmem:[%s249 + $0x68] sm:$0xff]
      %v4016 = vld [vmem:[%s249 + $0x70] sm:$0xff]
      %v4017 = vld [vmem:[%s249 + $0x78] sm:$0xff]
      %v4018 = vld [vmem:[%s249 + $0x80] sm:$0xff]
      %v4019 = vld [vmem:[%s249 + $0x88] sm:$0xff]
      %v4020 = vld [vmem:[%s249 + $0x90] sm:$0xff]
      %v4021 = vld [vmem:[%s249 + $0x98] sm:$0xff]
      %v4022 = vld [vmem:[%s249 + $0xa0] sm:$0xff]
      %v4023 = vld [vmem:[%s249 + $0xa8] sm:$0xff]
      %v4024 = vld [vmem:[%s249 + $0xb0] sm:$0xff]
      %v4025 = vld [vmem:[%s249 + $0xb8] sm:$0xff]
      %v4026 = vld [vmem:[%s249 + $0xc0] sm:$0xff]
      %v4027 = vld [vmem:[%s249 + $0xc8] sm:$0xff]
      %v4028 = vld [vmem:[%s249 + $0xd0] sm:$0xff]
      %v4029 = vld [vmem:[%s249 + $0xd8] sm:$0xff]
      %v4030 = vld [vmem:[%s249 + $0xe0] sm:$0xff]
      %v4031 = vld [vmem:[%s249 + $0xe8] sm:$0xff]
      %v4032 = vld [vmem:[%s249 + $0xf0] sm:$0xff]
      %v4033 = vld [vmem:[%s249 + $0xf8] sm:$0xff]
      %v4034 = vld [vmem:[%s249 + $0x100] sm:$0xff]
      %v4035 = vld [vmem:[%s249 + $0x108] sm:$0xff]
      %v4036 = vld [vmem:[%s249 + $0x110] sm:$0xff]
      %v4037 = vld [vmem:[%s249 + $0x118] sm:$0xff]
      %v4038 = vld [vmem:[%s249 + $0x120] sm:$0xff]
      %v4039 = vld [vmem:[%s249 + $0x128] sm:$0xff]
      %v4040 = vld [vmem:[%s249 + $0x130] sm:$0xff]
      %v4041 = vld [vmem:[%s249 + $0x138] sm:$0xff]
      %v4042 = vld [vmem:[%s249 + $0x140] sm:$0xff]
      %4044 = vset.pattern.permute.xlu0 0
      %4045 = vperm.xlu0 %4044, %v4002
      %v4046 = vpop.permute.xlu0 %4045
      %4049 = vset.pattern.permute.xlu0 0
      %4050 = vperm.xlu0 %4049, %v4003
      %v4051 = vpop.permute.xlu0 %4050
      %4054 = vset.pattern.permute.xlu0 0
      %4055 = vperm.xlu0 %4054, %v4004
      %v4056 = vpop.permute.xlu0 %4055
      %4059 = vset.pattern.permute.xlu0 0
      %4060 = vperm.xlu0 %4059, %v4005
      %v4061 = vpop.permute.xlu0 %4060
      %4064 = vset.pattern.permute.xlu0 0
      %4065 = vperm.xlu0 %4064, %v4006
      %v4066 = vpop.permute.xlu0 %4065
      %4069 = vset.pattern.permute.xlu0 0
      %4070 = vperm.xlu0 %4069, %v4007
      %v4071 = vpop.permute.xlu0 %4070
      %4074 = vset.pattern.permute.xlu0 0
      %4075 = vperm.xlu0 %4074, %v4008
      %v4076 = vpop.permute.xlu0 %4075
      %4079 = vset.pattern.permute.xlu0 0
      %4080 = vperm.xlu0 %4079, %v4009
      %v4081 = vpop.permute.xlu0 %4080
      %4084 = vset.pattern.permute.xlu0 0
      %4085 = vperm.xlu0 %4084, %v4010
      %v4086 = vpop.permute.xlu0 %4085
      %4089 = vset.pattern.permute.xlu0 0
      %4090 = vperm.xlu0 %4089, %v4011
      %v4091 = vpop.permute.xlu0 %4090
      %4094 = vset.pattern.permute.xlu0 0
      %4095 = vperm.xlu0 %4094, %v4012
      %v4096 = vpop.permute.xlu0 %4095
      %4099 = vset.pattern.permute.xlu0 0
      %4100 = vperm.xlu0 %4099, %v4013
      %v4101 = vpop.permute.xlu0 %4100
      %4104 = vset.pattern.permute.xlu0 0
      %4105 = vperm.xlu0 %4104, %v4014
      %v4106 = vpop.permute.xlu0 %4105
      %4109 = vset.pattern.permute.xlu0 0
      %4110 = vperm.xlu0 %4109, %v4015
      %v4111 = vpop.permute.xlu0 %4110
      %4114 = vset.pattern.permute.xlu0 0
      %4115 = vperm.xlu0 %4114, %v4016
      %v4116 = vpop.permute.xlu0 %4115
      %4119 = vset.pattern.permute.xlu0 0
      %4120 = vperm.xlu0 %4119, %v4017
      %v4121 = vpop.permute.xlu0 %4120
      %4124 = vset.pattern.permute.xlu0 0
      %4125 = vperm.xlu0 %4124, %v4018
      %v4126 = vpop.permute.xlu0 %4125
      %4129 = vset.pattern.permute.xlu0 0
      %4130 = vperm.xlu0 %4129, %v4019
      %v4131 = vpop.permute.xlu0 %4130
      %4134 = vset.pattern.permute.xlu0 0
      %4135 = vperm.xlu0 %4134, %v4020
      %v4136 = vpop.permute.xlu0 %4135
      %4139 = vset.pattern.permute.xlu0 0
      %4140 = vperm.xlu0 %4139, %v4021
      %v4141 = vpop.permute.xlu0 %4140
      %4144 = vset.pattern.permute.xlu0 0
      %4145 = vperm.xlu0 %4144, %v4022
      %v4146 = vpop.permute.xlu0 %4145
      %4149 = vset.pattern.permute.xlu0 0
      %4150 = vperm.xlu0 %4149, %v4023
      %v4151 = vpop.permute.xlu0 %4150
      %4154 = vset.pattern.permute.xlu0 0
      %4155 = vperm.xlu0 %4154, %v4024
      %v4156 = vpop.permute.xlu0 %4155
      %4159 = vset.pattern.permute.xlu0 0
      %4160 = vperm.xlu0 %4159, %v4025
      %v4161 = vpop.permute.xlu0 %4160
      %4164 = vset.pattern.permute.xlu0 0
      %4165 = vperm.xlu0 %4164, %v4026
      %v4166 = vpop.permute.xlu0 %4165
      %4169 = vset.pattern.permute.xlu0 0
      %4170 = vperm.xlu0 %4169, %v4027
      %v4171 = vpop.permute.xlu0 %4170
      %4174 = vset.pattern.permute.xlu0 0
      %4175 = vperm.xlu0 %4174, %v4028
      %v4176 = vpop.permute.xlu0 %4175
      %4179 = vset.pattern.permute.xlu0 0
      %4180 = vperm.xlu0 %4179, %v4029
      %v4181 = vpop.permute.xlu0 %4180
      %4184 = vset.pattern.permute.xlu0 0
      %4185 = vperm.xlu0 %4184, %v4030
      %v4186 = vpop.permute.xlu0 %4185
      %4189 = vset.pattern.permute.xlu0 0
      %4190 = vperm.xlu0 %4189, %v4031
      %v4191 = vpop.permute.xlu0 %4190
      %4194 = vset.pattern.permute.xlu0 0
      %4195 = vperm.xlu0 %4194, %v4032
      %v4196 = vpop.permute.xlu0 %4195
      %4199 = vset.pattern.permute.xlu0 0
      %4200 = vperm.xlu0 %4199, %v4033
      %v4201 = vpop.permute.xlu0 %4200
      %4204 = vset.pattern.permute.xlu0 0
      %4205 = vperm.xlu0 %4204, %v4034
      %v4206 = vpop.permute.xlu0 %4205
      %4209 = vset.pattern.permute.xlu0 0
      %4210 = vperm.xlu0 %4209, %v4035
      %v4211 = vpop.permute.xlu0 %4210
      %4214 = vset.pattern.permute.xlu0 0
      %4215 = vperm.xlu0 %4214, %v4036
      %v4216 = vpop.permute.xlu0 %4215
      %4219 = vset.pattern.permute.xlu0 0
      %4220 = vperm.xlu0 %4219, %v4037
      %v4221 = vpop.permute.xlu0 %4220
      %4224 = vset.pattern.permute.xlu0 0
      %4225 = vperm.xlu0 %4224, %v4038
      %v4226 = vpop.permute.xlu0 %4225
      %4229 = vset.pattern.permute.xlu0 0
      %4230 = vperm.xlu0 %4229, %v4039
      %v4231 = vpop.permute.xlu0 %4230
      %4234 = vset.pattern.permute.xlu0 0
      %4235 = vperm.xlu0 %4234, %v4040
      %v4236 = vpop.permute.xlu0 %4235
      %4239 = vset.pattern.permute.xlu0 0
      %4240 = vperm.xlu0 %4239, %v4041
      %v4241 = vpop.permute.xlu0 %4240
      %4244 = vset.pattern.permute.xlu0 0
      %4245 = vperm.xlu0 %4244, %v4042
      %v4246 = vpop.permute.xlu0 %4245
      %v4248 = vmul.f32 %v3879, %v4046
      %v4249 = vmul.f32 %v3880, %v4051
      %v4250 = vmul.f32 %v3881, %v4056
      %v4251 = vmul.f32 %v3882, %v4061
      %v4252 = vmul.f32 %v3883, %v4066
      %v4253 = vmul.f32 %v3884, %v4071
      %v4254 = vmul.f32 %v3885, %v4076
      %v4255 = vmul.f32 %v3886, %v4081
      %v4256 = vmul.f32 %v3887, %v4086
      %v4257 = vmul.f32 %v3888, %v4091
      %v4258 = vmul.f32 %v3889, %v4096
      %v4259 = vmul.f32 %v3890, %v4101
      %v4260 = vmul.f32 %v3891, %v4106
      %v4261 = vmul.f32 %v3892, %v4111
      %v4262 = vmul.f32 %v3893, %v4116
      %v4263 = vmul.f32 %v3894, %v4121
      %v4264 = vmul.f32 %v3895, %v4126
      %v4265 = vmul.f32 %v3896, %v4131
      %v4266 = vmul.f32 %v3897, %v4136
      %v4267 = vmul.f32 %v3898, %v4141
      %v4268 = vmul.f32 %v3899, %v4146
      %v4269 = vmul.f32 %v3900, %v4151
      %v4270 = vmul.f32 %v3901, %v4156
      %v4271 = vmul.f32 %v3902, %v4161
      %v4272 = vmul.f32 %v3903, %v4166
      %v4273 = vmul.f32 %v3904, %v4171
      %v4274 = vmul.f32 %v3905, %v4176
      %v4275 = vmul.f32 %v3906, %v4181
      %v4276 = vmul.f32 %v3907, %v4186
      %v4277 = vmul.f32 %v3908, %v4191
      %v4278 = vmul.f32 %v3909, %v4196
      %v4279 = vmul.f32 %v3910, %v4201
      %v4280 = vmul.f32 %v3911, %v4206
      %v4281 = vmul.f32 %v3912, %v4211
      %v4282 = vmul.f32 %v3913, %v4216
      %v4283 = vmul.f32 %v3914, %v4221
      %v4284 = vmul.f32 %v3915, %v4226
      %v4285 = vmul.f32 %v3916, %v4231
      %v4286 = vmul.f32 %v3917, %v4236
      %v4287 = vmul.f32 %v3918, %v4241
      %v4288 = vmul.f32 %v3919, %v4246
      %v4289 = vadd.f32 %v4248, %v4249
      %v4290 = vadd.f32 %v4289, %v4250
      %v4291 = vadd.f32 %v4290, %v4251
      %v4292 = vadd.f32 %v4291, %v4252
      %v4293 = vadd.f32 %v4292, %v4253
      %v4294 = vadd.f32 %v4293, %v4254
      %v4295 = vadd.f32 %v4294, %v4255
      %v4296 = vadd.f32 %v4295, %v4256
      %v4297 = vadd.f32 %v4296, %v4257
      %v4298 = vadd.f32 %v4297, %v4258
      %v4299 = vadd.f32 %v4298, %v4259
      %v4300 = vadd.f32 %v4299, %v4260
      %v4301 = vadd.f32 %v4300, %v4261
      %v4302 = vadd.f32 %v4301, %v4262
      %v4303 = vadd.f32 %v4302, %v4263
      %v4304 = vadd.f32 %v4303, %v4264
      %v4305 = vadd.f32 %v4304, %v4265
      %v4306 = vadd.f32 %v4305, %v4266
      %v4307 = vadd.f32 %v4306, %v4267
      %v4308 = vadd.f32 %v4307, %v4268
      %v4309 = vadd.f32 %v4308, %v4269
      %v4310 = vadd.f32 %v4309, %v4270
      %v4311 = vadd.f32 %v4310, %v4271
      %v4312 = vadd.f32 %v4311, %v4272
      %v4313 = vadd.f32 %v4312, %v4273
      %v4314 = vadd.f32 %v4313, %v4274
      %v4315 = vadd.f32 %v4314, %v4275
      %v4316 = vadd.f32 %v4315, %v4276
      %v4317 = vadd.f32 %v4316, %v4277
      %v4318 = vadd.f32 %v4317, %v4278
      %v4319 = vadd.f32 %v4318, %v4279
      %v4320 = vadd.f32 %v4319, %v4280
      %v4321 = vadd.f32 %v4320, %v4281
      %v4322 = vadd.f32 %v4321, %v4282
      %v4323 = vadd.f32 %v4322, %v4283
      %v4324 = vadd.f32 %v4323, %v4284
      %v4325 = vadd.f32 %v4324, %v4285
      %v4326 = vadd.f32 %v4325, %v4286
      %v4327 = vadd.f32 %v4326, %v4287
      %v4328 = vadd.f32 %v4327, %v4288
      %v4329 = vrot.slane %v4328, 4
      %v4330 = vadd.f32 %v4328, %v4329
      %v4331 = vrot.slane %v4330, 2
      %v4332 = vadd.f32 %v4330, %v4331
      %v4333 = vrot.slane %v4332, 1
      %v4334 = vadd.f32 %v4332, %v4333
      %v4335 = vmul.f32 %v4248, %v3879
      %v4336 = vmul.f32 %v4249, %v3880
      %v4337 = vmul.f32 %v4250, %v3881
      %v4338 = vmul.f32 %v4251, %v3882
      %v4339 = vmul.f32 %v4252, %v3883
      %v4340 = vmul.f32 %v4253, %v3884
      %v4341 = vmul.f32 %v4254, %v3885
      %v4342 = vmul.f32 %v4255, %v3886
      %v4343 = vmul.f32 %v4256, %v3887
      %v4344 = vmul.f32 %v4257, %v3888
      %v4345 = vmul.f32 %v4258, %v3889
      %v4346 = vmul.f32 %v4259, %v3890
      %v4347 = vmul.f32 %v4260, %v3891
      %v4348 = vmul.f32 %v4261, %v3892
      %v4349 = vmul.f32 %v4262, %v3893
      %v4350 = vmul.f32 %v4263, %v3894
      %v4351 = vmul.f32 %v4264, %v3895
      %v4352 = vmul.f32 %v4265, %v3896
      %v4353 = vmul.f32 %v4266, %v3897
      %v4354 = vmul.f32 %v4267, %v3898
      %v4355 = vmul.f32 %v4268, %v3899
      %v4356 = vmul.f32 %v4269, %v3900
      %v4357 = vmul.f32 %v4270, %v3901
      %v4358 = vmul.f32 %v4271, %v3902
      %v4359 = vmul.f32 %v4272, %v3903
      %v4360 = vmul.f32 %v4273, %v3904
      %v4361 = vmul.f32 %v4274, %v3905
      %v4362 = vmul.f32 %v4275, %v3906
      %v4363 = vmul.f32 %v4276, %v3907
      %v4364 = vmul.f32 %v4277, %v3908
      %v4365 = vmul.f32 %v4278, %v3909
      %v4366 = vmul.f32 %v4279, %v3910
      %v4367 = vmul.f32 %v4280, %v3911
      %v4368 = vmul.f32 %v4281, %v3912
      %v4369 = vmul.f32 %v4282, %v3913
      %v4370 = vmul.f32 %v4283, %v3914
      %v4371 = vmul.f32 %v4284, %v3915
      %v4372 = vmul.f32 %v4285, %v3916
      %v4373 = vmul.f32 %v4286, %v3917
      %v4374 = vmul.f32 %v4287, %v3918
      %v4375 = vmul.f32 %v4288, %v3919
      %v4376 = vadd.f32 %v4335, %v4336
      %v4377 = vadd.f32 %v4376, %v4337
      %v4378 = vadd.f32 %v4377, %v4338
      %v4379 = vadd.f32 %v4378, %v4339
      %v4380 = vadd.f32 %v4379, %v4340
      %v4381 = vadd.f32 %v4380, %v4341
      %v4382 = vadd.f32 %v4381, %v4342
      %v4383 = vadd.f32 %v4382, %v4343
      %v4384 = vadd.f32 %v4383, %v4344
      %v4385 = vadd.f32 %v4384, %v4345
      %v4386 = vadd.f32 %v4385, %v4346
      %v4387 = vadd.f32 %v4386, %v4347
      %v4388 = vadd.f32 %v4387, %v4348
      %v4389 = vadd.f32 %v4388, %v4349
      %v4390 = vadd.f32 %v4389, %v4350
      %v4391 = vadd.f32 %v4390, %v4351
      %v4392 = vadd.f32 %v4391, %v4352
      %v4393 = vadd.f32 %v4392, %v4353
      %v4394 = vadd.f32 %v4393, %v4354
      %v4395 = vadd.f32 %v4394, %v4355
      %v4396 = vadd.f32 %v4395, %v4356
      %v4397 = vadd.f32 %v4396, %v4357
      %v4398 = vadd.f32 %v4397, %v4358
      %v4399 = vadd.f32 %v4398, %v4359
      %v4400 = vadd.f32 %v4399, %v4360
      %v4401 = vadd.f32 %v4400, %v4361
      %v4402 = vadd.f32 %v4401, %v4362
      %v4403 = vadd.f32 %v4402, %v4363
      %v4404 = vadd.f32 %v4403, %v4364
      %v4405 = vadd.f32 %v4404, %v4365
      %v4406 = vadd.f32 %v4405, %v4366
      %v4407 = vadd.f32 %v4406, %v4367
      %v4408 = vadd.f32 %v4407, %v4368
      %v4409 = vadd.f32 %v4408, %v4369
      %v4410 = vadd.f32 %v4409, %v4370
      %v4411 = vadd.f32 %v4410, %v4371
      %v4412 = vadd.f32 %v4411, %v4372
      %v4413 = vadd.f32 %v4412, %v4373
      %v4414 = vadd.f32 %v4413, %v4374
      %v4415 = vadd.f32 %v4414, %v4375
      %v4416 = vrot.slane %v4415, 4
      %v4417 = vadd.f32 %v4415, %v4416
      %v4418 = vrot.slane %v4417, 2
      %v4419 = vadd.f32 %v4417, %v4418
      %v4420 = vrot.slane %v4419, 1
      %v4421 = vadd.f32 %v4419, %v4420
      %vm4422 = vcmask 1040384
      %v4423 = vsel %vm4422, %v4334, %v4421
      %4424 = vst [vmem:[%s268] sm:$0x3] %v4423
      %s4425 = smul.u32 41, %s21
      %p4426 = scmp.lt.s32.totalorder %s20, 1
      %s4427 = scalar_select %p4426, %s20, 1
      %p4428 = scmp.lt.s32.totalorder %s4425, 40
      %s4429 = scalar_select %p4428, %s4425, 40
      %s4430 = smul.addr %s4427, 41
      %s4431 = sadd.s32 %s4429, %s4430
      %s4432 = smul.addr %s4431, 4
      %s4433 = scalar_lea.vmem %s3, %s4432
      %p4434 = scmp.lt.s32.totalorder %s20, 1
      %s4435 = scalar_select %p4434, %s20, 1
      %p4436 = scmp.lt.s32.totalorder %s21, 0
      %s4437 = scalar_select %p4436, %s21, 0
      %s4438 = sadd.s32 %s4437, %s4435
      %s4439 = smul.addr %s4438, 2
      %s4440 = scalar_lea.vmem %s4, %s4439
      // Predicated region
      $region33: #{res_block.7} parent=31 // pred_check
        %p4441 = pneg %p123
      $region34: #{res_block.7} parent=31 // pred_check_branch
        %4443 = sbr.rel (%p4441) target = $region36
      $region35: #{res_block.7} parent=31 // pred_region
        %s4444 = smul.u32 41, %s21
      $region36: #{res_block.7} parent=31 // pred_fallthru
        _
      // Predicated region
      $region37: #{res_block.7} parent=31 // pred_check
        %p4445 = pneg %p151
      $region38: #{res_block.7} parent=31 // pred_check_branch
        %4447 = sbr.rel (%p4445) target = $region40
      $region39: #{res_block.7} parent=31 // pred_region
        _
      $region40: #{res_block.7} parent=31 // pred_fallthru
        _
    $region32: #{res_block.7} parent=5 // pred_fallthru
      _
    %p4448 = scmp.le.s32.totalorder 2, %s11
    // Predicated region
    $region41: #{res_block.7} parent=5 // pred_check
      %p4449 = pneg %p4448
    $region42: #{res_block.7} parent=5 // pred_check_branch
      %4451 = sbr.rel (%p4449) target = $region44
    $region43: #{res_block.7} parent=5 // pred_region
      %s4452 = ssub.s32 %s11, 2
      // Predicated region
      $region45: #{res_block.7} parent=43 // pred_check
        %p4453 = pneg %p129
      $region46: #{res_block.7} parent=43 // pred_check_branch
        %4455 = sbr.rel (%p4453) target = $region48
      $region47: #{res_block.7} parent=43 // pred_region
        %s4456 = smul.u32 41, %s23
        %p4457 = scmp.lt.s32.totalorder %s22, 1
        %s4458 = scalar_select %p4457, %s22, 1
        %p4459 = scmp.lt.s32.totalorder %s4456, 40
        %s4460 = scalar_select %p4459, %s4456, 40
        %s4461 = smul.addr %s4458, 41
        %s4462 = sadd.s32 %s4460, %s4461
        %s4463 = smul.addr %s4462, 4
        %s4464 = scalar_lea.vmem %s3, %s4463
      $region48: #{res_block.7} parent=43 // pred_fallthru
        _
      // Predicated region
      $region49: #{res_block.7} parent=43 // pred_check
        %p4465 = pneg %p157
      $region50: #{res_block.7} parent=43 // pred_check_branch
        %4467 = sbr.rel (%p4465) target = $region52
      $region51: #{res_block.7} parent=43 // pred_region
        %p4468 = scmp.lt.s32.totalorder %s22, 1
        %s4469 = scalar_select %p4468, %s22, 1
        %p4470 = scmp.lt.s32.totalorder %s23, 0
        %s4471 = scalar_select %p4470, %s23, 0
        %s4472 = sadd.s32 %s4471, %s4469
        %s4473 = smul.addr %s4472, 2
        %s4474 = scalar_lea.vmem %s4, %s4473
      $region52: #{res_block.7} parent=43 // pred_fallthru
        _
    $region44: #{res_block.7} parent=5 // pred_fallthru
      _
  $region6: #{res_block.7} parent=0 // loop_footer
    %s15 = sadd.s32 1, %s11
  $region7: #{res_block.7} parent=0 // loop_footer_branch
    %10 = sbr.rel target = $region3
  $region8: #{res_block.7} parent=0 // loop_exit
    _

</llo_original>
